<compile_context>
chip_gen: v7x
topology: tpu7x:2x2x1
jax: 0.10.0
libtpu: 0.0.40
codegen_flags: <defaults>
</compile_context>

<pallas_src>
import functools

import jax
import jax.numpy as jnp
from jax import lax
from jax.experimental import pallas as pl
from jax.experimental.pallas import tpu as pltpu

EPS = 1e-5          # nn.BatchNorm2d default eps
NEG_SLOPE = 0.2     # LeakyReLU(0.2)
VMEM_LIMIT = 32 * 1024 * 1024


def _round_up(x, m):
    return (x + m - 1) // m * m


def _mosaic_params():
    return pltpu.CompilerParams(
        dimension_semantics=("parallel",),
        vmem_limit_bytes=VMEM_LIMIT,
    )


# ----------------------------- Pallas kernels -----------------------------

def linear_kernel(z_ref, w_ref, b_ref, o_ref):
    # (B, nz) @ (nz, TK) + (1, TK); bf16 MXU, f32 accumulate.
    o_ref[...] = (
        jnp.dot(z_ref[...].astype(jnp.bfloat16), w_ref[...],
                preferred_element_type=jnp.float32)
        + b_ref[...]
    )


def upconv_kernel(xf_ref, mask_ref, wf_ref, out_ref, stats_ref, *, Wp, R_out, CP):
    """Fused nearest-2x upsample + 3x3 conv + BN batch-stat partials.

    xf_ref    : ((Hi+3)*(Wi+2), CP)  zero-padded, flattened PRE-upsample input
    mask_ref  : (R_out, 1)           1.0 on real columns, 0.0 on pad columns
    wf_ref    : (16, CP, CP)         folded sub-pixel weights (bf16)
    out_ref   : (R_out, 4*CP)        per-parity conv outputs (sub-pixel layout)
    stats_ref : (2, CP)              per-image [sum, sum_sq] over valid pixels
    """
    mask = mask_ref[...]
    s1 = jnp.zeros((1, CP), jnp.float32)
    s2 = jnp.zeros((1, CP), jnp.float32)
    for p in range(4):                       # output parity (a, b); p = 2*a + b
        a, b = p // 2, p % 2
        acc = jnp.zeros((R_out, CP), jnp.float32)
        for t in range(2):
            for u in range(2):
                off = (a + t) * Wp + (b + u)          # static row shift
                xt = xf_ref[pl.ds(off, R_out), :].astype(jnp.bfloat16)
                acc = acc + jnp.dot(xt, wf_ref[p * 4 + t * 2 + u],
                                    preferred_element_type=jnp.float32)
        out_ref[:, pl.ds(p * CP, CP)] = acc           # 128-aligned lane store
        am = acc * mask
        s1 = s1 + jnp.sum(am, axis=0, keepdims=True)
        s2 = s2 + jnp.sum(am * acc, axis=0, keepdims=True)
    stats_ref[0:1, :] = s1
    stats_ref[1:2, :] = s2


def conv_sigmoid_kernel(xf_ref, w_ref, b_ref, out_ref, *, Wp, R_out, CP):
    # plain 3x3 conv (9 shifted-row matmuls) + bias + sigmoid.
    acc = jnp.zeros((R_out, CP), jnp.float32)
    for kh in range(3):
        for kw in range(3):
            off = kh * Wp + kw
            xt = xf_ref[pl.ds(off, R_out), :].astype(jnp.bfloat16)
            acc = acc + jnp.dot(xt, w_ref[kh * 3 + kw],
                                preferred_element_type=jnp.float32)
    out_ref[...] = jax.nn.sigmoid(acc + b_ref[...])


# ---------------------------- pallas_call glue -----------------------------

def _linear(z, w_bf16, b):
    B, nz = z.shape
    K = w_bf16.shape[1]
    TK = K
    for cand in (2048, 1024, 512, 256, 128):
        if K % cand == 0:
            TK = cand
            break
    return pl.pallas_call(
        linear_kernel,
        grid=(K // TK,),
        in_specs=[
            pl.BlockSpec((B, nz), lambda j: (0, 0)),
            pl.BlockSpec((nz, TK), lambda j: (0, j)),
            pl.BlockSpec((1, TK), lambda j: (0, j)),
        ],
        out_specs=pl.BlockSpec((B, TK), lambda j: (0, j)),
        out_shape=jax.ShapeDtypeStruct((B, K), jnp.float32),
        compiler_params=_mosaic_params(),
    )(z, w_bf16, b)


def _upconv(xf, wf, Hi, Wi, CP):
    """xf: (B, (Hi+3)*(Wi+2), CP).  Returns (raw_subpixel, stats_partials)."""
    B = xf.shape[0]
    Wp = Wi + 2
    R_in = (Hi + 3) * Wp
    R_out = Hi * Wp
    cmask = jnp.tile(jnp.arange(Wp) < Wi, Hi).astype(jnp.float32)[:, None]
    kernel = functools.partial(upconv_kernel, Wp=Wp, R_out=R_out, CP=CP)
    return pl.pallas_call(
        kernel,
        grid=(B,),
        in_specs=[
            pl.BlockSpec((None, R_in, CP), lambda b: (b, 0, 0)),
            pl.BlockSpec((R_out, 1), lambda b: (0, 0)),
            pl.BlockSpec((16, CP, CP), lambda b: (0, 0, 0)),
        ],
        out_specs=(
            pl.BlockSpec((None, R_out, 4 * CP), lambda b: (b, 0, 0)),
            pl.BlockSpec((None, 2, CP), lambda b: (b, 0, 0)),
        ),
        out_shape=(
            jax.ShapeDtypeStruct((B, R_out, 4 * CP), jnp.float32),
            jax.ShapeDtypeStruct((B, 2, CP), jnp.float32),
        ),
        compiler_params=_mosaic_params(),
    )(xf, cmask, wf)


def _conv_out(xf, w, b, H, W, CP):
    B = xf.shape[0]
    Wp = W + 2
    R_in = (H + 3) * Wp
    R_out = H * Wp
    kernel = functools.partial(conv_sigmoid_kernel, Wp=Wp, R_out=R_out, CP=CP)
    return pl.pallas_call(
        kernel,
        grid=(B,),
        in_specs=[
            pl.BlockSpec((None, R_in, CP), lambda b_: (b_, 0, 0)),
            pl.BlockSpec((9, CP, CP), lambda b_: (0, 0, 0)),
            pl.BlockSpec((1, CP), lambda b_: (0, 0)),
        ],
        out_specs=pl.BlockSpec((None, R_out, CP), lambda b_: (b_, 0, 0)),
        out_shape=jax.ShapeDtypeStruct((B, R_out, CP), jnp.float32),
        compiler_params=_mosaic_params(),
    )(xf, w, b)


# ------------------------- wrapper-side helpers ----------------------------

def _padc(v, cp):
    return jnp.pad(v, (0, cp - v.shape[0]))


def _prep(act):
    """(B,H,W,C) -> (B,(H+3)*(W+2),C): zero pad (1 top, 2 bottom guard, 1 L/R), flatten."""
    B, H, W, C = act.shape
    ap = jnp.pad(act, ((0, 0), (1, 2), (1, 1), (0, 0)))
    return ap.reshape(B, (H + 3) * (W + 2), C)


def _fold_weights(w_oihw, cin_p, cout_p):
    """(Cout,Cin,3,3) -> (16, cin_p, cout_p) sub-pixel folded weights, bf16.

    Index = (2a+b)*4 + 2t + u; tap (t,u) reads padded input at (i+a+t, j+b+u).
    """
    cout, cin = w_oihw.shape[0], w_oihw.shape[1]
    w = jnp.transpose(w_oihw, (2, 3, 1, 0)).astype(jnp.float32)   # (kh,kw,Cin,Cout)
    sets = [[(0,), (1, 2)], [(0, 1), (2,)]]                        # [parity][tap] -> taps folded
    mats = []
    for a in range(2):
        for b in range(2):
            for t in range(2):
                for u in range(2):
                    m = jnp.zeros((cin, cout), jnp.float32)
                    for kh in sets[a][t]:
                        for kw in sets[b][u]:
                            m = m + w[kh, kw]
                    mats.append(m)
    wf = jnp.stack(mats, axis=0)
    wf = jnp.pad(wf, ((0, 0), (0, cin_p - cin), (0, cout_p - cout)))
    return wf.astype(jnp.bfloat16)


def _taps_weights(w_oihw, cin_p, cout_p):
    """(Cout,Cin,3,3) -> (9, cin_p, cout_p) plain conv tap weights, bf16."""
    cout, cin = w_oihw.shape[0], w_oihw.shape[1]
    w = jnp.transpose(w_oihw, (2, 3, 1, 0)).reshape(9, cin, cout)
    w = jnp.pad(w, ((0, 0), (0, cin_p - cin), (0, cout_p - cout)))
    return w.astype(jnp.bfloat16)


def _bn_lrelu_d2s(raw, stats, gamma_p, beta_p, Hi, Wi, CP):
    """BN(batch stats) + LeakyReLU + pixel-shuffle of a sub-pixel conv output.

    raw:   (B, Hi*(Wi+2), 4*CP), stats: (B, 2, CP).  Returns (B, 2Hi, 2Wi, CP).
    """
    B = raw.shape[0]
    Wp = Wi + 2
    n = B * 4 * Hi * Wi
    tot = jnp.sum(stats, axis=0)                       # (2, CP)
    mean = tot[0] / n
    var = jnp.maximum(tot[1] / n - mean * mean, 0.0)
    scale = gamma_p * lax.rsqrt(var + EPS)
    shift = beta_p - mean * scale
    t = raw.reshape(B, Hi, Wp, 2, 2, CP)[:, :, :Wi]    # drop garbage pad columns
    t = jnp.transpose(t, (0, 1, 3, 2, 4, 5)).reshape(B, 2 * Hi, 2 * Wi, CP)
    y = t * scale + shift
    return jnp.where(y > 0, y, NEG_SLOPE * y)


# ----------------------------- Generator model -----------------------------

def init_params(key, nz, ngf, img_size, nc):
    init_size = img_size // 4
    c1 = ngf * 2
    keys = jax.random.split(key, 12)
    p = {}
    k_out = c1 * init_size * init_size
    p["w1"] = jax.random.normal(keys[0], (k_out, nz), jnp.float32) / jnp.sqrt(nz)
    p["b1"] = 0.1 * jax.random.normal(keys[1], (k_out,), jnp.float32)
    p["g1"] = 1.0 + 0.1 * jax.random.normal(keys[2], (c1,), jnp.float32)
    p["be1"] = 0.1 * jax.random.normal(keys[3], (c1,), jnp.float32)
    p["wc1"] = jax.random.normal(keys[4], (c1, c1, 3, 3), jnp.float32) / jnp.sqrt(9 * c1)
    p["g2"] = 1.0 + 0.1 * jax.random.normal(keys[5], (c1,), jnp.float32)
    p["be2"] = 0.1 * jax.random.normal(keys[6], (c1,), jnp.float32)
    p["wc2"] = jax.random.normal(keys[7], (ngf, c1, 3, 3), jnp.float32) / jnp.sqrt(9 * c1)
    p["g3"] = 1.0 + 0.1 * jax.random.normal(keys[8], (ngf,), jnp.float32)
    p["be3"] = 0.1 * jax.random.normal(keys[9], (ngf,), jnp.float32)
    p["wc3"] = jax.random.normal(keys[10], (nc, ngf, 3, 3), jnp.float32) / jnp.sqrt(9 * ngf)
    p["bc3"] = 0.1 * jax.random.normal(keys[11], (nc,), jnp.float32)
    return p


def generator_forward(z, params, *, nz, ngf, img_size, nc):
    assert img_size % 4 == 0
    B = z.shape[0]
    s = img_size // 4
    c1 = ngf * 2
    CP = _round_up(max(c1, ngf, nc), 128)      # lane-dense channel padding

    # ---- l1: Linear, with the NCHW->NHWC reorder baked into the weights ----
    K = c1 * s * s
    m = jnp.arange(K)
    ch = m % c1
    ij = m // c1
    perm = ch * (s * s) + (ij // s) * s + (ij % s)
    w1p = jnp.transpose(params["w1"][perm]).astype(jnp.bfloat16)   # (nz, K)
    b1p = params["b1"][perm][None, :]                              # (1, K)
    lin = _linear(z, w1p, b1p)                                     # (B, K)

    # ---- BatchNorm2d(c1) #1 (stats tiny -> computed in wrapper, fused apply) ----
    x0 = lin.reshape(B, s, s, c1)                                  # NHWC (free reshape)
    mu = jnp.mean(x0, axis=(0, 1, 2))
    var = jnp.mean(jnp.square(x0 - mu), axis=(0, 1, 2))
    xn = (x0 - mu) * lax.rsqrt(var + EPS) * params["g1"] + params["be1"]
    xn = jnp.pad(xn, ((0, 0), (0, 0), (0, 0), (0, CP - c1)))

    # ---- Stage 1: Upsample x2 + Conv(c1->c1) [fused], BN#2 + LReLU in glue ----
    wf1 = _fold_weights(params["wc1"], CP, CP)
    raw1, st1 = _upconv(_prep(xn), wf1, s, s, CP)
    a1 = _bn_lrelu_d2s(raw1, st1, _padc(params["g2"], CP), _padc(params["be2"], CP),
                       s, s, CP)                                   # (B, 2s, 2s, CP)

    # ---- Stage 2: Upsample x2 + Conv(c1->ngf) [fused], BN#3 + LReLU in glue ----
    wf2 = _fold_weights(params["wc2"], CP, CP)
    raw2, st2 = _upconv(_prep(a1), wf2, 2 * s, 2 * s, CP)
    a2 = _bn_lrelu_d2s(raw2, st2, _padc(params["g3"], CP), _padc(params["be3"], CP),
                       2 * s, 2 * s, CP)                           # (B, 4s, 4s, CP)

    # ---- Stage 3: Conv(ngf->nc) + bias + Sigmoid ----
    w3 = _taps_weights(params["wc3"], CP, CP)
    b3 = _padc(params["bc3"], CP)[None, :]
    out = _conv_out(_prep(a2), w3, b3, 4 * s, 4 * s, CP)           # (B, 4s*(4s+2), CP)

    H = 4 * s
    img = out.reshape(B, H, H + 2, CP)[:, :, :H, :nc]
    return jnp.transpose(img, (0, 3, 1, 2))                        # NCHW


# ----------------------- pure-JAX reference (NCHW) --------------------------

def reference_forward(z, params, *, nz, ngf, img_size, nc):
    B = z.shape[0]
    s = img_size // 4
    c1 = ngf * 2

    def bn(x, g, b):
        mean = x.mean(axis=(0, 2, 3), keepdims=True)
        var = ((x - mean) ** 2).mean(axis=(0, 2, 3), keepdims=True)
        return g[None, :, None, None] * (x - mean) * lax.rsqrt(var + EPS) + \
            b[None, :, None, None]

    def up(x):
        return jnp.repeat(jnp.repeat(x, 2, axis=2), 2, axis=3)

    def conv(x, w, b=None):
        y = lax.conv_general_dilated(
            x, w, (1, 1), "SAME", dimension_numbers=("NCHW", "OIHW", "NCHW"))
        if b is not None:
            y = y + b[None, :, None, None]
        return y

    out = z @ params["w1"].T + params["b1"]
    x = out.reshape(B, c1, s, s)
    x = bn(x, params["g1"], params["be1"])
    x = up(x)
    x = conv(x, params["wc1"])
    x = bn(x, params["g2"], params["be2"])
    x = jnp.where(x > 0, x, NEG_SLOPE * x)
    x = up(x)
    x = conv(x, params["wc2"])
    x = bn(x, params["g3"], params["be3"])
    x = jnp.where(x > 0, x, NEG_SLOPE * x)
    x = conv(x, params["wc3"], params["bc3"])
    return jax.nn.sigmoid(x)


# --------------------------------- main -------------------------------------

if __name__ == "__main__":
    B, NZ, NGF, IMG, NC = 2, 32, 16, 16, 3

    key = jax.random.PRNGKey(0)
    kz, kp = jax.random.split(key)
    z = jax.random.normal(kz, (B, NZ), jnp.float32)
    params = init_params(kp, NZ, NGF, IMG, NC)

    fwd = jax.jit(functools.partial(
        generator_forward, nz=NZ, ngf=NGF, img_size=IMG, nc=NC))
    img = jax.block_until_ready(fwd(z, params))
    assert img.shape == (B, NC, IMG, IMG), img.shape

    ref = jax.block_until_ready(
        reference_forward(z, params, nz=NZ, ngf=NGF, img_size=IMG, nc=NC))
    max_err = float(jnp.max(jnp.abs(img - ref)))
    mean_err = float(jnp.mean(jnp.abs(img - ref)))
    # Kernel runs single-pass bf16 MXU matmuls with f32 accumulation (per perf
    # review), so allow bf16-level deviation from the f32 reference.
    assert max_err < 2.5e-2, f"max abs err {max_err}"
    assert mean_err < 5e-3, f"mean abs err {mean_err}"

    print("KERNEL_OK")
</pallas_src>

<mosaic_0001>
module attributes {stable_mosaic.version = 11 : i64} {
  func.func @linear_kernel(%arg0: i32, %arg1: memref<2x32xf32, #tpu.memory_space<vmem>>, %arg2: memref<32x512xbf16, #tpu.memory_space<vmem>>, %arg3: memref<1x512xf32, #tpu.memory_space<vmem>>, %arg4: memref<2x512xf32, #tpu.memory_space<vmem>>) attributes {dimension_semantics = [#tpu.dimension_semantics<parallel>], iteration_bounds = array<i64: 1>, scalar_prefetch = 0 : i64, scratch_operands = 0 : i64, tpu.core_type = #tpu.core_type<tc>, window_params = [{pipeline_mode = #tpu.pipeline_mode<synchronous>, transform_indices = @transform_0, window_bounds = array<i64: 2, 32>}, {transform_indices = @transform_1, window_bounds = array<i64: 32, 512>}, {transform_indices = @transform_2, window_bounds = array<i64: 1, 512>}, {transform_indices = @transform_3, window_bounds = array<i64: 2, 512>}]} {
    %c0 = arith.constant 0 : index
    %c0_0 = arith.constant 0 : index
    %0 = vector.load %arg1[%c0, %c0_0] : memref<2x32xf32, #tpu.memory_space<vmem>>, vector<2x32xf32>
    %1 = arith.truncf %0 : vector<2x32xf32> to vector<2x32xbf16>
    %c0_1 = arith.constant 0 : index
    %c0_2 = arith.constant 0 : index
    %2 = vector.load %arg2[%c0_1, %c0_2] : memref<32x512xbf16, #tpu.memory_space<vmem>>, vector<32x512xbf16>
    %cst = arith.constant dense<0.000000e+00> : vector<2x512xf32>
    %3 = tpu.matmul %1, %2, %cst {dimension_numbers = #tpu.dot_dimension_numbers<[1], [0], [0], [1], [0, 0, 1, 1], [], []>} : vector<2x32xbf16>, vector<32x512xbf16>, vector<2x512xf32> -> vector<2x512xf32>
    %c0_3 = arith.constant 0 : index
    %c0_4 = arith.constant 0 : index
    %4 = vector.load %arg3[%c0_3, %c0_4] : memref<1x512xf32, #tpu.memory_space<vmem>>, vector<1x512xf32>
    %5 = vector.broadcast %4 : vector<1x512xf32> to vector<2x512xf32>
    %6 = arith.addf %3, %5 : vector<2x512xf32>
    %c0_5 = arith.constant 0 : index
    %c0_6 = arith.constant 0 : index
    %7 = vector.load %arg4[%c0_5, %c0_6] : memref<2x512xf32, #tpu.memory_space<vmem>>, vector<2x512xf32>
    tpu.vector_store %arg4[%c0_5, %c0_6], %6 {strides = array<i32>} : memref<2x512xf32, #tpu.memory_space<vmem>>, vector<2x512xf32>,
    return
  }
  func.func @transform_0(%arg0: i32) -> (i32, i32) {
    %c0_i32 = arith.constant 0 : i32
    %c0_i32_0 = arith.constant 0 : i32
    %c0_i32_1 = arith.constant 0 : i32
    return %c0_i32, %c0_i32_0 : i32, i32
  }
  func.func @transform_1(%arg0: i32) -> (i32, i32) {
    %c0_i32 = arith.constant 0 : i32
    %c0_i32_0 = arith.constant 0 : i32
    return %c0_i32, %arg0 : i32, i32
  }
  func.func @transform_2(%arg0: i32) -> (i32, i32) {
    %c0_i32 = arith.constant 0 : i32
    %c0_i32_0 = arith.constant 0 : i32
    return %c0_i32, %arg0 : i32, i32
  }
  func.func @transform_3(%arg0: i32) -> (i32, i32) {
    %c0_i32 = arith.constant 0 : i32
    %c0_i32_0 = arith.constant 0 : i32
    return %c0_i32, %arg0 : i32, i32
  }
}

module attributes {stable_mosaic.version = 11 : i64} {
  func.func @upconv_kernel(%arg0: i32, %arg1: memref<1x42x128xf32, #tpu.memory_space<vmem>>, %arg2: memref<24x1xf32, #tpu.memory_space<vmem>>, %arg3: memref<16x128x128xbf16, #tpu.memory_space<vmem>>, %arg4: memref<1x24x512xf32, #tpu.memory_space<vmem>>, %arg5: memref<1x2x128xf32, #tpu.memory_space<vmem>>) attributes {dimension_semantics = [#tpu.dimension_semantics<parallel>], iteration_bounds = array<i64: 2>, scalar_prefetch = 0 : i64, scratch_operands = 0 : i64, tpu.core_type = #tpu.core_type<tc>, window_params = [{transform_indices = @transform_0, window_bounds = array<i64: 1, 42, 128>}, {pipeline_mode = #tpu.pipeline_mode<synchronous>, transform_indices = @transform_1, window_bounds = array<i64: 24, 1>}, {pipeline_mode = #tpu.pipeline_mode<synchronous>, transform_indices = @transform_2, window_bounds = array<i64: 16, 128, 128>}, {transform_indices = @transform_3, window_bounds = array<i64: 1, 24, 512>}, {transform_indices = @transform_4, window_bounds = array<i64: 1, 2, 128>}]} {
    %c0 = arith.constant 0 : index
    %c0_0 = arith.constant 0 : index
    %0 = vector.load %arg2[%c0, %c0_0] : memref<24x1xf32, #tpu.memory_space<vmem>>, vector<24x1xf32>
    %cst = arith.constant 0.000000e+00 : f32
    %1 = vector.broadcast %cst : f32 to vector<1x128xf32>
    %cst_1 = arith.constant 0.000000e+00 : f32
    %2 = vector.broadcast %cst_1 : f32 to vector<1x128xf32>
    %cst_2 = arith.constant 0.000000e+00 : f32
    %3 = vector.broadcast %cst_2 : f32 to vector<24x128xf32>
    %c0_3 = arith.constant 0 : index
    %c0_4 = arith.constant 0 : index
    %c0_5 = arith.constant 0 : index
    %4 = vector.load %arg1[%c0_3, %c0_4, %c0_5] : memref<1x42x128xf32, #tpu.memory_space<vmem>>, vector<1x24x128xf32>
    %5 = vector.shape_cast %4 : vector<1x24x128xf32> to vector<24x128xf32>
    %6 = arith.truncf %5 : vector<24x128xf32> to vector<24x128xbf16>
    %c0_6 = arith.constant 0 : index
    %c0_7 = arith.constant 0 : index
    %c0_8 = arith.constant 0 : index
    %7 = vector.load %arg3[%c0_6, %c0_7, %c0_8] : memref<16x128x128xbf16, #tpu.memory_space<vmem>>, vector<1x128x128xbf16>
    %8 = vector.shape_cast %7 : vector<1x128x128xbf16> to vector<128x128xbf16>
    %cst_9 = arith.constant dense<0.000000e+00> : vector<24x128xf32>
    %9 = tpu.matmul %6, %8, %cst_9 {dimension_numbers = #tpu.dot_dimension_numbers<[1], [0], [0], [1], [0, 0, 1, 1], [], []>} : vector<24x128xbf16>, vector<128x128xbf16>, vector<24x128xf32> -> vector<24x128xf32>
    %10 = arith.addf %3, %9 : vector<24x128xf32>
    %c0_10 = arith.constant 0 : index
    %c1 = arith.constant 1 : index
    %c0_11 = arith.constant 0 : index
    %11 = vector.load %arg1[%c0_10, %c1, %c0_11] : memref<1x42x128xf32, #tpu.memory_space<vmem>>, vector<1x24x128xf32>
    %12 = vector.shape_cast %11 : vector<1x24x128xf32> to vector<24x128xf32>
    %13 = arith.truncf %12 : vector<24x128xf32> to vector<24x128xbf16>
    %c1_12 = arith.constant 1 : index
    %c0_13 = arith.constant 0 : index
    %c0_14 = arith.constant 0 : index
    %14 = vector.load %arg3[%c1_12, %c0_13, %c0_14] : memref<16x128x128xbf16, #tpu.memory_space<vmem>>, vector<1x128x128xbf16>
    %15 = vector.shape_cast %14 : vector<1x128x128xbf16> to vector<128x128xbf16>
    %cst_15 = arith.constant dense<0.000000e+00> : vector<24x128xf32>
    %16 = tpu.matmul %13, %15, %cst_15 {dimension_numbers = #tpu.dot_dimension_numbers<[1], [0], [0], [1], [0, 0, 1, 1], [], []>} : vector<24x128xbf16>, vector<128x128xbf16>, vector<24x128xf32> -> vector<24x128xf32>
    %17 = arith.addf %10, %16 : vector<24x128xf32>
    %c0_16 = arith.constant 0 : index
    %c6 = arith.constant 6 : index
    %c0_17 = arith.constant 0 : index
    %18 = vector.load %arg1[%c0_16, %c6, %c0_17] : memref<1x42x128xf32, #tpu.memory_space<vmem>>, vector<1x24x128xf32>
    %19 = vector.shape_cast %18 : vector<1x24x128xf32> to vector<24x128xf32>
    %20 = arith.truncf %19 : vector<24x128xf32> to vector<24x128xbf16>
    %c2 = arith.constant 2 : index
    %c0_18 = arith.constant 0 : index
    %c0_19 = arith.constant 0 : index
    %21 = vector.load %arg3[%c2, %c0_18, %c0_19] : memref<16x128x128xbf16, #tpu.memory_space<vmem>>, vector<1x128x128xbf16>
    %22 = vector.shape_cast %21 : vector<1x128x128xbf16> to vector<128x128xbf16>
    %cst_20 = arith.constant dense<0.000000e+00> : vector<24x128xf32>
    %23 = tpu.matmul %20, %22, %cst_20 {dimension_numbers = #tpu.dot_dimension_numbers<[1], [0], [0], [1], [0, 0, 1, 1], [], []>} : vector<24x128xbf16>, vector<128x128xbf16>, vector<24x128xf32> -> vector<24x128xf32>
    %24 = arith.addf %17, %23 : vector<24x128xf32>
    %c0_21 = arith.constant 0 : index
    %c7 = arith.constant 7 : index
    %c0_22 = arith.constant 0 : index
    %25 = vector.load %arg1[%c0_21, %c7, %c0_22] : memref<1x42x128xf32, #tpu.memory_space<vmem>>, vector<1x24x128xf32>
    %26 = vector.shape_cast %25 : vector<1x24x128xf32> to vector<24x128xf32>
    %27 = arith.truncf %26 : vector<24x128xf32> to vector<24x128xbf16>
    %c3 = arith.constant 3 : index
    %c0_23 = arith.constant 0 : index
    %c0_24 = arith.constant 0 : index
    %28 = vector.load %arg3[%c3, %c0_23, %c0_24] : memref<16x128x128xbf16, #tpu.memory_space<vmem>>, vector<1x128x128xbf16>
    %29 = vector.shape_cast %28 : vector<1x128x128xbf16> to vector<128x128xbf16>
    %cst_25 = arith.constant dense<0.000000e+00> : vector<24x128xf32>
    %30 = tpu.matmul %27, %29, %cst_25 {dimension_numbers = #tpu.dot_dimension_numbers<[1], [0], [0], [1], [0, 0, 1, 1], [], []>} : vector<24x128xbf16>, vector<128x128xbf16>, vector<24x128xf32> -> vector<24x128xf32>
    %31 = arith.addf %24, %30 : vector<24x128xf32>
    %c0_26 = arith.constant 0 : index
    %c0_27 = arith.constant 0 : index
    %c0_28 = arith.constant 0 : index
    %32 = vector.load %arg4[%c0_26, %c0_27, %c0_28] : memref<1x24x512xf32, #tpu.memory_space<vmem>>, vector<1x24x128xf32>
    %33 = vector.shape_cast %32 : vector<1x24x128xf32> to vector<24x128xf32>
    %34 = vector.shape_cast %31 : vector<24x128xf32> to vector<1x24x128xf32>
    tpu.vector_store %arg4[%c0_26, %c0_27, %c0_28], %34 {strides = array<i32>} : memref<1x24x512xf32, #tpu.memory_space<vmem>>, vector<1x24x128xf32>,
    %35 = vector.broadcast %0 : vector<24x1xf32> to vector<24x128xf32>
    %36 = arith.mulf %31, %35 : vector<24x128xf32>
    %cst_29 = arith.constant dense<0.000000e+00> : vector<128xf32>
    %37 = vector.multi_reduction <add>, %36, %cst_29 [0] : vector<24x128xf32> to vector<128xf32>
    %38 = vector.shape_cast %37 : vector<128xf32> to vector<1x128xf32>
    %39 = arith.addf %1, %38 : vector<1x128xf32>
    %40 = arith.mulf %36, %31 : vector<24x128xf32>
    %cst_30 = arith.constant dense<0.000000e+00> : vector<128xf32>
    %41 = vector.multi_reduction <add>, %40, %cst_30 [0] : vector<24x128xf32> to vector<128xf32>
    %42 = vector.shape_cast %41 : vector<128xf32> to vector<1x128xf32>
    %43 = arith.addf %2, %42 : vector<1x128xf32>
    %cst_31 = arith.constant 0.000000e+00 : f32
    %44 = vector.broadcast %cst_31 : f32 to vector<24x128xf32>
    %c0_32 = arith.constant 0 : index
    %c1_33 = arith.constant 1 : index
    %c0_34 = arith.constant 0 : index
    %45 = vector.load %arg1[%c0_32, %c1_33, %c0_34] : memref<1x42x128xf32, #tpu.memory_space<vmem>>, vector<1x24x128xf32>
    %46 = vector.shape_cast %45 : vector<1x24x128xf32> to vector<24x128xf32>
    %47 = arith.truncf %46 : vector<24x128xf32> to vector<24x128xbf16>
    %c4 = arith.constant 4 : index
    %c0_35 = arith.constant 0 : index
    %c0_36 = arith.constant 0 : index
    %48 = vector.load %arg3[%c4, %c0_35, %c0_36] : memref<16x128x128xbf16, #tpu.memory_space<vmem>>, vector<1x128x128xbf16>
    %49 = vector.shape_cast %48 : vector<1x128x128xbf16> to vector<128x128xbf16>
    %cst_37 = arith.constant dense<0.000000e+00> : vector<24x128xf32>
    %50 = tpu.matmul %47, %49, %cst_37 {dimension_numbers = #tpu.dot_dimension_numbers<[1], [0], [0], [1], [0, 0, 1, 1], [], []>} : vector<24x128xbf16>, vector<128x128xbf16>, vector<24x128xf32> -> vector<24x128xf32>
    %51 = arith.addf %44, %50 : vector<24x128xf32>
    %c0_38 = arith.constant 0 : index
    %c2_39 = arith.constant 2 : index
    %c0_40 = arith.constant 0 : index
    %52 = vector.load %arg1[%c0_38, %c2_39, %c0_40] : memref<1x42x128xf32, #tpu.memory_space<vmem>>, vector<1x24x128xf32>
    %53 = vector.shape_cast %52 : vector<1x24x128xf32> to vector<24x128xf32>
    %54 = arith.truncf %53 : vector<24x128xf32> to vector<24x128xbf16>
    %c5 = arith.constant 5 : index
    %c0_41 = arith.constant 0 : index
    %c0_42 = arith.constant 0 : index
    %55 = vector.load %arg3[%c5, %c0_41, %c0_42] : memref<16x128x128xbf16, #tpu.memory_space<vmem>>, vector<1x128x128xbf16>
    %56 = vector.shape_cast %55 : vector<1x128x128xbf16> to vector<128x128xbf16>
    %cst_43 = arith.constant dense<0.000000e+00> : vector<24x128xf32>
    %57 = tpu.matmul %54, %56, %cst_43 {dimension_numbers = #tpu.dot_dimension_numbers<[1], [0], [0], [1], [0, 0, 1, 1], [], []>} : vector<24x128xbf16>, vector<128x128xbf16>, vector<24x128xf32> -> vector<24x128xf32>
    %58 = arith.addf %51, %57 : vector<24x128xf32>
    %c0_44 = arith.constant 0 : index
    %c7_45 = arith.constant 7 : index
    %c0_46 = arith.constant 0 : index
    %59 = vector.load %arg1[%c0_44, %c7_45, %c0_46] : memref<1x42x128xf32, #tpu.memory_space<vmem>>, vector<1x24x128xf32>
    %60 = vector.shape_cast %59 : vector<1x24x128xf32> to vector<24x128xf32>
    %61 = arith.truncf %60 : vector<24x128xf32> to vector<24x128xbf16>
    %c6_47 = arith.constant 6 : index
    %c0_48 = arith.constant 0 : index
    %c0_49 = arith.constant 0 : index
    %62 = vector.load %arg3[%c6_47, %c0_48, %c0_49] : memref<16x128x128xbf16, #tpu.memory_space<vmem>>, vector<1x128x128xbf16>
    %63 = vector.shape_cast %62 : vector<1x128x128xbf16> to vector<128x128xbf16>
    %cst_50 = arith.constant dense<0.000000e+00> : vector<24x128xf32>
    %64 = tpu.matmul %61, %63, %cst_50 {dimension_numbers = #tpu.dot_dimension_numbers<[1], [0], [0], [1], [0, 0, 1, 1], [], []>} : vector<24x128xbf16>, vector<128x128xbf16>, vector<24x128xf32> -> vector<24x128xf32>
    %65 = arith.addf %58, %64 : vector<24x128xf32>
    %c0_51 = arith.constant 0 : index
    %c8 = arith.constant 8 : index
    %c0_52 = arith.constant 0 : index
    %66 = vector.load %arg1[%c0_51, %c8, %c0_52] : memref<1x42x128xf32, #tpu.memory_space<vmem>>, vector<1x24x128xf32>
    %67 = vector.shape_cast %66 : vector<1x24x128xf32> to vector<24x128xf32>
    %68 = arith.truncf %67 : vector<24x128xf32> to vector<24x128xbf16>
    %c7_53 = arith.constant 7 : index
    %c0_54 = arith.constant 0 : index
    %c0_55 = arith.constant 0 : index
    %69 = vector.load %arg3[%c7_53, %c0_54, %c0_55] : memref<16x128x128xbf16, #tpu.memory_space<vmem>>, vector<1x128x128xbf16>
    %70 = vector.shape_cast %69 : vector<1x128x128xbf16> to vector<128x128xbf16>
    %cst_56 = arith.constant dense<0.000000e+00> : vector<24x128xf32>
    %71 = tpu.matmul %68, %70, %cst_56 {dimension_numbers = #tpu.dot_dimension_numbers<[1], [0], [0], [1], [0, 0, 1, 1], [], []>} : vector<24x128xbf16>, vector<128x128xbf16>, vector<24x128xf32> -> vector<24x128xf32>
    %72 = arith.addf %65, %71 : vector<24x128xf32>
    %c0_57 = arith.constant 0 : index
    %c0_58 = arith.constant 0 : index
    %c128 = arith.constant 128 : index
    %73 = vector.load %arg4[%c0_57, %c0_58, %c128] : memref<1x24x512xf32, #tpu.memory_space<vmem>>, vector<1x24x128xf32>
    %74 = vector.shape_cast %73 : vector<1x24x128xf32> to vector<24x128xf32>
    %75 = vector.shape_cast %72 : vector<24x128xf32> to vector<1x24x128xf32>
    tpu.vector_store %arg4[%c0_57, %c0_58, %c128], %75 {strides = array<i32>} : memref<1x24x512xf32, #tpu.memory_space<vmem>>, vector<1x24x128xf32>,
    %76 = vector.broadcast %0 : vector<24x1xf32> to vector<24x128xf32>
    %77 = arith.mulf %72, %76 : vector<24x128xf32>
    %cst_59 = arith.constant dense<0.000000e+00> : vector<128xf32>
    %78 = vector.multi_reduction <add>, %77, %cst_59 [0] : vector<24x128xf32> to vector<128xf32>
    %79 = vector.shape_cast %78 : vector<128xf32> to vector<1x128xf32>
    %80 = arith.addf %39, %79 : vector<1x128xf32>
    %81 = arith.mulf %77, %72 : vector<24x128xf32>
    %cst_60 = arith.constant dense<0.000000e+00> : vector<128xf32>
    %82 = vector.multi_reduction <add>, %81, %cst_60 [0] : vector<24x128xf32> to vector<128xf32>
    %83 = vector.shape_cast %82 : vector<128xf32> to vector<1x128xf32>
    %84 = arith.addf %43, %83 : vector<1x128xf32>
    %cst_61 = arith.constant 0.000000e+00 : f32
    %85 = vector.broadcast %cst_61 : f32 to vector<24x128xf32>
    %c0_62 = arith.constant 0 : index
    %c6_63 = arith.constant 6 : index
    %c0_64 = arith.constant 0 : index
    %86 = vector.load %arg1[%c0_62, %c6_63, %c0_64] : memref<1x42x128xf32, #tpu.memory_space<vmem>>, vector<1x24x128xf32>
    %87 = vector.shape_cast %86 : vector<1x24x128xf32> to vector<24x128xf32>
    %88 = arith.truncf %87 : vector<24x128xf32> to vector<24x128xbf16>
    %c8_65 = arith.constant 8 : index
    %c0_66 = arith.constant 0 : index
    %c0_67 = arith.constant 0 : index
    %89 = vector.load %arg3[%c8_65, %c0_66, %c0_67] : memref<16x128x128xbf16, #tpu.memory_space<vmem>>, vector<1x128x128xbf16>
    %90 = vector.shape_cast %89 : vector<1x128x128xbf16> to vector<128x128xbf16>
    %cst_68 = arith.constant dense<0.000000e+00> : vector<24x128xf32>
    %91 = tpu.matmul %88, %90, %cst_68 {dimension_numbers = #tpu.dot_dimension_numbers<[1], [0], [0], [1], [0, 0, 1, 1], [], []>} : vector<24x128xbf16>, vector<128x128xbf16>, vector<24x128xf32> -> vector<24x128xf32>
    %92 = arith.addf %85, %91 : vector<24x128xf32>
    %c0_69 = arith.constant 0 : index
    %c7_70 = arith.constant 7 : index
    %c0_71 = arith.constant 0 : index
    %93 = vector.load %arg1[%c0_69, %c7_70, %c0_71] : memref<1x42x128xf32, #tpu.memory_space<vmem>>, vector<1x24x128xf32>
    %94 = vector.shape_cast %93 : vector<1x24x128xf32> to vector<24x128xf32>
    %95 = arith.truncf %94 : vector<24x128xf32> to vector<24x128xbf16>
    %c9 = arith.constant 9 : index
    %c0_72 = arith.constant 0 : index
    %c0_73 = arith.constant 0 : index
    %96 = vector.load %arg3[%c9, %c0_72, %c0_73] : memref<16x128x128xbf16, #tpu.memory_space<vmem>>, vector<1x128x128xbf16>
    %97 = vector.shape_cast %96 : vector<1x128x128xbf16> to vector<128x128xbf16>
    %cst_74 = arith.constant dense<0.000000e+00> : vector<24x128xf32>
    %98 = tpu.matmul %95, %97, %cst_74 {dimension_numbers = #tpu.dot_dimension_numbers<[1], [0], [0], [1], [0, 0, 1, 1], [], []>} : vector<24x128xbf16>, vector<128x128xbf16>, vector<24x128xf32> -> vector<24x128xf32>
    %99 = arith.addf %92, %98 : vector<24x128xf32>
    %c0_75 = arith.constant 0 : index
    %c12 = arith.constant 12 : index
    %c0_76 = arith.constant 0 : index
    %100 = vector.load %arg1[%c0_75, %c12, %c0_76] : memref<1x42x128xf32, #tpu.memory_space<vmem>>, vector<1x24x128xf32>
    %101 = vector.shape_cast %100 : vector<1x24x128xf32> to vector<24x128xf32>
    %102 = arith.truncf %101 : vector<24x128xf32> to vector<24x128xbf16>
    %c10 = arith.constant 10 : index
    %c0_77 = arith.constant 0 : index
    %c0_78 = arith.constant 0 : index
    %103 = vector.load %arg3[%c10, %c0_77, %c0_78] : memref<16x128x128xbf16, #tpu.memory_space<vmem>>, vector<1x128x128xbf16>
    %104 = vector.shape_cast %103 : vector<1x128x128xbf16> to vector<128x128xbf16>
    %cst_79 = arith.constant dense<0.000000e+00> : vector<24x128xf32>
    %105 = tpu.matmul %102, %104, %cst_79 {dimension_numbers = #tpu.dot_dimension_numbers<[1], [0], [0], [1], [0, 0, 1, 1], [], []>} : vector<24x128xbf16>, vector<128x128xbf16>, vector<24x128xf32> -> vector<24x128xf32>
    %106 = arith.addf %99, %105 : vector<24x128xf32>
    %c0_80 = arith.constant 0 : index
    %c13 = arith.constant 13 : index
    %c0_81 = arith.constant 0 : index
    %107 = vector.load %arg1[%c0_80, %c13, %c0_81] : memref<1x42x128xf32, #tpu.memory_space<vmem>>, vector<1x24x128xf32>
    %108 = vector.shape_cast %107 : vector<1x24x128xf32> to vector<24x128xf32>
    %109 = arith.truncf %108 : vector<24x128xf32> to vector<24x128xbf16>
    %c11 = arith.constant 11 : index
    %c0_82 = arith.constant 0 : index
    %c0_83 = arith.constant 0 : index
    %110 = vector.load %arg3[%c11, %c0_82, %c0_83] : memref<16x128x128xbf16, #tpu.memory_space<vmem>>, vector<1x128x128xbf16>
    %111 = vector.shape_cast %110 : vector<1x128x128xbf16> to vector<128x128xbf16>
    %cst_84 = arith.constant dense<0.000000e+00> : vector<24x128xf32>
    %112 = tpu.matmul %109, %111, %cst_84 {dimension_numbers = #tpu.dot_dimension_numbers<[1], [0], [0], [1], [0, 0, 1, 1], [], []>} : vector<24x128xbf16>, vector<128x128xbf16>, vector<24x128xf32> -> vector<24x128xf32>
    %113 = arith.addf %106, %112 : vector<24x128xf32>
    %c0_85 = arith.constant 0 : index
    %c0_86 = arith.constant 0 : index
    %c256 = arith.constant 256 : index
    %114 = vector.load %arg4[%c0_85, %c0_86, %c256] : memref<1x24x512xf32, #tpu.memory_space<vmem>>, vector<1x24x128xf32>
    %115 = vector.shape_cast %114 : vector<1x24x128xf32> to vector<24x128xf32>
    %116 = vector.shape_cast %113 : vector<24x128xf32> to vector<1x24x128xf32>
    tpu.vector_store %arg4[%c0_85, %c0_86, %c256], %116 {strides = array<i32>} : memref<1x24x512xf32, #tpu.memory_space<vmem>>, vector<1x24x128xf32>,
    %117 = vector.broadcast %0 : vector<24x1xf32> to vector<24x128xf32>
    %118 = arith.mulf %113, %117 : vector<24x128xf32>
    %cst_87 = arith.constant dense<0.000000e+00> : vector<128xf32>
    %119 = vector.multi_reduction <add>, %118, %cst_87 [0] : vector<24x128xf32> to vector<128xf32>
    %120 = vector.shape_cast %119 : vector<128xf32> to vector<1x128xf32>
    %121 = arith.addf %80, %120 : vector<1x128xf32>
    %122 = arith.mulf %118, %113 : vector<24x128xf32>
    %cst_88 = arith.constant dense<0.000000e+00> : vector<128xf32>
    %123 = vector.multi_reduction <add>, %122, %cst_88 [0] : vector<24x128xf32> to vector<128xf32>
    %124 = vector.shape_cast %123 : vector<128xf32> to vector<1x128xf32>
    %125 = arith.addf %84, %124 : vector<1x128xf32>
    %cst_89 = arith.constant 0.000000e+00 : f32
    %126 = vector.broadcast %cst_89 : f32 to vector<24x128xf32>
    %c0_90 = arith.constant 0 : index
    %c7_91 = arith.constant 7 : index
    %c0_92 = arith.constant 0 : index
    %127 = vector.load %arg1[%c0_90, %c7_91, %c0_92] : memref<1x42x128xf32, #tpu.memory_space<vmem>>, vector<1x24x128xf32>
    %128 = vector.shape_cast %127 : vector<1x24x128xf32> to vector<24x128xf32>
    %129 = arith.truncf %128 : vector<24x128xf32> to vector<24x128xbf16>
    %c12_93 = arith.constant 12 : index
    %c0_94 = arith.constant 0 : index
    %c0_95 = arith.constant 0 : index
    %130 = vector.load %arg3[%c12_93, %c0_94, %c0_95] : memref<16x128x128xbf16, #tpu.memory_space<vmem>>, vector<1x128x128xbf16>
    %131 = vector.shape_cast %130 : vector<1x128x128xbf16> to vector<128x128xbf16>
    %cst_96 = arith.constant dense<0.000000e+00> : vector<24x128xf32>
    %132 = tpu.matmul %129, %131, %cst_96 {dimension_numbers = #tpu.dot_dimension_numbers<[1], [0], [0], [1], [0, 0, 1, 1], [], []>} : vector<24x128xbf16>, vector<128x128xbf16>, vector<24x128xf32> -> vector<24x128xf32>
    %133 = arith.addf %126, %132 : vector<24x128xf32>
    %c0_97 = arith.constant 0 : index
    %c8_98 = arith.constant 8 : index
    %c0_99 = arith.constant 0 : index
    %134 = vector.load %arg1[%c0_97, %c8_98, %c0_99] : memref<1x42x128xf32, #tpu.memory_space<vmem>>, vector<1x24x128xf32>
    %135 = vector.shape_cast %134 : vector<1x24x128xf32> to vector<24x128xf32>
    %136 = arith.truncf %135 : vector<24x128xf32> to vector<24x128xbf16>
    %c13_100 = arith.constant 13 : index
    %c0_101 = arith.constant 0 : index
    %c0_102 = arith.constant 0 : index
    %137 = vector.load %arg3[%c13_100, %c0_101, %c0_102] : memref<16x128x128xbf16, #tpu.memory_space<vmem>>, vector<1x128x128xbf16>
    %138 = vector.shape_cast %137 : vector<1x128x128xbf16> to vector<128x128xbf16>
    %cst_103 = arith.constant dense<0.000000e+00> : vector<24x128xf32>
    %139 = tpu.matmul %136, %138, %cst_103 {dimension_numbers = #tpu.dot_dimension_numbers<[1], [0], [0], [1], [0, 0, 1, 1], [], []>} : vector<24x128xbf16>, vector<128x128xbf16>, vector<24x128xf32> -> vector<24x128xf32>
    %140 = arith.addf %133, %139 : vector<24x128xf32>
    %c0_104 = arith.constant 0 : index
    %c13_105 = arith.constant 13 : index
    %c0_106 = arith.constant 0 : index
    %141 = vector.load %arg1[%c0_104, %c13_105, %c0_106] : memref<1x42x128xf32, #tpu.memory_space<vmem>>, vector<1x24x128xf32>
    %142 = vector.shape_cast %141 : vector<1x24x128xf32> to vector<24x128xf32>
    %143 = arith.truncf %142 : vector<24x128xf32> to vector<24x128xbf16>
    %c14 = arith.constant 14 : index
    %c0_107 = arith.constant 0 : index
    %c0_108 = arith.constant 0 : index
    %144 = vector.load %arg3[%c14, %c0_107, %c0_108] : memref<16x128x128xbf16, #tpu.memory_space<vmem>>, vector<1x128x128xbf16>
    %145 = vector.shape_cast %144 : vector<1x128x128xbf16> to vector<128x128xbf16>
    %cst_109 = arith.constant dense<0.000000e+00> : vector<24x128xf32>
    %146 = tpu.matmul %143, %145, %cst_109 {dimension_numbers = #tpu.dot_dimension_numbers<[1], [0], [0], [1], [0, 0, 1, 1], [], []>} : vector<24x128xbf16>, vector<128x128xbf16>, vector<24x128xf32> -> vector<24x128xf32>
    %147 = arith.addf %140, %146 : vector<24x128xf32>
    %c0_110 = arith.constant 0 : index
    %c14_111 = arith.constant 14 : index
    %c0_112 = arith.constant 0 : index
    %148 = vector.load %arg1[%c0_110, %c14_111, %c0_112] : memref<1x42x128xf32, #tpu.memory_space<vmem>>, vector<1x24x128xf32>
    %149 = vector.shape_cast %148 : vector<1x24x128xf32> to vector<24x128xf32>
    %150 = arith.truncf %149 : vector<24x128xf32> to vector<24x128xbf16>
    %c15 = arith.constant 15 : index
    %c0_113 = arith.constant 0 : index
    %c0_114 = arith.constant 0 : index
    %151 = vector.load %arg3[%c15, %c0_113, %c0_114] : memref<16x128x128xbf16, #tpu.memory_space<vmem>>, vector<1x128x128xbf16>
    %152 = vector.shape_cast %151 : vector<1x128x128xbf16> to vector<128x128xbf16>
    %cst_115 = arith.constant dense<0.000000e+00> : vector<24x128xf32>
    %153 = tpu.matmul %150, %152, %cst_115 {dimension_numbers = #tpu.dot_dimension_numbers<[1], [0], [0], [1], [0, 0, 1, 1], [], []>} : vector<24x128xbf16>, vector<128x128xbf16>, vector<24x128xf32> -> vector<24x128xf32>
    %154 = arith.addf %147, %153 : vector<24x128xf32>
    %c0_116 = arith.constant 0 : index
    %c0_117 = arith.constant 0 : index
    %c384 = arith.constant 384 : index
    %155 = vector.load %arg4[%c0_116, %c0_117, %c384] : memref<1x24x512xf32, #tpu.memory_space<vmem>>, vector<1x24x128xf32>
    %156 = vector.shape_cast %155 : vector<1x24x128xf32> to vector<24x128xf32>
    %157 = vector.shape_cast %154 : vector<24x128xf32> to vector<1x24x128xf32>
    tpu.vector_store %arg4[%c0_116, %c0_117, %c384], %157 {strides = array<i32>} : memref<1x24x512xf32, #tpu.memory_space<vmem>>, vector<1x24x128xf32>,
    %158 = vector.broadcast %0 : vector<24x1xf32> to vector<24x128xf32>
    %159 = arith.mulf %154, %158 : vector<24x128xf32>
    %cst_118 = arith.constant dense<0.000000e+00> : vector<128xf32>
    %160 = vector.multi_reduction <add>, %159, %cst_118 [0] : vector<24x128xf32> to vector<128xf32>
    %161 = vector.shape_cast %160 : vector<128xf32> to vector<1x128xf32>
    %162 = arith.addf %121, %161 : vector<1x128xf32>
    %163 = arith.mulf %159, %154 : vector<24x128xf32>
    %cst_119 = arith.constant dense<0.000000e+00> : vector<128xf32>
    %164 = vector.multi_reduction <add>, %163, %cst_119 [0] : vector<24x128xf32> to vector<128xf32>
    %165 = vector.shape_cast %164 : vector<128xf32> to vector<1x128xf32>
    %166 = arith.addf %125, %165 : vector<1x128xf32>
    %c0_120 = arith.constant 0 : index
    %c0_121 = arith.constant 0 : index
    %c0_122 = arith.constant 0 : index
    %167 = vector.load %arg5[%c0_120, %c0_121, %c0_122] : memref<1x2x128xf32, #tpu.memory_space<vmem>>, vector<1x1x128xf32>
    %168 = vector.shape_cast %167 : vector<1x1x128xf32> to vector<1x128xf32>
    %169 = vector.shape_cast %162 : vector<1x128xf32> to vector<1x1x128xf32>
    tpu.vector_store %arg5[%c0_120, %c0_121, %c0_122], %169 {strides = array<i32>} : memref<1x2x128xf32, #tpu.memory_space<vmem>>, vector<1x1x128xf32>,
    %c0_123 = arith.constant 0 : index
    %c1_124 = arith.constant 1 : index
    %c0_125 = arith.constant 0 : index
    %170 = vector.load %arg5[%c0_123, %c1_124, %c0_125] : memref<1x2x128xf32, #tpu.memory_space<vmem>>, vector<1x1x128xf32>
    %171 = vector.shape_cast %170 : vector<1x1x128xf32> to vector<1x128xf32>
    %172 = vector.shape_cast %166 : vector<1x128xf32> to vector<1x1x128xf32>
    tpu.vector_store %arg5[%c0_123, %c1_124, %c0_125], %172 {strides = array<i32>} : memref<1x2x128xf32, #tpu.memory_space<vmem>>, vector<1x1x128xf32>,
    return
  }
  func.func @transform_0(%arg0: i32) -> (i32, i32, i32) {
    %c0_i32 = arith.constant 0 : i32
    %c0_i32_0 = arith.constant 0 : i32
    %c0_i32_1 = arith.constant 0 : i32
    return %arg0, %c0_i32, %c0_i32_0 : i32, i32, i32
  }
  func.func @transform_1(%arg0: i32) -> (i32, i32) {
    %c0_i32 = arith.constant 0 : i32
    %c0_i32_0 = arith.constant 0 : i32
    %c0_i32_1 = arith.constant 0 : i32
    return %c0_i32, %c0_i32_0 : i32, i32
  }
  func.func @transform_2(%arg0: i32) -> (i32, i32, i32) {
    %c0_i32 = arith.constant 0 : i32
    %c0_i32_0 = arith.constant 0 : i32
    %c0_i32_1 = arith.constant 0 : i32
    %c0_i32_2 = arith.constant 0 : i32
    return %c0_i32, %c0_i32_0, %c0_i32_1 : i32, i32, i32
  }
  func.func @transform_3(%arg0: i32) -> (i32, i32, i32) {
    %c0_i32 = arith.constant 0 : i32
    %c0_i32_0 = arith.constant 0 : i32
    %c0_i32_1 = arith.constant 0 : i32
    return %arg0, %c0_i32, %c0_i32_0 : i32, i32, i32
  }
  func.func @transform_4(%arg0: i32) -> (i32, i32, i32) {
    %c0_i32 = arith.constant 0 : i32
    %c0_i32_0 = arith.constant 0 : i32
    %c0_i32_1 = arith.constant 0 : i32
    return %arg0, %c0_i32, %c0_i32_0 : i32, i32, i32
  }
}

module attributes {stable_mosaic.version = 11 : i64} {
  func.func @upconv_kernel(%arg0: i32, %arg1: memref<1x110x128xf32, #tpu.memory_space<vmem>>, %arg2: memref<80x1xf32, #tpu.memory_space<vmem>>, %arg3: memref<16x128x128xbf16, #tpu.memory_space<vmem>>, %arg4: memref<1x80x512xf32, #tpu.memory_space<vmem>>, %arg5: memref<1x2x128xf32, #tpu.memory_space<vmem>>) attributes {dimension_semantics = [#tpu.dimension_semantics<parallel>], iteration_bounds = array<i64: 2>, scalar_prefetch = 0 : i64, scratch_operands = 0 : i64, tpu.core_type = #tpu.core_type<tc>, window_params = [{transform_indices = @transform_0, window_bounds = array<i64: 1, 110, 128>}, {pipeline_mode = #tpu.pipeline_mode<synchronous>, transform_indices = @transform_1, window_bounds = array<i64: 80, 1>}, {pipeline_mode = #tpu.pipeline_mode<synchronous>, transform_indices = @transform_2, window_bounds = array<i64: 16, 128, 128>}, {transform_indices = @transform_3, window_bounds = array<i64: 1, 80, 512>}, {transform_indices = @transform_4, window_bounds = array<i64: 1, 2, 128>}]} {
    %c0 = arith.constant 0 : index
    %c0_0 = arith.constant 0 : index
    %0 = vector.load %arg2[%c0, %c0_0] : memref<80x1xf32, #tpu.memory_space<vmem>>, vector<80x1xf32>
    %cst = arith.constant 0.000000e+00 : f32
    %1 = vector.broadcast %cst : f32 to vector<1x128xf32>
    %cst_1 = arith.constant 0.000000e+00 : f32
    %2 = vector.broadcast %cst_1 : f32 to vector<1x128xf32>
    %cst_2 = arith.constant 0.000000e+00 : f32
    %3 = vector.broadcast %cst_2 : f32 to vector<80x128xf32>
    %c0_3 = arith.constant 0 : index
    %c0_4 = arith.constant 0 : index
    %c0_5 = arith.constant 0 : index
    %4 = vector.load %arg1[%c0_3, %c0_4, %c0_5] : memref<1x110x128xf32, #tpu.memory_space<vmem>>, vector<1x80x128xf32>
    %5 = vector.shape_cast %4 : vector<1x80x128xf32> to vector<80x128xf32>
    %6 = arith.truncf %5 : vector<80x128xf32> to vector<80x128xbf16>
    %c0_6 = arith.constant 0 : index
    %c0_7 = arith.constant 0 : index
    %c0_8 = arith.constant 0 : index
    %7 = vector.load %arg3[%c0_6, %c0_7, %c0_8] : memref<16x128x128xbf16, #tpu.memory_space<vmem>>, vector<1x128x128xbf16>
    %8 = vector.shape_cast %7 : vector<1x128x128xbf16> to vector<128x128xbf16>
    %cst_9 = arith.constant dense<0.000000e+00> : vector<80x128xf32>
    %9 = tpu.matmul %6, %8, %cst_9 {dimension_numbers = #tpu.dot_dimension_numbers<[1], [0], [0], [1], [0, 0, 1, 1], [], []>} : vector<80x128xbf16>, vector<128x128xbf16>, vector<80x128xf32> -> vector<80x128xf32>
    %10 = arith.addf %3, %9 : vector<80x128xf32>
    %c0_10 = arith.constant 0 : index
    %c1 = arith.constant 1 : index
    %c0_11 = arith.constant 0 : index
    %11 = vector.load %arg1[%c0_10, %c1, %c0_11] : memref<1x110x128xf32, #tpu.memory_space<vmem>>, vector<1x80x128xf32>
    %12 = vector.shape_cast %11 : vector<1x80x128xf32> to vector<80x128xf32>
    %13 = arith.truncf %12 : vector<80x128xf32> to vector<80x128xbf16>
    %c1_12 = arith.constant 1 : index
    %c0_13 = arith.constant 0 : index
    %c0_14 = arith.constant 0 : index
    %14 = vector.load %arg3[%c1_12, %c0_13, %c0_14] : memref<16x128x128xbf16, #tpu.memory_space<vmem>>, vector<1x128x128xbf16>
    %15 = vector.shape_cast %14 : vector<1x128x128xbf16> to vector<128x128xbf16>
    %cst_15 = arith.constant dense<0.000000e+00> : vector<80x128xf32>
    %16 = tpu.matmul %13, %15, %cst_15 {dimension_numbers = #tpu.dot_dimension_numbers<[1], [0], [0], [1], [0, 0, 1, 1], [], []>} : vector<80x128xbf16>, vector<128x128xbf16>, vector<80x128xf32> -> vector<80x128xf32>
    %17 = arith.addf %10, %16 : vector<80x128xf32>
    %c0_16 = arith.constant 0 : index
    %c10 = arith.constant 10 : index
    %c0_17 = arith.constant 0 : index
    %18 = vector.load %arg1[%c0_16, %c10, %c0_17] : memref<1x110x128xf32, #tpu.memory_space<vmem>>, vector<1x80x128xf32>
    %19 = vector.shape_cast %18 : vector<1x80x128xf32> to vector<80x128xf32>
    %20 = arith.truncf %19 : vector<80x128xf32> to vector<80x128xbf16>
    %c2 = arith.constant 2 : index
    %c0_18 = arith.constant 0 : index
    %c0_19 = arith.constant 0 : index
    %21 = vector.load %arg3[%c2, %c0_18, %c0_19] : memref<16x128x128xbf16, #tpu.memory_space<vmem>>, vector<1x128x128xbf16>
    %22 = vector.shape_cast %21 : vector<1x128x128xbf16> to vector<128x128xbf16>
    %cst_20 = arith.constant dense<0.000000e+00> : vector<80x128xf32>
    %23 = tpu.matmul %20, %22, %cst_20 {dimension_numbers = #tpu.dot_dimension_numbers<[1], [0], [0], [1], [0, 0, 1, 1], [], []>} : vector<80x128xbf16>, vector<128x128xbf16>, vector<80x128xf32> -> vector<80x128xf32>
    %24 = arith.addf %17, %23 : vector<80x128xf32>
    %c0_21 = arith.constant 0 : index
    %c11 = arith.constant 11 : index
    %c0_22 = arith.constant 0 : index
    %25 = vector.load %arg1[%c0_21, %c11, %c0_22] : memref<1x110x128xf32, #tpu.memory_space<vmem>>, vector<1x80x128xf32>
    %26 = vector.shape_cast %25 : vector<1x80x128xf32> to vector<80x128xf32>
    %27 = arith.truncf %26 : vector<80x128xf32> to vector<80x128xbf16>
    %c3 = arith.constant 3 : index
    %c0_23 = arith.constant 0 : index
    %c0_24 = arith.constant 0 : index
    %28 = vector.load %arg3[%c3, %c0_23, %c0_24] : memref<16x128x128xbf16, #tpu.memory_space<vmem>>, vector<1x128x128xbf16>
    %29 = vector.shape_cast %28 : vector<1x128x128xbf16> to vector<128x128xbf16>
    %cst_25 = arith.constant dense<0.000000e+00> : vector<80x128xf32>
    %30 = tpu.matmul %27, %29, %cst_25 {dimension_numbers = #tpu.dot_dimension_numbers<[1], [0], [0], [1], [0, 0, 1, 1], [], []>} : vector<80x128xbf16>, vector<128x128xbf16>, vector<80x128xf32> -> vector<80x128xf32>
    %31 = arith.addf %24, %30 : vector<80x128xf32>
    %c0_26 = arith.constant 0 : index
    %c0_27 = arith.constant 0 : index
    %c0_28 = arith.constant 0 : index
    %32 = vector.load %arg4[%c0_26, %c0_27, %c0_28] : memref<1x80x512xf32, #tpu.memory_space<vmem>>, vector<1x80x128xf32>
    %33 = vector.shape_cast %32 : vector<1x80x128xf32> to vector<80x128xf32>
    %34 = vector.shape_cast %31 : vector<80x128xf32> to vector<1x80x128xf32>
    tpu.vector_store %arg4[%c0_26, %c0_27, %c0_28], %34 {strides = array<i32>} : memref<1x80x512xf32, #tpu.memory_space<vmem>>, vector<1x80x128xf32>,
    %35 = vector.broadcast %0 : vector<80x1xf32> to vector<80x128xf32>
    %36 = arith.mulf %31, %35 : vector<80x128xf32>
    %cst_29 = arith.constant dense<0.000000e+00> : vector<128xf32>
    %37 = vector.multi_reduction <add>, %36, %cst_29 [0] : vector<80x128xf32> to vector<128xf32>
    %38 = vector.shape_cast %37 : vector<128xf32> to vector<1x128xf32>
    %39 = arith.addf %1, %38 : vector<1x128xf32>
    %40 = arith.mulf %36, %31 : vector<80x128xf32>
    %cst_30 = arith.constant dense<0.000000e+00> : vector<128xf32>
    %41 = vector.multi_reduction <add>, %40, %cst_30 [0] : vector<80x128xf32> to vector<128xf32>
    %42 = vector.shape_cast %41 : vector<128xf32> to vector<1x128xf32>
    %43 = arith.addf %2, %42 : vector<1x128xf32>
    %cst_31 = arith.constant 0.000000e+00 : f32
    %44 = vector.broadcast %cst_31 : f32 to vector<80x128xf32>
    %c0_32 = arith.constant 0 : index
    %c1_33 = arith.constant 1 : index
    %c0_34 = arith.constant 0 : index
    %45 = vector.load %arg1[%c0_32, %c1_33, %c0_34] : memref<1x110x128xf32, #tpu.memory_space<vmem>>, vector<1x80x128xf32>
    %46 = vector.shape_cast %45 : vector<1x80x128xf32> to vector<80x128xf32>
    %47 = arith.truncf %46 : vector<80x128xf32> to vector<80x128xbf16>
    %c4 = arith.constant 4 : index
    %c0_35 = arith.constant 0 : index
    %c0_36 = arith.constant 0 : index
    %48 = vector.load %arg3[%c4, %c0_35, %c0_36] : memref<16x128x128xbf16, #tpu.memory_space<vmem>>, vector<1x128x128xbf16>
    %49 = vector.shape_cast %48 : vector<1x128x128xbf16> to vector<128x128xbf16>
    %cst_37 = arith.constant dense<0.000000e+00> : vector<80x128xf32>
    %50 = tpu.matmul %47, %49, %cst_37 {dimension_numbers = #tpu.dot_dimension_numbers<[1], [0], [0], [1], [0, 0, 1, 1], [], []>} : vector<80x128xbf16>, vector<128x128xbf16>, vector<80x128xf32> -> vector<80x128xf32>
    %51 = arith.addf %44, %50 : vector<80x128xf32>
    %c0_38 = arith.constant 0 : index
    %c2_39 = arith.constant 2 : index
    %c0_40 = arith.constant 0 : index
    %52 = vector.load %arg1[%c0_38, %c2_39, %c0_40] : memref<1x110x128xf32, #tpu.memory_space<vmem>>, vector<1x80x128xf32>
    %53 = vector.shape_cast %52 : vector<1x80x128xf32> to vector<80x128xf32>
    %54 = arith.truncf %53 : vector<80x128xf32> to vector<80x128xbf16>
    %c5 = arith.constant 5 : index
    %c0_41 = arith.constant 0 : index
    %c0_42 = arith.constant 0 : index
    %55 = vector.load %arg3[%c5, %c0_41, %c0_42] : memref<16x128x128xbf16, #tpu.memory_space<vmem>>, vector<1x128x128xbf16>
    %56 = vector.shape_cast %55 : vector<1x128x128xbf16> to vector<128x128xbf16>
    %cst_43 = arith.constant dense<0.000000e+00> : vector<80x128xf32>
    %57 = tpu.matmul %54, %56, %cst_43 {dimension_numbers = #tpu.dot_dimension_numbers<[1], [0], [0], [1], [0, 0, 1, 1], [], []>} : vector<80x128xbf16>, vector<128x128xbf16>, vector<80x128xf32> -> vector<80x128xf32>
    %58 = arith.addf %51, %57 : vector<80x128xf32>
    %c0_44 = arith.constant 0 : index
    %c11_45 = arith.constant 11 : index
    %c0_46 = arith.constant 0 : index
    %59 = vector.load %arg1[%c0_44, %c11_45, %c0_46] : memref<1x110x128xf32, #tpu.memory_space<vmem>>, vector<1x80x128xf32>
    %60 = vector.shape_cast %59 : vector<1x80x128xf32> to vector<80x128xf32>
    %61 = arith.truncf %60 : vector<80x128xf32> to vector<80x128xbf16>
    %c6 = arith.constant 6 : index
    %c0_47 = arith.constant 0 : index
    %c0_48 = arith.constant 0 : index
    %62 = vector.load %arg3[%c6, %c0_47, %c0_48] : memref<16x128x128xbf16, #tpu.memory_space<vmem>>, vector<1x128x128xbf16>
    %63 = vector.shape_cast %62 : vector<1x128x128xbf16> to vector<128x128xbf16>
    %cst_49 = arith.constant dense<0.000000e+00> : vector<80x128xf32>
    %64 = tpu.matmul %61, %63, %cst_49 {dimension_numbers = #tpu.dot_dimension_numbers<[1], [0], [0], [1], [0, 0, 1, 1], [], []>} : vector<80x128xbf16>, vector<128x128xbf16>, vector<80x128xf32> -> vector<80x128xf32>
    %65 = arith.addf %58, %64 : vector<80x128xf32>
    %c0_50 = arith.constant 0 : index
    %c12 = arith.constant 12 : index
    %c0_51 = arith.constant 0 : index
    %66 = vector.load %arg1[%c0_50, %c12, %c0_51] : memref<1x110x128xf32, #tpu.memory_space<vmem>>, vector<1x80x128xf32>
    %67 = vector.shape_cast %66 : vector<1x80x128xf32> to vector<80x128xf32>
    %68 = arith.truncf %67 : vector<80x128xf32> to vector<80x128xbf16>
    %c7 = arith.constant 7 : index
    %c0_52 = arith.constant 0 : index
    %c0_53 = arith.constant 0 : index
    %69 = vector.load %arg3[%c7, %c0_52, %c0_53] : memref<16x128x128xbf16, #tpu.memory_space<vmem>>, vector<1x128x128xbf16>
    %70 = vector.shape_cast %69 : vector<1x128x128xbf16> to vector<128x128xbf16>
    %cst_54 = arith.constant dense<0.000000e+00> : vector<80x128xf32>
    %71 = tpu.matmul %68, %70, %cst_54 {dimension_numbers = #tpu.dot_dimension_numbers<[1], [0], [0], [1], [0, 0, 1, 1], [], []>} : vector<80x128xbf16>, vector<128x128xbf16>, vector<80x128xf32> -> vector<80x128xf32>
    %72 = arith.addf %65, %71 : vector<80x128xf32>
    %c0_55 = arith.constant 0 : index
    %c0_56 = arith.constant 0 : index
    %c128 = arith.constant 128 : index
    %73 = vector.load %arg4[%c0_55, %c0_56, %c128] : memref<1x80x512xf32, #tpu.memory_space<vmem>>, vector<1x80x128xf32>
    %74 = vector.shape_cast %73 : vector<1x80x128xf32> to vector<80x128xf32>
    %75 = vector.shape_cast %72 : vector<80x128xf32> to vector<1x80x128xf32>
    tpu.vector_store %arg4[%c0_55, %c0_56, %c128], %75 {strides = array<i32>} : memref<1x80x512xf32, #tpu.memory_space<vmem>>, vector<1x80x128xf32>,
    %76 = vector.broadcast %0 : vector<80x1xf32> to vector<80x128xf32>
    %77 = arith.mulf %72, %76 : vector<80x128xf32>
    %cst_57 = arith.constant dense<0.000000e+00> : vector<128xf32>
    %78 = vector.multi_reduction <add>, %77, %cst_57 [0] : vector<80x128xf32> to vector<128xf32>
    %79 = vector.shape_cast %78 : vector<128xf32> to vector<1x128xf32>
    %80 = arith.addf %39, %79 : vector<1x128xf32>
    %81 = arith.mulf %77, %72 : vector<80x128xf32>
    %cst_58 = arith.constant dense<0.000000e+00> : vector<128xf32>
    %82 = vector.multi_reduction <add>, %81, %cst_58 [0] : vector<80x128xf32> to vector<128xf32>
    %83 = vector.shape_cast %82 : vector<128xf32> to vector<1x128xf32>
    %84 = arith.addf %43, %83 : vector<1x128xf32>
    %cst_59 = arith.constant 0.000000e+00 : f32
    %85 = vector.broadcast %cst_59 : f32 to vector<80x128xf32>
    %c0_60 = arith.constant 0 : index
    %c10_61 = arith.constant 10 : index
    %c0_62 = arith.constant 0 : index
    %86 = vector.load %arg1[%c0_60, %c10_61, %c0_62] : memref<1x110x128xf32, #tpu.memory_space<vmem>>, vector<1x80x128xf32>
    %87 = vector.shape_cast %86 : vector<1x80x128xf32> to vector<80x128xf32>
    %88 = arith.truncf %87 : vector<80x128xf32> to vector<80x128xbf16>
    %c8 = arith.constant 8 : index
    %c0_63 = arith.constant 0 : index
    %c0_64 = arith.constant 0 : index
    %89 = vector.load %arg3[%c8, %c0_63, %c0_64] : memref<16x128x128xbf16, #tpu.memory_space<vmem>>, vector<1x128x128xbf16>
    %90 = vector.shape_cast %89 : vector<1x128x128xbf16> to vector<128x128xbf16>
    %cst_65 = arith.constant dense<0.000000e+00> : vector<80x128xf32>
    %91 = tpu.matmul %88, %90, %cst_65 {dimension_numbers = #tpu.dot_dimension_numbers<[1], [0], [0], [1], [0, 0, 1, 1], [], []>} : vector<80x128xbf16>, vector<128x128xbf16>, vector<80x128xf32> -> vector<80x128xf32>
    %92 = arith.addf %85, %91 : vector<80x128xf32>
    %c0_66 = arith.constant 0 : index
    %c11_67 = arith.constant 11 : index
    %c0_68 = arith.constant 0 : index
    %93 = vector.load %arg1[%c0_66, %c11_67, %c0_68] : memref<1x110x128xf32, #tpu.memory_space<vmem>>, vector<1x80x128xf32>
    %94 = vector.shape_cast %93 : vector<1x80x128xf32> to vector<80x128xf32>
    %95 = arith.truncf %94 : vector<80x128xf32> to vector<80x128xbf16>
    %c9 = arith.constant 9 : index
    %c0_69 = arith.constant 0 : index
    %c0_70 = arith.constant 0 : index
    %96 = vector.load %arg3[%c9, %c0_69, %c0_70] : memref<16x128x128xbf16, #tpu.memory_space<vmem>>, vector<1x128x128xbf16>
    %97 = vector.shape_cast %96 : vector<1x128x128xbf16> to vector<128x128xbf16>
    %cst_71 = arith.constant dense<0.000000e+00> : vector<80x128xf32>
    %98 = tpu.matmul %95, %97, %cst_71 {dimension_numbers = #tpu.dot_dimension_numbers<[1], [0], [0], [1], [0, 0, 1, 1], [], []>} : vector<80x128xbf16>, vector<128x128xbf16>, vector<80x128xf32> -> vector<80x128xf32>
    %99 = arith.addf %92, %98 : vector<80x128xf32>
    %c0_72 = arith.constant 0 : index
    %c20 = arith.constant 20 : index
    %c0_73 = arith.constant 0 : index
    %100 = vector.load %arg1[%c0_72, %c20, %c0_73] : memref<1x110x128xf32, #tpu.memory_space<vmem>>, vector<1x80x128xf32>
    %101 = vector.shape_cast %100 : vector<1x80x128xf32> to vector<80x128xf32>
    %102 = arith.truncf %101 : vector<80x128xf32> to vector<80x128xbf16>
    %c10_74 = arith.constant 10 : index
    %c0_75 = arith.constant 0 : index
    %c0_76 = arith.constant 0 : index
    %103 = vector.load %arg3[%c10_74, %c0_75, %c0_76] : memref<16x128x128xbf16, #tpu.memory_space<vmem>>, vector<1x128x128xbf16>
    %104 = vector.shape_cast %103 : vector<1x128x128xbf16> to vector<128x128xbf16>
    %cst_77 = arith.constant dense<0.000000e+00> : vector<80x128xf32>
    %105 = tpu.matmul %102, %104, %cst_77 {dimension_numbers = #tpu.dot_dimension_numbers<[1], [0], [0], [1], [0, 0, 1, 1], [], []>} : vector<80x128xbf16>, vector<128x128xbf16>, vector<80x128xf32> -> vector<80x128xf32>
    %106 = arith.addf %99, %105 : vector<80x128xf32>
    %c0_78 = arith.constant 0 : index
    %c21 = arith.constant 21 : index
    %c0_79 = arith.constant 0 : index
    %107 = vector.load %arg1[%c0_78, %c21, %c0_79] : memref<1x110x128xf32, #tpu.memory_space<vmem>>, vector<1x80x128xf32>
    %108 = vector.shape_cast %107 : vector<1x80x128xf32> to vector<80x128xf32>
    %109 = arith.truncf %108 : vector<80x128xf32> to vector<80x128xbf16>
    %c11_80 = arith.constant 11 : index
    %c0_81 = arith.constant 0 : index
    %c0_82 = arith.constant 0 : index
    %110 = vector.load %arg3[%c11_80, %c0_81, %c0_82] : memref<16x128x128xbf16, #tpu.memory_space<vmem>>, vector<1x128x128xbf16>
    %111 = vector.shape_cast %110 : vector<1x128x128xbf16> to vector<128x128xbf16>
    %cst_83 = arith.constant dense<0.000000e+00> : vector<80x128xf32>
    %112 = tpu.matmul %109, %111, %cst_83 {dimension_numbers = #tpu.dot_dimension_numbers<[1], [0], [0], [1], [0, 0, 1, 1], [], []>} : vector<80x128xbf16>, vector<128x128xbf16>, vector<80x128xf32> -> vector<80x128xf32>
    %113 = arith.addf %106, %112 : vector<80x128xf32>
    %c0_84 = arith.constant 0 : index
    %c0_85 = arith.constant 0 : index
    %c256 = arith.constant 256 : index
    %114 = vector.load %arg4[%c0_84, %c0_85, %c256] : memref<1x80x512xf32, #tpu.memory_space<vmem>>, vector<1x80x128xf32>
    %115 = vector.shape_cast %114 : vector<1x80x128xf32> to vector<80x128xf32>
    %116 = vector.shape_cast %113 : vector<80x128xf32> to vector<1x80x128xf32>
    tpu.vector_store %arg4[%c0_84, %c0_85, %c256], %116 {strides = array<i32>} : memref<1x80x512xf32, #tpu.memory_space<vmem>>, vector<1x80x128xf32>,
    %117 = vector.broadcast %0 : vector<80x1xf32> to vector<80x128xf32>
    %118 = arith.mulf %113, %117 : vector<80x128xf32>
    %cst_86 = arith.constant dense<0.000000e+00> : vector<128xf32>
    %119 = vector.multi_reduction <add>, %118, %cst_86 [0] : vector<80x128xf32> to vector<128xf32>
    %120 = vector.shape_cast %119 : vector<128xf32> to vector<1x128xf32>
    %121 = arith.addf %80, %120 : vector<1x128xf32>
    %122 = arith.mulf %118, %113 : vector<80x128xf32>
    %cst_87 = arith.constant dense<0.000000e+00> : vector<128xf32>
    %123 = vector.multi_reduction <add>, %122, %cst_87 [0] : vector<80x128xf32> to vector<128xf32>
    %124 = vector.shape_cast %123 : vector<128xf32> to vector<1x128xf32>
    %125 = arith.addf %84, %124 : vector<1x128xf32>
    %cst_88 = arith.constant 0.000000e+00 : f32
    %126 = vector.broadcast %cst_88 : f32 to vector<80x128xf32>
    %c0_89 = arith.constant 0 : index
    %c11_90 = arith.constant 11 : index
    %c0_91 = arith.constant 0 : index
    %127 = vector.load %arg1[%c0_89, %c11_90, %c0_91] : memref<1x110x128xf32, #tpu.memory_space<vmem>>, vector<1x80x128xf32>
    %128 = vector.shape_cast %127 : vector<1x80x128xf32> to vector<80x128xf32>
    %129 = arith.truncf %128 : vector<80x128xf32> to vector<80x128xbf16>
    %c12_92 = arith.constant 12 : index
    %c0_93 = arith.constant 0 : index
    %c0_94 = arith.constant 0 : index
    %130 = vector.load %arg3[%c12_92, %c0_93, %c0_94] : memref<16x128x128xbf16, #tpu.memory_space<vmem>>, vector<1x128x128xbf16>
    %131 = vector.shape_cast %130 : vector<1x128x128xbf16> to vector<128x128xbf16>
    %cst_95 = arith.constant dense<0.000000e+00> : vector<80x128xf32>
    %132 = tpu.matmul %129, %131, %cst_95 {dimension_numbers = #tpu.dot_dimension_numbers<[1], [0], [0], [1], [0, 0, 1, 1], [], []>} : vector<80x128xbf16>, vector<128x128xbf16>, vector<80x128xf32> -> vector<80x128xf32>
    %133 = arith.addf %126, %132 : vector<80x128xf32>
    %c0_96 = arith.constant 0 : index
    %c12_97 = arith.constant 12 : index
    %c0_98 = arith.constant 0 : index
    %134 = vector.load %arg1[%c0_96, %c12_97, %c0_98] : memref<1x110x128xf32, #tpu.memory_space<vmem>>, vector<1x80x128xf32>
    %135 = vector.shape_cast %134 : vector<1x80x128xf32> to vector<80x128xf32>
    %136 = arith.truncf %135 : vector<80x128xf32> to vector<80x128xbf16>
    %c13 = arith.constant 13 : index
    %c0_99 = arith.constant 0 : index
    %c0_100 = arith.constant 0 : index
    %137 = vector.load %arg3[%c13, %c0_99, %c0_100] : memref<16x128x128xbf16, #tpu.memory_space<vmem>>, vector<1x128x128xbf16>
    %138 = vector.shape_cast %137 : vector<1x128x128xbf16> to vector<128x128xbf16>
    %cst_101 = arith.constant dense<0.000000e+00> : vector<80x128xf32>
    %139 = tpu.matmul %136, %138, %cst_101 {dimension_numbers = #tpu.dot_dimension_numbers<[1], [0], [0], [1], [0, 0, 1, 1], [], []>} : vector<80x128xbf16>, vector<128x128xbf16>, vector<80x128xf32> -> vector<80x128xf32>
    %140 = arith.addf %133, %139 : vector<80x128xf32>
    %c0_102 = arith.constant 0 : index
    %c21_103 = arith.constant 21 : index
    %c0_104 = arith.constant 0 : index
    %141 = vector.load %arg1[%c0_102, %c21_103, %c0_104] : memref<1x110x128xf32, #tpu.memory_space<vmem>>, vector<1x80x128xf32>
    %142 = vector.shape_cast %141 : vector<1x80x128xf32> to vector<80x128xf32>
    %143 = arith.truncf %142 : vector<80x128xf32> to vector<80x128xbf16>
    %c14 = arith.constant 14 : index
    %c0_105 = arith.constant 0 : index
    %c0_106 = arith.constant 0 : index
    %144 = vector.load %arg3[%c14, %c0_105, %c0_106] : memref<16x128x128xbf16, #tpu.memory_space<vmem>>, vector<1x128x128xbf16>
    %145 = vector.shape_cast %144 : vector<1x128x128xbf16> to vector<128x128xbf16>
    %cst_107 = arith.constant dense<0.000000e+00> : vector<80x128xf32>
    %146 = tpu.matmul %143, %145, %cst_107 {dimension_numbers = #tpu.dot_dimension_numbers<[1], [0], [0], [1], [0, 0, 1, 1], [], []>} : vector<80x128xbf16>, vector<128x128xbf16>, vector<80x128xf32> -> vector<80x128xf32>
    %147 = arith.addf %140, %146 : vector<80x128xf32>
    %c0_108 = arith.constant 0 : index
    %c22 = arith.constant 22 : index
    %c0_109 = arith.constant 0 : index
    %148 = vector.load %arg1[%c0_108, %c22, %c0_109] : memref<1x110x128xf32, #tpu.memory_space<vmem>>, vector<1x80x128xf32>
    %149 = vector.shape_cast %148 : vector<1x80x128xf32> to vector<80x128xf32>
    %150 = arith.truncf %149 : vector<80x128xf32> to vector<80x128xbf16>
    %c15 = arith.constant 15 : index
    %c0_110 = arith.constant 0 : index
    %c0_111 = arith.constant 0 : index
    %151 = vector.load %arg3[%c15, %c0_110, %c0_111] : memref<16x128x128xbf16, #tpu.memory_space<vmem>>, vector<1x128x128xbf16>
    %152 = vector.shape_cast %151 : vector<1x128x128xbf16> to vector<128x128xbf16>
    %cst_112 = arith.constant dense<0.000000e+00> : vector<80x128xf32>
    %153 = tpu.matmul %150, %152, %cst_112 {dimension_numbers = #tpu.dot_dimension_numbers<[1], [0], [0], [1], [0, 0, 1, 1], [], []>} : vector<80x128xbf16>, vector<128x128xbf16>, vector<80x128xf32> -> vector<80x128xf32>
    %154 = arith.addf %147, %153 : vector<80x128xf32>
    %c0_113 = arith.constant 0 : index
    %c0_114 = arith.constant 0 : index
    %c384 = arith.constant 384 : index
    %155 = vector.load %arg4[%c0_113, %c0_114, %c384] : memref<1x80x512xf32, #tpu.memory_space<vmem>>, vector<1x80x128xf32>
    %156 = vector.shape_cast %155 : vector<1x80x128xf32> to vector<80x128xf32>
    %157 = vector.shape_cast %154 : vector<80x128xf32> to vector<1x80x128xf32>
    tpu.vector_store %arg4[%c0_113, %c0_114, %c384], %157 {strides = array<i32>} : memref<1x80x512xf32, #tpu.memory_space<vmem>>, vector<1x80x128xf32>,
    %158 = vector.broadcast %0 : vector<80x1xf32> to vector<80x128xf32>
    %159 = arith.mulf %154, %158 : vector<80x128xf32>
    %cst_115 = arith.constant dense<0.000000e+00> : vector<128xf32>
    %160 = vector.multi_reduction <add>, %159, %cst_115 [0] : vector<80x128xf32> to vector<128xf32>
    %161 = vector.shape_cast %160 : vector<128xf32> to vector<1x128xf32>
    %162 = arith.addf %121, %161 : vector<1x128xf32>
    %163 = arith.mulf %159, %154 : vector<80x128xf32>
    %cst_116 = arith.constant dense<0.000000e+00> : vector<128xf32>
    %164 = vector.multi_reduction <add>, %163, %cst_116 [0] : vector<80x128xf32> to vector<128xf32>
    %165 = vector.shape_cast %164 : vector<128xf32> to vector<1x128xf32>
    %166 = arith.addf %125, %165 : vector<1x128xf32>
    %c0_117 = arith.constant 0 : index
    %c0_118 = arith.constant 0 : index
    %c0_119 = arith.constant 0 : index
    %167 = vector.load %arg5[%c0_117, %c0_118, %c0_119] : memref<1x2x128xf32, #tpu.memory_space<vmem>>, vector<1x1x128xf32>
    %168 = vector.shape_cast %167 : vector<1x1x128xf32> to vector<1x128xf32>
    %169 = vector.shape_cast %162 : vector<1x128xf32> to vector<1x1x128xf32>
    tpu.vector_store %arg5[%c0_117, %c0_118, %c0_119], %169 {strides = array<i32>} : memref<1x2x128xf32, #tpu.memory_space<vmem>>, vector<1x1x128xf32>,
    %c0_120 = arith.constant 0 : index
    %c1_121 = arith.constant 1 : index
    %c0_122 = arith.constant 0 : index
    %170 = vector.load %arg5[%c0_120, %c1_121, %c0_122] : memref<1x2x128xf32, #tpu.memory_space<vmem>>, vector<1x1x128xf32>
    %171 = vector.shape_cast %170 : vector<1x1x128xf32> to vector<1x128xf32>
    %172 = vector.shape_cast %166 : vector<1x128xf32> to vector<1x1x128xf32>
    tpu.vector_store %arg5[%c0_120, %c1_121, %c0_122], %172 {strides = array<i32>} : memref<1x2x128xf32, #tpu.memory_space<vmem>>, vector<1x1x128xf32>,
    return
  }
  func.func @transform_0(%arg0: i32) -> (i32, i32, i32) {
    %c0_i32 = arith.constant 0 : i32
    %c0_i32_0 = arith.constant 0 : i32
    %c0_i32_1 = arith.constant 0 : i32
    return %arg0, %c0_i32, %c0_i32_0 : i32, i32, i32
  }
  func.func @transform_1(%arg0: i32) -> (i32, i32) {
    %c0_i32 = arith.constant 0 : i32
    %c0_i32_0 = arith.constant 0 : i32
    %c0_i32_1 = arith.constant 0 : i32
    return %c0_i32, %c0_i32_0 : i32, i32
  }
  func.func @transform_2(%arg0: i32) -> (i32, i32, i32) {
    %c0_i32 = arith.constant 0 : i32
    %c0_i32_0 = arith.constant 0 : i32
    %c0_i32_1 = arith.constant 0 : i32
    %c0_i32_2 = arith.constant 0 : i32
    return %c0_i32, %c0_i32_0, %c0_i32_1 : i32, i32, i32
  }
  func.func @transform_3(%arg0: i32) -> (i32, i32, i32) {
    %c0_i32 = arith.constant 0 : i32
    %c0_i32_0 = arith.constant 0 : i32
    %c0_i32_1 = arith.constant 0 : i32
    return %arg0, %c0_i32, %c0_i32_0 : i32, i32, i32
  }
  func.func @transform_4(%arg0: i32) -> (i32, i32, i32) {
    %c0_i32 = arith.constant 0 : i32
    %c0_i32_0 = arith.constant 0 : i32
    %c0_i32_1 = arith.constant 0 : i32
    return %arg0, %c0_i32, %c0_i32_0 : i32, i32, i32
  }
}

module attributes {stable_mosaic.version = 11 : i64} {
  func.func @conv_sigmoid_kernel(%arg0: i32, %arg1: memref<1x342x128xf32, #tpu.memory_space<vmem>>, %arg2: memref<9x128x128xbf16, #tpu.memory_space<vmem>>, %arg3: memref<1x128xf32, #tpu.memory_space<vmem>>, %arg4: memref<1x288x128xf32, #tpu.memory_space<vmem>>) attributes {dimension_semantics = [#tpu.dimension_semantics<parallel>], iteration_bounds = array<i64: 2>, scalar_prefetch = 0 : i64, scratch_operands = 0 : i64, tpu.core_type = #tpu.core_type<tc>, window_params = [{transform_indices = @transform_0, window_bounds = array<i64: 1, 342, 128>}, {pipeline_mode = #tpu.pipeline_mode<synchronous>, transform_indices = @transform_1, window_bounds = array<i64: 9, 128, 128>}, {pipeline_mode = #tpu.pipeline_mode<synchronous>, transform_indices = @transform_2, window_bounds = array<i64: 1, 128>}, {transform_indices = @transform_3, window_bounds = array<i64: 1, 288, 128>}]} {
    %cst = arith.constant 0.000000e+00 : f32
    %0 = vector.broadcast %cst : f32 to vector<288x128xf32>
    %c0 = arith.constant 0 : index
    %c0_0 = arith.constant 0 : index
    %c0_1 = arith.constant 0 : index
    %1 = vector.load %arg1[%c0, %c0_0, %c0_1] : memref<1x342x128xf32, #tpu.memory_space<vmem>>, vector<1x288x128xf32>
    %2 = vector.shape_cast %1 : vector<1x288x128xf32> to vector<288x128xf32>
    %3 = arith.truncf %2 : vector<288x128xf32> to vector<288x128xbf16>
    %c0_2 = arith.constant 0 : index
    %c0_3 = arith.constant 0 : index
    %c0_4 = arith.constant 0 : index
    %4 = vector.load %arg2[%c0_2, %c0_3, %c0_4] : memref<9x128x128xbf16, #tpu.memory_space<vmem>>, vector<1x128x128xbf16>
    %5 = vector.shape_cast %4 : vector<1x128x128xbf16> to vector<128x128xbf16>
    %cst_5 = arith.constant dense<0.000000e+00> : vector<288x128xf32>
    %6 = tpu.matmul %3, %5, %cst_5 {dimension_numbers = #tpu.dot_dimension_numbers<[1], [0], [0], [1], [0, 0, 1, 1], [], []>} : vector<288x128xbf16>, vector<128x128xbf16>, vector<288x128xf32> -> vector<288x128xf32>
    %7 = arith.addf %0, %6 : vector<288x128xf32>
    %c0_6 = arith.constant 0 : index
    %c1 = arith.constant 1 : index
    %c0_7 = arith.constant 0 : index
    %8 = vector.load %arg1[%c0_6, %c1, %c0_7] : memref<1x342x128xf32, #tpu.memory_space<vmem>>, vector<1x288x128xf32>
    %9 = vector.shape_cast %8 : vector<1x288x128xf32> to vector<288x128xf32>
    %10 = arith.truncf %9 : vector<288x128xf32> to vector<288x128xbf16>
    %c1_8 = arith.constant 1 : index
    %c0_9 = arith.constant 0 : index
    %c0_10 = arith.constant 0 : index
    %11 = vector.load %arg2[%c1_8, %c0_9, %c0_10] : memref<9x128x128xbf16, #tpu.memory_space<vmem>>, vector<1x128x128xbf16>
    %12 = vector.shape_cast %11 : vector<1x128x128xbf16> to vector<128x128xbf16>
    %cst_11 = arith.constant dense<0.000000e+00> : vector<288x128xf32>
    %13 = tpu.matmul %10, %12, %cst_11 {dimension_numbers = #tpu.dot_dimension_numbers<[1], [0], [0], [1], [0, 0, 1, 1], [], []>} : vector<288x128xbf16>, vector<128x128xbf16>, vector<288x128xf32> -> vector<288x128xf32>
    %14 = arith.addf %7, %13 : vector<288x128xf32>
    %c0_12 = arith.constant 0 : index
    %c2 = arith.constant 2 : index
    %c0_13 = arith.constant 0 : index
    %15 = vector.load %arg1[%c0_12, %c2, %c0_13] : memref<1x342x128xf32, #tpu.memory_space<vmem>>, vector<1x288x128xf32>
    %16 = vector.shape_cast %15 : vector<1x288x128xf32> to vector<288x128xf32>
    %17 = arith.truncf %16 : vector<288x128xf32> to vector<288x128xbf16>
    %c2_14 = arith.constant 2 : index
    %c0_15 = arith.constant 0 : index
    %c0_16 = arith.constant 0 : index
    %18 = vector.load %arg2[%c2_14, %c0_15, %c0_16] : memref<9x128x128xbf16, #tpu.memory_space<vmem>>, vector<1x128x128xbf16>
    %19 = vector.shape_cast %18 : vector<1x128x128xbf16> to vector<128x128xbf16>
    %cst_17 = arith.constant dense<0.000000e+00> : vector<288x128xf32>
    %20 = tpu.matmul %17, %19, %cst_17 {dimension_numbers = #tpu.dot_dimension_numbers<[1], [0], [0], [1], [0, 0, 1, 1], [], []>} : vector<288x128xbf16>, vector<128x128xbf16>, vector<288x128xf32> -> vector<288x128xf32>
    %21 = arith.addf %14, %20 : vector<288x128xf32>
    %c0_18 = arith.constant 0 : index
    %c18 = arith.constant 18 : index
    %c0_19 = arith.constant 0 : index
    %22 = vector.load %arg1[%c0_18, %c18, %c0_19] : memref<1x342x128xf32, #tpu.memory_space<vmem>>, vector<1x288x128xf32>
    %23 = vector.shape_cast %22 : vector<1x288x128xf32> to vector<288x128xf32>
    %24 = arith.truncf %23 : vector<288x128xf32> to vector<288x128xbf16>
    %c3 = arith.constant 3 : index
    %c0_20 = arith.constant 0 : index
    %c0_21 = arith.constant 0 : index
    %25 = vector.load %arg2[%c3, %c0_20, %c0_21] : memref<9x128x128xbf16, #tpu.memory_space<vmem>>, vector<1x128x128xbf16>
    %26 = vector.shape_cast %25 : vector<1x128x128xbf16> to vector<128x128xbf16>
    %cst_22 = arith.constant dense<0.000000e+00> : vector<288x128xf32>
    %27 = tpu.matmul %24, %26, %cst_22 {dimension_numbers = #tpu.dot_dimension_numbers<[1], [0], [0], [1], [0, 0, 1, 1], [], []>} : vector<288x128xbf16>, vector<128x128xbf16>, vector<288x128xf32> -> vector<288x128xf32>
    %28 = arith.addf %21, %27 : vector<288x128xf32>
    %c0_23 = arith.constant 0 : index
    %c19 = arith.constant 19 : index
    %c0_24 = arith.constant 0 : index
    %29 = vector.load %arg1[%c0_23, %c19, %c0_24] : memref<1x342x128xf32, #tpu.memory_space<vmem>>, vector<1x288x128xf32>
    %30 = vector.shape_cast %29 : vector<1x288x128xf32> to vector<288x128xf32>
    %31 = arith.truncf %30 : vector<288x128xf32> to vector<288x128xbf16>
    %c4 = arith.constant 4 : index
    %c0_25 = arith.constant 0 : index
    %c0_26 = arith.constant 0 : index
    %32 = vector.load %arg2[%c4, %c0_25, %c0_26] : memref<9x128x128xbf16, #tpu.memory_space<vmem>>, vector<1x128x128xbf16>
    %33 = vector.shape_cast %32 : vector<1x128x128xbf16> to vector<128x128xbf16>
    %cst_27 = arith.constant dense<0.000000e+00> : vector<288x128xf32>
    %34 = tpu.matmul %31, %33, %cst_27 {dimension_numbers = #tpu.dot_dimension_numbers<[1], [0], [0], [1], [0, 0, 1, 1], [], []>} : vector<288x128xbf16>, vector<128x128xbf16>, vector<288x128xf32> -> vector<288x128xf32>
    %35 = arith.addf %28, %34 : vector<288x128xf32>
    %c0_28 = arith.constant 0 : index
    %c20 = arith.constant 20 : index
    %c0_29 = arith.constant 0 : index
    %36 = vector.load %arg1[%c0_28, %c20, %c0_29] : memref<1x342x128xf32, #tpu.memory_space<vmem>>, vector<1x288x128xf32>
    %37 = vector.shape_cast %36 : vector<1x288x128xf32> to vector<288x128xf32>
    %38 = arith.truncf %37 : vector<288x128xf32> to vector<288x128xbf16>
    %c5 = arith.constant 5 : index
    %c0_30 = arith.constant 0 : index
    %c0_31 = arith.constant 0 : index
    %39 = vector.load %arg2[%c5, %c0_30, %c0_31] : memref<9x128x128xbf16, #tpu.memory_space<vmem>>, vector<1x128x128xbf16>
    %40 = vector.shape_cast %39 : vector<1x128x128xbf16> to vector<128x128xbf16>
    %cst_32 = arith.constant dense<0.000000e+00> : vector<288x128xf32>
    %41 = tpu.matmul %38, %40, %cst_32 {dimension_numbers = #tpu.dot_dimension_numbers<[1], [0], [0], [1], [0, 0, 1, 1], [], []>} : vector<288x128xbf16>, vector<128x128xbf16>, vector<288x128xf32> -> vector<288x128xf32>
    %42 = arith.addf %35, %41 : vector<288x128xf32>
    %c0_33 = arith.constant 0 : index
    %c36 = arith.constant 36 : index
    %c0_34 = arith.constant 0 : index
    %43 = vector.load %arg1[%c0_33, %c36, %c0_34] : memref<1x342x128xf32, #tpu.memory_space<vmem>>, vector<1x288x128xf32>
    %44 = vector.shape_cast %43 : vector<1x288x128xf32> to vector<288x128xf32>
    %45 = arith.truncf %44 : vector<288x128xf32> to vector<288x128xbf16>
    %c6 = arith.constant 6 : index
    %c0_35 = arith.constant 0 : index
    %c0_36 = arith.constant 0 : index
    %46 = vector.load %arg2[%c6, %c0_35, %c0_36] : memref<9x128x128xbf16, #tpu.memory_space<vmem>>, vector<1x128x128xbf16>
    %47 = vector.shape_cast %46 : vector<1x128x128xbf16> to vector<128x128xbf16>
    %cst_37 = arith.constant dense<0.000000e+00> : vector<288x128xf32>
    %48 = tpu.matmul %45, %47, %cst_37 {dimension_numbers = #tpu.dot_dimension_numbers<[1], [0], [0], [1], [0, 0, 1, 1], [], []>} : vector<288x128xbf16>, vector<128x128xbf16>, vector<288x128xf32> -> vector<288x128xf32>
    %49 = arith.addf %42, %48 : vector<288x128xf32>
    %c0_38 = arith.constant 0 : index
    %c37 = arith.constant 37 : index
    %c0_39 = arith.constant 0 : index
    %50 = vector.load %arg1[%c0_38, %c37, %c0_39] : memref<1x342x128xf32, #tpu.memory_space<vmem>>, vector<1x288x128xf32>
    %51 = vector.shape_cast %50 : vector<1x288x128xf32> to vector<288x128xf32>
    %52 = arith.truncf %51 : vector<288x128xf32> to vector<288x128xbf16>
    %c7 = arith.constant 7 : index
    %c0_40 = arith.constant 0 : index
    %c0_41 = arith.constant 0 : index
    %53 = vector.load %arg2[%c7, %c0_40, %c0_41] : memref<9x128x128xbf16, #tpu.memory_space<vmem>>, vector<1x128x128xbf16>
    %54 = vector.shape_cast %53 : vector<1x128x128xbf16> to vector<128x128xbf16>
    %cst_42 = arith.constant dense<0.000000e+00> : vector<288x128xf32>
    %55 = tpu.matmul %52, %54, %cst_42 {dimension_numbers = #tpu.dot_dimension_numbers<[1], [0], [0], [1], [0, 0, 1, 1], [], []>} : vector<288x128xbf16>, vector<128x128xbf16>, vector<288x128xf32> -> vector<288x128xf32>
    %56 = arith.addf %49, %55 : vector<288x128xf32>
    %c0_43 = arith.constant 0 : index
    %c38 = arith.constant 38 : index
    %c0_44 = arith.constant 0 : index
    %57 = vector.load %arg1[%c0_43, %c38, %c0_44] : memref<1x342x128xf32, #tpu.memory_space<vmem>>, vector<1x288x128xf32>
    %58 = vector.shape_cast %57 : vector<1x288x128xf32> to vector<288x128xf32>
    %59 = arith.truncf %58 : vector<288x128xf32> to vector<288x128xbf16>
    %c8 = arith.constant 8 : index
    %c0_45 = arith.constant 0 : index
    %c0_46 = arith.constant 0 : index
    %60 = vector.load %arg2[%c8, %c0_45, %c0_46] : memref<9x128x128xbf16, #tpu.memory_space<vmem>>, vector<1x128x128xbf16>
    %61 = vector.shape_cast %60 : vector<1x128x128xbf16> to vector<128x128xbf16>
    %cst_47 = arith.constant dense<0.000000e+00> : vector<288x128xf32>
    %62 = tpu.matmul %59, %61, %cst_47 {dimension_numbers = #tpu.dot_dimension_numbers<[1], [0], [0], [1], [0, 0, 1, 1], [], []>} : vector<288x128xbf16>, vector<128x128xbf16>, vector<288x128xf32> -> vector<288x128xf32>
    %63 = arith.addf %56, %62 : vector<288x128xf32>
    %c0_48 = arith.constant 0 : index
    %c0_49 = arith.constant 0 : index
    %64 = vector.load %arg3[%c0_48, %c0_49] : memref<1x128xf32, #tpu.memory_space<vmem>>, vector<1x128xf32>
    %65 = vector.broadcast %64 : vector<1x128xf32> to vector<288x128xf32>
    %66 = arith.addf %63, %65 : vector<288x128xf32>
    %67 = arith.negf %66 : vector<288x128xf32>
    %68 = math.exp %67 : vector<288x128xf32>
    %cst_50 = arith.constant 1.000000e+00 : f32
    %69 = vector.broadcast %cst_50 : f32 to vector<288x128xf32>
    %70 = arith.addf %69, %68 : vector<288x128xf32>
    %71 = arith.divf %69, %70 : vector<288x128xf32>
    %c0_51 = arith.constant 0 : index
    %c0_52 = arith.constant 0 : index
    %c0_53 = arith.constant 0 : index
    %72 = vector.load %arg4[%c0_51, %c0_52, %c0_53] : memref<1x288x128xf32, #tpu.memory_space<vmem>>, vector<1x288x128xf32>
    %73 = vector.shape_cast %72 : vector<1x288x128xf32> to vector<288x128xf32>
    %74 = vector.shape_cast %71 : vector<288x128xf32> to vector<1x288x128xf32>
    tpu.vector_store %arg4[%c0_51, %c0_52, %c0_53], %74 {strides = array<i32>} : memref<1x288x128xf32, #tpu.memory_space<vmem>>, vector<1x288x128xf32>,
    return
  }
  func.func @transform_0(%arg0: i32) -> (i32, i32, i32) {
    %c0_i32 = arith.constant 0 : i32
    %c0_i32_0 = arith.constant 0 : i32
    %c0_i32_1 = arith.constant 0 : i32
    return %arg0, %c0_i32, %c0_i32_0 : i32, i32, i32
  }
  func.func @transform_1(%arg0: i32) -> (i32, i32, i32) {
    %c0_i32 = arith.constant 0 : i32
    %c0_i32_0 = arith.constant 0 : i32
    %c0_i32_1 = arith.constant 0 : i32
    %c0_i32_2 = arith.constant 0 : i32
    return %c0_i32, %c0_i32_0, %c0_i32_1 : i32, i32, i32
  }
  func.func @transform_2(%arg0: i32) -> (i32, i32) {
    %c0_i32 = arith.constant 0 : i32
    %c0_i32_0 = arith.constant 0 : i32
    %c0_i32_1 = arith.constant 0 : i32
    return %c0_i32, %c0_i32_0 : i32, i32
  }
  func.func @transform_3(%arg0: i32) -> (i32, i32, i32) {
    %c0_i32 = arith.constant 0 : i32
    %c0_i32_0 = arith.constant 0 : i32
    %c0_i32_1 = arith.constant 0 : i32
    return %arg0, %c0_i32, %c0_i32_0 : i32, i32, i32
  }
}

</mosaic_0001>

<llo_original>
// kernel: generator_forward.4
$region0: #{generator_forward.4}
  #allocation0 [shape = 'u32[]', space=smem, size = 0x4, offset = 0x4, fixed_abs, tag = 'smem constant byte address 0x4 - core index']
  #allocation1 [shape = 'u32[144,128]{1,0:T(1,128)}', space=vmem, size = 0x12000, scoped, tag = 'internal scratch']
  %s0 = inlined_call_operand.vmem [shape: f32[2,32], index: 0, kind: input, shape index: {}]
  %s1 = inlined_call_operand.vmem [shape: bf16[32,512], index: 1, kind: input, shape index: {}]
  %s2 = inlined_call_operand.vmem [shape: f32[1,512], index: 2, kind: input, shape index: {}]
  %s3 = inlined_call_operand.vmem [shape: f32[2,512], index: 3, kind: output, shape index: {}]
  %s4 = sld [smem:[#allocation0]]
  $region22: #{generator_forward.4} parent=0
    _
  %s6 = ssub.s32 1, %s4
  %s7 = scalar_select 0, %s6, %s4
  // Predicated region
  $region2: #{generator_forward.4} parent=0 // pred_check
    _
  $region3: #{generator_forward.4} parent=0 // pred_check_branch
    %9 = sbr.rel (0) target = $region5
  $region4: #{generator_forward.4} parent=0 // pred_region
    _
  $region5: #{generator_forward.4} parent=0 // pred_fallthru
    _
  // Predicated region
  $region6: #{generator_forward.4} parent=0 // pred_check
    _
  $region7: #{generator_forward.4} parent=0 // pred_check_branch
    %11 = sbr.rel (0) target = $region9
  $region8: #{generator_forward.4} parent=0 // pred_region
    _
  $region9: #{generator_forward.4} parent=0 // pred_fallthru
    _
  // Predicated region
  $region10: #{generator_forward.4} parent=0 // pred_check
    _
  $region11: #{generator_forward.4} parent=0 // pred_check_branch
    %13 = sbr.rel (0) target = $region13
  $region12: #{generator_forward.4} parent=0 // pred_region
    _
  $region13: #{generator_forward.4} parent=0 // pred_fallthru
    _
  %v15 = vld [vmem:[%s0] sm:$0x3]
  %v16 = vpack.c.bf16 %v15, %v15
  %v17 = vld [vmem:[%s1] sm:$0xff]
  %v18 = vld [vmem:[%s1 + $0x8] sm:$0xff]
  %v19 = vld [vmem:[%s1 + $0x10] sm:$0xff]
  %v20 = vld [vmem:[%s1 + $0x18] sm:$0xff]
  %v21 = vld [vmem:[%s1 + $0x20] sm:$0xff]
  %v22 = vld [vmem:[%s1 + $0x28] sm:$0xff]
  %v23 = vld [vmem:[%s1 + $0x30] sm:$0xff]
  %v24 = vld [vmem:[%s1 + $0x38] sm:$0xff]
  %v25 = vld [vmem:[%s2] sm:$0xf]
  %v27 = vlaneseq
  %v28 = vshrl.u32 %v27, 7
  %v29 = vsub.s32 0, %v28
  %v30 = vrot.slane %v25, %v29
  %v31 = vlaneseq
  %v32 = vshrl.u32 %v31, 7
  %v33 = vsub.s32 1, %v32
  %v34 = vrot.slane %v25, %v33
  %v35 = vlaneseq
  %v36 = vshrl.u32 %v35, 7
  %v37 = vsub.s32 2, %v36
  %v38 = vrot.slane %v25, %v37
  %v39 = vlaneseq
  %v40 = vshrl.u32 %v39, 7
  %v41 = vsub.s32 3, %v40
  %v42 = vrot.slane %v25, %v41
  %v55 = vunpack.c.l.b16 %v17
  %v56 = vunpack.c.h.b16 %v17
  %v57 = vunpack.c.l.b16 %v18
  %v58 = vunpack.c.h.b16 %v18
  %v59 = vunpack.c.l.b16 %v19
  %v60 = vunpack.c.h.b16 %v19
  %v61 = vunpack.c.l.b16 %v20
  %v62 = vunpack.c.h.b16 %v20
  %v63 = vunpack.c.l.b16 %v21
  %v64 = vunpack.c.h.b16 %v21
  %v65 = vunpack.c.l.b16 %v22
  %v66 = vunpack.c.h.b16 %v22
  %v67 = vunpack.c.l.b16 %v23
  %v68 = vunpack.c.h.b16 %v23
  %v69 = vunpack.c.l.b16 %v24
  %v70 = vunpack.c.h.b16 %v24
  %v71 = vpack.c.b16 %v59, %v55
  %v72 = vpack.c.b16 %v60, %v56
  %v73 = vpack.c.b16 %v61, %v57
  %v74 = vpack.c.b16 %v62, %v58
  %v75 = vpack.c.b16 %v67, %v63
  %v76 = vpack.c.b16 %v68, %v64
  %v77 = vpack.c.b16 %v69, %v65
  %v78 = vpack.c.b16 %v70, %v66
  %vm87 = vcmask 261120
  %v89 = vsel %vm87, %v16, 0
  %91 = vmatprep.subr.bf16.mxu0 %v72
  %92 = vmatpush1.bf16.msra.mxu0 %v71
  %93 = vmatprep.subr.bf16.mxu0 %v76
  %94 = vmatpush1.bf16.msra.mxu0 %v75
  %95 = vmatprep.subr.bf16.mxu0 0
  %96 = vmatpush1.bf16.msra.mxu0 0
  %97 = vmatprep.subr.bf16.mxu0 0
  %98 = vmatpush1.bf16.msra.mxu0 0
  %99 = vmatprep.subr.bf16.mxu0 0
  %100 = vmatpush1.bf16.msra.mxu0 0
  %101 = vmatprep.subr.bf16.mxu0 0
  %102 = vmatpush1.bf16.msra.mxu0 0
  %103 = vmatprep.subr.bf16.mxu0 0
  %104 = vmatpush1.bf16.msra.mxu0 0
  %105 = vmatprep.subr.bf16.mxu0 0
  %106 = vmatpush1.bf16.msra.mxu0 0
  %107 = vmatprep.subr.bf16.mxu0 0
  %108 = vmatpush1.bf16.msra.mxu0 0
  %109 = vmatprep.subr.bf16.mxu0 0
  %110 = vmatpush1.bf16.msra.mxu0 0
  %111 = vmatprep.subr.bf16.mxu0 0
  %112 = vmatpush1.bf16.msra.mxu0 0
  %113 = vmatprep.subr.bf16.mxu0 0
  %114 = vmatpush1.bf16.msra.mxu0 0
  %115 = vmatprep.subr.bf16.mxu0 0
  %116 = vmatpush1.bf16.msra.mxu0 0
  %117 = vmatprep.subr.bf16.mxu0 0
  %118 = vmatpush1.bf16.msra.mxu0 0
  %119 = vmatprep.subr.bf16.mxu0 0
  %120 = vmatpush1.bf16.msra.mxu0 0
  %121 = vmatprep.subr.bf16.mxu0 0
  %122 = vmatpush1.bf16.msra.mxu0 0
  %123 = vmatprep.mubr.bf16.mxu0 0
  %124 = vmatmul.mubr.bf16.gmra.mrb[0].mxu0 %v89
  %v125 = vpop.f32.mrb[0].mxu0
  %v126 = vadd.f32 %v30, %v125
  %v127 = vpop.f32.mrb[0].mxu0
  %v128 = vadd.f32 %v34, %v127
  %v129 = vpop.f32.mrb[0].mxu0
  %v130 = vpop.f32.mrb[0].mxu0
  %131 = vdwg.mxu0
  %132 = vmatprep.subr.bf16.mxu0 %v74
  %133 = vmatpush1.bf16.msra.mxu0 %v73
  %134 = vmatprep.subr.bf16.mxu0 %v78
  %135 = vmatpush1.bf16.msra.mxu0 %v77
  %136 = vmatprep.subr.bf16.mxu0 0
  %137 = vmatpush1.bf16.msra.mxu0 0
  %138 = vmatprep.subr.bf16.mxu0 0
  %139 = vmatpush1.bf16.msra.mxu0 0
  %140 = vmatprep.subr.bf16.mxu0 0
  %141 = vmatpush1.bf16.msra.mxu0 0
  %142 = vmatprep.subr.bf16.mxu0 0
  %143 = vmatpush1.bf16.msra.mxu0 0
  %144 = vmatprep.subr.bf16.mxu0 0
  %145 = vmatpush1.bf16.msra.mxu0 0
  %146 = vmatprep.subr.bf16.mxu0 0
  %147 = vmatpush1.bf16.msra.mxu0 0
  %148 = vmatprep.subr.bf16.mxu0 0
  %149 = vmatpush1.bf16.msra.mxu0 0
  %150 = vmatprep.subr.bf16.mxu0 0
  %151 = vmatpush1.bf16.msra.mxu0 0
  %152 = vmatprep.subr.bf16.mxu0 0
  %153 = vmatpush1.bf16.msra.mxu0 0
  %154 = vmatprep.subr.bf16.mxu0 0
  %155 = vmatpush1.bf16.msra.mxu0 0
  %156 = vmatprep.subr.bf16.mxu0 0
  %157 = vmatpush1.bf16.msra.mxu0 0
  %158 = vmatprep.subr.bf16.mxu0 0
  %159 = vmatpush1.bf16.msra.mxu0 0
  %160 = vmatprep.subr.bf16.mxu0 0
  %161 = vmatpush1.bf16.msra.mxu0 0
  %162 = vmatprep.subr.bf16.mxu0 0
  %163 = vmatpush1.bf16.msra.mxu0 0
  %164 = vmatprep.mubr.bf16.mxu0 0
  %165 = vmatmul.mubr.bf16.gmra.mrb[0].mxu0 %v89
  %v166 = vpop.f32.mrb[0].mxu0
  %v167 = vadd.f32 %v38, %v166
  %v168 = vpop.f32.mrb[0].mxu0
  %v169 = vadd.f32 %v42, %v168
  %v170 = vpop.f32.mrb[0].mxu0
  %v171 = vpop.f32.mrb[0].mxu0
  %172 = vdwg.mxu0
  %v177 = vcombine.low %v126, %v128
  %v178 = vcombine.low %v167, %v169
  %v180 = vunpack.c.l.s4 1983009808
  %v181 = vunpack.c.0.s8 %v180
  %v182 = vlaneseq
  %v183 = vshrl.u32 %v182, 7
  %v184 = vsub.s32 %v181, %v183
  %v185 = vrot.slane %v177, %v184
  %v187 = vunpack.c.l.s4 1983009808
  %v188 = vunpack.c.0.s8 %v187
  %v189 = vlaneseq
  %v190 = vshrl.u32 %v189, 7
  %v191 = vsub.s32 %v188, %v190
  %v192 = vrot.slane %v178, %v191
  %v193 = vcombine.low %v185, %v192
  %195 = vst [vmem:[%s3] sm:$0xff] %v193
  // Predicated region
  $region14: #{generator_forward.4} parent=0 // pred_check
    _
  $region15: #{generator_forward.4} parent=0 // pred_check_branch
    %197 = sbr.rel (0) target = $region17
  $region16: #{generator_forward.4} parent=0 // pred_region
    _
  $region17: #{generator_forward.4} parent=0 // pred_fallthru
    _
  // Predicated region
  $region18: #{generator_forward.4} parent=0 // pred_check
    _
  $region19: #{generator_forward.4} parent=0 // pred_check_branch
    %199 = sbr.rel (0) target = $region21
  $region20: #{generator_forward.4} parent=0 // pred_region
    _
  $region21: #{generator_forward.4} parent=0 // pred_fallthru
    _

// kernel: generator_forward.5
$region0: #{generator_forward.5}
  #allocation0 [shape = 'u32[]', space=smem, size = 0x4, offset = 0x4, fixed_abs, tag = 'smem constant byte address 0x4 - core index']
  #allocation1 [shape = 'u32[144,128]{1,0:T(1,128)}', space=vmem, size = 0x12000, scoped, tag = 'internal scratch']
  %s0 = inlined_call_operand.vmem [shape: f32[2,42,128], index: 0, kind: input, shape index: {}]
  %s1 = inlined_call_operand.vmem [shape: f32[24,1], index: 1, kind: input, shape index: {}]
  %s2 = inlined_call_operand.vmem [shape: bf16[16,128,128], index: 2, kind: input, shape index: {}]
  %s3 = inlined_call_operand.vmem [shape: f32[2,24,512], index: 3, kind: output, shape index: {0}]
  %s4 = inlined_call_operand.vmem [shape: f32[2,2,128], index: 4, kind: output, shape index: {1}]
  %5 = xla_tuple %s3, %s4
  %s6 = sld [smem:[#allocation0]]
  $region53: #{generator_forward.5} parent=0
    _
  %s8 = ssub.s32 1, %s6
  %s9 = scalar_select 0, %s8, %s6
  loop: start=0, step=1, limit=4
  $region2: #{generator_forward.5} parent=0 // loop_pre_header
    _
  $region3: #{generator_forward.5} parent=0 // loop_header
    %s11 = sphi 0, %s15
    %p12 = scmp.ge.s32.totalorder %s11, 4
    %s21 = sphi 0, %s23
    %s24 = sphi 0, %s21
    %s25 = sphi 0, %s24
    %s41 = sphi 0, %s25
    %s45 = sphi 0, %s45
    %s47 = sphi 0, %s45
    %s48 = sphi 0, %s47
    %s62 = sphi 0, %s48
    %s66 = sphi 0, %s66
    %s68 = sphi 0, %s66
    %s69 = sphi 0, %s68
    %s83 = sphi 0, %s69
    %s89 = sphi 0, %s91
    %s92 = sphi 0, %s89
    %s93 = sphi 0, %s92
    %s109 = sphi 0, %s93
    %s115 = sphi 0, %s117
    %s118 = sphi 0, %s115
    %s119 = sphi 0, %s118
    %s135 = sphi 0, %s119
  $region4: #{generator_forward.5} parent=0 // loop_header_branch
    %14 = sbr.rel (%p12) target = $region8
  $region5: #{generator_forward.5} parent=0 // loop_body
    %s16 = ssub.s32 %s11, 1
    %s17 = ssub.s32 %s11, 2
    %s18 = sadd.s32 %s11, 1
    %s19 = ssub.s32 %s11, %s18
    %p20 = scmp.eq.s32.totalorder %s19, 0
    %s22 = sadd.s32 %s21, 1
    %s23 = scalar_select %p20, %s21, %s22
    %p26 = pneg %p20
    %p27 = scmp.eq.s32.totalorder %s11, 1
    %p28 = por %p26, %p27
    %p29 = scmp.ne.s32.totalorder %s21, %s24
    %p30 = scmp.eq.s32.totalorder %s11, 0
    %p31 = por %p29, %p30
    %p32 = scmp.ne.s32.totalorder %s21, %s24
    %p33 = scmp.eq.s32.totalorder %s16, 1
    %p34 = por %p32, %p33
    %p35 = scmp.ne.s32.totalorder %s24, %s25
    %p36 = scmp.eq.s32.totalorder %s16, 0
    %p37 = por %p35, %p36
    %p38 = scmp.ne.s32.totalorder %s24, %s25
    %p39 = scmp.eq.s32.totalorder %s17, 1
    %p40 = por %p38, %p39
    %p42 = scmp.ne.s32.totalorder %s25, %s41
    %p43 = scmp.eq.s32.totalorder %s17, 0
    %p44 = por %p42, %p43
    %s46 = sadd.s32 %s45, 1
    %p49 = scmp.eq.s32.totalorder %s11, 1
    %p50 = scmp.ne.s32.totalorder %s45, %s47
    %p51 = scmp.eq.s32.totalorder %s11, 0
    %p52 = por %p50, %p51
    %p53 = scmp.ne.s32.totalorder %s45, %s47
    %p54 = scmp.eq.s32.totalorder %s16, 1
    %p55 = por %p53, %p54
    %p56 = scmp.ne.s32.totalorder %s47, %s48
    %p57 = scmp.eq.s32.totalorder %s16, 0
    %p58 = por %p56, %p57
    %p59 = scmp.ne.s32.totalorder %s47, %s48
    %p60 = scmp.eq.s32.totalorder %s17, 1
    %p61 = por %p59, %p60
    %p63 = scmp.ne.s32.totalorder %s48, %s62
    %p64 = scmp.eq.s32.totalorder %s17, 0
    %p65 = por %p63, %p64
    %s67 = sadd.s32 %s66, 1
    %p70 = scmp.eq.s32.totalorder %s11, 1
    %p71 = scmp.ne.s32.totalorder %s66, %s68
    %p72 = scmp.eq.s32.totalorder %s11, 0
    %p73 = por %p71, %p72
    %p74 = scmp.ne.s32.totalorder %s66, %s68
    %p75 = scmp.eq.s32.totalorder %s16, 1
    %p76 = por %p74, %p75
    %p77 = scmp.ne.s32.totalorder %s68, %s69
    %p78 = scmp.eq.s32.totalorder %s16, 0
    %p79 = por %p77, %p78
    %p80 = scmp.ne.s32.totalorder %s68, %s69
    %p81 = scmp.eq.s32.totalorder %s17, 1
    %p82 = por %p80, %p81
    %p84 = scmp.ne.s32.totalorder %s69, %s83
    %p85 = scmp.eq.s32.totalorder %s17, 0
    %p86 = por %p84, %p85
    %s87 = ssub.s32 %s11, %s18
    %p88 = scmp.eq.s32.totalorder %s87, 0
    %s90 = sadd.s32 %s89, 1
    %s91 = scalar_select %p88, %s89, %s90
    %p94 = pneg %p88
    %p95 = scmp.eq.s32.totalorder %s11, 1
    %p96 = por %p94, %p95
    %p97 = scmp.ne.s32.totalorder %s89, %s92
    %p98 = scmp.eq.s32.totalorder %s11, 0
    %p99 = por %p97, %p98
    %p100 = scmp.ne.s32.totalorder %s89, %s92
    %p101 = scmp.eq.s32.totalorder %s16, 1
    %p102 = por %p100, %p101
    %p103 = scmp.ne.s32.totalorder %s92, %s93
    %p104 = scmp.eq.s32.totalorder %s16, 0
    %p105 = por %p103, %p104
    %p106 = scmp.ne.s32.totalorder %s92, %s93
    %p107 = scmp.eq.s32.totalorder %s17, 1
    %p108 = por %p106, %p107
    %p110 = scmp.ne.s32.totalorder %s93, %s109
    %p111 = scmp.eq.s32.totalorder %s17, 0
    %p112 = por %p110, %p111
    %s113 = ssub.s32 %s11, %s18
    %p114 = scmp.eq.s32.totalorder %s113, 0
    %s116 = sadd.s32 %s115, 1
    %s117 = scalar_select %p114, %s115, %s116
    %p120 = pneg %p114
    %p121 = scmp.eq.s32.totalorder %s11, 1
    %p122 = por %p120, %p121
    %p123 = scmp.ne.s32.totalorder %s115, %s118
    %p124 = scmp.eq.s32.totalorder %s11, 0
    %p125 = por %p123, %p124
    %p126 = scmp.ne.s32.totalorder %s115, %s118
    %p127 = scmp.eq.s32.totalorder %s16, 1
    %p128 = por %p126, %p127
    %p129 = scmp.ne.s32.totalorder %s118, %s119
    %p130 = scmp.eq.s32.totalorder %s16, 0
    %p131 = por %p129, %p130
    %p132 = scmp.ne.s32.totalorder %s118, %s119
    %p133 = scmp.eq.s32.totalorder %s17, 1
    %p134 = por %p132, %p133
    %p136 = scmp.ne.s32.totalorder %s119, %s135
    %p137 = scmp.eq.s32.totalorder %s17, 0
    %p138 = por %p136, %p137
    %p139 = scmp.le.s32.totalorder 1, %s11
    %p140 = scmp.lt.s32.totalorder %s11, 3
    %p141 = pnand %p139, %p140
    %p142 = pneg %p141
    // Predicated region
    $region9: #{generator_forward.5} parent=5 // pred_check
      _
    $region10: #{generator_forward.5} parent=5 // pred_check_branch
      %144 = sbr.rel (%p141) target = $region12
    $region11: #{generator_forward.5} parent=5 // pred_region
      %s145 = ssub.s32 %s11, 1
      // Predicated region
      $region13: #{generator_forward.5} parent=11 // pred_check
        %p146 = pneg %p58
      $region14: #{generator_forward.5} parent=11 // pred_check_branch
        %148 = sbr.rel (%p146) target = $region16
      $region15: #{generator_forward.5} parent=11 // pred_region
        _
      $region16: #{generator_forward.5} parent=11 // pred_fallthru
        _
      // Predicated region
      $region17: #{generator_forward.5} parent=11 // pred_check
        %p149 = pneg %p79
      $region18: #{generator_forward.5} parent=11 // pred_check_branch
        %151 = sbr.rel (%p149) target = $region20
      $region19: #{generator_forward.5} parent=11 // pred_region
        _
      $region20: #{generator_forward.5} parent=11 // pred_fallthru
        _
    $region12: #{generator_forward.5} parent=5 // pred_fallthru
      _
    %p152 = scmp.lt.s32.totalorder %s11, 2
    // Predicated region
    $region21: #{generator_forward.5} parent=5 // pred_check
      %p153 = pneg %p152
    $region22: #{generator_forward.5} parent=5 // pred_check_branch
      %155 = sbr.rel (%p153) target = $region24
    $region23: #{generator_forward.5} parent=5 // pred_region
      // Predicated region
      $region25: #{generator_forward.5} parent=23 // pred_check
        %p156 = pneg %p31
      $region26: #{generator_forward.5} parent=23 // pred_check_branch
        %158 = sbr.rel (%p156) target = $region28
      $region27: #{generator_forward.5} parent=23 // pred_region
        %p159 = scmp.lt.s32.totalorder %s11, 1
        %s160 = scalar_select %p159, %s11, 1
        %s161 = smul.addr %s160, 6
        %s162 = smul.addr %s161, 8
        %s163 = scalar_lea.vmem %s0, %s162
      $region28: #{generator_forward.5} parent=23 // pred_fallthru
        _
    $region24: #{generator_forward.5} parent=5 // pred_fallthru
      _
    %p164 = scmp.le.s32.totalorder 1, %s11
    %p165 = scmp.lt.s32.totalorder %s11, 3
    %p166 = pnand %p164, %p165
    %p167 = pneg %p166
    // Predicated region
    $region29: #{generator_forward.5} parent=5 // pred_check
      _
    $region30: #{generator_forward.5} parent=5 // pred_check_branch
      %169 = sbr.rel (%p166) target = $region32
    $region31: #{generator_forward.5} parent=5 // pred_region
      %s170 = ssub.s32 %s11, 1
      %p171 = scmp.lt.s32.totalorder %s16, 1
      %s172 = scalar_select %p171, %s16, 1
      %s173 = smul.addr %s172, 6
      %s174 = smul.addr %s173, 8
      %s175 = scalar_lea.vmem %s0, %s174
      %p176 = pneg %p37
      %p177 = pneg %p34
      %p178 = pneg %p58
      %p179 = pneg %p55
      %p180 = pneg %p79
      %p181 = pneg %p76
      %p182 = pneg %p105
      %p183 = pneg %p102
      %p184 = scmp.lt.s32.totalorder %s16, 1
      %s185 = scalar_select %p184, %s16, 1
      %s186 = smul.addr %s185, 12
      %s187 = smul.addr %s186, 8
      %s188 = scalar_lea.vmem %s3, %s187
      %p189 = pneg %p131
      %p190 = pneg %p128
      %p191 = scmp.lt.s32.totalorder %s16, 1
      %s192 = scalar_select %p191, %s16, 1
      %s193 = smul.addr %s192, 2
      %s194 = scalar_lea.vmem %s4, %s193
      %p195 = scmp.lt.s32.totalorder %s16, 1
      %s196 = scalar_select %p195, %s16, 1
      %s197 = smul.addr %s196, 6
      %s198 = smul.addr %s197, 8
      %s199 = scalar_lea.vmem %s0, %s198
      %p200 = scmp.lt.s32.totalorder %s16, 1
      %s201 = scalar_select %p200, %s16, 1
      %s202 = smul.addr %s201, 12
      %s203 = smul.addr %s202, 8
      %s204 = scalar_lea.vmem %s3, %s203
      %p205 = scmp.lt.s32.totalorder %s16, 1
      %s206 = scalar_select %p205, %s16, 1
      %s207 = smul.addr %s206, 2
      %s208 = scalar_lea.vmem %s4, %s207
      %v210 = vld [vmem:[%s1] sm:$0xff]
      %v211 = vld [vmem:[%s1 + $0x8] sm:$0xff]
      %v212 = vld [vmem:[%s1 + $0x10] sm:$0xff]
      %v213 = vld [vmem:[%s199] sm:$0xff]
      %v214 = vld [vmem:[%s199 + $0x8] sm:$0xff]
      %v215 = vld [vmem:[%s199 + $0x10] sm:$0xff]
      %v216 = vpack.c.bf16 %v214, %v213
      %v217 = vpack.c.bf16 %v215, %v215
      %v218 = vld [vmem:[%s2] sm:$0xf]
      %v219 = vld [vmem:[%s2 + $0x4] sm:$0xf]
      %v220 = vld [vmem:[%s2 + $0x8] sm:$0xf]
      %v221 = vld [vmem:[%s2 + $0xc] sm:$0xf]
      %v222 = vld [vmem:[%s2 + $0x10] sm:$0xf]
      %v223 = vld [vmem:[%s2 + $0x14] sm:$0xf]
      %v224 = vld [vmem:[%s2 + $0x18] sm:$0xf]
      %v225 = vld [vmem:[%s2 + $0x1c] sm:$0xf]
      %v226 = vld [vmem:[%s2 + $0x20] sm:$0xf]
      %v227 = vld [vmem:[%s2 + $0x24] sm:$0xf]
      %v228 = vld [vmem:[%s2 + $0x28] sm:$0xf]
      %v229 = vld [vmem:[%s2 + $0x2c] sm:$0xf]
      %v230 = vld [vmem:[%s2 + $0x30] sm:$0xf]
      %v231 = vld [vmem:[%s2 + $0x34] sm:$0xf]
      %v232 = vld [vmem:[%s2 + $0x38] sm:$0xf]
      %v233 = vld [vmem:[%s2 + $0x3c] sm:$0xf]
      %v234 = vld [vmem:[%s199 + $0x1] sm:$0xff]
      %v235 = vld [vmem:[%s199 + $0x9] sm:$0xff]
      %v236 = vld [vmem:[%s199 + $0x11] sm:$0xff]
      %v237 = vpack.c.bf16 %v235, %v234
      %v238 = vpack.c.bf16 %v236, %v236
      %s239 = scalar_lea.vmem %s2, 64
      %v240 = vld [vmem:[%s239] sm:$0xf]
      %v241 = vld [vmem:[%s239 + $0x4] sm:$0xf]
      %v242 = vld [vmem:[%s239 + $0x8] sm:$0xf]
      %v243 = vld [vmem:[%s239 + $0xc] sm:$0xf]
      %v244 = vld [vmem:[%s239 + $0x10] sm:$0xf]
      %v245 = vld [vmem:[%s239 + $0x14] sm:$0xf]
      %v246 = vld [vmem:[%s239 + $0x18] sm:$0xf]
      %v247 = vld [vmem:[%s239 + $0x1c] sm:$0xf]
      %v248 = vld [vmem:[%s239 + $0x20] sm:$0xf]
      %v249 = vld [vmem:[%s239 + $0x24] sm:$0xf]
      %v250 = vld [vmem:[%s239 + $0x28] sm:$0xf]
      %v251 = vld [vmem:[%s239 + $0x2c] sm:$0xf]
      %v252 = vld [vmem:[%s239 + $0x30] sm:$0xf]
      %v253 = vld [vmem:[%s239 + $0x34] sm:$0xf]
      %v254 = vld [vmem:[%s239 + $0x38] sm:$0xf]
      %v255 = vld [vmem:[%s239 + $0x3c] sm:$0xf]
      %v272 = vunpack.c.l.b16 %v240
      %v273 = vunpack.c.l.b16 %v241
      %v274 = vunpack.c.l.b16 %v242
      %v275 = vunpack.c.l.b16 %v243
      %v276 = vunpack.c.l.b16 %v244
      %v277 = vunpack.c.l.b16 %v245
      %v278 = vunpack.c.l.b16 %v246
      %v279 = vunpack.c.l.b16 %v247
      %v280 = vunpack.c.l.b16 %v248
      %v281 = vunpack.c.l.b16 %v249
      %v282 = vunpack.c.l.b16 %v250
      %v283 = vunpack.c.l.b16 %v251
      %v284 = vunpack.c.l.b16 %v252
      %v285 = vunpack.c.l.b16 %v253
      %v286 = vunpack.c.l.b16 %v254
      %v287 = vunpack.c.l.b16 %v255
      %v288 = vpack.c.b16 %v273, %v272
      %v289 = vpack.c.b16 %v275, %v274
      %v290 = vpack.c.b16 %v277, %v276
      %v291 = vpack.c.b16 %v279, %v278
      %v292 = vpack.c.b16 %v281, %v280
      %v293 = vpack.c.b16 %v283, %v282
      %v294 = vpack.c.b16 %v285, %v284
      %v295 = vpack.c.b16 %v287, %v286
      %304 = vmatprep.subr.bf16.mxu0 0
      %305 = vmatpush1.bf16.msra.mxu0 %v288
      %306 = vmatprep.subr.bf16.mxu0 0
      %307 = vmatpush1.bf16.msra.mxu0 %v289
      %308 = vmatprep.subr.bf16.mxu0 0
      %309 = vmatpush1.bf16.msra.mxu0 %v290
      %310 = vmatprep.subr.bf16.mxu0 0
      %311 = vmatpush1.bf16.msra.mxu0 %v291
      %312 = vmatprep.subr.bf16.mxu0 0
      %313 = vmatpush1.bf16.msra.mxu0 %v292
      %314 = vmatprep.subr.bf16.mxu0 0
      %315 = vmatpush1.bf16.msra.mxu0 %v293
      %316 = vmatprep.subr.bf16.mxu0 0
      %317 = vmatpush1.bf16.msra.mxu0 %v294
      %318 = vmatprep.subr.bf16.mxu0 0
      %319 = vmatpush1.bf16.msra.mxu0 %v295
      %320 = vmatprep.subr.bf16.mxu0 0
      %321 = vmatpush1.bf16.msra.mxu0 0
      %322 = vmatprep.subr.bf16.mxu0 0
      %323 = vmatpush1.bf16.msra.mxu0 0
      %324 = vmatprep.subr.bf16.mxu0 0
      %325 = vmatpush1.bf16.msra.mxu0 0
      %326 = vmatprep.subr.bf16.mxu0 0
      %327 = vmatpush1.bf16.msra.mxu0 0
      %328 = vmatprep.subr.bf16.mxu0 0
      %329 = vmatpush1.bf16.msra.mxu0 0
      %330 = vmatprep.subr.bf16.mxu0 0
      %331 = vmatpush1.bf16.msra.mxu0 0
      %332 = vmatprep.subr.bf16.mxu0 0
      %333 = vmatpush1.bf16.msra.mxu0 0
      %334 = vmatprep.subr.bf16.mxu0 0
      %335 = vmatpush1.bf16.msra.mxu0 0
      %336 = vmatprep.mubr.bf16.mxu0 0
      %337 = vmatmul.mubr.bf16.gmra.mrb[0].mxu0 %v237
      %v338 = vpop.f32.mrb[0].mxu0
      %v339 = vadd.f32 0.0, %v338
      %v340 = vpop.f32.mrb[0].mxu0
      %v341 = vpop.f32.mrb[0].mxu0
      %v342 = vadd.f32 0.0, %v341
      %v343 = vpop.f32.mrb[0].mxu0
      %344 = vmatprep.mubr.bf16.mxu0 0
      %345 = vmatmul.mubr.bf16.gmra.mrb[0].mxu0 %v238
      %v346 = vpop.f32.mrb[0].mxu0
      %v347 = vadd.f32 0.0, %v346
      %v348 = vpop.f32.mrb[0].mxu0
      %v349 = vpop.f32.mrb[0].mxu0
      %v350 = vpop.f32.mrb[0].mxu0
      %351 = vdwg.mxu0
      %v368 = vunpack.c.l.b16 %v218
      %v369 = vunpack.c.l.b16 %v219
      %v370 = vunpack.c.l.b16 %v220
      %v371 = vunpack.c.l.b16 %v221
      %v372 = vunpack.c.l.b16 %v222
      %v373 = vunpack.c.l.b16 %v223
      %v374 = vunpack.c.l.b16 %v224
      %v375 = vunpack.c.l.b16 %v225
      %v376 = vunpack.c.l.b16 %v226
      %v377 = vunpack.c.l.b16 %v227
      %v378 = vunpack.c.l.b16 %v228
      %v379 = vunpack.c.l.b16 %v229
      %v380 = vunpack.c.l.b16 %v230
      %v381 = vunpack.c.l.b16 %v231
      %v382 = vunpack.c.l.b16 %v232
      %v383 = vunpack.c.l.b16 %v233
      %v384 = vpack.c.b16 %v369, %v368
      %v385 = vpack.c.b16 %v371, %v370
      %v386 = vpack.c.b16 %v373, %v372
      %v387 = vpack.c.b16 %v375, %v374
      %v388 = vpack.c.b16 %v377, %v376
      %v389 = vpack.c.b16 %v379, %v378
      %v390 = vpack.c.b16 %v381, %v380
      %v391 = vpack.c.b16 %v383, %v382
      %400 = vmatprep.subr.bf16.mxu0 0
      %401 = vmatpush1.bf16.msra.mxu0 %v384
      %402 = vmatprep.subr.bf16.mxu0 0
      %403 = vmatpush1.bf16.msra.mxu0 %v385
      %404 = vmatprep.subr.bf16.mxu0 0
      %405 = vmatpush1.bf16.msra.mxu0 %v386
      %406 = vmatprep.subr.bf16.mxu0 0
      %407 = vmatpush1.bf16.msra.mxu0 %v387
      %408 = vmatprep.subr.bf16.mxu0 0
      %409 = vmatpush1.bf16.msra.mxu0 %v388
      %410 = vmatprep.subr.bf16.mxu0 0
      %411 = vmatpush1.bf16.msra.mxu0 %v389
      %412 = vmatprep.subr.bf16.mxu0 0
      %413 = vmatpush1.bf16.msra.mxu0 %v390
      %414 = vmatprep.subr.bf16.mxu0 0
      %415 = vmatpush1.bf16.msra.mxu0 %v391
      %416 = vmatprep.subr.bf16.mxu0 0
      %417 = vmatpush1.bf16.msra.mxu0 0
      %418 = vmatprep.subr.bf16.mxu0 0
      %419 = vmatpush1.bf16.msra.mxu0 0
      %420 = vmatprep.subr.bf16.mxu0 0
      %421 = vmatpush1.bf16.msra.mxu0 0
      %422 = vmatprep.subr.bf16.mxu0 0
      %423 = vmatpush1.bf16.msra.mxu0 0
      %424 = vmatprep.subr.bf16.mxu0 0
      %425 = vmatpush1.bf16.msra.mxu0 0
      %426 = vmatprep.subr.bf16.mxu0 0
      %427 = vmatpush1.bf16.msra.mxu0 0
      %428 = vmatprep.subr.bf16.mxu0 0
      %429 = vmatpush1.bf16.msra.mxu0 0
      %430 = vmatprep.subr.bf16.mxu0 0
      %431 = vmatpush1.bf16.msra.mxu0 0
      %432 = vmatprep.mubr.bf16.mxu0 0
      %433 = vmatmul.mubr.bf16.gmra.mrb[0].mxu0 %v216
      %v434 = vpop.f32.mrb[0].mxu0
      %v435 = vadd.f32 %v339, %v434
      %v436 = vpop.f32.mrb[0].mxu0
      %v437 = vpop.f32.mrb[0].mxu0
      %v438 = vadd.f32 %v342, %v437
      %v439 = vpop.f32.mrb[0].mxu0
      %440 = vmatprep.mubr.bf16.mxu0 0
      %441 = vmatmul.mubr.bf16.gmra.mrb[0].mxu0 %v217
      %v442 = vpop.f32.mrb[0].mxu0
      %v443 = vadd.f32 %v347, %v442
      %v444 = vpop.f32.mrb[0].mxu0
      %v445 = vpop.f32.mrb[0].mxu0
      %v446 = vpop.f32.mrb[0].mxu0
      %447 = vdwg.mxu0
      %v448 = vld [vmem:[%s199 + $0x6] sm:$0xff]
      %v449 = vld [vmem:[%s199 + $0xe] sm:$0xff]
      %v450 = vld [vmem:[%s199 + $0x16] sm:$0xff]
      %v451 = vpack.c.bf16 %v449, %v448
      %v452 = vpack.c.bf16 %v450, %v450
      %s453 = scalar_lea.vmem %s2, 128
      %v454 = vld [vmem:[%s453] sm:$0xf]
      %v455 = vld [vmem:[%s453 + $0x4] sm:$0xf]
      %v456 = vld [vmem:[%s453 + $0x8] sm:$0xf]
      %v457 = vld [vmem:[%s453 + $0xc] sm:$0xf]
      %v458 = vld [vmem:[%s453 + $0x10] sm:$0xf]
      %v459 = vld [vmem:[%s453 + $0x14] sm:$0xf]
      %v460 = vld [vmem:[%s453 + $0x18] sm:$0xf]
      %v461 = vld [vmem:[%s453 + $0x1c] sm:$0xf]
      %v462 = vld [vmem:[%s453 + $0x20] sm:$0xf]
      %v463 = vld [vmem:[%s453 + $0x24] sm:$0xf]
      %v464 = vld [vmem:[%s453 + $0x28] sm:$0xf]
      %v465 = vld [vmem:[%s453 + $0x2c] sm:$0xf]
      %v466 = vld [vmem:[%s453 + $0x30] sm:$0xf]
      %v467 = vld [vmem:[%s453 + $0x34] sm:$0xf]
      %v468 = vld [vmem:[%s453 + $0x38] sm:$0xf]
      %v469 = vld [vmem:[%s453 + $0x3c] sm:$0xf]
      %v486 = vunpack.c.l.b16 %v454
      %v487 = vunpack.c.l.b16 %v455
      %v488 = vunpack.c.l.b16 %v456
      %v489 = vunpack.c.l.b16 %v457
      %v490 = vunpack.c.l.b16 %v458
      %v491 = vunpack.c.l.b16 %v459
      %v492 = vunpack.c.l.b16 %v460
      %v493 = vunpack.c.l.b16 %v461
      %v494 = vunpack.c.l.b16 %v462
      %v495 = vunpack.c.l.b16 %v463
      %v496 = vunpack.c.l.b16 %v464
      %v497 = vunpack.c.l.b16 %v465
      %v498 = vunpack.c.l.b16 %v466
      %v499 = vunpack.c.l.b16 %v467
      %v500 = vunpack.c.l.b16 %v468
      %v501 = vunpack.c.l.b16 %v469
      %v502 = vpack.c.b16 %v487, %v486
      %v503 = vpack.c.b16 %v489, %v488
      %v504 = vpack.c.b16 %v491, %v490
      %v505 = vpack.c.b16 %v493, %v492
      %v506 = vpack.c.b16 %v495, %v494
      %v507 = vpack.c.b16 %v497, %v496
      %v508 = vpack.c.b16 %v499, %v498
      %v509 = vpack.c.b16 %v501, %v500
      %518 = vmatprep.subr.bf16.mxu0 0
      %519 = vmatpush1.bf16.msra.mxu0 %v502
      %520 = vmatprep.subr.bf16.mxu0 0
      %521 = vmatpush1.bf16.msra.mxu0 %v503
      %522 = vmatprep.subr.bf16.mxu0 0
      %523 = vmatpush1.bf16.msra.mxu0 %v504
      %524 = vmatprep.subr.bf16.mxu0 0
      %525 = vmatpush1.bf16.msra.mxu0 %v505
      %526 = vmatprep.subr.bf16.mxu0 0
      %527 = vmatpush1.bf16.msra.mxu0 %v506
      %528 = vmatprep.subr.bf16.mxu0 0
      %529 = vmatpush1.bf16.msra.mxu0 %v507
      %530 = vmatprep.subr.bf16.mxu0 0
      %531 = vmatpush1.bf16.msra.mxu0 %v508
      %532 = vmatprep.subr.bf16.mxu0 0
      %533 = vmatpush1.bf16.msra.mxu0 %v509
      %534 = vmatprep.subr.bf16.mxu0 0
      %535 = vmatpush1.bf16.msra.mxu0 0
      %536 = vmatprep.subr.bf16.mxu0 0
      %537 = vmatpush1.bf16.msra.mxu0 0
      %538 = vmatprep.subr.bf16.mxu0 0
      %539 = vmatpush1.bf16.msra.mxu0 0
      %540 = vmatprep.subr.bf16.mxu0 0
      %541 = vmatpush1.bf16.msra.mxu0 0
      %542 = vmatprep.subr.bf16.mxu0 0
      %543 = vmatpush1.bf16.msra.mxu0 0
      %544 = vmatprep.subr.bf16.mxu0 0
      %545 = vmatpush1.bf16.msra.mxu0 0
      %546 = vmatprep.subr.bf16.mxu0 0
      %547 = vmatpush1.bf16.msra.mxu0 0
      %548 = vmatprep.subr.bf16.mxu0 0
      %549 = vmatpush1.bf16.msra.mxu0 0
      %550 = vmatprep.mubr.bf16.mxu0 0
      %551 = vmatmul.mubr.bf16.gmra.mrb[0].mxu0 %v451
      %v552 = vpop.f32.mrb[0].mxu0
      %v553 = vadd.f32 0.0, %v552
      %v554 = vpop.f32.mrb[0].mxu0
      %v555 = vpop.f32.mrb[0].mxu0
      %v556 = vadd.f32 0.0, %v555
      %v557 = vpop.f32.mrb[0].mxu0
      %558 = vmatprep.mubr.bf16.mxu0 0
      %559 = vmatmul.mubr.bf16.gmra.mrb[0].mxu0 %v452
      %v560 = vpop.f32.mrb[0].mxu0
      %v561 = vadd.f32 0.0, %v560
      %v562 = vpop.f32.mrb[0].mxu0
      %v563 = vpop.f32.mrb[0].mxu0
      %v564 = vpop.f32.mrb[0].mxu0
      %565 = vdwg.mxu0
      %v566 = vadd.f32 %v435, %v553
      %v567 = vadd.f32 %v438, %v556
      %v568 = vadd.f32 %v443, %v561
      %v569 = vld [vmem:[%s199 + $0x7] sm:$0xff]
      %v570 = vld [vmem:[%s199 + $0xf] sm:$0xff]
      %v571 = vld [vmem:[%s199 + $0x17] sm:$0xff]
      %v572 = vpack.c.bf16 %v570, %v569
      %v573 = vpack.c.bf16 %v571, %v571
      %s574 = scalar_lea.vmem %s2, 192
      %v575 = vld [vmem:[%s574] sm:$0xf]
      %v576 = vld [vmem:[%s574 + $0x4] sm:$0xf]
      %v577 = vld [vmem:[%s574 + $0x8] sm:$0xf]
      %v578 = vld [vmem:[%s574 + $0xc] sm:$0xf]
      %v579 = vld [vmem:[%s574 + $0x10] sm:$0xf]
      %v580 = vld [vmem:[%s574 + $0x14] sm:$0xf]
      %v581 = vld [vmem:[%s574 + $0x18] sm:$0xf]
      %v582 = vld [vmem:[%s574 + $0x1c] sm:$0xf]
      %v583 = vld [vmem:[%s574 + $0x20] sm:$0xf]
      %v584 = vld [vmem:[%s574 + $0x24] sm:$0xf]
      %v585 = vld [vmem:[%s574 + $0x28] sm:$0xf]
      %v586 = vld [vmem:[%s574 + $0x2c] sm:$0xf]
      %v587 = vld [vmem:[%s574 + $0x30] sm:$0xf]
      %v588 = vld [vmem:[%s574 + $0x34] sm:$0xf]
      %v589 = vld [vmem:[%s574 + $0x38] sm:$0xf]
      %v590 = vld [vmem:[%s574 + $0x3c] sm:$0xf]
      %v607 = vunpack.c.l.b16 %v575
      %v608 = vunpack.c.l.b16 %v576
      %v609 = vunpack.c.l.b16 %v577
      %v610 = vunpack.c.l.b16 %v578
      %v611 = vunpack.c.l.b16 %v579
      %v612 = vunpack.c.l.b16 %v580
      %v613 = vunpack.c.l.b16 %v581
      %v614 = vunpack.c.l.b16 %v582
      %v615 = vunpack.c.l.b16 %v583
      %v616 = vunpack.c.l.b16 %v584
      %v617 = vunpack.c.l.b16 %v585
      %v618 = vunpack.c.l.b16 %v586
      %v619 = vunpack.c.l.b16 %v587
      %v620 = vunpack.c.l.b16 %v588
      %v621 = vunpack.c.l.b16 %v589
      %v622 = vunpack.c.l.b16 %v590
      %v623 = vpack.c.b16 %v608, %v607
      %v624 = vpack.c.b16 %v610, %v609
      %v625 = vpack.c.b16 %v612, %v611
      %v626 = vpack.c.b16 %v614, %v613
      %v627 = vpack.c.b16 %v616, %v615
      %v628 = vpack.c.b16 %v618, %v617
      %v629 = vpack.c.b16 %v620, %v619
      %v630 = vpack.c.b16 %v622, %v621
      %639 = vmatprep.subr.bf16.mxu0 0
      %640 = vmatpush1.bf16.msra.mxu0 %v623
      %641 = vmatprep.subr.bf16.mxu0 0
      %642 = vmatpush1.bf16.msra.mxu0 %v624
      %643 = vmatprep.subr.bf16.mxu0 0
      %644 = vmatpush1.bf16.msra.mxu0 %v625
      %645 = vmatprep.subr.bf16.mxu0 0
      %646 = vmatpush1.bf16.msra.mxu0 %v626
      %647 = vmatprep.subr.bf16.mxu0 0
      %648 = vmatpush1.bf16.msra.mxu0 %v627
      %649 = vmatprep.subr.bf16.mxu0 0
      %650 = vmatpush1.bf16.msra.mxu0 %v628
      %651 = vmatprep.subr.bf16.mxu0 0
      %652 = vmatpush1.bf16.msra.mxu0 %v629
      %653 = vmatprep.subr.bf16.mxu0 0
      %654 = vmatpush1.bf16.msra.mxu0 %v630
      %655 = vmatprep.subr.bf16.mxu0 0
      %656 = vmatpush1.bf16.msra.mxu0 0
      %657 = vmatprep.subr.bf16.mxu0 0
      %658 = vmatpush1.bf16.msra.mxu0 0
      %659 = vmatprep.subr.bf16.mxu0 0
      %660 = vmatpush1.bf16.msra.mxu0 0
      %661 = vmatprep.subr.bf16.mxu0 0
      %662 = vmatpush1.bf16.msra.mxu0 0
      %663 = vmatprep.subr.bf16.mxu0 0
      %664 = vmatpush1.bf16.msra.mxu0 0
      %665 = vmatprep.subr.bf16.mxu0 0
      %666 = vmatpush1.bf16.msra.mxu0 0
      %667 = vmatprep.subr.bf16.mxu0 0
      %668 = vmatpush1.bf16.msra.mxu0 0
      %669 = vmatprep.subr.bf16.mxu0 0
      %670 = vmatpush1.bf16.msra.mxu0 0
      %671 = vmatprep.mubr.bf16.mxu0 0
      %672 = vmatmul.mubr.bf16.gmra.mrb[0].mxu0 %v572
      %v673 = vpop.f32.mrb[0].mxu0
      %v674 = vadd.f32 0.0, %v673
      %v675 = vpop.f32.mrb[0].mxu0
      %v676 = vpop.f32.mrb[0].mxu0
      %v677 = vadd.f32 0.0, %v676
      %v678 = vpop.f32.mrb[0].mxu0
      %679 = vmatprep.mubr.bf16.mxu0 0
      %680 = vmatmul.mubr.bf16.gmra.mrb[0].mxu0 %v573
      %v681 = vpop.f32.mrb[0].mxu0
      %v682 = vadd.f32 0.0, %v681
      %v683 = vpop.f32.mrb[0].mxu0
      %v684 = vpop.f32.mrb[0].mxu0
      %v685 = vpop.f32.mrb[0].mxu0
      %686 = vdwg.mxu0
      %v687 = vadd.f32 %v566, %v674
      %v688 = vadd.f32 %v567, %v677
      %v689 = vadd.f32 %v568, %v682
      %690 = vst [vmem:[%s204] sm:$0xff] %v687
      %691 = vst [vmem:[%s204 + $0x20] sm:$0xff] %v688
      %692 = vst [vmem:[%s204 + $0x40] sm:$0xff] %v689
      %694 = vset.pattern.permute.xlu0 0
      %695 = vperm.xlu0 %694, %v210
      %v696 = vpop.permute.xlu0 %695
      %699 = vset.pattern.permute.xlu0 0
      %700 = vperm.xlu0 %699, %v211
      %v701 = vpop.permute.xlu0 %700
      %704 = vset.pattern.permute.xlu0 0
      %705 = vperm.xlu0 %704, %v212
      %v706 = vpop.permute.xlu0 %705
      %v708 = vmul.f32 %v687, %v696
      %v709 = vmul.f32 %v688, %v701
      %v710 = vmul.f32 %v689, %v706
      %v711 = vadd.f32 %v708, %v709
      %v712 = vadd.f32 %v711, %v710
      %v713 = vrot.slane %v712, 4
      %v714 = vadd.f32 %v712, %v713
      %v715 = vrot.slane %v714, 2
      %v716 = vadd.f32 %v714, %v715
      %v717 = vrot.slane %v716, 1
      %v718 = vadd.f32 %v716, %v717
      %v719 = vadd.f32 %v718, 0.0
      %v720 = vmul.f32 %v708, %v687
      %v721 = vmul.f32 %v709, %v688
      %v722 = vmul.f32 %v710, %v689
      %v723 = vadd.f32 %v720, %v721
      %v724 = vadd.f32 %v723, %v722
      %v725 = vrot.slane %v724, 4
      %v726 = vadd.f32 %v724, %v725
      %v727 = vrot.slane %v726, 2
      %v728 = vadd.f32 %v726, %v727
      %v729 = vrot.slane %v728, 1
      %v730 = vadd.f32 %v728, %v729
      %v731 = vadd.f32 %v730, 0.0
      %v732 = vld [vmem:[%s199 + $0x1] sm:$0xff]
      %v733 = vld [vmem:[%s199 + $0x9] sm:$0xff]
      %v734 = vld [vmem:[%s199 + $0x11] sm:$0xff]
      %v735 = vpack.c.bf16 %v733, %v732
      %v736 = vpack.c.bf16 %v734, %v734
      %s737 = scalar_lea.vmem %s2, 256
      %v738 = vld [vmem:[%s737] sm:$0xf]
      %v739 = vld [vmem:[%s737 + $0x4] sm:$0xf]
      %v740 = vld [vmem:[%s737 + $0x8] sm:$0xf]
      %v741 = vld [vmem:[%s737 + $0xc] sm:$0xf]
      %v742 = vld [vmem:[%s737 + $0x10] sm:$0xf]
      %v743 = vld [vmem:[%s737 + $0x14] sm:$0xf]
      %v744 = vld [vmem:[%s737 + $0x18] sm:$0xf]
      %v745 = vld [vmem:[%s737 + $0x1c] sm:$0xf]
      %v746 = vld [vmem:[%s737 + $0x20] sm:$0xf]
      %v747 = vld [vmem:[%s737 + $0x24] sm:$0xf]
      %v748 = vld [vmem:[%s737 + $0x28] sm:$0xf]
      %v749 = vld [vmem:[%s737 + $0x2c] sm:$0xf]
      %v750 = vld [vmem:[%s737 + $0x30] sm:$0xf]
      %v751 = vld [vmem:[%s737 + $0x34] sm:$0xf]
      %v752 = vld [vmem:[%s737 + $0x38] sm:$0xf]
      %v753 = vld [vmem:[%s737 + $0x3c] sm:$0xf]
      %v754 = vld [vmem:[%s199 + $0x2] sm:$0xff]
      %v755 = vld [vmem:[%s199 + $0xa] sm:$0xff]
      %v756 = vld [vmem:[%s199 + $0x12] sm:$0xff]
      %v757 = vpack.c.bf16 %v755, %v754
      %v758 = vpack.c.bf16 %v756, %v756
      %s759 = scalar_lea.vmem %s2, 320
      %v760 = vld [vmem:[%s759] sm:$0xf]
      %v761 = vld [vmem:[%s759 + $0x4] sm:$0xf]
      %v762 = vld [vmem:[%s759 + $0x8] sm:$0xf]
      %v763 = vld [vmem:[%s759 + $0xc] sm:$0xf]
      %v764 = vld [vmem:[%s759 + $0x10] sm:$0xf]
      %v765 = vld [vmem:[%s759 + $0x14] sm:$0xf]
      %v766 = vld [vmem:[%s759 + $0x18] sm:$0xf]
      %v767 = vld [vmem:[%s759 + $0x1c] sm:$0xf]
      %v768 = vld [vmem:[%s759 + $0x20] sm:$0xf]
      %v769 = vld [vmem:[%s759 + $0x24] sm:$0xf]
      %v770 = vld [vmem:[%s759 + $0x28] sm:$0xf]
      %v771 = vld [vmem:[%s759 + $0x2c] sm:$0xf]
      %v772 = vld [vmem:[%s759 + $0x30] sm:$0xf]
      %v773 = vld [vmem:[%s759 + $0x34] sm:$0xf]
      %v774 = vld [vmem:[%s759 + $0x38] sm:$0xf]
      %v775 = vld [vmem:[%s759 + $0x3c] sm:$0xf]
      %v792 = vunpack.c.l.b16 %v760
      %v793 = vunpack.c.l.b16 %v761
      %v794 = vunpack.c.l.b16 %v762
      %v795 = vunpack.c.l.b16 %v763
      %v796 = vunpack.c.l.b16 %v764
      %v797 = vunpack.c.l.b16 %v765
      %v798 = vunpack.c.l.b16 %v766
      %v799 = vunpack.c.l.b16 %v767
      %v800 = vunpack.c.l.b16 %v768
      %v801 = vunpack.c.l.b16 %v769
      %v802 = vunpack.c.l.b16 %v770
      %v803 = vunpack.c.l.b16 %v771
      %v804 = vunpack.c.l.b16 %v772
      %v805 = vunpack.c.l.b16 %v773
      %v806 = vunpack.c.l.b16 %v774
      %v807 = vunpack.c.l.b16 %v775
      %v808 = vpack.c.b16 %v793, %v792
      %v809 = vpack.c.b16 %v795, %v794
      %v810 = vpack.c.b16 %v797, %v796
      %v811 = vpack.c.b16 %v799, %v798
      %v812 = vpack.c.b16 %v801, %v800
      %v813 = vpack.c.b16 %v803, %v802
      %v814 = vpack.c.b16 %v805, %v804
      %v815 = vpack.c.b16 %v807, %v806
      %824 = vmatprep.subr.bf16.mxu0 0
      %825 = vmatpush1.bf16.msra.mxu0 %v808
      %826 = vmatprep.subr.bf16.mxu0 0
      %827 = vmatpush1.bf16.msra.mxu0 %v809
      %828 = vmatprep.subr.bf16.mxu0 0
      %829 = vmatpush1.bf16.msra.mxu0 %v810
      %830 = vmatprep.subr.bf16.mxu0 0
      %831 = vmatpush1.bf16.msra.mxu0 %v811
      %832 = vmatprep.subr.bf16.mxu0 0
      %833 = vmatpush1.bf16.msra.mxu0 %v812
      %834 = vmatprep.subr.bf16.mxu0 0
      %835 = vmatpush1.bf16.msra.mxu0 %v813
      %836 = vmatprep.subr.bf16.mxu0 0
      %837 = vmatpush1.bf16.msra.mxu0 %v814
      %838 = vmatprep.subr.bf16.mxu0 0
      %839 = vmatpush1.bf16.msra.mxu0 %v815
      %840 = vmatprep.subr.bf16.mxu0 0
      %841 = vmatpush1.bf16.msra.mxu0 0
      %842 = vmatprep.subr.bf16.mxu0 0
      %843 = vmatpush1.bf16.msra.mxu0 0
      %844 = vmatprep.subr.bf16.mxu0 0
      %845 = vmatpush1.bf16.msra.mxu0 0
      %846 = vmatprep.subr.bf16.mxu0 0
      %847 = vmatpush1.bf16.msra.mxu0 0
      %848 = vmatprep.subr.bf16.mxu0 0
      %849 = vmatpush1.bf16.msra.mxu0 0
      %850 = vmatprep.subr.bf16.mxu0 0
      %851 = vmatpush1.bf16.msra.mxu0 0
      %852 = vmatprep.subr.bf16.mxu0 0
      %853 = vmatpush1.bf16.msra.mxu0 0
      %854 = vmatprep.subr.bf16.mxu0 0
      %855 = vmatpush1.bf16.msra.mxu0 0
      %856 = vmatprep.mubr.bf16.mxu0 0
      %857 = vmatmul.mubr.bf16.gmra.mrb[0].mxu0 %v757
      %v858 = vpop.f32.mrb[0].mxu0
      %v859 = vadd.f32 0.0, %v858
      %v860 = vpop.f32.mrb[0].mxu0
      %v861 = vpop.f32.mrb[0].mxu0
      %v862 = vadd.f32 0.0, %v861
      %v863 = vpop.f32.mrb[0].mxu0
      %864 = vmatprep.mubr.bf16.mxu0 0
      %865 = vmatmul.mubr.bf16.gmra.mrb[0].mxu0 %v758
      %v866 = vpop.f32.mrb[0].mxu0
      %v867 = vadd.f32 0.0, %v866
      %v868 = vpop.f32.mrb[0].mxu0
      %v869 = vpop.f32.mrb[0].mxu0
      %v870 = vpop.f32.mrb[0].mxu0
      %871 = vdwg.mxu0
      %v888 = vunpack.c.l.b16 %v738
      %v889 = vunpack.c.l.b16 %v739
      %v890 = vunpack.c.l.b16 %v740
      %v891 = vunpack.c.l.b16 %v741
      %v892 = vunpack.c.l.b16 %v742
      %v893 = vunpack.c.l.b16 %v743
      %v894 = vunpack.c.l.b16 %v744
      %v895 = vunpack.c.l.b16 %v745
      %v896 = vunpack.c.l.b16 %v746
      %v897 = vunpack.c.l.b16 %v747
      %v898 = vunpack.c.l.b16 %v748
      %v899 = vunpack.c.l.b16 %v749
      %v900 = vunpack.c.l.b16 %v750
      %v901 = vunpack.c.l.b16 %v751
      %v902 = vunpack.c.l.b16 %v752
      %v903 = vunpack.c.l.b16 %v753
      %v904 = vpack.c.b16 %v889, %v888
      %v905 = vpack.c.b16 %v891, %v890
      %v906 = vpack.c.b16 %v893, %v892
      %v907 = vpack.c.b16 %v895, %v894
      %v908 = vpack.c.b16 %v897, %v896
      %v909 = vpack.c.b16 %v899, %v898
      %v910 = vpack.c.b16 %v901, %v900
      %v911 = vpack.c.b16 %v903, %v902
      %920 = vmatprep.subr.bf16.mxu0 0
      %921 = vmatpush1.bf16.msra.mxu0 %v904
      %922 = vmatprep.subr.bf16.mxu0 0
      %923 = vmatpush1.bf16.msra.mxu0 %v905
      %924 = vmatprep.subr.bf16.mxu0 0
      %925 = vmatpush1.bf16.msra.mxu0 %v906
      %926 = vmatprep.subr.bf16.mxu0 0
      %927 = vmatpush1.bf16.msra.mxu0 %v907
      %928 = vmatprep.subr.bf16.mxu0 0
      %929 = vmatpush1.bf16.msra.mxu0 %v908
      %930 = vmatprep.subr.bf16.mxu0 0
      %931 = vmatpush1.bf16.msra.mxu0 %v909
      %932 = vmatprep.subr.bf16.mxu0 0
      %933 = vmatpush1.bf16.msra.mxu0 %v910
      %934 = vmatprep.subr.bf16.mxu0 0
      %935 = vmatpush1.bf16.msra.mxu0 %v911
      %936 = vmatprep.subr.bf16.mxu0 0
      %937 = vmatpush1.bf16.msra.mxu0 0
      %938 = vmatprep.subr.bf16.mxu0 0
      %939 = vmatpush1.bf16.msra.mxu0 0
      %940 = vmatprep.subr.bf16.mxu0 0
      %941 = vmatpush1.bf16.msra.mxu0 0
      %942 = vmatprep.subr.bf16.mxu0 0
      %943 = vmatpush1.bf16.msra.mxu0 0
      %944 = vmatprep.subr.bf16.mxu0 0
      %945 = vmatpush1.bf16.msra.mxu0 0
      %946 = vmatprep.subr.bf16.mxu0 0
      %947 = vmatpush1.bf16.msra.mxu0 0
      %948 = vmatprep.subr.bf16.mxu0 0
      %949 = vmatpush1.bf16.msra.mxu0 0
      %950 = vmatprep.subr.bf16.mxu0 0
      %951 = vmatpush1.bf16.msra.mxu0 0
      %952 = vmatprep.mubr.bf16.mxu0 0
      %953 = vmatmul.mubr.bf16.gmra.mrb[0].mxu0 %v735
      %v954 = vpop.f32.mrb[0].mxu0
      %v955 = vadd.f32 %v859, %v954
      %v956 = vpop.f32.mrb[0].mxu0
      %v957 = vpop.f32.mrb[0].mxu0
      %v958 = vadd.f32 %v862, %v957
      %v959 = vpop.f32.mrb[0].mxu0
      %960 = vmatprep.mubr.bf16.mxu0 0
      %961 = vmatmul.mubr.bf16.gmra.mrb[0].mxu0 %v736
      %v962 = vpop.f32.mrb[0].mxu0
      %v963 = vadd.f32 %v867, %v962
      %v964 = vpop.f32.mrb[0].mxu0
      %v965 = vpop.f32.mrb[0].mxu0
      %v966 = vpop.f32.mrb[0].mxu0
      %967 = vdwg.mxu0
      %v968 = vld [vmem:[%s199 + $0x7] sm:$0xff]
      %v969 = vld [vmem:[%s199 + $0xf] sm:$0xff]
      %v970 = vld [vmem:[%s199 + $0x17] sm:$0xff]
      %v971 = vpack.c.bf16 %v969, %v968
      %v972 = vpack.c.bf16 %v970, %v970
      %s973 = scalar_lea.vmem %s2, 384
      %v974 = vld [vmem:[%s973] sm:$0xf]
      %v975 = vld [vmem:[%s973 + $0x4] sm:$0xf]
      %v976 = vld [vmem:[%s973 + $0x8] sm:$0xf]
      %v977 = vld [vmem:[%s973 + $0xc] sm:$0xf]
      %v978 = vld [vmem:[%s973 + $0x10] sm:$0xf]
      %v979 = vld [vmem:[%s973 + $0x14] sm:$0xf]
      %v980 = vld [vmem:[%s973 + $0x18] sm:$0xf]
      %v981 = vld [vmem:[%s973 + $0x1c] sm:$0xf]
      %v982 = vld [vmem:[%s973 + $0x20] sm:$0xf]
      %v983 = vld [vmem:[%s973 + $0x24] sm:$0xf]
      %v984 = vld [vmem:[%s973 + $0x28] sm:$0xf]
      %v985 = vld [vmem:[%s973 + $0x2c] sm:$0xf]
      %v986 = vld [vmem:[%s973 + $0x30] sm:$0xf]
      %v987 = vld [vmem:[%s973 + $0x34] sm:$0xf]
      %v988 = vld [vmem:[%s973 + $0x38] sm:$0xf]
      %v989 = vld [vmem:[%s973 + $0x3c] sm:$0xf]
      %v1006 = vunpack.c.l.b16 %v974
      %v1007 = vunpack.c.l.b16 %v975
      %v1008 = vunpack.c.l.b16 %v976
      %v1009 = vunpack.c.l.b16 %v977
      %v1010 = vunpack.c.l.b16 %v978
      %v1011 = vunpack.c.l.b16 %v979
      %v1012 = vunpack.c.l.b16 %v980
      %v1013 = vunpack.c.l.b16 %v981
      %v1014 = vunpack.c.l.b16 %v982
      %v1015 = vunpack.c.l.b16 %v983
      %v1016 = vunpack.c.l.b16 %v984
      %v1017 = vunpack.c.l.b16 %v985
      %v1018 = vunpack.c.l.b16 %v986
      %v1019 = vunpack.c.l.b16 %v987
      %v1020 = vunpack.c.l.b16 %v988
      %v1021 = vunpack.c.l.b16 %v989
      %v1022 = vpack.c.b16 %v1007, %v1006
      %v1023 = vpack.c.b16 %v1009, %v1008
      %v1024 = vpack.c.b16 %v1011, %v1010
      %v1025 = vpack.c.b16 %v1013, %v1012
      %v1026 = vpack.c.b16 %v1015, %v1014
      %v1027 = vpack.c.b16 %v1017, %v1016
      %v1028 = vpack.c.b16 %v1019, %v1018
      %v1029 = vpack.c.b16 %v1021, %v1020
      %1038 = vmatprep.subr.bf16.mxu0 0
      %1039 = vmatpush1.bf16.msra.mxu0 %v1022
      %1040 = vmatprep.subr.bf16.mxu0 0
      %1041 = vmatpush1.bf16.msra.mxu0 %v1023
      %1042 = vmatprep.subr.bf16.mxu0 0
      %1043 = vmatpush1.bf16.msra.mxu0 %v1024
      %1044 = vmatprep.subr.bf16.mxu0 0
      %1045 = vmatpush1.bf16.msra.mxu0 %v1025
      %1046 = vmatprep.subr.bf16.mxu0 0
      %1047 = vmatpush1.bf16.msra.mxu0 %v1026
      %1048 = vmatprep.subr.bf16.mxu0 0
      %1049 = vmatpush1.bf16.msra.mxu0 %v1027
      %1050 = vmatprep.subr.bf16.mxu0 0
      %1051 = vmatpush1.bf16.msra.mxu0 %v1028
      %1052 = vmatprep.subr.bf16.mxu0 0
      %1053 = vmatpush1.bf16.msra.mxu0 %v1029
      %1054 = vmatprep.subr.bf16.mxu0 0
      %1055 = vmatpush1.bf16.msra.mxu0 0
      %1056 = vmatprep.subr.bf16.mxu0 0
      %1057 = vmatpush1.bf16.msra.mxu0 0
      %1058 = vmatprep.subr.bf16.mxu0 0
      %1059 = vmatpush1.bf16.msra.mxu0 0
      %1060 = vmatprep.subr.bf16.mxu0 0
      %1061 = vmatpush1.bf16.msra.mxu0 0
      %1062 = vmatprep.subr.bf16.mxu0 0
      %1063 = vmatpush1.bf16.msra.mxu0 0
      %1064 = vmatprep.subr.bf16.mxu0 0
      %1065 = vmatpush1.bf16.msra.mxu0 0
      %1066 = vmatprep.subr.bf16.mxu0 0
      %1067 = vmatpush1.bf16.msra.mxu0 0
      %1068 = vmatprep.subr.bf16.mxu0 0
      %1069 = vmatpush1.bf16.msra.mxu0 0
      %1070 = vmatprep.mubr.bf16.mxu0 0
      %1071 = vmatmul.mubr.bf16.gmra.mrb[0].mxu0 %v971
      %v1072 = vpop.f32.mrb[0].mxu0
      %v1073 = vadd.f32 0.0, %v1072
      %v1074 = vpop.f32.mrb[0].mxu0
      %v1075 = vpop.f32.mrb[0].mxu0
      %v1076 = vadd.f32 0.0, %v1075
      %v1077 = vpop.f32.mrb[0].mxu0
      %1078 = vmatprep.mubr.bf16.mxu0 0
      %1079 = vmatmul.mubr.bf16.gmra.mrb[0].mxu0 %v972
      %v1080 = vpop.f32.mrb[0].mxu0
      %v1081 = vadd.f32 0.0, %v1080
      %v1082 = vpop.f32.mrb[0].mxu0
      %v1083 = vpop.f32.mrb[0].mxu0
      %v1084 = vpop.f32.mrb[0].mxu0
      %1085 = vdwg.mxu0
      %v1086 = vadd.f32 %v955, %v1073
      %v1087 = vadd.f32 %v958, %v1076
      %v1088 = vadd.f32 %v963, %v1081
      %v1089 = vld [vmem:[%s199 + $0x8] sm:$0xff]
      %v1090 = vld [vmem:[%s199 + $0x10] sm:$0xff]
      %v1091 = vld [vmem:[%s199 + $0x18] sm:$0xff]
      %v1092 = vpack.c.bf16 %v1090, %v1089
      %v1093 = vpack.c.bf16 %v1091, %v1091
      %s1094 = scalar_lea.vmem %s2, 448
      %v1095 = vld [vmem:[%s1094] sm:$0xf]
      %v1096 = vld [vmem:[%s1094 + $0x4] sm:$0xf]
      %v1097 = vld [vmem:[%s1094 + $0x8] sm:$0xf]
      %v1098 = vld [vmem:[%s1094 + $0xc] sm:$0xf]
      %v1099 = vld [vmem:[%s1094 + $0x10] sm:$0xf]
      %v1100 = vld [vmem:[%s1094 + $0x14] sm:$0xf]
      %v1101 = vld [vmem:[%s1094 + $0x18] sm:$0xf]
      %v1102 = vld [vmem:[%s1094 + $0x1c] sm:$0xf]
      %v1103 = vld [vmem:[%s1094 + $0x20] sm:$0xf]
      %v1104 = vld [vmem:[%s1094 + $0x24] sm:$0xf]
      %v1105 = vld [vmem:[%s1094 + $0x28] sm:$0xf]
      %v1106 = vld [vmem:[%s1094 + $0x2c] sm:$0xf]
      %v1107 = vld [vmem:[%s1094 + $0x30] sm:$0xf]
      %v1108 = vld [vmem:[%s1094 + $0x34] sm:$0xf]
      %v1109 = vld [vmem:[%s1094 + $0x38] sm:$0xf]
      %v1110 = vld [vmem:[%s1094 + $0x3c] sm:$0xf]
      %v1127 = vunpack.c.l.b16 %v1095
      %v1128 = vunpack.c.l.b16 %v1096
      %v1129 = vunpack.c.l.b16 %v1097
      %v1130 = vunpack.c.l.b16 %v1098
      %v1131 = vunpack.c.l.b16 %v1099
      %v1132 = vunpack.c.l.b16 %v1100
      %v1133 = vunpack.c.l.b16 %v1101
      %v1134 = vunpack.c.l.b16 %v1102
      %v1135 = vunpack.c.l.b16 %v1103
      %v1136 = vunpack.c.l.b16 %v1104
      %v1137 = vunpack.c.l.b16 %v1105
      %v1138 = vunpack.c.l.b16 %v1106
      %v1139 = vunpack.c.l.b16 %v1107
      %v1140 = vunpack.c.l.b16 %v1108
      %v1141 = vunpack.c.l.b16 %v1109
      %v1142 = vunpack.c.l.b16 %v1110
      %v1143 = vpack.c.b16 %v1128, %v1127
      %v1144 = vpack.c.b16 %v1130, %v1129
      %v1145 = vpack.c.b16 %v1132, %v1131
      %v1146 = vpack.c.b16 %v1134, %v1133
      %v1147 = vpack.c.b16 %v1136, %v1135
      %v1148 = vpack.c.b16 %v1138, %v1137
      %v1149 = vpack.c.b16 %v1140, %v1139
      %v1150 = vpack.c.b16 %v1142, %v1141
      %1159 = vmatprep.subr.bf16.mxu0 0
      %1160 = vmatpush1.bf16.msra.mxu0 %v1143
      %1161 = vmatprep.subr.bf16.mxu0 0
      %1162 = vmatpush1.bf16.msra.mxu0 %v1144
      %1163 = vmatprep.subr.bf16.mxu0 0
      %1164 = vmatpush1.bf16.msra.mxu0 %v1145
      %1165 = vmatprep.subr.bf16.mxu0 0
      %1166 = vmatpush1.bf16.msra.mxu0 %v1146
      %1167 = vmatprep.subr.bf16.mxu0 0
      %1168 = vmatpush1.bf16.msra.mxu0 %v1147
      %1169 = vmatprep.subr.bf16.mxu0 0
      %1170 = vmatpush1.bf16.msra.mxu0 %v1148
      %1171 = vmatprep.subr.bf16.mxu0 0
      %1172 = vmatpush1.bf16.msra.mxu0 %v1149
      %1173 = vmatprep.subr.bf16.mxu0 0
      %1174 = vmatpush1.bf16.msra.mxu0 %v1150
      %1175 = vmatprep.subr.bf16.mxu0 0
      %1176 = vmatpush1.bf16.msra.mxu0 0
      %1177 = vmatprep.subr.bf16.mxu0 0
      %1178 = vmatpush1.bf16.msra.mxu0 0
      %1179 = vmatprep.subr.bf16.mxu0 0
      %1180 = vmatpush1.bf16.msra.mxu0 0
      %1181 = vmatprep.subr.bf16.mxu0 0
      %1182 = vmatpush1.bf16.msra.mxu0 0
      %1183 = vmatprep.subr.bf16.mxu0 0
      %1184 = vmatpush1.bf16.msra.mxu0 0
      %1185 = vmatprep.subr.bf16.mxu0 0
      %1186 = vmatpush1.bf16.msra.mxu0 0
      %1187 = vmatprep.subr.bf16.mxu0 0
      %1188 = vmatpush1.bf16.msra.mxu0 0
      %1189 = vmatprep.subr.bf16.mxu0 0
      %1190 = vmatpush1.bf16.msra.mxu0 0
      %1191 = vmatprep.mubr.bf16.mxu0 0
      %1192 = vmatmul.mubr.bf16.gmra.mrb[0].mxu0 %v1092
      %v1193 = vpop.f32.mrb[0].mxu0
      %v1194 = vadd.f32 0.0, %v1193
      %v1195 = vpop.f32.mrb[0].mxu0
      %v1196 = vpop.f32.mrb[0].mxu0
      %v1197 = vadd.f32 0.0, %v1196
      %v1198 = vpop.f32.mrb[0].mxu0
      %1199 = vmatprep.mubr.bf16.mxu0 0
      %1200 = vmatmul.mubr.bf16.gmra.mrb[0].mxu0 %v1093
      %v1201 = vpop.f32.mrb[0].mxu0
      %v1202 = vadd.f32 0.0, %v1201
      %v1203 = vpop.f32.mrb[0].mxu0
      %v1204 = vpop.f32.mrb[0].mxu0
      %v1205 = vpop.f32.mrb[0].mxu0
      %1206 = vdwg.mxu0
      %v1207 = vadd.f32 %v1086, %v1194
      %v1208 = vadd.f32 %v1087, %v1197
      %v1209 = vadd.f32 %v1088, %v1202
      %1210 = vst [vmem:[%s204 + $0x8] sm:$0xff] %v1207
      %1211 = vst [vmem:[%s204 + $0x28] sm:$0xff] %v1208
      %1212 = vst [vmem:[%s204 + $0x48] sm:$0xff] %v1209
      %v1213 = vmul.f32 %v1207, %v696
      %v1214 = vmul.f32 %v1208, %v701
      %v1215 = vmul.f32 %v1209, %v706
      %v1216 = vadd.f32 %v1213, %v1214
      %v1217 = vadd.f32 %v1216, %v1215
      %v1218 = vrot.slane %v1217, 4
      %v1219 = vadd.f32 %v1217, %v1218
      %v1220 = vrot.slane %v1219, 2
      %v1221 = vadd.f32 %v1219, %v1220
      %v1222 = vrot.slane %v1221, 1
      %v1223 = vadd.f32 %v1221, %v1222
      %v1224 = vadd.f32 %v719, %v1223
      %v1225 = vmul.f32 %v1213, %v1207
      %v1226 = vmul.f32 %v1214, %v1208
      %v1227 = vmul.f32 %v1215, %v1209
      %v1228 = vadd.f32 %v1225, %v1226
      %v1229 = vadd.f32 %v1228, %v1227
      %v1230 = vrot.slane %v1229, 4
      %v1231 = vadd.f32 %v1229, %v1230
      %v1232 = vrot.slane %v1231, 2
      %v1233 = vadd.f32 %v1231, %v1232
      %v1234 = vrot.slane %v1233, 1
      %v1235 = vadd.f32 %v1233, %v1234
      %v1236 = vadd.f32 %v731, %v1235
      %v1237 = vld [vmem:[%s199 + $0x6] sm:$0xff]
      %v1238 = vld [vmem:[%s199 + $0xe] sm:$0xff]
      %v1239 = vld [vmem:[%s199 + $0x16] sm:$0xff]
      %v1240 = vpack.c.bf16 %v1238, %v1237
      %v1241 = vpack.c.bf16 %v1239, %v1239
      %s1242 = scalar_lea.vmem %s2, 512
      %v1243 = vld [vmem:[%s1242] sm:$0xf]
      %v1244 = vld [vmem:[%s1242 + $0x4] sm:$0xf]
      %v1245 = vld [vmem:[%s1242 + $0x8] sm:$0xf]
      %v1246 = vld [vmem:[%s1242 + $0xc] sm:$0xf]
      %v1247 = vld [vmem:[%s1242 + $0x10] sm:$0xf]
      %v1248 = vld [vmem:[%s1242 + $0x14] sm:$0xf]
      %v1249 = vld [vmem:[%s1242 + $0x18] sm:$0xf]
      %v1250 = vld [vmem:[%s1242 + $0x1c] sm:$0xf]
      %v1251 = vld [vmem:[%s1242 + $0x20] sm:$0xf]
      %v1252 = vld [vmem:[%s1242 + $0x24] sm:$0xf]
      %v1253 = vld [vmem:[%s1242 + $0x28] sm:$0xf]
      %v1254 = vld [vmem:[%s1242 + $0x2c] sm:$0xf]
      %v1255 = vld [vmem:[%s1242 + $0x30] sm:$0xf]
      %v1256 = vld [vmem:[%s1242 + $0x34] sm:$0xf]
      %v1257 = vld [vmem:[%s1242 + $0x38] sm:$0xf]
      %v1258 = vld [vmem:[%s1242 + $0x3c] sm:$0xf]
      %v1259 = vld [vmem:[%s199 + $0x7] sm:$0xff]
      %v1260 = vld [vmem:[%s199 + $0xf] sm:$0xff]
      %v1261 = vld [vmem:[%s199 + $0x17] sm:$0xff]
      %v1262 = vpack.c.bf16 %v1260, %v1259
      %v1263 = vpack.c.bf16 %v1261, %v1261
      %s1264 = scalar_lea.vmem %s2, 576
      %v1265 = vld [vmem:[%s1264] sm:$0xf]
      %v1266 = vld [vmem:[%s1264 + $0x4] sm:$0xf]
      %v1267 = vld [vmem:[%s1264 + $0x8] sm:$0xf]
      %v1268 = vld [vmem:[%s1264 + $0xc] sm:$0xf]
      %v1269 = vld [vmem:[%s1264 + $0x10] sm:$0xf]
      %v1270 = vld [vmem:[%s1264 + $0x14] sm:$0xf]
      %v1271 = vld [vmem:[%s1264 + $0x18] sm:$0xf]
      %v1272 = vld [vmem:[%s1264 + $0x1c] sm:$0xf]
      %v1273 = vld [vmem:[%s1264 + $0x20] sm:$0xf]
      %v1274 = vld [vmem:[%s1264 + $0x24] sm:$0xf]
      %v1275 = vld [vmem:[%s1264 + $0x28] sm:$0xf]
      %v1276 = vld [vmem:[%s1264 + $0x2c] sm:$0xf]
      %v1277 = vld [vmem:[%s1264 + $0x30] sm:$0xf]
      %v1278 = vld [vmem:[%s1264 + $0x34] sm:$0xf]
      %v1279 = vld [vmem:[%s1264 + $0x38] sm:$0xf]
      %v1280 = vld [vmem:[%s1264 + $0x3c] sm:$0xf]
      %v1297 = vunpack.c.l.b16 %v1265
      %v1298 = vunpack.c.l.b16 %v1266
      %v1299 = vunpack.c.l.b16 %v1267
      %v1300 = vunpack.c.l.b16 %v1268
      %v1301 = vunpack.c.l.b16 %v1269
      %v1302 = vunpack.c.l.b16 %v1270
      %v1303 = vunpack.c.l.b16 %v1271
      %v1304 = vunpack.c.l.b16 %v1272
      %v1305 = vunpack.c.l.b16 %v1273
      %v1306 = vunpack.c.l.b16 %v1274
      %v1307 = vunpack.c.l.b16 %v1275
      %v1308 = vunpack.c.l.b16 %v1276
      %v1309 = vunpack.c.l.b16 %v1277
      %v1310 = vunpack.c.l.b16 %v1278
      %v1311 = vunpack.c.l.b16 %v1279
      %v1312 = vunpack.c.l.b16 %v1280
      %v1313 = vpack.c.b16 %v1298, %v1297
      %v1314 = vpack.c.b16 %v1300, %v1299
      %v1315 = vpack.c.b16 %v1302, %v1301
      %v1316 = vpack.c.b16 %v1304, %v1303
      %v1317 = vpack.c.b16 %v1306, %v1305
      %v1318 = vpack.c.b16 %v1308, %v1307
      %v1319 = vpack.c.b16 %v1310, %v1309
      %v1320 = vpack.c.b16 %v1312, %v1311
      %1329 = vmatprep.subr.bf16.mxu0 0
      %1330 = vmatpush1.bf16.msra.mxu0 %v1313
      %1331 = vmatprep.subr.bf16.mxu0 0
      %1332 = vmatpush1.bf16.msra.mxu0 %v1314
      %1333 = vmatprep.subr.bf16.mxu0 0
      %1334 = vmatpush1.bf16.msra.mxu0 %v1315
      %1335 = vmatprep.subr.bf16.mxu0 0
      %1336 = vmatpush1.bf16.msra.mxu0 %v1316
      %1337 = vmatprep.subr.bf16.mxu0 0
      %1338 = vmatpush1.bf16.msra.mxu0 %v1317
      %1339 = vmatprep.subr.bf16.mxu0 0
      %1340 = vmatpush1.bf16.msra.mxu0 %v1318
      %1341 = vmatprep.subr.bf16.mxu0 0
      %1342 = vmatpush1.bf16.msra.mxu0 %v1319
      %1343 = vmatprep.subr.bf16.mxu0 0
      %1344 = vmatpush1.bf16.msra.mxu0 %v1320
      %1345 = vmatprep.subr.bf16.mxu0 0
      %1346 = vmatpush1.bf16.msra.mxu0 0
      %1347 = vmatprep.subr.bf16.mxu0 0
      %1348 = vmatpush1.bf16.msra.mxu0 0
      %1349 = vmatprep.subr.bf16.mxu0 0
      %1350 = vmatpush1.bf16.msra.mxu0 0
      %1351 = vmatprep.subr.bf16.mxu0 0
      %1352 = vmatpush1.bf16.msra.mxu0 0
      %1353 = vmatprep.subr.bf16.mxu0 0
      %1354 = vmatpush1.bf16.msra.mxu0 0
      %1355 = vmatprep.subr.bf16.mxu0 0
      %1356 = vmatpush1.bf16.msra.mxu0 0
      %1357 = vmatprep.subr.bf16.mxu0 0
      %1358 = vmatpush1.bf16.msra.mxu0 0
      %1359 = vmatprep.subr.bf16.mxu0 0
      %1360 = vmatpush1.bf16.msra.mxu0 0
      %1361 = vmatprep.mubr.bf16.mxu0 0
      %1362 = vmatmul.mubr.bf16.gmra.mrb[0].mxu0 %v1262
      %v1363 = vpop.f32.mrb[0].mxu0
      %v1364 = vadd.f32 0.0, %v1363
      %v1365 = vpop.f32.mrb[0].mxu0
      %v1366 = vpop.f32.mrb[0].mxu0
      %v1367 = vadd.f32 0.0, %v1366
      %v1368 = vpop.f32.mrb[0].mxu0
      %1369 = vmatprep.mubr.bf16.mxu0 0
      %1370 = vmatmul.mubr.bf16.gmra.mrb[0].mxu0 %v1263
      %v1371 = vpop.f32.mrb[0].mxu0
      %v1372 = vadd.f32 0.0, %v1371
      %v1373 = vpop.f32.mrb[0].mxu0
      %v1374 = vpop.f32.mrb[0].mxu0
      %v1375 = vpop.f32.mrb[0].mxu0
      %1376 = vdwg.mxu0
      %v1393 = vunpack.c.l.b16 %v1243
      %v1394 = vunpack.c.l.b16 %v1244
      %v1395 = vunpack.c.l.b16 %v1245
      %v1396 = vunpack.c.l.b16 %v1246
      %v1397 = vunpack.c.l.b16 %v1247
      %v1398 = vunpack.c.l.b16 %v1248
      %v1399 = vunpack.c.l.b16 %v1249
      %v1400 = vunpack.c.l.b16 %v1250
      %v1401 = vunpack.c.l.b16 %v1251
      %v1402 = vunpack.c.l.b16 %v1252
      %v1403 = vunpack.c.l.b16 %v1253
      %v1404 = vunpack.c.l.b16 %v1254
      %v1405 = vunpack.c.l.b16 %v1255
      %v1406 = vunpack.c.l.b16 %v1256
      %v1407 = vunpack.c.l.b16 %v1257
      %v1408 = vunpack.c.l.b16 %v1258
      %v1409 = vpack.c.b16 %v1394, %v1393
      %v1410 = vpack.c.b16 %v1396, %v1395
      %v1411 = vpack.c.b16 %v1398, %v1397
      %v1412 = vpack.c.b16 %v1400, %v1399
      %v1413 = vpack.c.b16 %v1402, %v1401
      %v1414 = vpack.c.b16 %v1404, %v1403
      %v1415 = vpack.c.b16 %v1406, %v1405
      %v1416 = vpack.c.b16 %v1408, %v1407
      %1425 = vmatprep.subr.bf16.mxu0 0
      %1426 = vmatpush1.bf16.msra.mxu0 %v1409
      %1427 = vmatprep.subr.bf16.mxu0 0
      %1428 = vmatpush1.bf16.msra.mxu0 %v1410
      %1429 = vmatprep.subr.bf16.mxu0 0
      %1430 = vmatpush1.bf16.msra.mxu0 %v1411
      %1431 = vmatprep.subr.bf16.mxu0 0
      %1432 = vmatpush1.bf16.msra.mxu0 %v1412
      %1433 = vmatprep.subr.bf16.mxu0 0
      %1434 = vmatpush1.bf16.msra.mxu0 %v1413
      %1435 = vmatprep.subr.bf16.mxu0 0
      %1436 = vmatpush1.bf16.msra.mxu0 %v1414
      %1437 = vmatprep.subr.bf16.mxu0 0
      %1438 = vmatpush1.bf16.msra.mxu0 %v1415
      %1439 = vmatprep.subr.bf16.mxu0 0
      %1440 = vmatpush1.bf16.msra.mxu0 %v1416
      %1441 = vmatprep.subr.bf16.mxu0 0
      %1442 = vmatpush1.bf16.msra.mxu0 0
      %1443 = vmatprep.subr.bf16.mxu0 0
      %1444 = vmatpush1.bf16.msra.mxu0 0
      %1445 = vmatprep.subr.bf16.mxu0 0
      %1446 = vmatpush1.bf16.msra.mxu0 0
      %1447 = vmatprep.subr.bf16.mxu0 0
      %1448 = vmatpush1.bf16.msra.mxu0 0
      %1449 = vmatprep.subr.bf16.mxu0 0
      %1450 = vmatpush1.bf16.msra.mxu0 0
      %1451 = vmatprep.subr.bf16.mxu0 0
      %1452 = vmatpush1.bf16.msra.mxu0 0
      %1453 = vmatprep.subr.bf16.mxu0 0
      %1454 = vmatpush1.bf16.msra.mxu0 0
      %1455 = vmatprep.subr.bf16.mxu0 0
      %1456 = vmatpush1.bf16.msra.mxu0 0
      %1457 = vmatprep.mubr.bf16.mxu0 0
      %1458 = vmatmul.mubr.bf16.gmra.mrb[0].mxu0 %v1240
      %v1459 = vpop.f32.mrb[0].mxu0
      %v1460 = vadd.f32 %v1364, %v1459
      %v1461 = vpop.f32.mrb[0].mxu0
      %v1462 = vpop.f32.mrb[0].mxu0
      %v1463 = vadd.f32 %v1367, %v1462
      %v1464 = vpop.f32.mrb[0].mxu0
      %1465 = vmatprep.mubr.bf16.mxu0 0
      %1466 = vmatmul.mubr.bf16.gmra.mrb[0].mxu0 %v1241
      %v1467 = vpop.f32.mrb[0].mxu0
      %v1468 = vadd.f32 %v1372, %v1467
      %v1469 = vpop.f32.mrb[0].mxu0
      %v1470 = vpop.f32.mrb[0].mxu0
      %v1471 = vpop.f32.mrb[0].mxu0
      %1472 = vdwg.mxu0
      %v1473 = vld [vmem:[%s199 + $0xc] sm:$0xff]
      %v1474 = vld [vmem:[%s199 + $0x14] sm:$0xff]
      %v1475 = vld [vmem:[%s199 + $0x1c] sm:$0xff]
      %v1476 = vpack.c.bf16 %v1474, %v1473
      %v1477 = vpack.c.bf16 %v1475, %v1475
      %s1478 = scalar_lea.vmem %s2, 640
      %v1479 = vld [vmem:[%s1478] sm:$0xf]
      %v1480 = vld [vmem:[%s1478 + $0x4] sm:$0xf]
      %v1481 = vld [vmem:[%s1478 + $0x8] sm:$0xf]
      %v1482 = vld [vmem:[%s1478 + $0xc] sm:$0xf]
      %v1483 = vld [vmem:[%s1478 + $0x10] sm:$0xf]
      %v1484 = vld [vmem:[%s1478 + $0x14] sm:$0xf]
      %v1485 = vld [vmem:[%s1478 + $0x18] sm:$0xf]
      %v1486 = vld [vmem:[%s1478 + $0x1c] sm:$0xf]
      %v1487 = vld [vmem:[%s1478 + $0x20] sm:$0xf]
      %v1488 = vld [vmem:[%s1478 + $0x24] sm:$0xf]
      %v1489 = vld [vmem:[%s1478 + $0x28] sm:$0xf]
      %v1490 = vld [vmem:[%s1478 + $0x2c] sm:$0xf]
      %v1491 = vld [vmem:[%s1478 + $0x30] sm:$0xf]
      %v1492 = vld [vmem:[%s1478 + $0x34] sm:$0xf]
      %v1493 = vld [vmem:[%s1478 + $0x38] sm:$0xf]
      %v1494 = vld [vmem:[%s1478 + $0x3c] sm:$0xf]
      %v1511 = vunpack.c.l.b16 %v1479
      %v1512 = vunpack.c.l.b16 %v1480
      %v1513 = vunpack.c.l.b16 %v1481
      %v1514 = vunpack.c.l.b16 %v1482
      %v1515 = vunpack.c.l.b16 %v1483
      %v1516 = vunpack.c.l.b16 %v1484
      %v1517 = vunpack.c.l.b16 %v1485
      %v1518 = vunpack.c.l.b16 %v1486
      %v1519 = vunpack.c.l.b16 %v1487
      %v1520 = vunpack.c.l.b16 %v1488
      %v1521 = vunpack.c.l.b16 %v1489
      %v1522 = vunpack.c.l.b16 %v1490
      %v1523 = vunpack.c.l.b16 %v1491
      %v1524 = vunpack.c.l.b16 %v1492
      %v1525 = vunpack.c.l.b16 %v1493
      %v1526 = vunpack.c.l.b16 %v1494
      %v1527 = vpack.c.b16 %v1512, %v1511
      %v1528 = vpack.c.b16 %v1514, %v1513
      %v1529 = vpack.c.b16 %v1516, %v1515
      %v1530 = vpack.c.b16 %v1518, %v1517
      %v1531 = vpack.c.b16 %v1520, %v1519
      %v1532 = vpack.c.b16 %v1522, %v1521
      %v1533 = vpack.c.b16 %v1524, %v1523
      %v1534 = vpack.c.b16 %v1526, %v1525
      %1543 = vmatprep.subr.bf16.mxu0 0
      %1544 = vmatpush1.bf16.msra.mxu0 %v1527
      %1545 = vmatprep.subr.bf16.mxu0 0
      %1546 = vmatpush1.bf16.msra.mxu0 %v1528
      %1547 = vmatprep.subr.bf16.mxu0 0
      %1548 = vmatpush1.bf16.msra.mxu0 %v1529
      %1549 = vmatprep.subr.bf16.mxu0 0
      %1550 = vmatpush1.bf16.msra.mxu0 %v1530
      %1551 = vmatprep.subr.bf16.mxu0 0
      %1552 = vmatpush1.bf16.msra.mxu0 %v1531
      %1553 = vmatprep.subr.bf16.mxu0 0
      %1554 = vmatpush1.bf16.msra.mxu0 %v1532
      %1555 = vmatprep.subr.bf16.mxu0 0
      %1556 = vmatpush1.bf16.msra.mxu0 %v1533
      %1557 = vmatprep.subr.bf16.mxu0 0
      %1558 = vmatpush1.bf16.msra.mxu0 %v1534
      %1559 = vmatprep.subr.bf16.mxu0 0
      %1560 = vmatpush1.bf16.msra.mxu0 0
      %1561 = vmatprep.subr.bf16.mxu0 0
      %1562 = vmatpush1.bf16.msra.mxu0 0
      %1563 = vmatprep.subr.bf16.mxu0 0
      %1564 = vmatpush1.bf16.msra.mxu0 0
      %1565 = vmatprep.subr.bf16.mxu0 0
      %1566 = vmatpush1.bf16.msra.mxu0 0
      %1567 = vmatprep.subr.bf16.mxu0 0
      %1568 = vmatpush1.bf16.msra.mxu0 0
      %1569 = vmatprep.subr.bf16.mxu0 0
      %1570 = vmatpush1.bf16.msra.mxu0 0
      %1571 = vmatprep.subr.bf16.mxu0 0
      %1572 = vmatpush1.bf16.msra.mxu0 0
      %1573 = vmatprep.subr.bf16.mxu0 0
      %1574 = vmatpush1.bf16.msra.mxu0 0
      %1575 = vmatprep.mubr.bf16.mxu0 0
      %1576 = vmatmul.mubr.bf16.gmra.mrb[0].mxu0 %v1476
      %v1577 = vpop.f32.mrb[0].mxu0
      %v1578 = vadd.f32 0.0, %v1577
      %v1579 = vpop.f32.mrb[0].mxu0
      %v1580 = vpop.f32.mrb[0].mxu0
      %v1581 = vadd.f32 0.0, %v1580
      %v1582 = vpop.f32.mrb[0].mxu0
      %1583 = vmatprep.mubr.bf16.mxu0 0
      %1584 = vmatmul.mubr.bf16.gmra.mrb[0].mxu0 %v1477
      %v1585 = vpop.f32.mrb[0].mxu0
      %v1586 = vadd.f32 0.0, %v1585
      %v1587 = vpop.f32.mrb[0].mxu0
      %v1588 = vpop.f32.mrb[0].mxu0
      %v1589 = vpop.f32.mrb[0].mxu0
      %1590 = vdwg.mxu0
      %v1591 = vadd.f32 %v1460, %v1578
      %v1592 = vadd.f32 %v1463, %v1581
      %v1593 = vadd.f32 %v1468, %v1586
      %v1594 = vld [vmem:[%s199 + $0xd] sm:$0xff]
      %v1595 = vld [vmem:[%s199 + $0x15] sm:$0xff]
      %v1596 = vld [vmem:[%s199 + $0x1d] sm:$0xff]
      %v1597 = vpack.c.bf16 %v1595, %v1594
      %v1598 = vpack.c.bf16 %v1596, %v1596
      %s1599 = scalar_lea.vmem %s2, 704
      %v1600 = vld [vmem:[%s1599] sm:$0xf]
      %v1601 = vld [vmem:[%s1599 + $0x4] sm:$0xf]
      %v1602 = vld [vmem:[%s1599 + $0x8] sm:$0xf]
      %v1603 = vld [vmem:[%s1599 + $0xc] sm:$0xf]
      %v1604 = vld [vmem:[%s1599 + $0x10] sm:$0xf]
      %v1605 = vld [vmem:[%s1599 + $0x14] sm:$0xf]
      %v1606 = vld [vmem:[%s1599 + $0x18] sm:$0xf]
      %v1607 = vld [vmem:[%s1599 + $0x1c] sm:$0xf]
      %v1608 = vld [vmem:[%s1599 + $0x20] sm:$0xf]
      %v1609 = vld [vmem:[%s1599 + $0x24] sm:$0xf]
      %v1610 = vld [vmem:[%s1599 + $0x28] sm:$0xf]
      %v1611 = vld [vmem:[%s1599 + $0x2c] sm:$0xf]
      %v1612 = vld [vmem:[%s1599 + $0x30] sm:$0xf]
      %v1613 = vld [vmem:[%s1599 + $0x34] sm:$0xf]
      %v1614 = vld [vmem:[%s1599 + $0x38] sm:$0xf]
      %v1615 = vld [vmem:[%s1599 + $0x3c] sm:$0xf]
      %v1632 = vunpack.c.l.b16 %v1600
      %v1633 = vunpack.c.l.b16 %v1601
      %v1634 = vunpack.c.l.b16 %v1602
      %v1635 = vunpack.c.l.b16 %v1603
      %v1636 = vunpack.c.l.b16 %v1604
      %v1637 = vunpack.c.l.b16 %v1605
      %v1638 = vunpack.c.l.b16 %v1606
      %v1639 = vunpack.c.l.b16 %v1607
      %v1640 = vunpack.c.l.b16 %v1608
      %v1641 = vunpack.c.l.b16 %v1609
      %v1642 = vunpack.c.l.b16 %v1610
      %v1643 = vunpack.c.l.b16 %v1611
      %v1644 = vunpack.c.l.b16 %v1612
      %v1645 = vunpack.c.l.b16 %v1613
      %v1646 = vunpack.c.l.b16 %v1614
      %v1647 = vunpack.c.l.b16 %v1615
      %v1648 = vpack.c.b16 %v1633, %v1632
      %v1649 = vpack.c.b16 %v1635, %v1634
      %v1650 = vpack.c.b16 %v1637, %v1636
      %v1651 = vpack.c.b16 %v1639, %v1638
      %v1652 = vpack.c.b16 %v1641, %v1640
      %v1653 = vpack.c.b16 %v1643, %v1642
      %v1654 = vpack.c.b16 %v1645, %v1644
      %v1655 = vpack.c.b16 %v1647, %v1646
      %1664 = vmatprep.subr.bf16.mxu0 0
      %1665 = vmatpush1.bf16.msra.mxu0 %v1648
      %1666 = vmatprep.subr.bf16.mxu0 0
      %1667 = vmatpush1.bf16.msra.mxu0 %v1649
      %1668 = vmatprep.subr.bf16.mxu0 0
      %1669 = vmatpush1.bf16.msra.mxu0 %v1650
      %1670 = vmatprep.subr.bf16.mxu0 0
      %1671 = vmatpush1.bf16.msra.mxu0 %v1651
      %1672 = vmatprep.subr.bf16.mxu0 0
      %1673 = vmatpush1.bf16.msra.mxu0 %v1652
      %1674 = vmatprep.subr.bf16.mxu0 0
      %1675 = vmatpush1.bf16.msra.mxu0 %v1653
      %1676 = vmatprep.subr.bf16.mxu0 0
      %1677 = vmatpush1.bf16.msra.mxu0 %v1654
      %1678 = vmatprep.subr.bf16.mxu0 0
      %1679 = vmatpush1.bf16.msra.mxu0 %v1655
      %1680 = vmatprep.subr.bf16.mxu0 0
      %1681 = vmatpush1.bf16.msra.mxu0 0
      %1682 = vmatprep.subr.bf16.mxu0 0
      %1683 = vmatpush1.bf16.msra.mxu0 0
      %1684 = vmatprep.subr.bf16.mxu0 0
      %1685 = vmatpush1.bf16.msra.mxu0 0
      %1686 = vmatprep.subr.bf16.mxu0 0
      %1687 = vmatpush1.bf16.msra.mxu0 0
      %1688 = vmatprep.subr.bf16.mxu0 0
      %1689 = vmatpush1.bf16.msra.mxu0 0
      %1690 = vmatprep.subr.bf16.mxu0 0
      %1691 = vmatpush1.bf16.msra.mxu0 0
      %1692 = vmatprep.subr.bf16.mxu0 0
      %1693 = vmatpush1.bf16.msra.mxu0 0
      %1694 = vmatprep.subr.bf16.mxu0 0
      %1695 = vmatpush1.bf16.msra.mxu0 0
      %1696 = vmatprep.mubr.bf16.mxu0 0
      %1697 = vmatmul.mubr.bf16.gmra.mrb[0].mxu0 %v1597
      %v1698 = vpop.f32.mrb[0].mxu0
      %v1699 = vadd.f32 0.0, %v1698
      %v1700 = vpop.f32.mrb[0].mxu0
      %v1701 = vpop.f32.mrb[0].mxu0
      %v1702 = vadd.f32 0.0, %v1701
      %v1703 = vpop.f32.mrb[0].mxu0
      %1704 = vmatprep.mubr.bf16.mxu0 0
      %1705 = vmatmul.mubr.bf16.gmra.mrb[0].mxu0 %v1598
      %v1706 = vpop.f32.mrb[0].mxu0
      %v1707 = vadd.f32 0.0, %v1706
      %v1708 = vpop.f32.mrb[0].mxu0
      %v1709 = vpop.f32.mrb[0].mxu0
      %v1710 = vpop.f32.mrb[0].mxu0
      %1711 = vdwg.mxu0
      %v1712 = vadd.f32 %v1591, %v1699
      %v1713 = vadd.f32 %v1592, %v1702
      %v1714 = vadd.f32 %v1593, %v1707
      %1715 = vst [vmem:[%s204 + $0x10] sm:$0xff] %v1712
      %1716 = vst [vmem:[%s204 + $0x30] sm:$0xff] %v1713
      %1717 = vst [vmem:[%s204 + $0x50] sm:$0xff] %v1714
      %v1718 = vmul.f32 %v1712, %v696
      %v1719 = vmul.f32 %v1713, %v701
      %v1720 = vmul.f32 %v1714, %v706
      %v1721 = vadd.f32 %v1718, %v1719
      %v1722 = vadd.f32 %v1721, %v1720
      %v1723 = vrot.slane %v1722, 4
      %v1724 = vadd.f32 %v1722, %v1723
      %v1725 = vrot.slane %v1724, 2
      %v1726 = vadd.f32 %v1724, %v1725
      %v1727 = vrot.slane %v1726, 1
      %v1728 = vadd.f32 %v1726, %v1727
      %v1729 = vadd.f32 %v1224, %v1728
      %v1730 = vmul.f32 %v1718, %v1712
      %v1731 = vmul.f32 %v1719, %v1713
      %v1732 = vmul.f32 %v1720, %v1714
      %v1733 = vadd.f32 %v1730, %v1731
      %v1734 = vadd.f32 %v1733, %v1732
      %v1735 = vrot.slane %v1734, 4
      %v1736 = vadd.f32 %v1734, %v1735
      %v1737 = vrot.slane %v1736, 2
      %v1738 = vadd.f32 %v1736, %v1737
      %v1739 = vrot.slane %v1738, 1
      %v1740 = vadd.f32 %v1738, %v1739
      %v1741 = vadd.f32 %v1236, %v1740
      %v1742 = vld [vmem:[%s199 + $0x7] sm:$0xff]
      %v1743 = vld [vmem:[%s199 + $0xf] sm:$0xff]
      %v1744 = vld [vmem:[%s199 + $0x17] sm:$0xff]
      %v1745 = vpack.c.bf16 %v1743, %v1742
      %v1746 = vpack.c.bf16 %v1744, %v1744
      %s1747 = scalar_lea.vmem %s2, 768
      %v1748 = vld [vmem:[%s1747] sm:$0xf]
      %v1749 = vld [vmem:[%s1747 + $0x4] sm:$0xf]
      %v1750 = vld [vmem:[%s1747 + $0x8] sm:$0xf]
      %v1751 = vld [vmem:[%s1747 + $0xc] sm:$0xf]
      %v1752 = vld [vmem:[%s1747 + $0x10] sm:$0xf]
      %v1753 = vld [vmem:[%s1747 + $0x14] sm:$0xf]
      %v1754 = vld [vmem:[%s1747 + $0x18] sm:$0xf]
      %v1755 = vld [vmem:[%s1747 + $0x1c] sm:$0xf]
      %v1756 = vld [vmem:[%s1747 + $0x20] sm:$0xf]
      %v1757 = vld [vmem:[%s1747 + $0x24] sm:$0xf]
      %v1758 = vld [vmem:[%s1747 + $0x28] sm:$0xf]
      %v1759 = vld [vmem:[%s1747 + $0x2c] sm:$0xf]
      %v1760 = vld [vmem:[%s1747 + $0x30] sm:$0xf]
      %v1761 = vld [vmem:[%s1747 + $0x34] sm:$0xf]
      %v1762 = vld [vmem:[%s1747 + $0x38] sm:$0xf]
      %v1763 = vld [vmem:[%s1747 + $0x3c] sm:$0xf]
      %v1764 = vld [vmem:[%s199 + $0x8] sm:$0xff]
      %v1765 = vld [vmem:[%s199 + $0x10] sm:$0xff]
      %v1766 = vld [vmem:[%s199 + $0x18] sm:$0xff]
      %v1767 = vpack.c.bf16 %v1765, %v1764
      %v1768 = vpack.c.bf16 %v1766, %v1766
      %s1769 = scalar_lea.vmem %s2, 832
      %v1770 = vld [vmem:[%s1769] sm:$0xf]
      %v1771 = vld [vmem:[%s1769 + $0x4] sm:$0xf]
      %v1772 = vld [vmem:[%s1769 + $0x8] sm:$0xf]
      %v1773 = vld [vmem:[%s1769 + $0xc] sm:$0xf]
      %v1774 = vld [vmem:[%s1769 + $0x10] sm:$0xf]
      %v1775 = vld [vmem:[%s1769 + $0x14] sm:$0xf]
      %v1776 = vld [vmem:[%s1769 + $0x18] sm:$0xf]
      %v1777 = vld [vmem:[%s1769 + $0x1c] sm:$0xf]
      %v1778 = vld [vmem:[%s1769 + $0x20] sm:$0xf]
      %v1779 = vld [vmem:[%s1769 + $0x24] sm:$0xf]
      %v1780 = vld [vmem:[%s1769 + $0x28] sm:$0xf]
      %v1781 = vld [vmem:[%s1769 + $0x2c] sm:$0xf]
      %v1782 = vld [vmem:[%s1769 + $0x30] sm:$0xf]
      %v1783 = vld [vmem:[%s1769 + $0x34] sm:$0xf]
      %v1784 = vld [vmem:[%s1769 + $0x38] sm:$0xf]
      %v1785 = vld [vmem:[%s1769 + $0x3c] sm:$0xf]
      %v1802 = vunpack.c.l.b16 %v1770
      %v1803 = vunpack.c.l.b16 %v1771
      %v1804 = vunpack.c.l.b16 %v1772
      %v1805 = vunpack.c.l.b16 %v1773
      %v1806 = vunpack.c.l.b16 %v1774
      %v1807 = vunpack.c.l.b16 %v1775
      %v1808 = vunpack.c.l.b16 %v1776
      %v1809 = vunpack.c.l.b16 %v1777
      %v1810 = vunpack.c.l.b16 %v1778
      %v1811 = vunpack.c.l.b16 %v1779
      %v1812 = vunpack.c.l.b16 %v1780
      %v1813 = vunpack.c.l.b16 %v1781
      %v1814 = vunpack.c.l.b16 %v1782
      %v1815 = vunpack.c.l.b16 %v1783
      %v1816 = vunpack.c.l.b16 %v1784
      %v1817 = vunpack.c.l.b16 %v1785
      %v1818 = vpack.c.b16 %v1803, %v1802
      %v1819 = vpack.c.b16 %v1805, %v1804
      %v1820 = vpack.c.b16 %v1807, %v1806
      %v1821 = vpack.c.b16 %v1809, %v1808
      %v1822 = vpack.c.b16 %v1811, %v1810
      %v1823 = vpack.c.b16 %v1813, %v1812
      %v1824 = vpack.c.b16 %v1815, %v1814
      %v1825 = vpack.c.b16 %v1817, %v1816
      %1834 = vmatprep.subr.bf16.mxu0 0
      %1835 = vmatpush1.bf16.msra.mxu0 %v1818
      %1836 = vmatprep.subr.bf16.mxu0 0
      %1837 = vmatpush1.bf16.msra.mxu0 %v1819
      %1838 = vmatprep.subr.bf16.mxu0 0
      %1839 = vmatpush1.bf16.msra.mxu0 %v1820
      %1840 = vmatprep.subr.bf16.mxu0 0
      %1841 = vmatpush1.bf16.msra.mxu0 %v1821
      %1842 = vmatprep.subr.bf16.mxu0 0
      %1843 = vmatpush1.bf16.msra.mxu0 %v1822
      %1844 = vmatprep.subr.bf16.mxu0 0
      %1845 = vmatpush1.bf16.msra.mxu0 %v1823
      %1846 = vmatprep.subr.bf16.mxu0 0
      %1847 = vmatpush1.bf16.msra.mxu0 %v1824
      %1848 = vmatprep.subr.bf16.mxu0 0
      %1849 = vmatpush1.bf16.msra.mxu0 %v1825
      %1850 = vmatprep.subr.bf16.mxu0 0
      %1851 = vmatpush1.bf16.msra.mxu0 0
      %1852 = vmatprep.subr.bf16.mxu0 0
      %1853 = vmatpush1.bf16.msra.mxu0 0
      %1854 = vmatprep.subr.bf16.mxu0 0
      %1855 = vmatpush1.bf16.msra.mxu0 0
      %1856 = vmatprep.subr.bf16.mxu0 0
      %1857 = vmatpush1.bf16.msra.mxu0 0
      %1858 = vmatprep.subr.bf16.mxu0 0
      %1859 = vmatpush1.bf16.msra.mxu0 0
      %1860 = vmatprep.subr.bf16.mxu0 0
      %1861 = vmatpush1.bf16.msra.mxu0 0
      %1862 = vmatprep.subr.bf16.mxu0 0
      %1863 = vmatpush1.bf16.msra.mxu0 0
      %1864 = vmatprep.subr.bf16.mxu0 0
      %1865 = vmatpush1.bf16.msra.mxu0 0
      %1866 = vmatprep.mubr.bf16.mxu0 0
      %1867 = vmatmul.mubr.bf16.gmra.mrb[0].mxu0 %v1767
      %v1868 = vpop.f32.mrb[0].mxu0
      %v1869 = vadd.f32 0.0, %v1868
      %v1870 = vpop.f32.mrb[0].mxu0
      %v1871 = vpop.f32.mrb[0].mxu0
      %v1872 = vadd.f32 0.0, %v1871
      %v1873 = vpop.f32.mrb[0].mxu0
      %1874 = vmatprep.mubr.bf16.mxu0 0
      %1875 = vmatmul.mubr.bf16.gmra.mrb[0].mxu0 %v1768
      %v1876 = vpop.f32.mrb[0].mxu0
      %v1877 = vadd.f32 0.0, %v1876
      %v1878 = vpop.f32.mrb[0].mxu0
      %v1879 = vpop.f32.mrb[0].mxu0
      %v1880 = vpop.f32.mrb[0].mxu0
      %1881 = vdwg.mxu0
      %v1898 = vunpack.c.l.b16 %v1748
      %v1899 = vunpack.c.l.b16 %v1749
      %v1900 = vunpack.c.l.b16 %v1750
      %v1901 = vunpack.c.l.b16 %v1751
      %v1902 = vunpack.c.l.b16 %v1752
      %v1903 = vunpack.c.l.b16 %v1753
      %v1904 = vunpack.c.l.b16 %v1754
      %v1905 = vunpack.c.l.b16 %v1755
      %v1906 = vunpack.c.l.b16 %v1756
      %v1907 = vunpack.c.l.b16 %v1757
      %v1908 = vunpack.c.l.b16 %v1758
      %v1909 = vunpack.c.l.b16 %v1759
      %v1910 = vunpack.c.l.b16 %v1760
      %v1911 = vunpack.c.l.b16 %v1761
      %v1912 = vunpack.c.l.b16 %v1762
      %v1913 = vunpack.c.l.b16 %v1763
      %v1914 = vpack.c.b16 %v1899, %v1898
      %v1915 = vpack.c.b16 %v1901, %v1900
      %v1916 = vpack.c.b16 %v1903, %v1902
      %v1917 = vpack.c.b16 %v1905, %v1904
      %v1918 = vpack.c.b16 %v1907, %v1906
      %v1919 = vpack.c.b16 %v1909, %v1908
      %v1920 = vpack.c.b16 %v1911, %v1910
      %v1921 = vpack.c.b16 %v1913, %v1912
      %1930 = vmatprep.subr.bf16.mxu0 0
      %1931 = vmatpush1.bf16.msra.mxu0 %v1914
      %1932 = vmatprep.subr.bf16.mxu0 0
      %1933 = vmatpush1.bf16.msra.mxu0 %v1915
      %1934 = vmatprep.subr.bf16.mxu0 0
      %1935 = vmatpush1.bf16.msra.mxu0 %v1916
      %1936 = vmatprep.subr.bf16.mxu0 0
      %1937 = vmatpush1.bf16.msra.mxu0 %v1917
      %1938 = vmatprep.subr.bf16.mxu0 0
      %1939 = vmatpush1.bf16.msra.mxu0 %v1918
      %1940 = vmatprep.subr.bf16.mxu0 0
      %1941 = vmatpush1.bf16.msra.mxu0 %v1919
      %1942 = vmatprep.subr.bf16.mxu0 0
      %1943 = vmatpush1.bf16.msra.mxu0 %v1920
      %1944 = vmatprep.subr.bf16.mxu0 0
      %1945 = vmatpush1.bf16.msra.mxu0 %v1921
      %1946 = vmatprep.subr.bf16.mxu0 0
      %1947 = vmatpush1.bf16.msra.mxu0 0
      %1948 = vmatprep.subr.bf16.mxu0 0
      %1949 = vmatpush1.bf16.msra.mxu0 0
      %1950 = vmatprep.subr.bf16.mxu0 0
      %1951 = vmatpush1.bf16.msra.mxu0 0
      %1952 = vmatprep.subr.bf16.mxu0 0
      %1953 = vmatpush1.bf16.msra.mxu0 0
      %1954 = vmatprep.subr.bf16.mxu0 0
      %1955 = vmatpush1.bf16.msra.mxu0 0
      %1956 = vmatprep.subr.bf16.mxu0 0
      %1957 = vmatpush1.bf16.msra.mxu0 0
      %1958 = vmatprep.subr.bf16.mxu0 0
      %1959 = vmatpush1.bf16.msra.mxu0 0
      %1960 = vmatprep.subr.bf16.mxu0 0
      %1961 = vmatpush1.bf16.msra.mxu0 0
      %1962 = vmatprep.mubr.bf16.mxu0 0
      %1963 = vmatmul.mubr.bf16.gmra.mrb[0].mxu0 %v1745
      %v1964 = vpop.f32.mrb[0].mxu0
      %v1965 = vadd.f32 %v1869, %v1964
      %v1966 = vpop.f32.mrb[0].mxu0
      %v1967 = vpop.f32.mrb[0].mxu0
      %v1968 = vadd.f32 %v1872, %v1967
      %v1969 = vpop.f32.mrb[0].mxu0
      %1970 = vmatprep.mubr.bf16.mxu0 0
      %1971 = vmatmul.mubr.bf16.gmra.mrb[0].mxu0 %v1746
      %v1972 = vpop.f32.mrb[0].mxu0
      %v1973 = vadd.f32 %v1877, %v1972
      %v1974 = vpop.f32.mrb[0].mxu0
      %v1975 = vpop.f32.mrb[0].mxu0
      %v1976 = vpop.f32.mrb[0].mxu0
      %1977 = vdwg.mxu0
      %v1978 = vld [vmem:[%s199 + $0xd] sm:$0xff]
      %v1979 = vld [vmem:[%s199 + $0x15] sm:$0xff]
      %v1980 = vld [vmem:[%s199 + $0x1d] sm:$0xff]
      %v1981 = vpack.c.bf16 %v1979, %v1978
      %v1982 = vpack.c.bf16 %v1980, %v1980
      %s1983 = scalar_lea.vmem %s2, 896
      %v1984 = vld [vmem:[%s1983] sm:$0xf]
      %v1985 = vld [vmem:[%s1983 + $0x4] sm:$0xf]
      %v1986 = vld [vmem:[%s1983 + $0x8] sm:$0xf]
      %v1987 = vld [vmem:[%s1983 + $0xc] sm:$0xf]
      %v1988 = vld [vmem:[%s1983 + $0x10] sm:$0xf]
      %v1989 = vld [vmem:[%s1983 + $0x14] sm:$0xf]
      %v1990 = vld [vmem:[%s1983 + $0x18] sm:$0xf]
      %v1991 = vld [vmem:[%s1983 + $0x1c] sm:$0xf]
      %v1992 = vld [vmem:[%s1983 + $0x20] sm:$0xf]
      %v1993 = vld [vmem:[%s1983 + $0x24] sm:$0xf]
      %v1994 = vld [vmem:[%s1983 + $0x28] sm:$0xf]
      %v1995 = vld [vmem:[%s1983 + $0x2c] sm:$0xf]
      %v1996 = vld [vmem:[%s1983 + $0x30] sm:$0xf]
      %v1997 = vld [vmem:[%s1983 + $0x34] sm:$0xf]
      %v1998 = vld [vmem:[%s1983 + $0x38] sm:$0xf]
      %v1999 = vld [vmem:[%s1983 + $0x3c] sm:$0xf]
      %v2016 = vunpack.c.l.b16 %v1984
      %v2017 = vunpack.c.l.b16 %v1985
      %v2018 = vunpack.c.l.b16 %v1986
      %v2019 = vunpack.c.l.b16 %v1987
      %v2020 = vunpack.c.l.b16 %v1988
      %v2021 = vunpack.c.l.b16 %v1989
      %v2022 = vunpack.c.l.b16 %v1990
      %v2023 = vunpack.c.l.b16 %v1991
      %v2024 = vunpack.c.l.b16 %v1992
      %v2025 = vunpack.c.l.b16 %v1993
      %v2026 = vunpack.c.l.b16 %v1994
      %v2027 = vunpack.c.l.b16 %v1995
      %v2028 = vunpack.c.l.b16 %v1996
      %v2029 = vunpack.c.l.b16 %v1997
      %v2030 = vunpack.c.l.b16 %v1998
      %v2031 = vunpack.c.l.b16 %v1999
      %v2032 = vpack.c.b16 %v2017, %v2016
      %v2033 = vpack.c.b16 %v2019, %v2018
      %v2034 = vpack.c.b16 %v2021, %v2020
      %v2035 = vpack.c.b16 %v2023, %v2022
      %v2036 = vpack.c.b16 %v2025, %v2024
      %v2037 = vpack.c.b16 %v2027, %v2026
      %v2038 = vpack.c.b16 %v2029, %v2028
      %v2039 = vpack.c.b16 %v2031, %v2030
      %2048 = vmatprep.subr.bf16.mxu0 0
      %2049 = vmatpush1.bf16.msra.mxu0 %v2032
      %2050 = vmatprep.subr.bf16.mxu0 0
      %2051 = vmatpush1.bf16.msra.mxu0 %v2033
      %2052 = vmatprep.subr.bf16.mxu0 0
      %2053 = vmatpush1.bf16.msra.mxu0 %v2034
      %2054 = vmatprep.subr.bf16.mxu0 0
      %2055 = vmatpush1.bf16.msra.mxu0 %v2035
      %2056 = vmatprep.subr.bf16.mxu0 0
      %2057 = vmatpush1.bf16.msra.mxu0 %v2036
      %2058 = vmatprep.subr.bf16.mxu0 0
      %2059 = vmatpush1.bf16.msra.mxu0 %v2037
      %2060 = vmatprep.subr.bf16.mxu0 0
      %2061 = vmatpush1.bf16.msra.mxu0 %v2038
      %2062 = vmatprep.subr.bf16.mxu0 0
      %2063 = vmatpush1.bf16.msra.mxu0 %v2039
      %2064 = vmatprep.subr.bf16.mxu0 0
      %2065 = vmatpush1.bf16.msra.mxu0 0
      %2066 = vmatprep.subr.bf16.mxu0 0
      %2067 = vmatpush1.bf16.msra.mxu0 0
      %2068 = vmatprep.subr.bf16.mxu0 0
      %2069 = vmatpush1.bf16.msra.mxu0 0
      %2070 = vmatprep.subr.bf16.mxu0 0
      %2071 = vmatpush1.bf16.msra.mxu0 0
      %2072 = vmatprep.subr.bf16.mxu0 0
      %2073 = vmatpush1.bf16.msra.mxu0 0
      %2074 = vmatprep.subr.bf16.mxu0 0
      %2075 = vmatpush1.bf16.msra.mxu0 0
      %2076 = vmatprep.subr.bf16.mxu0 0
      %2077 = vmatpush1.bf16.msra.mxu0 0
      %2078 = vmatprep.subr.bf16.mxu0 0
      %2079 = vmatpush1.bf16.msra.mxu0 0
      %2080 = vmatprep.mubr.bf16.mxu0 0
      %2081 = vmatmul.mubr.bf16.gmra.mrb[0].mxu0 %v1981
      %v2082 = vpop.f32.mrb[0].mxu0
      %v2083 = vadd.f32 0.0, %v2082
      %v2084 = vpop.f32.mrb[0].mxu0
      %v2085 = vpop.f32.mrb[0].mxu0
      %v2086 = vadd.f32 0.0, %v2085
      %v2087 = vpop.f32.mrb[0].mxu0
      %2088 = vmatprep.mubr.bf16.mxu0 0
      %2089 = vmatmul.mubr.bf16.gmra.mrb[0].mxu0 %v1982
      %v2090 = vpop.f32.mrb[0].mxu0
      %v2091 = vadd.f32 0.0, %v2090
      %v2092 = vpop.f32.mrb[0].mxu0
      %v2093 = vpop.f32.mrb[0].mxu0
      %v2094 = vpop.f32.mrb[0].mxu0
      %2095 = vdwg.mxu0
      %v2096 = vadd.f32 %v1965, %v2083
      %v2097 = vadd.f32 %v1968, %v2086
      %v2098 = vadd.f32 %v1973, %v2091
      %v2099 = vld [vmem:[%s199 + $0xe] sm:$0xff]
      %v2100 = vld [vmem:[%s199 + $0x16] sm:$0xff]
      %v2101 = vld [vmem:[%s199 + $0x1e] sm:$0xff]
      %v2102 = vpack.c.bf16 %v2100, %v2099
      %v2103 = vpack.c.bf16 %v2101, %v2101
      %s2104 = scalar_lea.vmem %s2, 960
      %v2105 = vld [vmem:[%s2104] sm:$0xf]
      %v2106 = vld [vmem:[%s2104 + $0x4] sm:$0xf]
      %v2107 = vld [vmem:[%s2104 + $0x8] sm:$0xf]
      %v2108 = vld [vmem:[%s2104 + $0xc] sm:$0xf]
      %v2109 = vld [vmem:[%s2104 + $0x10] sm:$0xf]
      %v2110 = vld [vmem:[%s2104 + $0x14] sm:$0xf]
      %v2111 = vld [vmem:[%s2104 + $0x18] sm:$0xf]
      %v2112 = vld [vmem:[%s2104 + $0x1c] sm:$0xf]
      %v2113 = vld [vmem:[%s2104 + $0x20] sm:$0xf]
      %v2114 = vld [vmem:[%s2104 + $0x24] sm:$0xf]
      %v2115 = vld [vmem:[%s2104 + $0x28] sm:$0xf]
      %v2116 = vld [vmem:[%s2104 + $0x2c] sm:$0xf]
      %v2117 = vld [vmem:[%s2104 + $0x30] sm:$0xf]
      %v2118 = vld [vmem:[%s2104 + $0x34] sm:$0xf]
      %v2119 = vld [vmem:[%s2104 + $0x38] sm:$0xf]
      %v2120 = vld [vmem:[%s2104 + $0x3c] sm:$0xf]
      %v2137 = vunpack.c.l.b16 %v2105
      %v2138 = vunpack.c.l.b16 %v2106
      %v2139 = vunpack.c.l.b16 %v2107
      %v2140 = vunpack.c.l.b16 %v2108
      %v2141 = vunpack.c.l.b16 %v2109
      %v2142 = vunpack.c.l.b16 %v2110
      %v2143 = vunpack.c.l.b16 %v2111
      %v2144 = vunpack.c.l.b16 %v2112
      %v2145 = vunpack.c.l.b16 %v2113
      %v2146 = vunpack.c.l.b16 %v2114
      %v2147 = vunpack.c.l.b16 %v2115
      %v2148 = vunpack.c.l.b16 %v2116
      %v2149 = vunpack.c.l.b16 %v2117
      %v2150 = vunpack.c.l.b16 %v2118
      %v2151 = vunpack.c.l.b16 %v2119
      %v2152 = vunpack.c.l.b16 %v2120
      %v2153 = vpack.c.b16 %v2138, %v2137
      %v2154 = vpack.c.b16 %v2140, %v2139
      %v2155 = vpack.c.b16 %v2142, %v2141
      %v2156 = vpack.c.b16 %v2144, %v2143
      %v2157 = vpack.c.b16 %v2146, %v2145
      %v2158 = vpack.c.b16 %v2148, %v2147
      %v2159 = vpack.c.b16 %v2150, %v2149
      %v2160 = vpack.c.b16 %v2152, %v2151
      %2169 = vmatprep.subr.bf16.mxu0 0
      %2170 = vmatpush1.bf16.msra.mxu0 %v2153
      %2171 = vmatprep.subr.bf16.mxu0 0
      %2172 = vmatpush1.bf16.msra.mxu0 %v2154
      %2173 = vmatprep.subr.bf16.mxu0 0
      %2174 = vmatpush1.bf16.msra.mxu0 %v2155
      %2175 = vmatprep.subr.bf16.mxu0 0
      %2176 = vmatpush1.bf16.msra.mxu0 %v2156
      %2177 = vmatprep.subr.bf16.mxu0 0
      %2178 = vmatpush1.bf16.msra.mxu0 %v2157
      %2179 = vmatprep.subr.bf16.mxu0 0
      %2180 = vmatpush1.bf16.msra.mxu0 %v2158
      %2181 = vmatprep.subr.bf16.mxu0 0
      %2182 = vmatpush1.bf16.msra.mxu0 %v2159
      %2183 = vmatprep.subr.bf16.mxu0 0
      %2184 = vmatpush1.bf16.msra.mxu0 %v2160
      %2185 = vmatprep.subr.bf16.mxu0 0
      %2186 = vmatpush1.bf16.msra.mxu0 0
      %2187 = vmatprep.subr.bf16.mxu0 0
      %2188 = vmatpush1.bf16.msra.mxu0 0
      %2189 = vmatprep.subr.bf16.mxu0 0
      %2190 = vmatpush1.bf16.msra.mxu0 0
      %2191 = vmatprep.subr.bf16.mxu0 0
      %2192 = vmatpush1.bf16.msra.mxu0 0
      %2193 = vmatprep.subr.bf16.mxu0 0
      %2194 = vmatpush1.bf16.msra.mxu0 0
      %2195 = vmatprep.subr.bf16.mxu0 0
      %2196 = vmatpush1.bf16.msra.mxu0 0
      %2197 = vmatprep.subr.bf16.mxu0 0
      %2198 = vmatpush1.bf16.msra.mxu0 0
      %2199 = vmatprep.subr.bf16.mxu0 0
      %2200 = vmatpush1.bf16.msra.mxu0 0
      %2201 = vmatprep.mubr.bf16.mxu0 0
      %2202 = vmatmul.mubr.bf16.gmra.mrb[0].mxu0 %v2102
      %v2203 = vpop.f32.mrb[0].mxu0
      %v2204 = vadd.f32 0.0, %v2203
      %v2205 = vpop.f32.mrb[0].mxu0
      %v2206 = vpop.f32.mrb[0].mxu0
      %v2207 = vadd.f32 0.0, %v2206
      %v2208 = vpop.f32.mrb[0].mxu0
      %2209 = vmatprep.mubr.bf16.mxu0 0
      %2210 = vmatmul.mubr.bf16.gmra.mrb[0].mxu0 %v2103
      %v2211 = vpop.f32.mrb[0].mxu0
      %v2212 = vadd.f32 0.0, %v2211
      %v2213 = vpop.f32.mrb[0].mxu0
      %v2214 = vpop.f32.mrb[0].mxu0
      %v2215 = vpop.f32.mrb[0].mxu0
      %2216 = vdwg.mxu0
      %v2217 = vadd.f32 %v2096, %v2204
      %v2218 = vadd.f32 %v2097, %v2207
      %v2219 = vadd.f32 %v2098, %v2212
      %2220 = vst [vmem:[%s204 + $0x18] sm:$0xff] %v2217
      %2221 = vst [vmem:[%s204 + $0x38] sm:$0xff] %v2218
      %2222 = vst [vmem:[%s204 + $0x58] sm:$0xff] %v2219
      %v2223 = vmul.f32 %v2217, %v696
      %v2224 = vmul.f32 %v2218, %v701
      %v2225 = vmul.f32 %v2219, %v706
      %v2226 = vadd.f32 %v2223, %v2224
      %v2227 = vadd.f32 %v2226, %v2225
      %v2228 = vrot.slane %v2227, 4
      %v2229 = vadd.f32 %v2227, %v2228
      %v2230 = vrot.slane %v2229, 2
      %v2231 = vadd.f32 %v2229, %v2230
      %v2232 = vrot.slane %v2231, 1
      %v2233 = vadd.f32 %v2231, %v2232
      %v2234 = vadd.f32 %v1729, %v2233
      %v2235 = vmul.f32 %v2223, %v2217
      %v2236 = vmul.f32 %v2224, %v2218
      %v2237 = vmul.f32 %v2225, %v2219
      %v2238 = vadd.f32 %v2235, %v2236
      %v2239 = vadd.f32 %v2238, %v2237
      %v2240 = vrot.slane %v2239, 4
      %v2241 = vadd.f32 %v2239, %v2240
      %v2242 = vrot.slane %v2241, 2
      %v2243 = vadd.f32 %v2241, %v2242
      %v2244 = vrot.slane %v2243, 1
      %v2245 = vadd.f32 %v2243, %v2244
      %v2246 = vadd.f32 %v1741, %v2245
      %2247 = vst [vmem:[%s208] sm:$0x1] %v2234
      %2248 = vst [vmem:[%s208 + $0x1] sm:$0x1] %v2246
      %p2249 = scmp.lt.s32.totalorder %s16, 1
      %s2250 = scalar_select %p2249, %s16, 1
      %s2251 = smul.addr %s2250, 12
      %s2252 = smul.addr %s2251, 8
      %s2253 = scalar_lea.vmem %s3, %s2252
      %p2254 = scmp.lt.s32.totalorder %s16, 1
      %s2255 = scalar_select %p2254, %s16, 1
      %s2256 = smul.addr %s2255, 2
      %s2257 = scalar_lea.vmem %s4, %s2256
      // Predicated region
      $region33: #{generator_forward.5} parent=31 // pred_check
        %p2258 = pneg %p102
      $region34: #{generator_forward.5} parent=31 // pred_check_branch
        %2260 = sbr.rel (%p2258) target = $region36
      $region35: #{generator_forward.5} parent=31 // pred_region
        _
      $region36: #{generator_forward.5} parent=31 // pred_fallthru
        _
      // Predicated region
      $region37: #{generator_forward.5} parent=31 // pred_check
        %p2261 = pneg %p128
      $region38: #{generator_forward.5} parent=31 // pred_check_branch
        %2263 = sbr.rel (%p2261) target = $region40
      $region39: #{generator_forward.5} parent=31 // pred_region
        _
      $region40: #{generator_forward.5} parent=31 // pred_fallthru
        _
    $region32: #{generator_forward.5} parent=5 // pred_fallthru
      _
    %p2264 = scmp.le.s32.totalorder 2, %s11
    // Predicated region
    $region41: #{generator_forward.5} parent=5 // pred_check
      %p2265 = pneg %p2264
    $region42: #{generator_forward.5} parent=5 // pred_check_branch
      %2267 = sbr.rel (%p2265) target = $region44
    $region43: #{generator_forward.5} parent=5 // pred_region
      %s2268 = ssub.s32 %s11, 2
      // Predicated region
      $region45: #{generator_forward.5} parent=43 // pred_check
        %p2269 = pneg %p108
      $region46: #{generator_forward.5} parent=43 // pred_check_branch
        %2271 = sbr.rel (%p2269) target = $region48
      $region47: #{generator_forward.5} parent=43 // pred_region
        %p2272 = scmp.lt.s32.totalorder %s17, 1
        %s2273 = scalar_select %p2272, %s17, 1
        %s2274 = smul.addr %s2273, 12
        %s2275 = smul.addr %s2274, 8
        %s2276 = scalar_lea.vmem %s3, %s2275
      $region48: #{generator_forward.5} parent=43 // pred_fallthru
        _
      // Predicated region
      $region49: #{generator_forward.5} parent=43 // pred_check
        %p2277 = pneg %p134
      $region50: #{generator_forward.5} parent=43 // pred_check_branch
        %2279 = sbr.rel (%p2277) target = $region52
      $region51: #{generator_forward.5} parent=43 // pred_region
        %p2280 = scmp.lt.s32.totalorder %s17, 1
        %s2281 = scalar_select %p2280, %s17, 1
        %s2282 = smul.addr %s2281, 2
        %s2283 = scalar_lea.vmem %s4, %s2282
      $region52: #{generator_forward.5} parent=43 // pred_fallthru
        _
    $region44: #{generator_forward.5} parent=5 // pred_fallthru
      _
  $region6: #{generator_forward.5} parent=0 // loop_footer
    %s15 = sadd.s32 1, %s11
  $region7: #{generator_forward.5} parent=0 // loop_footer_branch
    %10 = sbr.rel target = $region3
  $region8: #{generator_forward.5} parent=0 // loop_exit
    _

// kernel: generator_forward.6
$region0: #{generator_forward.6}
  #allocation0 [shape = 'u32[]', space=smem, size = 0x4, offset = 0x4, fixed_abs, tag = 'smem constant byte address 0x4 - core index']
  #allocation1 [shape = 'u32[144,128]{1,0:T(1,128)}', space=vmem, size = 0x12000, scoped, tag = 'internal scratch']
  %s0 = inlined_call_operand.vmem [shape: f32[2,110,128], index: 0, kind: input, shape index: {}]
  %s1 = inlined_call_operand.vmem [shape: f32[80,1], index: 1, kind: input, shape index: {}]
  %s2 = inlined_call_operand.vmem [shape: bf16[16,128,128], index: 2, kind: input, shape index: {}]
  %s3 = inlined_call_operand.vmem [shape: f32[2,80,512], index: 3, kind: output, shape index: {0}]
  %s4 = inlined_call_operand.vmem [shape: f32[2,2,128], index: 4, kind: output, shape index: {1}]
  %5 = xla_tuple %s3, %s4
  %s6 = sld [smem:[#allocation0]]
  $region53: #{generator_forward.6} parent=0
    _
  %s8 = ssub.s32 1, %s6
  %s9 = scalar_select 0, %s8, %s6
  loop: start=0, step=1, limit=4
  $region2: #{generator_forward.6} parent=0 // loop_pre_header
    _
  $region3: #{generator_forward.6} parent=0 // loop_header
    %s11 = sphi 0, %s15
    %p12 = scmp.ge.s32.totalorder %s11, 4
    %s21 = sphi 0, %s23
    %s24 = sphi 0, %s21
    %s25 = sphi 0, %s24
    %s41 = sphi 0, %s25
    %s45 = sphi 0, %s45
    %s47 = sphi 0, %s45
    %s48 = sphi 0, %s47
    %s62 = sphi 0, %s48
    %s66 = sphi 0, %s66
    %s68 = sphi 0, %s66
    %s69 = sphi 0, %s68
    %s83 = sphi 0, %s69
    %s89 = sphi 0, %s91
    %s92 = sphi 0, %s89
    %s93 = sphi 0, %s92
    %s109 = sphi 0, %s93
    %s115 = sphi 0, %s117
    %s118 = sphi 0, %s115
    %s119 = sphi 0, %s118
    %s135 = sphi 0, %s119
  $region4: #{generator_forward.6} parent=0 // loop_header_branch
    %14 = sbr.rel (%p12) target = $region8
  $region5: #{generator_forward.6} parent=0 // loop_body
    %s16 = ssub.s32 %s11, 1
    %s17 = ssub.s32 %s11, 2
    %s18 = sadd.s32 %s11, 1
    %s19 = ssub.s32 %s11, %s18
    %p20 = scmp.eq.s32.totalorder %s19, 0
    %s22 = sadd.s32 %s21, 1
    %s23 = scalar_select %p20, %s21, %s22
    %p26 = pneg %p20
    %p27 = scmp.eq.s32.totalorder %s11, 1
    %p28 = por %p26, %p27
    %p29 = scmp.ne.s32.totalorder %s21, %s24
    %p30 = scmp.eq.s32.totalorder %s11, 0
    %p31 = por %p29, %p30
    %p32 = scmp.ne.s32.totalorder %s21, %s24
    %p33 = scmp.eq.s32.totalorder %s16, 1
    %p34 = por %p32, %p33
    %p35 = scmp.ne.s32.totalorder %s24, %s25
    %p36 = scmp.eq.s32.totalorder %s16, 0
    %p37 = por %p35, %p36
    %p38 = scmp.ne.s32.totalorder %s24, %s25
    %p39 = scmp.eq.s32.totalorder %s17, 1
    %p40 = por %p38, %p39
    %p42 = scmp.ne.s32.totalorder %s25, %s41
    %p43 = scmp.eq.s32.totalorder %s17, 0
    %p44 = por %p42, %p43
    %s46 = sadd.s32 %s45, 1
    %p49 = scmp.eq.s32.totalorder %s11, 1
    %p50 = scmp.ne.s32.totalorder %s45, %s47
    %p51 = scmp.eq.s32.totalorder %s11, 0
    %p52 = por %p50, %p51
    %p53 = scmp.ne.s32.totalorder %s45, %s47
    %p54 = scmp.eq.s32.totalorder %s16, 1
    %p55 = por %p53, %p54
    %p56 = scmp.ne.s32.totalorder %s47, %s48
    %p57 = scmp.eq.s32.totalorder %s16, 0
    %p58 = por %p56, %p57
    %p59 = scmp.ne.s32.totalorder %s47, %s48
    %p60 = scmp.eq.s32.totalorder %s17, 1
    %p61 = por %p59, %p60
    %p63 = scmp.ne.s32.totalorder %s48, %s62
    %p64 = scmp.eq.s32.totalorder %s17, 0
    %p65 = por %p63, %p64
    %s67 = sadd.s32 %s66, 1
    %p70 = scmp.eq.s32.totalorder %s11, 1
    %p71 = scmp.ne.s32.totalorder %s66, %s68
    %p72 = scmp.eq.s32.totalorder %s11, 0
    %p73 = por %p71, %p72
    %p74 = scmp.ne.s32.totalorder %s66, %s68
    %p75 = scmp.eq.s32.totalorder %s16, 1
    %p76 = por %p74, %p75
    %p77 = scmp.ne.s32.totalorder %s68, %s69
    %p78 = scmp.eq.s32.totalorder %s16, 0
    %p79 = por %p77, %p78
    %p80 = scmp.ne.s32.totalorder %s68, %s69
    %p81 = scmp.eq.s32.totalorder %s17, 1
    %p82 = por %p80, %p81
    %p84 = scmp.ne.s32.totalorder %s69, %s83
    %p85 = scmp.eq.s32.totalorder %s17, 0
    %p86 = por %p84, %p85
    %s87 = ssub.s32 %s11, %s18
    %p88 = scmp.eq.s32.totalorder %s87, 0
    %s90 = sadd.s32 %s89, 1
    %s91 = scalar_select %p88, %s89, %s90
    %p94 = pneg %p88
    %p95 = scmp.eq.s32.totalorder %s11, 1
    %p96 = por %p94, %p95
    %p97 = scmp.ne.s32.totalorder %s89, %s92
    %p98 = scmp.eq.s32.totalorder %s11, 0
    %p99 = por %p97, %p98
    %p100 = scmp.ne.s32.totalorder %s89, %s92
    %p101 = scmp.eq.s32.totalorder %s16, 1
    %p102 = por %p100, %p101
    %p103 = scmp.ne.s32.totalorder %s92, %s93
    %p104 = scmp.eq.s32.totalorder %s16, 0
    %p105 = por %p103, %p104
    %p106 = scmp.ne.s32.totalorder %s92, %s93
    %p107 = scmp.eq.s32.totalorder %s17, 1
    %p108 = por %p106, %p107
    %p110 = scmp.ne.s32.totalorder %s93, %s109
    %p111 = scmp.eq.s32.totalorder %s17, 0
    %p112 = por %p110, %p111
    %s113 = ssub.s32 %s11, %s18
    %p114 = scmp.eq.s32.totalorder %s113, 0
    %s116 = sadd.s32 %s115, 1
    %s117 = scalar_select %p114, %s115, %s116
    %p120 = pneg %p114
    %p121 = scmp.eq.s32.totalorder %s11, 1
    %p122 = por %p120, %p121
    %p123 = scmp.ne.s32.totalorder %s115, %s118
    %p124 = scmp.eq.s32.totalorder %s11, 0
    %p125 = por %p123, %p124
    %p126 = scmp.ne.s32.totalorder %s115, %s118
    %p127 = scmp.eq.s32.totalorder %s16, 1
    %p128 = por %p126, %p127
    %p129 = scmp.ne.s32.totalorder %s118, %s119
    %p130 = scmp.eq.s32.totalorder %s16, 0
    %p131 = por %p129, %p130
    %p132 = scmp.ne.s32.totalorder %s118, %s119
    %p133 = scmp.eq.s32.totalorder %s17, 1
    %p134 = por %p132, %p133
    %p136 = scmp.ne.s32.totalorder %s119, %s135
    %p137 = scmp.eq.s32.totalorder %s17, 0
    %p138 = por %p136, %p137
    %p139 = scmp.le.s32.totalorder 1, %s11
    %p140 = scmp.lt.s32.totalorder %s11, 3
    %p141 = pnand %p139, %p140
    %p142 = pneg %p141
    // Predicated region
    $region9: #{generator_forward.6} parent=5 // pred_check
      _
    $region10: #{generator_forward.6} parent=5 // pred_check_branch
      %144 = sbr.rel (%p141) target = $region12
    $region11: #{generator_forward.6} parent=5 // pred_region
      %s145 = ssub.s32 %s11, 1
      // Predicated region
      $region13: #{generator_forward.6} parent=11 // pred_check
        %p146 = pneg %p58
      $region14: #{generator_forward.6} parent=11 // pred_check_branch
        %148 = sbr.rel (%p146) target = $region16
      $region15: #{generator_forward.6} parent=11 // pred_region
        _
      $region16: #{generator_forward.6} parent=11 // pred_fallthru
        _
      // Predicated region
      $region17: #{generator_forward.6} parent=11 // pred_check
        %p149 = pneg %p79
      $region18: #{generator_forward.6} parent=11 // pred_check_branch
        %151 = sbr.rel (%p149) target = $region20
      $region19: #{generator_forward.6} parent=11 // pred_region
        _
      $region20: #{generator_forward.6} parent=11 // pred_fallthru
        _
    $region12: #{generator_forward.6} parent=5 // pred_fallthru
      _
    %p152 = scmp.lt.s32.totalorder %s11, 2
    // Predicated region
    $region21: #{generator_forward.6} parent=5 // pred_check
      %p153 = pneg %p152
    $region22: #{generator_forward.6} parent=5 // pred_check_branch
      %155 = sbr.rel (%p153) target = $region24
    $region23: #{generator_forward.6} parent=5 // pred_region
      // Predicated region
      $region25: #{generator_forward.6} parent=23 // pred_check
        %p156 = pneg %p31
      $region26: #{generator_forward.6} parent=23 // pred_check_branch
        %158 = sbr.rel (%p156) target = $region28
      $region27: #{generator_forward.6} parent=23 // pred_region
        %p159 = scmp.lt.s32.totalorder %s11, 1
        %s160 = scalar_select %p159, %s11, 1
        %s161 = smul.addr %s160, 14
        %s162 = smul.addr %s161, 8
        %s163 = scalar_lea.vmem %s0, %s162
      $region28: #{generator_forward.6} parent=23 // pred_fallthru
        _
    $region24: #{generator_forward.6} parent=5 // pred_fallthru
      _
    %p164 = scmp.le.s32.totalorder 1, %s11
    %p165 = scmp.lt.s32.totalorder %s11, 3
    %p166 = pnand %p164, %p165
    %p167 = pneg %p166
    // Predicated region
    $region29: #{generator_forward.6} parent=5 // pred_check
      _
    $region30: #{generator_forward.6} parent=5 // pred_check_branch
      %169 = sbr.rel (%p166) target = $region32
    $region31: #{generator_forward.6} parent=5 // pred_region
      %s170 = ssub.s32 %s11, 1
      %p171 = scmp.lt.s32.totalorder %s16, 1
      %s172 = scalar_select %p171, %s16, 1
      %s173 = smul.addr %s172, 14
      %s174 = smul.addr %s173, 8
      %s175 = scalar_lea.vmem %s0, %s174
      %p176 = pneg %p37
      %p177 = pneg %p34
      %p178 = pneg %p58
      %p179 = pneg %p55
      %p180 = pneg %p79
      %p181 = pneg %p76
      %p182 = pneg %p105
      %p183 = pneg %p102
      %p184 = scmp.lt.s32.totalorder %s16, 1
      %s185 = scalar_select %p184, %s16, 1
      %s186 = smul.addr %s185, 40
      %s187 = smul.addr %s186, 8
      %s188 = scalar_lea.vmem %s3, %s187
      %p189 = pneg %p131
      %p190 = pneg %p128
      %p191 = scmp.lt.s32.totalorder %s16, 1
      %s192 = scalar_select %p191, %s16, 1
      %s193 = smul.addr %s192, 2
      %s194 = scalar_lea.vmem %s4, %s193
      %p195 = scmp.lt.s32.totalorder %s16, 1
      %s196 = scalar_select %p195, %s16, 1
      %s197 = smul.addr %s196, 14
      %s198 = smul.addr %s197, 8
      %s199 = scalar_lea.vmem %s0, %s198
      %p200 = scmp.lt.s32.totalorder %s16, 1
      %s201 = scalar_select %p200, %s16, 1
      %s202 = smul.addr %s201, 40
      %s203 = smul.addr %s202, 8
      %s204 = scalar_lea.vmem %s3, %s203
      %p205 = scmp.lt.s32.totalorder %s16, 1
      %s206 = scalar_select %p205, %s16, 1
      %s207 = smul.addr %s206, 2
      %s208 = scalar_lea.vmem %s4, %s207
      %v210 = vld [vmem:[%s1] sm:$0xff]
      %v211 = vld [vmem:[%s1 + $0x8] sm:$0xff]
      %v212 = vld [vmem:[%s1 + $0x10] sm:$0xff]
      %v213 = vld [vmem:[%s1 + $0x18] sm:$0xff]
      %v214 = vld [vmem:[%s1 + $0x20] sm:$0xff]
      %v215 = vld [vmem:[%s1 + $0x28] sm:$0xff]
      %v216 = vld [vmem:[%s1 + $0x30] sm:$0xff]
      %v217 = vld [vmem:[%s1 + $0x38] sm:$0xff]
      %v218 = vld [vmem:[%s1 + $0x40] sm:$0xff]
      %v219 = vld [vmem:[%s1 + $0x48] sm:$0xff]
      %v220 = vld [vmem:[%s199] sm:$0xff]
      %v221 = vld [vmem:[%s199 + $0x8] sm:$0xff]
      %v222 = vld [vmem:[%s199 + $0x10] sm:$0xff]
      %v223 = vld [vmem:[%s199 + $0x18] sm:$0xff]
      %v224 = vld [vmem:[%s199 + $0x20] sm:$0xff]
      %v225 = vld [vmem:[%s199 + $0x28] sm:$0xff]
      %v226 = vld [vmem:[%s199 + $0x30] sm:$0xff]
      %v227 = vld [vmem:[%s199 + $0x38] sm:$0xff]
      %v228 = vld [vmem:[%s199 + $0x40] sm:$0xff]
      %v229 = vld [vmem:[%s199 + $0x48] sm:$0xff]
      %v230 = vpack.c.bf16 %v221, %v220
      %v231 = vpack.c.bf16 %v223, %v222
      %v232 = vpack.c.bf16 %v225, %v224
      %v233 = vpack.c.bf16 %v227, %v226
      %v234 = vpack.c.bf16 %v229, %v228
      %v235 = vld [vmem:[%s2] sm:$0xf]
      %v236 = vld [vmem:[%s2 + $0x4] sm:$0xf]
      %v237 = vld [vmem:[%s2 + $0x8] sm:$0xf]
      %v238 = vld [vmem:[%s2 + $0xc] sm:$0xf]
      %v239 = vld [vmem:[%s2 + $0x10] sm:$0xf]
      %v240 = vld [vmem:[%s2 + $0x14] sm:$0xf]
      %v241 = vld [vmem:[%s2 + $0x18] sm:$0xf]
      %v242 = vld [vmem:[%s2 + $0x1c] sm:$0xf]
      %v243 = vld [vmem:[%s2 + $0x20] sm:$0xf]
      %v244 = vld [vmem:[%s2 + $0x24] sm:$0xf]
      %v245 = vld [vmem:[%s2 + $0x28] sm:$0xf]
      %v246 = vld [vmem:[%s2 + $0x2c] sm:$0xf]
      %v247 = vld [vmem:[%s2 + $0x30] sm:$0xf]
      %v248 = vld [vmem:[%s2 + $0x34] sm:$0xf]
      %v249 = vld [vmem:[%s2 + $0x38] sm:$0xf]
      %v250 = vld [vmem:[%s2 + $0x3c] sm:$0xf]
      %v251 = vld [vmem:[%s199 + $0x1] sm:$0xff]
      %v252 = vld [vmem:[%s199 + $0x9] sm:$0xff]
      %v253 = vld [vmem:[%s199 + $0x11] sm:$0xff]
      %v254 = vld [vmem:[%s199 + $0x19] sm:$0xff]
      %v255 = vld [vmem:[%s199 + $0x21] sm:$0xff]
      %v256 = vld [vmem:[%s199 + $0x29] sm:$0xff]
      %v257 = vld [vmem:[%s199 + $0x31] sm:$0xff]
      %v258 = vld [vmem:[%s199 + $0x39] sm:$0xff]
      %v259 = vld [vmem:[%s199 + $0x41] sm:$0xff]
      %v260 = vld [vmem:[%s199 + $0x49] sm:$0xff]
      %v261 = vpack.c.bf16 %v252, %v251
      %v262 = vpack.c.bf16 %v254, %v253
      %v263 = vpack.c.bf16 %v256, %v255
      %v264 = vpack.c.bf16 %v258, %v257
      %v265 = vpack.c.bf16 %v260, %v259
      %s266 = scalar_lea.vmem %s2, 64
      %v267 = vld [vmem:[%s266] sm:$0xf]
      %v268 = vld [vmem:[%s266 + $0x4] sm:$0xf]
      %v269 = vld [vmem:[%s266 + $0x8] sm:$0xf]
      %v270 = vld [vmem:[%s266 + $0xc] sm:$0xf]
      %v271 = vld [vmem:[%s266 + $0x10] sm:$0xf]
      %v272 = vld [vmem:[%s266 + $0x14] sm:$0xf]
      %v273 = vld [vmem:[%s266 + $0x18] sm:$0xf]
      %v274 = vld [vmem:[%s266 + $0x1c] sm:$0xf]
      %v275 = vld [vmem:[%s266 + $0x20] sm:$0xf]
      %v276 = vld [vmem:[%s266 + $0x24] sm:$0xf]
      %v277 = vld [vmem:[%s266 + $0x28] sm:$0xf]
      %v278 = vld [vmem:[%s266 + $0x2c] sm:$0xf]
      %v279 = vld [vmem:[%s266 + $0x30] sm:$0xf]
      %v280 = vld [vmem:[%s266 + $0x34] sm:$0xf]
      %v281 = vld [vmem:[%s266 + $0x38] sm:$0xf]
      %v282 = vld [vmem:[%s266 + $0x3c] sm:$0xf]
      %v299 = vunpack.c.l.b16 %v267
      %v300 = vunpack.c.l.b16 %v268
      %v301 = vunpack.c.l.b16 %v269
      %v302 = vunpack.c.l.b16 %v270
      %v303 = vunpack.c.l.b16 %v271
      %v304 = vunpack.c.l.b16 %v272
      %v305 = vunpack.c.l.b16 %v273
      %v306 = vunpack.c.l.b16 %v274
      %v307 = vunpack.c.l.b16 %v275
      %v308 = vunpack.c.l.b16 %v276
      %v309 = vunpack.c.l.b16 %v277
      %v310 = vunpack.c.l.b16 %v278
      %v311 = vunpack.c.l.b16 %v279
      %v312 = vunpack.c.l.b16 %v280
      %v313 = vunpack.c.l.b16 %v281
      %v314 = vunpack.c.l.b16 %v282
      %v315 = vpack.c.b16 %v300, %v299
      %v316 = vpack.c.b16 %v302, %v301
      %v317 = vpack.c.b16 %v304, %v303
      %v318 = vpack.c.b16 %v306, %v305
      %v319 = vpack.c.b16 %v308, %v307
      %v320 = vpack.c.b16 %v310, %v309
      %v321 = vpack.c.b16 %v312, %v311
      %v322 = vpack.c.b16 %v314, %v313
      %331 = vmatprep.subr.bf16.mxu0 0
      %332 = vmatpush1.bf16.msra.mxu0 %v315
      %333 = vmatprep.subr.bf16.mxu0 0
      %334 = vmatpush1.bf16.msra.mxu0 %v316
      %335 = vmatprep.subr.bf16.mxu0 0
      %336 = vmatpush1.bf16.msra.mxu0 %v317
      %337 = vmatprep.subr.bf16.mxu0 0
      %338 = vmatpush1.bf16.msra.mxu0 %v318
      %339 = vmatprep.subr.bf16.mxu0 0
      %340 = vmatpush1.bf16.msra.mxu0 %v319
      %341 = vmatprep.subr.bf16.mxu0 0
      %342 = vmatpush1.bf16.msra.mxu0 %v320
      %343 = vmatprep.subr.bf16.mxu0 0
      %344 = vmatpush1.bf16.msra.mxu0 %v321
      %345 = vmatprep.subr.bf16.mxu0 0
      %346 = vmatpush1.bf16.msra.mxu0 %v322
      %347 = vmatprep.subr.bf16.mxu0 0
      %348 = vmatpush1.bf16.msra.mxu0 0
      %349 = vmatprep.subr.bf16.mxu0 0
      %350 = vmatpush1.bf16.msra.mxu0 0
      %351 = vmatprep.subr.bf16.mxu0 0
      %352 = vmatpush1.bf16.msra.mxu0 0
      %353 = vmatprep.subr.bf16.mxu0 0
      %354 = vmatpush1.bf16.msra.mxu0 0
      %355 = vmatprep.subr.bf16.mxu0 0
      %356 = vmatpush1.bf16.msra.mxu0 0
      %357 = vmatprep.subr.bf16.mxu0 0
      %358 = vmatpush1.bf16.msra.mxu0 0
      %359 = vmatprep.subr.bf16.mxu0 0
      %360 = vmatpush1.bf16.msra.mxu0 0
      %361 = vmatprep.subr.bf16.mxu0 0
      %362 = vmatpush1.bf16.msra.mxu0 0
      %363 = vmatprep.mubr.bf16.mxu0 0
      %364 = vmatmul.mubr.bf16.gmra.mrb[0].mxu0 %v261
      %v365 = vpop.f32.mrb[0].mxu0
      %v366 = vadd.f32 0.0, %v365
      %v367 = vpop.f32.mrb[0].mxu0
      %v368 = vpop.f32.mrb[0].mxu0
      %v369 = vadd.f32 0.0, %v368
      %v370 = vpop.f32.mrb[0].mxu0
      %371 = vmatprep.mubr.bf16.mxu0 0
      %372 = vmatmul.mubr.bf16.gmra.mrb[0].mxu0 %v262
      %v373 = vpop.f32.mrb[0].mxu0
      %v374 = vadd.f32 0.0, %v373
      %v375 = vpop.f32.mrb[0].mxu0
      %v376 = vpop.f32.mrb[0].mxu0
      %v377 = vadd.f32 0.0, %v376
      %v378 = vpop.f32.mrb[0].mxu0
      %379 = vmatprep.mubr.bf16.mxu0 0
      %380 = vmatmul.mubr.bf16.gmra.mrb[0].mxu0 %v263
      %v381 = vpop.f32.mrb[0].mxu0
      %v382 = vadd.f32 0.0, %v381
      %v383 = vpop.f32.mrb[0].mxu0
      %v384 = vpop.f32.mrb[0].mxu0
      %v385 = vadd.f32 0.0, %v384
      %v386 = vpop.f32.mrb[0].mxu0
      %387 = vmatprep.mubr.bf16.mxu0 0
      %388 = vmatmul.mubr.bf16.gmra.mrb[0].mxu0 %v264
      %v389 = vpop.f32.mrb[0].mxu0
      %v390 = vadd.f32 0.0, %v389
      %v391 = vpop.f32.mrb[0].mxu0
      %v392 = vpop.f32.mrb[0].mxu0
      %v393 = vadd.f32 0.0, %v392
      %v394 = vpop.f32.mrb[0].mxu0
      %395 = vmatprep.mubr.bf16.mxu0 0
      %396 = vmatmul.mubr.bf16.gmra.mrb[0].mxu0 %v265
      %v397 = vpop.f32.mrb[0].mxu0
      %v398 = vadd.f32 0.0, %v397
      %v399 = vpop.f32.mrb[0].mxu0
      %v400 = vpop.f32.mrb[0].mxu0
      %v401 = vadd.f32 0.0, %v400
      %v402 = vpop.f32.mrb[0].mxu0
      %403 = vdwg.mxu0
      %v420 = vunpack.c.l.b16 %v235
      %v421 = vunpack.c.l.b16 %v236
      %v422 = vunpack.c.l.b16 %v237
      %v423 = vunpack.c.l.b16 %v238
      %v424 = vunpack.c.l.b16 %v239
      %v425 = vunpack.c.l.b16 %v240
      %v426 = vunpack.c.l.b16 %v241
      %v427 = vunpack.c.l.b16 %v242
      %v428 = vunpack.c.l.b16 %v243
      %v429 = vunpack.c.l.b16 %v244
      %v430 = vunpack.c.l.b16 %v245
      %v431 = vunpack.c.l.b16 %v246
      %v432 = vunpack.c.l.b16 %v247
      %v433 = vunpack.c.l.b16 %v248
      %v434 = vunpack.c.l.b16 %v249
      %v435 = vunpack.c.l.b16 %v250
      %v436 = vpack.c.b16 %v421, %v420
      %v437 = vpack.c.b16 %v423, %v422
      %v438 = vpack.c.b16 %v425, %v424
      %v439 = vpack.c.b16 %v427, %v426
      %v440 = vpack.c.b16 %v429, %v428
      %v441 = vpack.c.b16 %v431, %v430
      %v442 = vpack.c.b16 %v433, %v432
      %v443 = vpack.c.b16 %v435, %v434
      %452 = vmatprep.subr.bf16.mxu0 0
      %453 = vmatpush1.bf16.msra.mxu0 %v436
      %454 = vmatprep.subr.bf16.mxu0 0
      %455 = vmatpush1.bf16.msra.mxu0 %v437
      %456 = vmatprep.subr.bf16.mxu0 0
      %457 = vmatpush1.bf16.msra.mxu0 %v438
      %458 = vmatprep.subr.bf16.mxu0 0
      %459 = vmatpush1.bf16.msra.mxu0 %v439
      %460 = vmatprep.subr.bf16.mxu0 0
      %461 = vmatpush1.bf16.msra.mxu0 %v440
      %462 = vmatprep.subr.bf16.mxu0 0
      %463 = vmatpush1.bf16.msra.mxu0 %v441
      %464 = vmatprep.subr.bf16.mxu0 0
      %465 = vmatpush1.bf16.msra.mxu0 %v442
      %466 = vmatprep.subr.bf16.mxu0 0
      %467 = vmatpush1.bf16.msra.mxu0 %v443
      %468 = vmatprep.subr.bf16.mxu0 0
      %469 = vmatpush1.bf16.msra.mxu0 0
      %470 = vmatprep.subr.bf16.mxu0 0
      %471 = vmatpush1.bf16.msra.mxu0 0
      %472 = vmatprep.subr.bf16.mxu0 0
      %473 = vmatpush1.bf16.msra.mxu0 0
      %474 = vmatprep.subr.bf16.mxu0 0
      %475 = vmatpush1.bf16.msra.mxu0 0
      %476 = vmatprep.subr.bf16.mxu0 0
      %477 = vmatpush1.bf16.msra.mxu0 0
      %478 = vmatprep.subr.bf16.mxu0 0
      %479 = vmatpush1.bf16.msra.mxu0 0
      %480 = vmatprep.subr.bf16.mxu0 0
      %481 = vmatpush1.bf16.msra.mxu0 0
      %482 = vmatprep.subr.bf16.mxu0 0
      %483 = vmatpush1.bf16.msra.mxu0 0
      %484 = vmatprep.mubr.bf16.mxu0 0
      %485 = vmatmul.mubr.bf16.gmra.mrb[0].mxu0 %v230
      %v486 = vpop.f32.mrb[0].mxu0
      %v487 = vadd.f32 %v366, %v486
      %v488 = vpop.f32.mrb[0].mxu0
      %v489 = vpop.f32.mrb[0].mxu0
      %v490 = vadd.f32 %v369, %v489
      %v491 = vpop.f32.mrb[0].mxu0
      %492 = vmatprep.mubr.bf16.mxu0 0
      %493 = vmatmul.mubr.bf16.gmra.mrb[0].mxu0 %v231
      %v494 = vpop.f32.mrb[0].mxu0
      %v495 = vadd.f32 %v374, %v494
      %v496 = vpop.f32.mrb[0].mxu0
      %v497 = vpop.f32.mrb[0].mxu0
      %v498 = vadd.f32 %v377, %v497
      %v499 = vpop.f32.mrb[0].mxu0
      %500 = vmatprep.mubr.bf16.mxu0 0
      %501 = vmatmul.mubr.bf16.gmra.mrb[0].mxu0 %v232
      %v502 = vpop.f32.mrb[0].mxu0
      %v503 = vadd.f32 %v382, %v502
      %v504 = vpop.f32.mrb[0].mxu0
      %v505 = vpop.f32.mrb[0].mxu0
      %v506 = vadd.f32 %v385, %v505
      %v507 = vpop.f32.mrb[0].mxu0
      %508 = vmatprep.mubr.bf16.mxu0 0
      %509 = vmatmul.mubr.bf16.gmra.mrb[0].mxu0 %v233
      %v510 = vpop.f32.mrb[0].mxu0
      %v511 = vadd.f32 %v390, %v510
      %v512 = vpop.f32.mrb[0].mxu0
      %v513 = vpop.f32.mrb[0].mxu0
      %v514 = vadd.f32 %v393, %v513
      %v515 = vpop.f32.mrb[0].mxu0
      %516 = vmatprep.mubr.bf16.mxu0 0
      %517 = vmatmul.mubr.bf16.gmra.mrb[0].mxu0 %v234
      %v518 = vpop.f32.mrb[0].mxu0
      %v519 = vadd.f32 %v398, %v518
      %v520 = vpop.f32.mrb[0].mxu0
      %v521 = vpop.f32.mrb[0].mxu0
      %v522 = vadd.f32 %v401, %v521
      %v523 = vpop.f32.mrb[0].mxu0
      %524 = vdwg.mxu0
      %v525 = vld [vmem:[%s199 + $0xa] sm:$0xff]
      %v526 = vld [vmem:[%s199 + $0x12] sm:$0xff]
      %v527 = vld [vmem:[%s199 + $0x1a] sm:$0xff]
      %v528 = vld [vmem:[%s199 + $0x22] sm:$0xff]
      %v529 = vld [vmem:[%s199 + $0x2a] sm:$0xff]
      %v530 = vld [vmem:[%s199 + $0x32] sm:$0xff]
      %v531 = vld [vmem:[%s199 + $0x3a] sm:$0xff]
      %v532 = vld [vmem:[%s199 + $0x42] sm:$0xff]
      %v533 = vld [vmem:[%s199 + $0x4a] sm:$0xff]
      %v534 = vld [vmem:[%s199 + $0x52] sm:$0xff]
      %v535 = vpack.c.bf16 %v526, %v525
      %v536 = vpack.c.bf16 %v528, %v527
      %v537 = vpack.c.bf16 %v530, %v529
      %v538 = vpack.c.bf16 %v532, %v531
      %v539 = vpack.c.bf16 %v534, %v533
      %s540 = scalar_lea.vmem %s2, 128
      %v541 = vld [vmem:[%s540] sm:$0xf]
      %v542 = vld [vmem:[%s540 + $0x4] sm:$0xf]
      %v543 = vld [vmem:[%s540 + $0x8] sm:$0xf]
      %v544 = vld [vmem:[%s540 + $0xc] sm:$0xf]
      %v545 = vld [vmem:[%s540 + $0x10] sm:$0xf]
      %v546 = vld [vmem:[%s540 + $0x14] sm:$0xf]
      %v547 = vld [vmem:[%s540 + $0x18] sm:$0xf]
      %v548 = vld [vmem:[%s540 + $0x1c] sm:$0xf]
      %v549 = vld [vmem:[%s540 + $0x20] sm:$0xf]
      %v550 = vld [vmem:[%s540 + $0x24] sm:$0xf]
      %v551 = vld [vmem:[%s540 + $0x28] sm:$0xf]
      %v552 = vld [vmem:[%s540 + $0x2c] sm:$0xf]
      %v553 = vld [vmem:[%s540 + $0x30] sm:$0xf]
      %v554 = vld [vmem:[%s540 + $0x34] sm:$0xf]
      %v555 = vld [vmem:[%s540 + $0x38] sm:$0xf]
      %v556 = vld [vmem:[%s540 + $0x3c] sm:$0xf]
      %v573 = vunpack.c.l.b16 %v541
      %v574 = vunpack.c.l.b16 %v542
      %v575 = vunpack.c.l.b16 %v543
      %v576 = vunpack.c.l.b16 %v544
      %v577 = vunpack.c.l.b16 %v545
      %v578 = vunpack.c.l.b16 %v546
      %v579 = vunpack.c.l.b16 %v547
      %v580 = vunpack.c.l.b16 %v548
      %v581 = vunpack.c.l.b16 %v549
      %v582 = vunpack.c.l.b16 %v550
      %v583 = vunpack.c.l.b16 %v551
      %v584 = vunpack.c.l.b16 %v552
      %v585 = vunpack.c.l.b16 %v553
      %v586 = vunpack.c.l.b16 %v554
      %v587 = vunpack.c.l.b16 %v555
      %v588 = vunpack.c.l.b16 %v556
      %v589 = vpack.c.b16 %v574, %v573
      %v590 = vpack.c.b16 %v576, %v575
      %v591 = vpack.c.b16 %v578, %v577
      %v592 = vpack.c.b16 %v580, %v579
      %v593 = vpack.c.b16 %v582, %v581
      %v594 = vpack.c.b16 %v584, %v583
      %v595 = vpack.c.b16 %v586, %v585
      %v596 = vpack.c.b16 %v588, %v587
      %605 = vmatprep.subr.bf16.mxu0 0
      %606 = vmatpush1.bf16.msra.mxu0 %v589
      %607 = vmatprep.subr.bf16.mxu0 0
      %608 = vmatpush1.bf16.msra.mxu0 %v590
      %609 = vmatprep.subr.bf16.mxu0 0
      %610 = vmatpush1.bf16.msra.mxu0 %v591
      %611 = vmatprep.subr.bf16.mxu0 0
      %612 = vmatpush1.bf16.msra.mxu0 %v592
      %613 = vmatprep.subr.bf16.mxu0 0
      %614 = vmatpush1.bf16.msra.mxu0 %v593
      %615 = vmatprep.subr.bf16.mxu0 0
      %616 = vmatpush1.bf16.msra.mxu0 %v594
      %617 = vmatprep.subr.bf16.mxu0 0
      %618 = vmatpush1.bf16.msra.mxu0 %v595
      %619 = vmatprep.subr.bf16.mxu0 0
      %620 = vmatpush1.bf16.msra.mxu0 %v596
      %621 = vmatprep.subr.bf16.mxu0 0
      %622 = vmatpush1.bf16.msra.mxu0 0
      %623 = vmatprep.subr.bf16.mxu0 0
      %624 = vmatpush1.bf16.msra.mxu0 0
      %625 = vmatprep.subr.bf16.mxu0 0
      %626 = vmatpush1.bf16.msra.mxu0 0
      %627 = vmatprep.subr.bf16.mxu0 0
      %628 = vmatpush1.bf16.msra.mxu0 0
      %629 = vmatprep.subr.bf16.mxu0 0
      %630 = vmatpush1.bf16.msra.mxu0 0
      %631 = vmatprep.subr.bf16.mxu0 0
      %632 = vmatpush1.bf16.msra.mxu0 0
      %633 = vmatprep.subr.bf16.mxu0 0
      %634 = vmatpush1.bf16.msra.mxu0 0
      %635 = vmatprep.subr.bf16.mxu0 0
      %636 = vmatpush1.bf16.msra.mxu0 0
      %637 = vmatprep.mubr.bf16.mxu0 0
      %638 = vmatmul.mubr.bf16.gmra.mrb[0].mxu0 %v535
      %v639 = vpop.f32.mrb[0].mxu0
      %v640 = vadd.f32 0.0, %v639
      %v641 = vpop.f32.mrb[0].mxu0
      %v642 = vpop.f32.mrb[0].mxu0
      %v643 = vadd.f32 0.0, %v642
      %v644 = vpop.f32.mrb[0].mxu0
      %645 = vmatprep.mubr.bf16.mxu0 0
      %646 = vmatmul.mubr.bf16.gmra.mrb[0].mxu0 %v536
      %v647 = vpop.f32.mrb[0].mxu0
      %v648 = vadd.f32 0.0, %v647
      %v649 = vpop.f32.mrb[0].mxu0
      %v650 = vpop.f32.mrb[0].mxu0
      %v651 = vadd.f32 0.0, %v650
      %v652 = vpop.f32.mrb[0].mxu0
      %653 = vmatprep.mubr.bf16.mxu0 0
      %654 = vmatmul.mubr.bf16.gmra.mrb[0].mxu0 %v537
      %v655 = vpop.f32.mrb[0].mxu0
      %v656 = vadd.f32 0.0, %v655
      %v657 = vpop.f32.mrb[0].mxu0
      %v658 = vpop.f32.mrb[0].mxu0
      %v659 = vadd.f32 0.0, %v658
      %v660 = vpop.f32.mrb[0].mxu0
      %661 = vmatprep.mubr.bf16.mxu0 0
      %662 = vmatmul.mubr.bf16.gmra.mrb[0].mxu0 %v538
      %v663 = vpop.f32.mrb[0].mxu0
      %v664 = vadd.f32 0.0, %v663
      %v665 = vpop.f32.mrb[0].mxu0
      %v666 = vpop.f32.mrb[0].mxu0
      %v667 = vadd.f32 0.0, %v666
      %v668 = vpop.f32.mrb[0].mxu0
      %669 = vmatprep.mubr.bf16.mxu0 0
      %670 = vmatmul.mubr.bf16.gmra.mrb[0].mxu0 %v539
      %v671 = vpop.f32.mrb[0].mxu0
      %v672 = vadd.f32 0.0, %v671
      %v673 = vpop.f32.mrb[0].mxu0
      %v674 = vpop.f32.mrb[0].mxu0
      %v675 = vadd.f32 0.0, %v674
      %v676 = vpop.f32.mrb[0].mxu0
      %677 = vdwg.mxu0
      %v678 = vadd.f32 %v487, %v640
      %v679 = vadd.f32 %v490, %v643
      %v680 = vadd.f32 %v495, %v648
      %v681 = vadd.f32 %v498, %v651
      %v682 = vadd.f32 %v503, %v656
      %v683 = vadd.f32 %v506, %v659
      %v684 = vadd.f32 %v511, %v664
      %v685 = vadd.f32 %v514, %v667
      %v686 = vadd.f32 %v519, %v672
      %v687 = vadd.f32 %v522, %v675
      %v688 = vld [vmem:[%s199 + $0xb] sm:$0xff]
      %v689 = vld [vmem:[%s199 + $0x13] sm:$0xff]
      %v690 = vld [vmem:[%s199 + $0x1b] sm:$0xff]
      %v691 = vld [vmem:[%s199 + $0x23] sm:$0xff]
      %v692 = vld [vmem:[%s199 + $0x2b] sm:$0xff]
      %v693 = vld [vmem:[%s199 + $0x33] sm:$0xff]
      %v694 = vld [vmem:[%s199 + $0x3b] sm:$0xff]
      %v695 = vld [vmem:[%s199 + $0x43] sm:$0xff]
      %v696 = vld [vmem:[%s199 + $0x4b] sm:$0xff]
      %v697 = vld [vmem:[%s199 + $0x53] sm:$0xff]
      %v698 = vpack.c.bf16 %v689, %v688
      %v699 = vpack.c.bf16 %v691, %v690
      %v700 = vpack.c.bf16 %v693, %v692
      %v701 = vpack.c.bf16 %v695, %v694
      %v702 = vpack.c.bf16 %v697, %v696
      %s703 = scalar_lea.vmem %s2, 192
      %v704 = vld [vmem:[%s703] sm:$0xf]
      %v705 = vld [vmem:[%s703 + $0x4] sm:$0xf]
      %v706 = vld [vmem:[%s703 + $0x8] sm:$0xf]
      %v707 = vld [vmem:[%s703 + $0xc] sm:$0xf]
      %v708 = vld [vmem:[%s703 + $0x10] sm:$0xf]
      %v709 = vld [vmem:[%s703 + $0x14] sm:$0xf]
      %v710 = vld [vmem:[%s703 + $0x18] sm:$0xf]
      %v711 = vld [vmem:[%s703 + $0x1c] sm:$0xf]
      %v712 = vld [vmem:[%s703 + $0x20] sm:$0xf]
      %v713 = vld [vmem:[%s703 + $0x24] sm:$0xf]
      %v714 = vld [vmem:[%s703 + $0x28] sm:$0xf]
      %v715 = vld [vmem:[%s703 + $0x2c] sm:$0xf]
      %v716 = vld [vmem:[%s703 + $0x30] sm:$0xf]
      %v717 = vld [vmem:[%s703 + $0x34] sm:$0xf]
      %v718 = vld [vmem:[%s703 + $0x38] sm:$0xf]
      %v719 = vld [vmem:[%s703 + $0x3c] sm:$0xf]
      %v736 = vunpack.c.l.b16 %v704
      %v737 = vunpack.c.l.b16 %v705
      %v738 = vunpack.c.l.b16 %v706
      %v739 = vunpack.c.l.b16 %v707
      %v740 = vunpack.c.l.b16 %v708
      %v741 = vunpack.c.l.b16 %v709
      %v742 = vunpack.c.l.b16 %v710
      %v743 = vunpack.c.l.b16 %v711
      %v744 = vunpack.c.l.b16 %v712
      %v745 = vunpack.c.l.b16 %v713
      %v746 = vunpack.c.l.b16 %v714
      %v747 = vunpack.c.l.b16 %v715
      %v748 = vunpack.c.l.b16 %v716
      %v749 = vunpack.c.l.b16 %v717
      %v750 = vunpack.c.l.b16 %v718
      %v751 = vunpack.c.l.b16 %v719
      %v752 = vpack.c.b16 %v737, %v736
      %v753 = vpack.c.b16 %v739, %v738
      %v754 = vpack.c.b16 %v741, %v740
      %v755 = vpack.c.b16 %v743, %v742
      %v756 = vpack.c.b16 %v745, %v744
      %v757 = vpack.c.b16 %v747, %v746
      %v758 = vpack.c.b16 %v749, %v748
      %v759 = vpack.c.b16 %v751, %v750
      %768 = vmatprep.subr.bf16.mxu0 0
      %769 = vmatpush1.bf16.msra.mxu0 %v752
      %770 = vmatprep.subr.bf16.mxu0 0
      %771 = vmatpush1.bf16.msra.mxu0 %v753
      %772 = vmatprep.subr.bf16.mxu0 0
      %773 = vmatpush1.bf16.msra.mxu0 %v754
      %774 = vmatprep.subr.bf16.mxu0 0
      %775 = vmatpush1.bf16.msra.mxu0 %v755
      %776 = vmatprep.subr.bf16.mxu0 0
      %777 = vmatpush1.bf16.msra.mxu0 %v756
      %778 = vmatprep.subr.bf16.mxu0 0
      %779 = vmatpush1.bf16.msra.mxu0 %v757
      %780 = vmatprep.subr.bf16.mxu0 0
      %781 = vmatpush1.bf16.msra.mxu0 %v758
      %782 = vmatprep.subr.bf16.mxu0 0
      %783 = vmatpush1.bf16.msra.mxu0 %v759
      %784 = vmatprep.subr.bf16.mxu0 0
      %785 = vmatpush1.bf16.msra.mxu0 0
      %786 = vmatprep.subr.bf16.mxu0 0
      %787 = vmatpush1.bf16.msra.mxu0 0
      %788 = vmatprep.subr.bf16.mxu0 0
      %789 = vmatpush1.bf16.msra.mxu0 0
      %790 = vmatprep.subr.bf16.mxu0 0
      %791 = vmatpush1.bf16.msra.mxu0 0
      %792 = vmatprep.subr.bf16.mxu0 0
      %793 = vmatpush1.bf16.msra.mxu0 0
      %794 = vmatprep.subr.bf16.mxu0 0
      %795 = vmatpush1.bf16.msra.mxu0 0
      %796 = vmatprep.subr.bf16.mxu0 0
      %797 = vmatpush1.bf16.msra.mxu0 0
      %798 = vmatprep.subr.bf16.mxu0 0
      %799 = vmatpush1.bf16.msra.mxu0 0
      %800 = vmatprep.mubr.bf16.mxu0 0
      %801 = vmatmul.mubr.bf16.gmra.mrb[0].mxu0 %v698
      %v802 = vpop.f32.mrb[0].mxu0
      %v803 = vadd.f32 0.0, %v802
      %v804 = vpop.f32.mrb[0].mxu0
      %v805 = vpop.f32.mrb[0].mxu0
      %v806 = vadd.f32 0.0, %v805
      %v807 = vpop.f32.mrb[0].mxu0
      %808 = vmatprep.mubr.bf16.mxu0 0
      %809 = vmatmul.mubr.bf16.gmra.mrb[0].mxu0 %v699
      %v810 = vpop.f32.mrb[0].mxu0
      %v811 = vadd.f32 0.0, %v810
      %v812 = vpop.f32.mrb[0].mxu0
      %v813 = vpop.f32.mrb[0].mxu0
      %v814 = vadd.f32 0.0, %v813
      %v815 = vpop.f32.mrb[0].mxu0
      %816 = vmatprep.mubr.bf16.mxu0 0
      %817 = vmatmul.mubr.bf16.gmra.mrb[0].mxu0 %v700
      %v818 = vpop.f32.mrb[0].mxu0
      %v819 = vadd.f32 0.0, %v818
      %v820 = vpop.f32.mrb[0].mxu0
      %v821 = vpop.f32.mrb[0].mxu0
      %v822 = vadd.f32 0.0, %v821
      %v823 = vpop.f32.mrb[0].mxu0
      %824 = vmatprep.mubr.bf16.mxu0 0
      %825 = vmatmul.mubr.bf16.gmra.mrb[0].mxu0 %v701
      %v826 = vpop.f32.mrb[0].mxu0
      %v827 = vadd.f32 0.0, %v826
      %v828 = vpop.f32.mrb[0].mxu0
      %v829 = vpop.f32.mrb[0].mxu0
      %v830 = vadd.f32 0.0, %v829
      %v831 = vpop.f32.mrb[0].mxu0
      %832 = vmatprep.mubr.bf16.mxu0 0
      %833 = vmatmul.mubr.bf16.gmra.mrb[0].mxu0 %v702
      %v834 = vpop.f32.mrb[0].mxu0
      %v835 = vadd.f32 0.0, %v834
      %v836 = vpop.f32.mrb[0].mxu0
      %v837 = vpop.f32.mrb[0].mxu0
      %v838 = vadd.f32 0.0, %v837
      %v839 = vpop.f32.mrb[0].mxu0
      %840 = vdwg.mxu0
      %v841 = vadd.f32 %v678, %v803
      %v842 = vadd.f32 %v679, %v806
      %v843 = vadd.f32 %v680, %v811
      %v844 = vadd.f32 %v681, %v814
      %v845 = vadd.f32 %v682, %v819
      %v846 = vadd.f32 %v683, %v822
      %v847 = vadd.f32 %v684, %v827
      %v848 = vadd.f32 %v685, %v830
      %v849 = vadd.f32 %v686, %v835
      %v850 = vadd.f32 %v687, %v838
      %851 = vst [vmem:[%s204] sm:$0xff] %v841
      %852 = vst [vmem:[%s204 + $0x20] sm:$0xff] %v842
      %853 = vst [vmem:[%s204 + $0x40] sm:$0xff] %v843
      %854 = vst [vmem:[%s204 + $0x60] sm:$0xff] %v844
      %855 = vst [vmem:[%s204 + $0x80] sm:$0xff] %v845
      %856 = vst [vmem:[%s204 + $0xa0] sm:$0xff] %v846
      %857 = vst [vmem:[%s204 + $0xc0] sm:$0xff] %v847
      %858 = vst [vmem:[%s204 + $0xe0] sm:$0xff] %v848
      %859 = vst [vmem:[%s204 + $0x100] sm:$0xff] %v849
      %860 = vst [vmem:[%s204 + $0x120] sm:$0xff] %v850
      %862 = vset.pattern.permute.xlu0 0
      %863 = vperm.xlu0 %862, %v210
      %v864 = vpop.permute.xlu0 %863
      %867 = vset.pattern.permute.xlu0 0
      %868 = vperm.xlu0 %867, %v211
      %v869 = vpop.permute.xlu0 %868
      %872 = vset.pattern.permute.xlu0 0
      %873 = vperm.xlu0 %872, %v212
      %v874 = vpop.permute.xlu0 %873
      %877 = vset.pattern.permute.xlu0 0
      %878 = vperm.xlu0 %877, %v213
      %v879 = vpop.permute.xlu0 %878
      %882 = vset.pattern.permute.xlu0 0
      %883 = vperm.xlu0 %882, %v214
      %v884 = vpop.permute.xlu0 %883
      %887 = vset.pattern.permute.xlu0 0
      %888 = vperm.xlu0 %887, %v215
      %v889 = vpop.permute.xlu0 %888
      %892 = vset.pattern.permute.xlu0 0
      %893 = vperm.xlu0 %892, %v216
      %v894 = vpop.permute.xlu0 %893
      %897 = vset.pattern.permute.xlu0 0
      %898 = vperm.xlu0 %897, %v217
      %v899 = vpop.permute.xlu0 %898
      %902 = vset.pattern.permute.xlu0 0
      %903 = vperm.xlu0 %902, %v218
      %v904 = vpop.permute.xlu0 %903
      %907 = vset.pattern.permute.xlu0 0
      %908 = vperm.xlu0 %907, %v219
      %v909 = vpop.permute.xlu0 %908
      %v911 = vmul.f32 %v841, %v864
      %v912 = vmul.f32 %v842, %v869
      %v913 = vmul.f32 %v843, %v874
      %v914 = vmul.f32 %v844, %v879
      %v915 = vmul.f32 %v845, %v884
      %v916 = vmul.f32 %v846, %v889
      %v917 = vmul.f32 %v847, %v894
      %v918 = vmul.f32 %v848, %v899
      %v919 = vmul.f32 %v849, %v904
      %v920 = vmul.f32 %v850, %v909
      %v921 = vadd.f32 %v911, %v912
      %v922 = vadd.f32 %v921, %v913
      %v923 = vadd.f32 %v922, %v914
      %v924 = vadd.f32 %v923, %v915
      %v925 = vadd.f32 %v924, %v916
      %v926 = vadd.f32 %v925, %v917
      %v927 = vadd.f32 %v926, %v918
      %v928 = vadd.f32 %v927, %v919
      %v929 = vadd.f32 %v928, %v920
      %v930 = vrot.slane %v929, 4
      %v931 = vadd.f32 %v929, %v930
      %v932 = vrot.slane %v931, 2
      %v933 = vadd.f32 %v931, %v932
      %v934 = vrot.slane %v933, 1
      %v935 = vadd.f32 %v933, %v934
      %v936 = vadd.f32 %v935, 0.0
      %v937 = vmul.f32 %v911, %v841
      %v938 = vmul.f32 %v912, %v842
      %v939 = vmul.f32 %v913, %v843
      %v940 = vmul.f32 %v914, %v844
      %v941 = vmul.f32 %v915, %v845
      %v942 = vmul.f32 %v916, %v846
      %v943 = vmul.f32 %v917, %v847
      %v944 = vmul.f32 %v918, %v848
      %v945 = vmul.f32 %v919, %v849
      %v946 = vmul.f32 %v920, %v850
      %v947 = vadd.f32 %v937, %v938
      %v948 = vadd.f32 %v947, %v939
      %v949 = vadd.f32 %v948, %v940
      %v950 = vadd.f32 %v949, %v941
      %v951 = vadd.f32 %v950, %v942
      %v952 = vadd.f32 %v951, %v943
      %v953 = vadd.f32 %v952, %v944
      %v954 = vadd.f32 %v953, %v945
      %v955 = vadd.f32 %v954, %v946
      %v956 = vrot.slane %v955, 4
      %v957 = vadd.f32 %v955, %v956
      %v958 = vrot.slane %v957, 2
      %v959 = vadd.f32 %v957, %v958
      %v960 = vrot.slane %v959, 1
      %v961 = vadd.f32 %v959, %v960
      %v962 = vadd.f32 %v961, 0.0
      %v963 = vld [vmem:[%s199 + $0x1] sm:$0xff]
      %v964 = vld [vmem:[%s199 + $0x9] sm:$0xff]
      %v965 = vld [vmem:[%s199 + $0x11] sm:$0xff]
      %v966 = vld [vmem:[%s199 + $0x19] sm:$0xff]
      %v967 = vld [vmem:[%s199 + $0x21] sm:$0xff]
      %v968 = vld [vmem:[%s199 + $0x29] sm:$0xff]
      %v969 = vld [vmem:[%s199 + $0x31] sm:$0xff]
      %v970 = vld [vmem:[%s199 + $0x39] sm:$0xff]
      %v971 = vld [vmem:[%s199 + $0x41] sm:$0xff]
      %v972 = vld [vmem:[%s199 + $0x49] sm:$0xff]
      %v973 = vpack.c.bf16 %v964, %v963
      %v974 = vpack.c.bf16 %v966, %v965
      %v975 = vpack.c.bf16 %v968, %v967
      %v976 = vpack.c.bf16 %v970, %v969
      %v977 = vpack.c.bf16 %v972, %v971
      %s978 = scalar_lea.vmem %s2, 256
      %v979 = vld [vmem:[%s978] sm:$0xf]
      %v980 = vld [vmem:[%s978 + $0x4] sm:$0xf]
      %v981 = vld [vmem:[%s978 + $0x8] sm:$0xf]
      %v982 = vld [vmem:[%s978 + $0xc] sm:$0xf]
      %v983 = vld [vmem:[%s978 + $0x10] sm:$0xf]
      %v984 = vld [vmem:[%s978 + $0x14] sm:$0xf]
      %v985 = vld [vmem:[%s978 + $0x18] sm:$0xf]
      %v986 = vld [vmem:[%s978 + $0x1c] sm:$0xf]
      %v987 = vld [vmem:[%s978 + $0x20] sm:$0xf]
      %v988 = vld [vmem:[%s978 + $0x24] sm:$0xf]
      %v989 = vld [vmem:[%s978 + $0x28] sm:$0xf]
      %v990 = vld [vmem:[%s978 + $0x2c] sm:$0xf]
      %v991 = vld [vmem:[%s978 + $0x30] sm:$0xf]
      %v992 = vld [vmem:[%s978 + $0x34] sm:$0xf]
      %v993 = vld [vmem:[%s978 + $0x38] sm:$0xf]
      %v994 = vld [vmem:[%s978 + $0x3c] sm:$0xf]
      %v995 = vld [vmem:[%s199 + $0x2] sm:$0xff]
      %v996 = vld [vmem:[%s199 + $0xa] sm:$0xff]
      %v997 = vld [vmem:[%s199 + $0x12] sm:$0xff]
      %v998 = vld [vmem:[%s199 + $0x1a] sm:$0xff]
      %v999 = vld [vmem:[%s199 + $0x22] sm:$0xff]
      %v1000 = vld [vmem:[%s199 + $0x2a] sm:$0xff]
      %v1001 = vld [vmem:[%s199 + $0x32] sm:$0xff]
      %v1002 = vld [vmem:[%s199 + $0x3a] sm:$0xff]
      %v1003 = vld [vmem:[%s199 + $0x42] sm:$0xff]
      %v1004 = vld [vmem:[%s199 + $0x4a] sm:$0xff]
      %v1005 = vpack.c.bf16 %v996, %v995
      %v1006 = vpack.c.bf16 %v998, %v997
      %v1007 = vpack.c.bf16 %v1000, %v999
      %v1008 = vpack.c.bf16 %v1002, %v1001
      %v1009 = vpack.c.bf16 %v1004, %v1003
      %s1010 = scalar_lea.vmem %s2, 320
      %v1011 = vld [vmem:[%s1010] sm:$0xf]
      %v1012 = vld [vmem:[%s1010 + $0x4] sm:$0xf]
      %v1013 = vld [vmem:[%s1010 + $0x8] sm:$0xf]
      %v1014 = vld [vmem:[%s1010 + $0xc] sm:$0xf]
      %v1015 = vld [vmem:[%s1010 + $0x10] sm:$0xf]
      %v1016 = vld [vmem:[%s1010 + $0x14] sm:$0xf]
      %v1017 = vld [vmem:[%s1010 + $0x18] sm:$0xf]
      %v1018 = vld [vmem:[%s1010 + $0x1c] sm:$0xf]
      %v1019 = vld [vmem:[%s1010 + $0x20] sm:$0xf]
      %v1020 = vld [vmem:[%s1010 + $0x24] sm:$0xf]
      %v1021 = vld [vmem:[%s1010 + $0x28] sm:$0xf]
      %v1022 = vld [vmem:[%s1010 + $0x2c] sm:$0xf]
      %v1023 = vld [vmem:[%s1010 + $0x30] sm:$0xf]
      %v1024 = vld [vmem:[%s1010 + $0x34] sm:$0xf]
      %v1025 = vld [vmem:[%s1010 + $0x38] sm:$0xf]
      %v1026 = vld [vmem:[%s1010 + $0x3c] sm:$0xf]
      %v1043 = vunpack.c.l.b16 %v1011
      %v1044 = vunpack.c.l.b16 %v1012
      %v1045 = vunpack.c.l.b16 %v1013
      %v1046 = vunpack.c.l.b16 %v1014
      %v1047 = vunpack.c.l.b16 %v1015
      %v1048 = vunpack.c.l.b16 %v1016
      %v1049 = vunpack.c.l.b16 %v1017
      %v1050 = vunpack.c.l.b16 %v1018
      %v1051 = vunpack.c.l.b16 %v1019
      %v1052 = vunpack.c.l.b16 %v1020
      %v1053 = vunpack.c.l.b16 %v1021
      %v1054 = vunpack.c.l.b16 %v1022
      %v1055 = vunpack.c.l.b16 %v1023
      %v1056 = vunpack.c.l.b16 %v1024
      %v1057 = vunpack.c.l.b16 %v1025
      %v1058 = vunpack.c.l.b16 %v1026
      %v1059 = vpack.c.b16 %v1044, %v1043
      %v1060 = vpack.c.b16 %v1046, %v1045
      %v1061 = vpack.c.b16 %v1048, %v1047
      %v1062 = vpack.c.b16 %v1050, %v1049
      %v1063 = vpack.c.b16 %v1052, %v1051
      %v1064 = vpack.c.b16 %v1054, %v1053
      %v1065 = vpack.c.b16 %v1056, %v1055
      %v1066 = vpack.c.b16 %v1058, %v1057
      %1075 = vmatprep.subr.bf16.mxu0 0
      %1076 = vmatpush1.bf16.msra.mxu0 %v1059
      %1077 = vmatprep.subr.bf16.mxu0 0
      %1078 = vmatpush1.bf16.msra.mxu0 %v1060
      %1079 = vmatprep.subr.bf16.mxu0 0
      %1080 = vmatpush1.bf16.msra.mxu0 %v1061
      %1081 = vmatprep.subr.bf16.mxu0 0
      %1082 = vmatpush1.bf16.msra.mxu0 %v1062
      %1083 = vmatprep.subr.bf16.mxu0 0
      %1084 = vmatpush1.bf16.msra.mxu0 %v1063
      %1085 = vmatprep.subr.bf16.mxu0 0
      %1086 = vmatpush1.bf16.msra.mxu0 %v1064
      %1087 = vmatprep.subr.bf16.mxu0 0
      %1088 = vmatpush1.bf16.msra.mxu0 %v1065
      %1089 = vmatprep.subr.bf16.mxu0 0
      %1090 = vmatpush1.bf16.msra.mxu0 %v1066
      %1091 = vmatprep.subr.bf16.mxu0 0
      %1092 = vmatpush1.bf16.msra.mxu0 0
      %1093 = vmatprep.subr.bf16.mxu0 0
      %1094 = vmatpush1.bf16.msra.mxu0 0
      %1095 = vmatprep.subr.bf16.mxu0 0
      %1096 = vmatpush1.bf16.msra.mxu0 0
      %1097 = vmatprep.subr.bf16.mxu0 0
      %1098 = vmatpush1.bf16.msra.mxu0 0
      %1099 = vmatprep.subr.bf16.mxu0 0
      %1100 = vmatpush1.bf16.msra.mxu0 0
      %1101 = vmatprep.subr.bf16.mxu0 0
      %1102 = vmatpush1.bf16.msra.mxu0 0
      %1103 = vmatprep.subr.bf16.mxu0 0
      %1104 = vmatpush1.bf16.msra.mxu0 0
      %1105 = vmatprep.subr.bf16.mxu0 0
      %1106 = vmatpush1.bf16.msra.mxu0 0
      %1107 = vmatprep.mubr.bf16.mxu0 0
      %1108 = vmatmul.mubr.bf16.gmra.mrb[0].mxu0 %v1005
      %v1109 = vpop.f32.mrb[0].mxu0
      %v1110 = vadd.f32 0.0, %v1109
      %v1111 = vpop.f32.mrb[0].mxu0
      %v1112 = vpop.f32.mrb[0].mxu0
      %v1113 = vadd.f32 0.0, %v1112
      %v1114 = vpop.f32.mrb[0].mxu0
      %1115 = vmatprep.mubr.bf16.mxu0 0
      %1116 = vmatmul.mubr.bf16.gmra.mrb[0].mxu0 %v1006
      %v1117 = vpop.f32.mrb[0].mxu0
      %v1118 = vadd.f32 0.0, %v1117
      %v1119 = vpop.f32.mrb[0].mxu0
      %v1120 = vpop.f32.mrb[0].mxu0
      %v1121 = vadd.f32 0.0, %v1120
      %v1122 = vpop.f32.mrb[0].mxu0
      %1123 = vmatprep.mubr.bf16.mxu0 0
      %1124 = vmatmul.mubr.bf16.gmra.mrb[0].mxu0 %v1007
      %v1125 = vpop.f32.mrb[0].mxu0
      %v1126 = vadd.f32 0.0, %v1125
      %v1127 = vpop.f32.mrb[0].mxu0
      %v1128 = vpop.f32.mrb[0].mxu0
      %v1129 = vadd.f32 0.0, %v1128
      %v1130 = vpop.f32.mrb[0].mxu0
      %1131 = vmatprep.mubr.bf16.mxu0 0
      %1132 = vmatmul.mubr.bf16.gmra.mrb[0].mxu0 %v1008
      %v1133 = vpop.f32.mrb[0].mxu0
      %v1134 = vadd.f32 0.0, %v1133
      %v1135 = vpop.f32.mrb[0].mxu0
      %v1136 = vpop.f32.mrb[0].mxu0
      %v1137 = vadd.f32 0.0, %v1136
      %v1138 = vpop.f32.mrb[0].mxu0
      %1139 = vmatprep.mubr.bf16.mxu0 0
      %1140 = vmatmul.mubr.bf16.gmra.mrb[0].mxu0 %v1009
      %v1141 = vpop.f32.mrb[0].mxu0
      %v1142 = vadd.f32 0.0, %v1141
      %v1143 = vpop.f32.mrb[0].mxu0
      %v1144 = vpop.f32.mrb[0].mxu0
      %v1145 = vadd.f32 0.0, %v1144
      %v1146 = vpop.f32.mrb[0].mxu0
      %1147 = vdwg.mxu0
      %v1164 = vunpack.c.l.b16 %v979
      %v1165 = vunpack.c.l.b16 %v980
      %v1166 = vunpack.c.l.b16 %v981
      %v1167 = vunpack.c.l.b16 %v982
      %v1168 = vunpack.c.l.b16 %v983
      %v1169 = vunpack.c.l.b16 %v984
      %v1170 = vunpack.c.l.b16 %v985
      %v1171 = vunpack.c.l.b16 %v986
      %v1172 = vunpack.c.l.b16 %v987
      %v1173 = vunpack.c.l.b16 %v988
      %v1174 = vunpack.c.l.b16 %v989
      %v1175 = vunpack.c.l.b16 %v990
      %v1176 = vunpack.c.l.b16 %v991
      %v1177 = vunpack.c.l.b16 %v992
      %v1178 = vunpack.c.l.b16 %v993
      %v1179 = vunpack.c.l.b16 %v994
      %v1180 = vpack.c.b16 %v1165, %v1164
      %v1181 = vpack.c.b16 %v1167, %v1166
      %v1182 = vpack.c.b16 %v1169, %v1168
      %v1183 = vpack.c.b16 %v1171, %v1170
      %v1184 = vpack.c.b16 %v1173, %v1172
      %v1185 = vpack.c.b16 %v1175, %v1174
      %v1186 = vpack.c.b16 %v1177, %v1176
      %v1187 = vpack.c.b16 %v1179, %v1178
      %1196 = vmatprep.subr.bf16.mxu0 0
      %1197 = vmatpush1.bf16.msra.mxu0 %v1180
      %1198 = vmatprep.subr.bf16.mxu0 0
      %1199 = vmatpush1.bf16.msra.mxu0 %v1181
      %1200 = vmatprep.subr.bf16.mxu0 0
      %1201 = vmatpush1.bf16.msra.mxu0 %v1182
      %1202 = vmatprep.subr.bf16.mxu0 0
      %1203 = vmatpush1.bf16.msra.mxu0 %v1183
      %1204 = vmatprep.subr.bf16.mxu0 0
      %1205 = vmatpush1.bf16.msra.mxu0 %v1184
      %1206 = vmatprep.subr.bf16.mxu0 0
      %1207 = vmatpush1.bf16.msra.mxu0 %v1185
      %1208 = vmatprep.subr.bf16.mxu0 0
      %1209 = vmatpush1.bf16.msra.mxu0 %v1186
      %1210 = vmatprep.subr.bf16.mxu0 0
      %1211 = vmatpush1.bf16.msra.mxu0 %v1187
      %1212 = vmatprep.subr.bf16.mxu0 0
      %1213 = vmatpush1.bf16.msra.mxu0 0
      %1214 = vmatprep.subr.bf16.mxu0 0
      %1215 = vmatpush1.bf16.msra.mxu0 0
      %1216 = vmatprep.subr.bf16.mxu0 0
      %1217 = vmatpush1.bf16.msra.mxu0 0
      %1218 = vmatprep.subr.bf16.mxu0 0
      %1219 = vmatpush1.bf16.msra.mxu0 0
      %1220 = vmatprep.subr.bf16.mxu0 0
      %1221 = vmatpush1.bf16.msra.mxu0 0
      %1222 = vmatprep.subr.bf16.mxu0 0
      %1223 = vmatpush1.bf16.msra.mxu0 0
      %1224 = vmatprep.subr.bf16.mxu0 0
      %1225 = vmatpush1.bf16.msra.mxu0 0
      %1226 = vmatprep.subr.bf16.mxu0 0
      %1227 = vmatpush1.bf16.msra.mxu0 0
      %1228 = vmatprep.mubr.bf16.mxu0 0
      %1229 = vmatmul.mubr.bf16.gmra.mrb[0].mxu0 %v973
      %v1230 = vpop.f32.mrb[0].mxu0
      %v1231 = vadd.f32 %v1110, %v1230
      %v1232 = vpop.f32.mrb[0].mxu0
      %v1233 = vpop.f32.mrb[0].mxu0
      %v1234 = vadd.f32 %v1113, %v1233
      %v1235 = vpop.f32.mrb[0].mxu0
      %1236 = vmatprep.mubr.bf16.mxu0 0
      %1237 = vmatmul.mubr.bf16.gmra.mrb[0].mxu0 %v974
      %v1238 = vpop.f32.mrb[0].mxu0
      %v1239 = vadd.f32 %v1118, %v1238
      %v1240 = vpop.f32.mrb[0].mxu0
      %v1241 = vpop.f32.mrb[0].mxu0
      %v1242 = vadd.f32 %v1121, %v1241
      %v1243 = vpop.f32.mrb[0].mxu0
      %1244 = vmatprep.mubr.bf16.mxu0 0
      %1245 = vmatmul.mubr.bf16.gmra.mrb[0].mxu0 %v975
      %v1246 = vpop.f32.mrb[0].mxu0
      %v1247 = vadd.f32 %v1126, %v1246
      %v1248 = vpop.f32.mrb[0].mxu0
      %v1249 = vpop.f32.mrb[0].mxu0
      %v1250 = vadd.f32 %v1129, %v1249
      %v1251 = vpop.f32.mrb[0].mxu0
      %1252 = vmatprep.mubr.bf16.mxu0 0
      %1253 = vmatmul.mubr.bf16.gmra.mrb[0].mxu0 %v976
      %v1254 = vpop.f32.mrb[0].mxu0
      %v1255 = vadd.f32 %v1134, %v1254
      %v1256 = vpop.f32.mrb[0].mxu0
      %v1257 = vpop.f32.mrb[0].mxu0
      %v1258 = vadd.f32 %v1137, %v1257
      %v1259 = vpop.f32.mrb[0].mxu0
      %1260 = vmatprep.mubr.bf16.mxu0 0
      %1261 = vmatmul.mubr.bf16.gmra.mrb[0].mxu0 %v977
      %v1262 = vpop.f32.mrb[0].mxu0
      %v1263 = vadd.f32 %v1142, %v1262
      %v1264 = vpop.f32.mrb[0].mxu0
      %v1265 = vpop.f32.mrb[0].mxu0
      %v1266 = vadd.f32 %v1145, %v1265
      %v1267 = vpop.f32.mrb[0].mxu0
      %1268 = vdwg.mxu0
      %v1269 = vld [vmem:[%s199 + $0xb] sm:$0xff]
      %v1270 = vld [vmem:[%s199 + $0x13] sm:$0xff]
      %v1271 = vld [vmem:[%s199 + $0x1b] sm:$0xff]
      %v1272 = vld [vmem:[%s199 + $0x23] sm:$0xff]
      %v1273 = vld [vmem:[%s199 + $0x2b] sm:$0xff]
      %v1274 = vld [vmem:[%s199 + $0x33] sm:$0xff]
      %v1275 = vld [vmem:[%s199 + $0x3b] sm:$0xff]
      %v1276 = vld [vmem:[%s199 + $0x43] sm:$0xff]
      %v1277 = vld [vmem:[%s199 + $0x4b] sm:$0xff]
      %v1278 = vld [vmem:[%s199 + $0x53] sm:$0xff]
      %v1279 = vpack.c.bf16 %v1270, %v1269
      %v1280 = vpack.c.bf16 %v1272, %v1271
      %v1281 = vpack.c.bf16 %v1274, %v1273
      %v1282 = vpack.c.bf16 %v1276, %v1275
      %v1283 = vpack.c.bf16 %v1278, %v1277
      %s1284 = scalar_lea.vmem %s2, 384
      %v1285 = vld [vmem:[%s1284] sm:$0xf]
      %v1286 = vld [vmem:[%s1284 + $0x4] sm:$0xf]
      %v1287 = vld [vmem:[%s1284 + $0x8] sm:$0xf]
      %v1288 = vld [vmem:[%s1284 + $0xc] sm:$0xf]
      %v1289 = vld [vmem:[%s1284 + $0x10] sm:$0xf]
      %v1290 = vld [vmem:[%s1284 + $0x14] sm:$0xf]
      %v1291 = vld [vmem:[%s1284 + $0x18] sm:$0xf]
      %v1292 = vld [vmem:[%s1284 + $0x1c] sm:$0xf]
      %v1293 = vld [vmem:[%s1284 + $0x20] sm:$0xf]
      %v1294 = vld [vmem:[%s1284 + $0x24] sm:$0xf]
      %v1295 = vld [vmem:[%s1284 + $0x28] sm:$0xf]
      %v1296 = vld [vmem:[%s1284 + $0x2c] sm:$0xf]
      %v1297 = vld [vmem:[%s1284 + $0x30] sm:$0xf]
      %v1298 = vld [vmem:[%s1284 + $0x34] sm:$0xf]
      %v1299 = vld [vmem:[%s1284 + $0x38] sm:$0xf]
      %v1300 = vld [vmem:[%s1284 + $0x3c] sm:$0xf]
      %v1317 = vunpack.c.l.b16 %v1285
      %v1318 = vunpack.c.l.b16 %v1286
      %v1319 = vunpack.c.l.b16 %v1287
      %v1320 = vunpack.c.l.b16 %v1288
      %v1321 = vunpack.c.l.b16 %v1289
      %v1322 = vunpack.c.l.b16 %v1290
      %v1323 = vunpack.c.l.b16 %v1291
      %v1324 = vunpack.c.l.b16 %v1292
      %v1325 = vunpack.c.l.b16 %v1293
      %v1326 = vunpack.c.l.b16 %v1294
      %v1327 = vunpack.c.l.b16 %v1295
      %v1328 = vunpack.c.l.b16 %v1296
      %v1329 = vunpack.c.l.b16 %v1297
      %v1330 = vunpack.c.l.b16 %v1298
      %v1331 = vunpack.c.l.b16 %v1299
      %v1332 = vunpack.c.l.b16 %v1300
      %v1333 = vpack.c.b16 %v1318, %v1317
      %v1334 = vpack.c.b16 %v1320, %v1319
      %v1335 = vpack.c.b16 %v1322, %v1321
      %v1336 = vpack.c.b16 %v1324, %v1323
      %v1337 = vpack.c.b16 %v1326, %v1325
      %v1338 = vpack.c.b16 %v1328, %v1327
      %v1339 = vpack.c.b16 %v1330, %v1329
      %v1340 = vpack.c.b16 %v1332, %v1331
      %1349 = vmatprep.subr.bf16.mxu0 0
      %1350 = vmatpush1.bf16.msra.mxu0 %v1333
      %1351 = vmatprep.subr.bf16.mxu0 0
      %1352 = vmatpush1.bf16.msra.mxu0 %v1334
      %1353 = vmatprep.subr.bf16.mxu0 0
      %1354 = vmatpush1.bf16.msra.mxu0 %v1335
      %1355 = vmatprep.subr.bf16.mxu0 0
      %1356 = vmatpush1.bf16.msra.mxu0 %v1336
      %1357 = vmatprep.subr.bf16.mxu0 0
      %1358 = vmatpush1.bf16.msra.mxu0 %v1337
      %1359 = vmatprep.subr.bf16.mxu0 0
      %1360 = vmatpush1.bf16.msra.mxu0 %v1338
      %1361 = vmatprep.subr.bf16.mxu0 0
      %1362 = vmatpush1.bf16.msra.mxu0 %v1339
      %1363 = vmatprep.subr.bf16.mxu0 0
      %1364 = vmatpush1.bf16.msra.mxu0 %v1340
      %1365 = vmatprep.subr.bf16.mxu0 0
      %1366 = vmatpush1.bf16.msra.mxu0 0
      %1367 = vmatprep.subr.bf16.mxu0 0
      %1368 = vmatpush1.bf16.msra.mxu0 0
      %1369 = vmatprep.subr.bf16.mxu0 0
      %1370 = vmatpush1.bf16.msra.mxu0 0
      %1371 = vmatprep.subr.bf16.mxu0 0
      %1372 = vmatpush1.bf16.msra.mxu0 0
      %1373 = vmatprep.subr.bf16.mxu0 0
      %1374 = vmatpush1.bf16.msra.mxu0 0
      %1375 = vmatprep.subr.bf16.mxu0 0
      %1376 = vmatpush1.bf16.msra.mxu0 0
      %1377 = vmatprep.subr.bf16.mxu0 0
      %1378 = vmatpush1.bf16.msra.mxu0 0
      %1379 = vmatprep.subr.bf16.mxu0 0
      %1380 = vmatpush1.bf16.msra.mxu0 0
      %1381 = vmatprep.mubr.bf16.mxu0 0
      %1382 = vmatmul.mubr.bf16.gmra.mrb[0].mxu0 %v1279
      %v1383 = vpop.f32.mrb[0].mxu0
      %v1384 = vadd.f32 0.0, %v1383
      %v1385 = vpop.f32.mrb[0].mxu0
      %v1386 = vpop.f32.mrb[0].mxu0
      %v1387 = vadd.f32 0.0, %v1386
      %v1388 = vpop.f32.mrb[0].mxu0
      %1389 = vmatprep.mubr.bf16.mxu0 0
      %1390 = vmatmul.mubr.bf16.gmra.mrb[0].mxu0 %v1280
      %v1391 = vpop.f32.mrb[0].mxu0
      %v1392 = vadd.f32 0.0, %v1391
      %v1393 = vpop.f32.mrb[0].mxu0
      %v1394 = vpop.f32.mrb[0].mxu0
      %v1395 = vadd.f32 0.0, %v1394
      %v1396 = vpop.f32.mrb[0].mxu0
      %1397 = vmatprep.mubr.bf16.mxu0 0
      %1398 = vmatmul.mubr.bf16.gmra.mrb[0].mxu0 %v1281
      %v1399 = vpop.f32.mrb[0].mxu0
      %v1400 = vadd.f32 0.0, %v1399
      %v1401 = vpop.f32.mrb[0].mxu0
      %v1402 = vpop.f32.mrb[0].mxu0
      %v1403 = vadd.f32 0.0, %v1402
      %v1404 = vpop.f32.mrb[0].mxu0
      %1405 = vmatprep.mubr.bf16.mxu0 0
      %1406 = vmatmul.mubr.bf16.gmra.mrb[0].mxu0 %v1282
      %v1407 = vpop.f32.mrb[0].mxu0
      %v1408 = vadd.f32 0.0, %v1407
      %v1409 = vpop.f32.mrb[0].mxu0
      %v1410 = vpop.f32.mrb[0].mxu0
      %v1411 = vadd.f32 0.0, %v1410
      %v1412 = vpop.f32.mrb[0].mxu0
      %1413 = vmatprep.mubr.bf16.mxu0 0
      %1414 = vmatmul.mubr.bf16.gmra.mrb[0].mxu0 %v1283
      %v1415 = vpop.f32.mrb[0].mxu0
      %v1416 = vadd.f32 0.0, %v1415
      %v1417 = vpop.f32.mrb[0].mxu0
      %v1418 = vpop.f32.mrb[0].mxu0
      %v1419 = vadd.f32 0.0, %v1418
      %v1420 = vpop.f32.mrb[0].mxu0
      %1421 = vdwg.mxu0
      %v1422 = vadd.f32 %v1231, %v1384
      %v1423 = vadd.f32 %v1234, %v1387
      %v1424 = vadd.f32 %v1239, %v1392
      %v1425 = vadd.f32 %v1242, %v1395
      %v1426 = vadd.f32 %v1247, %v1400
      %v1427 = vadd.f32 %v1250, %v1403
      %v1428 = vadd.f32 %v1255, %v1408
      %v1429 = vadd.f32 %v1258, %v1411
      %v1430 = vadd.f32 %v1263, %v1416
      %v1431 = vadd.f32 %v1266, %v1419
      %v1432 = vld [vmem:[%s199 + $0xc] sm:$0xff]
      %v1433 = vld [vmem:[%s199 + $0x14] sm:$0xff]
      %v1434 = vld [vmem:[%s199 + $0x1c] sm:$0xff]
      %v1435 = vld [vmem:[%s199 + $0x24] sm:$0xff]
      %v1436 = vld [vmem:[%s199 + $0x2c] sm:$0xff]
      %v1437 = vld [vmem:[%s199 + $0x34] sm:$0xff]
      %v1438 = vld [vmem:[%s199 + $0x3c] sm:$0xff]
      %v1439 = vld [vmem:[%s199 + $0x44] sm:$0xff]
      %v1440 = vld [vmem:[%s199 + $0x4c] sm:$0xff]
      %v1441 = vld [vmem:[%s199 + $0x54] sm:$0xff]
      %v1442 = vpack.c.bf16 %v1433, %v1432
      %v1443 = vpack.c.bf16 %v1435, %v1434
      %v1444 = vpack.c.bf16 %v1437, %v1436
      %v1445 = vpack.c.bf16 %v1439, %v1438
      %v1446 = vpack.c.bf16 %v1441, %v1440
      %s1447 = scalar_lea.vmem %s2, 448
      %v1448 = vld [vmem:[%s1447] sm:$0xf]
      %v1449 = vld [vmem:[%s1447 + $0x4] sm:$0xf]
      %v1450 = vld [vmem:[%s1447 + $0x8] sm:$0xf]
      %v1451 = vld [vmem:[%s1447 + $0xc] sm:$0xf]
      %v1452 = vld [vmem:[%s1447 + $0x10] sm:$0xf]
      %v1453 = vld [vmem:[%s1447 + $0x14] sm:$0xf]
      %v1454 = vld [vmem:[%s1447 + $0x18] sm:$0xf]
      %v1455 = vld [vmem:[%s1447 + $0x1c] sm:$0xf]
      %v1456 = vld [vmem:[%s1447 + $0x20] sm:$0xf]
      %v1457 = vld [vmem:[%s1447 + $0x24] sm:$0xf]
      %v1458 = vld [vmem:[%s1447 + $0x28] sm:$0xf]
      %v1459 = vld [vmem:[%s1447 + $0x2c] sm:$0xf]
      %v1460 = vld [vmem:[%s1447 + $0x30] sm:$0xf]
      %v1461 = vld [vmem:[%s1447 + $0x34] sm:$0xf]
      %v1462 = vld [vmem:[%s1447 + $0x38] sm:$0xf]
      %v1463 = vld [vmem:[%s1447 + $0x3c] sm:$0xf]
      %v1480 = vunpack.c.l.b16 %v1448
      %v1481 = vunpack.c.l.b16 %v1449
      %v1482 = vunpack.c.l.b16 %v1450
      %v1483 = vunpack.c.l.b16 %v1451
      %v1484 = vunpack.c.l.b16 %v1452
      %v1485 = vunpack.c.l.b16 %v1453
      %v1486 = vunpack.c.l.b16 %v1454
      %v1487 = vunpack.c.l.b16 %v1455
      %v1488 = vunpack.c.l.b16 %v1456
      %v1489 = vunpack.c.l.b16 %v1457
      %v1490 = vunpack.c.l.b16 %v1458
      %v1491 = vunpack.c.l.b16 %v1459
      %v1492 = vunpack.c.l.b16 %v1460
      %v1493 = vunpack.c.l.b16 %v1461
      %v1494 = vunpack.c.l.b16 %v1462
      %v1495 = vunpack.c.l.b16 %v1463
      %v1496 = vpack.c.b16 %v1481, %v1480
      %v1497 = vpack.c.b16 %v1483, %v1482
      %v1498 = vpack.c.b16 %v1485, %v1484
      %v1499 = vpack.c.b16 %v1487, %v1486
      %v1500 = vpack.c.b16 %v1489, %v1488
      %v1501 = vpack.c.b16 %v1491, %v1490
      %v1502 = vpack.c.b16 %v1493, %v1492
      %v1503 = vpack.c.b16 %v1495, %v1494
      %1512 = vmatprep.subr.bf16.mxu0 0
      %1513 = vmatpush1.bf16.msra.mxu0 %v1496
      %1514 = vmatprep.subr.bf16.mxu0 0
      %1515 = vmatpush1.bf16.msra.mxu0 %v1497
      %1516 = vmatprep.subr.bf16.mxu0 0
      %1517 = vmatpush1.bf16.msra.mxu0 %v1498
      %1518 = vmatprep.subr.bf16.mxu0 0
      %1519 = vmatpush1.bf16.msra.mxu0 %v1499
      %1520 = vmatprep.subr.bf16.mxu0 0
      %1521 = vmatpush1.bf16.msra.mxu0 %v1500
      %1522 = vmatprep.subr.bf16.mxu0 0
      %1523 = vmatpush1.bf16.msra.mxu0 %v1501
      %1524 = vmatprep.subr.bf16.mxu0 0
      %1525 = vmatpush1.bf16.msra.mxu0 %v1502
      %1526 = vmatprep.subr.bf16.mxu0 0
      %1527 = vmatpush1.bf16.msra.mxu0 %v1503
      %1528 = vmatprep.subr.bf16.mxu0 0
      %1529 = vmatpush1.bf16.msra.mxu0 0
      %1530 = vmatprep.subr.bf16.mxu0 0
      %1531 = vmatpush1.bf16.msra.mxu0 0
      %1532 = vmatprep.subr.bf16.mxu0 0
      %1533 = vmatpush1.bf16.msra.mxu0 0
      %1534 = vmatprep.subr.bf16.mxu0 0
      %1535 = vmatpush1.bf16.msra.mxu0 0
      %1536 = vmatprep.subr.bf16.mxu0 0
      %1537 = vmatpush1.bf16.msra.mxu0 0
      %1538 = vmatprep.subr.bf16.mxu0 0
      %1539 = vmatpush1.bf16.msra.mxu0 0
      %1540 = vmatprep.subr.bf16.mxu0 0
      %1541 = vmatpush1.bf16.msra.mxu0 0
      %1542 = vmatprep.subr.bf16.mxu0 0
      %1543 = vmatpush1.bf16.msra.mxu0 0
      %1544 = vmatprep.mubr.bf16.mxu0 0
      %1545 = vmatmul.mubr.bf16.gmra.mrb[0].mxu0 %v1442
      %v1546 = vpop.f32.mrb[0].mxu0
      %v1547 = vadd.f32 0.0, %v1546
      %v1548 = vpop.f32.mrb[0].mxu0
      %v1549 = vpop.f32.mrb[0].mxu0
      %v1550 = vadd.f32 0.0, %v1549
      %v1551 = vpop.f32.mrb[0].mxu0
      %1552 = vmatprep.mubr.bf16.mxu0 0
      %1553 = vmatmul.mubr.bf16.gmra.mrb[0].mxu0 %v1443
      %v1554 = vpop.f32.mrb[0].mxu0
      %v1555 = vadd.f32 0.0, %v1554
      %v1556 = vpop.f32.mrb[0].mxu0
      %v1557 = vpop.f32.mrb[0].mxu0
      %v1558 = vadd.f32 0.0, %v1557
      %v1559 = vpop.f32.mrb[0].mxu0
      %1560 = vmatprep.mubr.bf16.mxu0 0
      %1561 = vmatmul.mubr.bf16.gmra.mrb[0].mxu0 %v1444
      %v1562 = vpop.f32.mrb[0].mxu0
      %v1563 = vadd.f32 0.0, %v1562
      %v1564 = vpop.f32.mrb[0].mxu0
      %v1565 = vpop.f32.mrb[0].mxu0
      %v1566 = vadd.f32 0.0, %v1565
      %v1567 = vpop.f32.mrb[0].mxu0
      %1568 = vmatprep.mubr.bf16.mxu0 0
      %1569 = vmatmul.mubr.bf16.gmra.mrb[0].mxu0 %v1445
      %v1570 = vpop.f32.mrb[0].mxu0
      %v1571 = vadd.f32 0.0, %v1570
      %v1572 = vpop.f32.mrb[0].mxu0
      %v1573 = vpop.f32.mrb[0].mxu0
      %v1574 = vadd.f32 0.0, %v1573
      %v1575 = vpop.f32.mrb[0].mxu0
      %1576 = vmatprep.mubr.bf16.mxu0 0
      %1577 = vmatmul.mubr.bf16.gmra.mrb[0].mxu0 %v1446
      %v1578 = vpop.f32.mrb[0].mxu0
      %v1579 = vadd.f32 0.0, %v1578
      %v1580 = vpop.f32.mrb[0].mxu0
      %v1581 = vpop.f32.mrb[0].mxu0
      %v1582 = vadd.f32 0.0, %v1581
      %v1583 = vpop.f32.mrb[0].mxu0
      %1584 = vdwg.mxu0
      %v1585 = vadd.f32 %v1422, %v1547
      %v1586 = vadd.f32 %v1423, %v1550
      %v1587 = vadd.f32 %v1424, %v1555
      %v1588 = vadd.f32 %v1425, %v1558
      %v1589 = vadd.f32 %v1426, %v1563
      %v1590 = vadd.f32 %v1427, %v1566
      %v1591 = vadd.f32 %v1428, %v1571
      %v1592 = vadd.f32 %v1429, %v1574
      %v1593 = vadd.f32 %v1430, %v1579
      %v1594 = vadd.f32 %v1431, %v1582
      %1595 = vst [vmem:[%s204 + $0x8] sm:$0xff] %v1585
      %1596 = vst [vmem:[%s204 + $0x28] sm:$0xff] %v1586
      %1597 = vst [vmem:[%s204 + $0x48] sm:$0xff] %v1587
      %1598 = vst [vmem:[%s204 + $0x68] sm:$0xff] %v1588
      %1599 = vst [vmem:[%s204 + $0x88] sm:$0xff] %v1589
      %1600 = vst [vmem:[%s204 + $0xa8] sm:$0xff] %v1590
      %1601 = vst [vmem:[%s204 + $0xc8] sm:$0xff] %v1591
      %1602 = vst [vmem:[%s204 + $0xe8] sm:$0xff] %v1592
      %1603 = vst [vmem:[%s204 + $0x108] sm:$0xff] %v1593
      %1604 = vst [vmem:[%s204 + $0x128] sm:$0xff] %v1594
      %v1605 = vmul.f32 %v1585, %v864
      %v1606 = vmul.f32 %v1586, %v869
      %v1607 = vmul.f32 %v1587, %v874
      %v1608 = vmul.f32 %v1588, %v879
      %v1609 = vmul.f32 %v1589, %v884
      %v1610 = vmul.f32 %v1590, %v889
      %v1611 = vmul.f32 %v1591, %v894
      %v1612 = vmul.f32 %v1592, %v899
      %v1613 = vmul.f32 %v1593, %v904
      %v1614 = vmul.f32 %v1594, %v909
      %v1615 = vadd.f32 %v1605, %v1606
      %v1616 = vadd.f32 %v1615, %v1607
      %v1617 = vadd.f32 %v1616, %v1608
      %v1618 = vadd.f32 %v1617, %v1609
      %v1619 = vadd.f32 %v1618, %v1610
      %v1620 = vadd.f32 %v1619, %v1611
      %v1621 = vadd.f32 %v1620, %v1612
      %v1622 = vadd.f32 %v1621, %v1613
      %v1623 = vadd.f32 %v1622, %v1614
      %v1624 = vrot.slane %v1623, 4
      %v1625 = vadd.f32 %v1623, %v1624
      %v1626 = vrot.slane %v1625, 2
      %v1627 = vadd.f32 %v1625, %v1626
      %v1628 = vrot.slane %v1627, 1
      %v1629 = vadd.f32 %v1627, %v1628
      %v1630 = vadd.f32 %v936, %v1629
      %v1631 = vmul.f32 %v1605, %v1585
      %v1632 = vmul.f32 %v1606, %v1586
      %v1633 = vmul.f32 %v1607, %v1587
      %v1634 = vmul.f32 %v1608, %v1588
      %v1635 = vmul.f32 %v1609, %v1589
      %v1636 = vmul.f32 %v1610, %v1590
      %v1637 = vmul.f32 %v1611, %v1591
      %v1638 = vmul.f32 %v1612, %v1592
      %v1639 = vmul.f32 %v1613, %v1593
      %v1640 = vmul.f32 %v1614, %v1594
      %v1641 = vadd.f32 %v1631, %v1632
      %v1642 = vadd.f32 %v1641, %v1633
      %v1643 = vadd.f32 %v1642, %v1634
      %v1644 = vadd.f32 %v1643, %v1635
      %v1645 = vadd.f32 %v1644, %v1636
      %v1646 = vadd.f32 %v1645, %v1637
      %v1647 = vadd.f32 %v1646, %v1638
      %v1648 = vadd.f32 %v1647, %v1639
      %v1649 = vadd.f32 %v1648, %v1640
      %v1650 = vrot.slane %v1649, 4
      %v1651 = vadd.f32 %v1649, %v1650
      %v1652 = vrot.slane %v1651, 2
      %v1653 = vadd.f32 %v1651, %v1652
      %v1654 = vrot.slane %v1653, 1
      %v1655 = vadd.f32 %v1653, %v1654
      %v1656 = vadd.f32 %v962, %v1655
      %v1657 = vld [vmem:[%s199 + $0xa] sm:$0xff]
      %v1658 = vld [vmem:[%s199 + $0x12] sm:$0xff]
      %v1659 = vld [vmem:[%s199 + $0x1a] sm:$0xff]
      %v1660 = vld [vmem:[%s199 + $0x22] sm:$0xff]
      %v1661 = vld [vmem:[%s199 + $0x2a] sm:$0xff]
      %v1662 = vld [vmem:[%s199 + $0x32] sm:$0xff]
      %v1663 = vld [vmem:[%s199 + $0x3a] sm:$0xff]
      %v1664 = vld [vmem:[%s199 + $0x42] sm:$0xff]
      %v1665 = vld [vmem:[%s199 + $0x4a] sm:$0xff]
      %v1666 = vld [vmem:[%s199 + $0x52] sm:$0xff]
      %v1667 = vpack.c.bf16 %v1658, %v1657
      %v1668 = vpack.c.bf16 %v1660, %v1659
      %v1669 = vpack.c.bf16 %v1662, %v1661
      %v1670 = vpack.c.bf16 %v1664, %v1663
      %v1671 = vpack.c.bf16 %v1666, %v1665
      %s1672 = scalar_lea.vmem %s2, 512
      %v1673 = vld [vmem:[%s1672] sm:$0xf]
      %v1674 = vld [vmem:[%s1672 + $0x4] sm:$0xf]
      %v1675 = vld [vmem:[%s1672 + $0x8] sm:$0xf]
      %v1676 = vld [vmem:[%s1672 + $0xc] sm:$0xf]
      %v1677 = vld [vmem:[%s1672 + $0x10] sm:$0xf]
      %v1678 = vld [vmem:[%s1672 + $0x14] sm:$0xf]
      %v1679 = vld [vmem:[%s1672 + $0x18] sm:$0xf]
      %v1680 = vld [vmem:[%s1672 + $0x1c] sm:$0xf]
      %v1681 = vld [vmem:[%s1672 + $0x20] sm:$0xf]
      %v1682 = vld [vmem:[%s1672 + $0x24] sm:$0xf]
      %v1683 = vld [vmem:[%s1672 + $0x28] sm:$0xf]
      %v1684 = vld [vmem:[%s1672 + $0x2c] sm:$0xf]
      %v1685 = vld [vmem:[%s1672 + $0x30] sm:$0xf]
      %v1686 = vld [vmem:[%s1672 + $0x34] sm:$0xf]
      %v1687 = vld [vmem:[%s1672 + $0x38] sm:$0xf]
      %v1688 = vld [vmem:[%s1672 + $0x3c] sm:$0xf]
      %v1689 = vld [vmem:[%s199 + $0xb] sm:$0xff]
      %v1690 = vld [vmem:[%s199 + $0x13] sm:$0xff]
      %v1691 = vld [vmem:[%s199 + $0x1b] sm:$0xff]
      %v1692 = vld [vmem:[%s199 + $0x23] sm:$0xff]
      %v1693 = vld [vmem:[%s199 + $0x2b] sm:$0xff]
      %v1694 = vld [vmem:[%s199 + $0x33] sm:$0xff]
      %v1695 = vld [vmem:[%s199 + $0x3b] sm:$0xff]
      %v1696 = vld [vmem:[%s199 + $0x43] sm:$0xff]
      %v1697 = vld [vmem:[%s199 + $0x4b] sm:$0xff]
      %v1698 = vld [vmem:[%s199 + $0x53] sm:$0xff]
      %v1699 = vpack.c.bf16 %v1690, %v1689
      %v1700 = vpack.c.bf16 %v1692, %v1691
      %v1701 = vpack.c.bf16 %v1694, %v1693
      %v1702 = vpack.c.bf16 %v1696, %v1695
      %v1703 = vpack.c.bf16 %v1698, %v1697
      %s1704 = scalar_lea.vmem %s2, 576
      %v1705 = vld [vmem:[%s1704] sm:$0xf]
      %v1706 = vld [vmem:[%s1704 + $0x4] sm:$0xf]
      %v1707 = vld [vmem:[%s1704 + $0x8] sm:$0xf]
      %v1708 = vld [vmem:[%s1704 + $0xc] sm:$0xf]
      %v1709 = vld [vmem:[%s1704 + $0x10] sm:$0xf]
      %v1710 = vld [vmem:[%s1704 + $0x14] sm:$0xf]
      %v1711 = vld [vmem:[%s1704 + $0x18] sm:$0xf]
      %v1712 = vld [vmem:[%s1704 + $0x1c] sm:$0xf]
      %v1713 = vld [vmem:[%s1704 + $0x20] sm:$0xf]
      %v1714 = vld [vmem:[%s1704 + $0x24] sm:$0xf]
      %v1715 = vld [vmem:[%s1704 + $0x28] sm:$0xf]
      %v1716 = vld [vmem:[%s1704 + $0x2c] sm:$0xf]
      %v1717 = vld [vmem:[%s1704 + $0x30] sm:$0xf]
      %v1718 = vld [vmem:[%s1704 + $0x34] sm:$0xf]
      %v1719 = vld [vmem:[%s1704 + $0x38] sm:$0xf]
      %v1720 = vld [vmem:[%s1704 + $0x3c] sm:$0xf]
      %v1737 = vunpack.c.l.b16 %v1705
      %v1738 = vunpack.c.l.b16 %v1706
      %v1739 = vunpack.c.l.b16 %v1707
      %v1740 = vunpack.c.l.b16 %v1708
      %v1741 = vunpack.c.l.b16 %v1709
      %v1742 = vunpack.c.l.b16 %v1710
      %v1743 = vunpack.c.l.b16 %v1711
      %v1744 = vunpack.c.l.b16 %v1712
      %v1745 = vunpack.c.l.b16 %v1713
      %v1746 = vunpack.c.l.b16 %v1714
      %v1747 = vunpack.c.l.b16 %v1715
      %v1748 = vunpack.c.l.b16 %v1716
      %v1749 = vunpack.c.l.b16 %v1717
      %v1750 = vunpack.c.l.b16 %v1718
      %v1751 = vunpack.c.l.b16 %v1719
      %v1752 = vunpack.c.l.b16 %v1720
      %v1753 = vpack.c.b16 %v1738, %v1737
      %v1754 = vpack.c.b16 %v1740, %v1739
      %v1755 = vpack.c.b16 %v1742, %v1741
      %v1756 = vpack.c.b16 %v1744, %v1743
      %v1757 = vpack.c.b16 %v1746, %v1745
      %v1758 = vpack.c.b16 %v1748, %v1747
      %v1759 = vpack.c.b16 %v1750, %v1749
      %v1760 = vpack.c.b16 %v1752, %v1751
      %1769 = vmatprep.subr.bf16.mxu0 0
      %1770 = vmatpush1.bf16.msra.mxu0 %v1753
      %1771 = vmatprep.subr.bf16.mxu0 0
      %1772 = vmatpush1.bf16.msra.mxu0 %v1754
      %1773 = vmatprep.subr.bf16.mxu0 0
      %1774 = vmatpush1.bf16.msra.mxu0 %v1755
      %1775 = vmatprep.subr.bf16.mxu0 0
      %1776 = vmatpush1.bf16.msra.mxu0 %v1756
      %1777 = vmatprep.subr.bf16.mxu0 0
      %1778 = vmatpush1.bf16.msra.mxu0 %v1757
      %1779 = vmatprep.subr.bf16.mxu0 0
      %1780 = vmatpush1.bf16.msra.mxu0 %v1758
      %1781 = vmatprep.subr.bf16.mxu0 0
      %1782 = vmatpush1.bf16.msra.mxu0 %v1759
      %1783 = vmatprep.subr.bf16.mxu0 0
      %1784 = vmatpush1.bf16.msra.mxu0 %v1760
      %1785 = vmatprep.subr.bf16.mxu0 0
      %1786 = vmatpush1.bf16.msra.mxu0 0
      %1787 = vmatprep.subr.bf16.mxu0 0
      %1788 = vmatpush1.bf16.msra.mxu0 0
      %1789 = vmatprep.subr.bf16.mxu0 0
      %1790 = vmatpush1.bf16.msra.mxu0 0
      %1791 = vmatprep.subr.bf16.mxu0 0
      %1792 = vmatpush1.bf16.msra.mxu0 0
      %1793 = vmatprep.subr.bf16.mxu0 0
      %1794 = vmatpush1.bf16.msra.mxu0 0
      %1795 = vmatprep.subr.bf16.mxu0 0
      %1796 = vmatpush1.bf16.msra.mxu0 0
      %1797 = vmatprep.subr.bf16.mxu0 0
      %1798 = vmatpush1.bf16.msra.mxu0 0
      %1799 = vmatprep.subr.bf16.mxu0 0
      %1800 = vmatpush1.bf16.msra.mxu0 0
      %1801 = vmatprep.mubr.bf16.mxu0 0
      %1802 = vmatmul.mubr.bf16.gmra.mrb[0].mxu0 %v1699
      %v1803 = vpop.f32.mrb[0].mxu0
      %v1804 = vadd.f32 0.0, %v1803
      %v1805 = vpop.f32.mrb[0].mxu0
      %v1806 = vpop.f32.mrb[0].mxu0
      %v1807 = vadd.f32 0.0, %v1806
      %v1808 = vpop.f32.mrb[0].mxu0
      %1809 = vmatprep.mubr.bf16.mxu0 0
      %1810 = vmatmul.mubr.bf16.gmra.mrb[0].mxu0 %v1700
      %v1811 = vpop.f32.mrb[0].mxu0
      %v1812 = vadd.f32 0.0, %v1811
      %v1813 = vpop.f32.mrb[0].mxu0
      %v1814 = vpop.f32.mrb[0].mxu0
      %v1815 = vadd.f32 0.0, %v1814
      %v1816 = vpop.f32.mrb[0].mxu0
      %1817 = vmatprep.mubr.bf16.mxu0 0
      %1818 = vmatmul.mubr.bf16.gmra.mrb[0].mxu0 %v1701
      %v1819 = vpop.f32.mrb[0].mxu0
      %v1820 = vadd.f32 0.0, %v1819
      %v1821 = vpop.f32.mrb[0].mxu0
      %v1822 = vpop.f32.mrb[0].mxu0
      %v1823 = vadd.f32 0.0, %v1822
      %v1824 = vpop.f32.mrb[0].mxu0
      %1825 = vmatprep.mubr.bf16.mxu0 0
      %1826 = vmatmul.mubr.bf16.gmra.mrb[0].mxu0 %v1702
      %v1827 = vpop.f32.mrb[0].mxu0
      %v1828 = vadd.f32 0.0, %v1827
      %v1829 = vpop.f32.mrb[0].mxu0
      %v1830 = vpop.f32.mrb[0].mxu0
      %v1831 = vadd.f32 0.0, %v1830
      %v1832 = vpop.f32.mrb[0].mxu0
      %1833 = vmatprep.mubr.bf16.mxu0 0
      %1834 = vmatmul.mubr.bf16.gmra.mrb[0].mxu0 %v1703
      %v1835 = vpop.f32.mrb[0].mxu0
      %v1836 = vadd.f32 0.0, %v1835
      %v1837 = vpop.f32.mrb[0].mxu0
      %v1838 = vpop.f32.mrb[0].mxu0
      %v1839 = vadd.f32 0.0, %v1838
      %v1840 = vpop.f32.mrb[0].mxu0
      %1841 = vdwg.mxu0
      %v1858 = vunpack.c.l.b16 %v1673
      %v1859 = vunpack.c.l.b16 %v1674
      %v1860 = vunpack.c.l.b16 %v1675
      %v1861 = vunpack.c.l.b16 %v1676
      %v1862 = vunpack.c.l.b16 %v1677
      %v1863 = vunpack.c.l.b16 %v1678
      %v1864 = vunpack.c.l.b16 %v1679
      %v1865 = vunpack.c.l.b16 %v1680
      %v1866 = vunpack.c.l.b16 %v1681
      %v1867 = vunpack.c.l.b16 %v1682
      %v1868 = vunpack.c.l.b16 %v1683
      %v1869 = vunpack.c.l.b16 %v1684
      %v1870 = vunpack.c.l.b16 %v1685
      %v1871 = vunpack.c.l.b16 %v1686
      %v1872 = vunpack.c.l.b16 %v1687
      %v1873 = vunpack.c.l.b16 %v1688
      %v1874 = vpack.c.b16 %v1859, %v1858
      %v1875 = vpack.c.b16 %v1861, %v1860
      %v1876 = vpack.c.b16 %v1863, %v1862
      %v1877 = vpack.c.b16 %v1865, %v1864
      %v1878 = vpack.c.b16 %v1867, %v1866
      %v1879 = vpack.c.b16 %v1869, %v1868
      %v1880 = vpack.c.b16 %v1871, %v1870
      %v1881 = vpack.c.b16 %v1873, %v1872
      %1890 = vmatprep.subr.bf16.mxu0 0
      %1891 = vmatpush1.bf16.msra.mxu0 %v1874
      %1892 = vmatprep.subr.bf16.mxu0 0
      %1893 = vmatpush1.bf16.msra.mxu0 %v1875
      %1894 = vmatprep.subr.bf16.mxu0 0
      %1895 = vmatpush1.bf16.msra.mxu0 %v1876
      %1896 = vmatprep.subr.bf16.mxu0 0
      %1897 = vmatpush1.bf16.msra.mxu0 %v1877
      %1898 = vmatprep.subr.bf16.mxu0 0
      %1899 = vmatpush1.bf16.msra.mxu0 %v1878
      %1900 = vmatprep.subr.bf16.mxu0 0
      %1901 = vmatpush1.bf16.msra.mxu0 %v1879
      %1902 = vmatprep.subr.bf16.mxu0 0
      %1903 = vmatpush1.bf16.msra.mxu0 %v1880
      %1904 = vmatprep.subr.bf16.mxu0 0
      %1905 = vmatpush1.bf16.msra.mxu0 %v1881
      %1906 = vmatprep.subr.bf16.mxu0 0
      %1907 = vmatpush1.bf16.msra.mxu0 0
      %1908 = vmatprep.subr.bf16.mxu0 0
      %1909 = vmatpush1.bf16.msra.mxu0 0
      %1910 = vmatprep.subr.bf16.mxu0 0
      %1911 = vmatpush1.bf16.msra.mxu0 0
      %1912 = vmatprep.subr.bf16.mxu0 0
      %1913 = vmatpush1.bf16.msra.mxu0 0
      %1914 = vmatprep.subr.bf16.mxu0 0
      %1915 = vmatpush1.bf16.msra.mxu0 0
      %1916 = vmatprep.subr.bf16.mxu0 0
      %1917 = vmatpush1.bf16.msra.mxu0 0
      %1918 = vmatprep.subr.bf16.mxu0 0
      %1919 = vmatpush1.bf16.msra.mxu0 0
      %1920 = vmatprep.subr.bf16.mxu0 0
      %1921 = vmatpush1.bf16.msra.mxu0 0
      %1922 = vmatprep.mubr.bf16.mxu0 0
      %1923 = vmatmul.mubr.bf16.gmra.mrb[0].mxu0 %v1667
      %v1924 = vpop.f32.mrb[0].mxu0
      %v1925 = vadd.f32 %v1804, %v1924
      %v1926 = vpop.f32.mrb[0].mxu0
      %v1927 = vpop.f32.mrb[0].mxu0
      %v1928 = vadd.f32 %v1807, %v1927
      %v1929 = vpop.f32.mrb[0].mxu0
      %1930 = vmatprep.mubr.bf16.mxu0 0
      %1931 = vmatmul.mubr.bf16.gmra.mrb[0].mxu0 %v1668
      %v1932 = vpop.f32.mrb[0].mxu0
      %v1933 = vadd.f32 %v1812, %v1932
      %v1934 = vpop.f32.mrb[0].mxu0
      %v1935 = vpop.f32.mrb[0].mxu0
      %v1936 = vadd.f32 %v1815, %v1935
      %v1937 = vpop.f32.mrb[0].mxu0
      %1938 = vmatprep.mubr.bf16.mxu0 0
      %1939 = vmatmul.mubr.bf16.gmra.mrb[0].mxu0 %v1669
      %v1940 = vpop.f32.mrb[0].mxu0
      %v1941 = vadd.f32 %v1820, %v1940
      %v1942 = vpop.f32.mrb[0].mxu0
      %v1943 = vpop.f32.mrb[0].mxu0
      %v1944 = vadd.f32 %v1823, %v1943
      %v1945 = vpop.f32.mrb[0].mxu0
      %1946 = vmatprep.mubr.bf16.mxu0 0
      %1947 = vmatmul.mubr.bf16.gmra.mrb[0].mxu0 %v1670
      %v1948 = vpop.f32.mrb[0].mxu0
      %v1949 = vadd.f32 %v1828, %v1948
      %v1950 = vpop.f32.mrb[0].mxu0
      %v1951 = vpop.f32.mrb[0].mxu0
      %v1952 = vadd.f32 %v1831, %v1951
      %v1953 = vpop.f32.mrb[0].mxu0
      %1954 = vmatprep.mubr.bf16.mxu0 0
      %1955 = vmatmul.mubr.bf16.gmra.mrb[0].mxu0 %v1671
      %v1956 = vpop.f32.mrb[0].mxu0
      %v1957 = vadd.f32 %v1836, %v1956
      %v1958 = vpop.f32.mrb[0].mxu0
      %v1959 = vpop.f32.mrb[0].mxu0
      %v1960 = vadd.f32 %v1839, %v1959
      %v1961 = vpop.f32.mrb[0].mxu0
      %1962 = vdwg.mxu0
      %v1963 = vld [vmem:[%s199 + $0x14] sm:$0xff]
      %v1964 = vld [vmem:[%s199 + $0x1c] sm:$0xff]
      %v1965 = vld [vmem:[%s199 + $0x24] sm:$0xff]
      %v1966 = vld [vmem:[%s199 + $0x2c] sm:$0xff]
      %v1967 = vld [vmem:[%s199 + $0x34] sm:$0xff]
      %v1968 = vld [vmem:[%s199 + $0x3c] sm:$0xff]
      %v1969 = vld [vmem:[%s199 + $0x44] sm:$0xff]
      %v1970 = vld [vmem:[%s199 + $0x4c] sm:$0xff]
      %v1971 = vld [vmem:[%s199 + $0x54] sm:$0xff]
      %v1972 = vld [vmem:[%s199 + $0x5c] sm:$0xff]
      %v1973 = vpack.c.bf16 %v1964, %v1963
      %v1974 = vpack.c.bf16 %v1966, %v1965
      %v1975 = vpack.c.bf16 %v1968, %v1967
      %v1976 = vpack.c.bf16 %v1970, %v1969
      %v1977 = vpack.c.bf16 %v1972, %v1971
      %s1978 = scalar_lea.vmem %s2, 640
      %v1979 = vld [vmem:[%s1978] sm:$0xf]
      %v1980 = vld [vmem:[%s1978 + $0x4] sm:$0xf]
      %v1981 = vld [vmem:[%s1978 + $0x8] sm:$0xf]
      %v1982 = vld [vmem:[%s1978 + $0xc] sm:$0xf]
      %v1983 = vld [vmem:[%s1978 + $0x10] sm:$0xf]
      %v1984 = vld [vmem:[%s1978 + $0x14] sm:$0xf]
      %v1985 = vld [vmem:[%s1978 + $0x18] sm:$0xf]
      %v1986 = vld [vmem:[%s1978 + $0x1c] sm:$0xf]
      %v1987 = vld [vmem:[%s1978 + $0x20] sm:$0xf]
      %v1988 = vld [vmem:[%s1978 + $0x24] sm:$0xf]
      %v1989 = vld [vmem:[%s1978 + $0x28] sm:$0xf]
      %v1990 = vld [vmem:[%s1978 + $0x2c] sm:$0xf]
      %v1991 = vld [vmem:[%s1978 + $0x30] sm:$0xf]
      %v1992 = vld [vmem:[%s1978 + $0x34] sm:$0xf]
      %v1993 = vld [vmem:[%s1978 + $0x38] sm:$0xf]
      %v1994 = vld [vmem:[%s1978 + $0x3c] sm:$0xf]
      %v2011 = vunpack.c.l.b16 %v1979
      %v2012 = vunpack.c.l.b16 %v1980
      %v2013 = vunpack.c.l.b16 %v1981
      %v2014 = vunpack.c.l.b16 %v1982
      %v2015 = vunpack.c.l.b16 %v1983
      %v2016 = vunpack.c.l.b16 %v1984
      %v2017 = vunpack.c.l.b16 %v1985
      %v2018 = vunpack.c.l.b16 %v1986
      %v2019 = vunpack.c.l.b16 %v1987
      %v2020 = vunpack.c.l.b16 %v1988
      %v2021 = vunpack.c.l.b16 %v1989
      %v2022 = vunpack.c.l.b16 %v1990
      %v2023 = vunpack.c.l.b16 %v1991
      %v2024 = vunpack.c.l.b16 %v1992
      %v2025 = vunpack.c.l.b16 %v1993
      %v2026 = vunpack.c.l.b16 %v1994
      %v2027 = vpack.c.b16 %v2012, %v2011
      %v2028 = vpack.c.b16 %v2014, %v2013
      %v2029 = vpack.c.b16 %v2016, %v2015
      %v2030 = vpack.c.b16 %v2018, %v2017
      %v2031 = vpack.c.b16 %v2020, %v2019
      %v2032 = vpack.c.b16 %v2022, %v2021
      %v2033 = vpack.c.b16 %v2024, %v2023
      %v2034 = vpack.c.b16 %v2026, %v2025
      %2043 = vmatprep.subr.bf16.mxu0 0
      %2044 = vmatpush1.bf16.msra.mxu0 %v2027
      %2045 = vmatprep.subr.bf16.mxu0 0
      %2046 = vmatpush1.bf16.msra.mxu0 %v2028
      %2047 = vmatprep.subr.bf16.mxu0 0
      %2048 = vmatpush1.bf16.msra.mxu0 %v2029
      %2049 = vmatprep.subr.bf16.mxu0 0
      %2050 = vmatpush1.bf16.msra.mxu0 %v2030
      %2051 = vmatprep.subr.bf16.mxu0 0
      %2052 = vmatpush1.bf16.msra.mxu0 %v2031
      %2053 = vmatprep.subr.bf16.mxu0 0
      %2054 = vmatpush1.bf16.msra.mxu0 %v2032
      %2055 = vmatprep.subr.bf16.mxu0 0
      %2056 = vmatpush1.bf16.msra.mxu0 %v2033
      %2057 = vmatprep.subr.bf16.mxu0 0
      %2058 = vmatpush1.bf16.msra.mxu0 %v2034
      %2059 = vmatprep.subr.bf16.mxu0 0
      %2060 = vmatpush1.bf16.msra.mxu0 0
      %2061 = vmatprep.subr.bf16.mxu0 0
      %2062 = vmatpush1.bf16.msra.mxu0 0
      %2063 = vmatprep.subr.bf16.mxu0 0
      %2064 = vmatpush1.bf16.msra.mxu0 0
      %2065 = vmatprep.subr.bf16.mxu0 0
      %2066 = vmatpush1.bf16.msra.mxu0 0
      %2067 = vmatprep.subr.bf16.mxu0 0
      %2068 = vmatpush1.bf16.msra.mxu0 0
      %2069 = vmatprep.subr.bf16.mxu0 0
      %2070 = vmatpush1.bf16.msra.mxu0 0
      %2071 = vmatprep.subr.bf16.mxu0 0
      %2072 = vmatpush1.bf16.msra.mxu0 0
      %2073 = vmatprep.subr.bf16.mxu0 0
      %2074 = vmatpush1.bf16.msra.mxu0 0
      %2075 = vmatprep.mubr.bf16.mxu0 0
      %2076 = vmatmul.mubr.bf16.gmra.mrb[0].mxu0 %v1973
      %v2077 = vpop.f32.mrb[0].mxu0
      %v2078 = vadd.f32 0.0, %v2077
      %v2079 = vpop.f32.mrb[0].mxu0
      %v2080 = vpop.f32.mrb[0].mxu0
      %v2081 = vadd.f32 0.0, %v2080
      %v2082 = vpop.f32.mrb[0].mxu0
      %2083 = vmatprep.mubr.bf16.mxu0 0
      %2084 = vmatmul.mubr.bf16.gmra.mrb[0].mxu0 %v1974
      %v2085 = vpop.f32.mrb[0].mxu0
      %v2086 = vadd.f32 0.0, %v2085
      %v2087 = vpop.f32.mrb[0].mxu0
      %v2088 = vpop.f32.mrb[0].mxu0
      %v2089 = vadd.f32 0.0, %v2088
      %v2090 = vpop.f32.mrb[0].mxu0
      %2091 = vmatprep.mubr.bf16.mxu0 0
      %2092 = vmatmul.mubr.bf16.gmra.mrb[0].mxu0 %v1975
      %v2093 = vpop.f32.mrb[0].mxu0
      %v2094 = vadd.f32 0.0, %v2093
      %v2095 = vpop.f32.mrb[0].mxu0
      %v2096 = vpop.f32.mrb[0].mxu0
      %v2097 = vadd.f32 0.0, %v2096
      %v2098 = vpop.f32.mrb[0].mxu0
      %2099 = vmatprep.mubr.bf16.mxu0 0
      %2100 = vmatmul.mubr.bf16.gmra.mrb[0].mxu0 %v1976
      %v2101 = vpop.f32.mrb[0].mxu0
      %v2102 = vadd.f32 0.0, %v2101
      %v2103 = vpop.f32.mrb[0].mxu0
      %v2104 = vpop.f32.mrb[0].mxu0
      %v2105 = vadd.f32 0.0, %v2104
      %v2106 = vpop.f32.mrb[0].mxu0
      %2107 = vmatprep.mubr.bf16.mxu0 0
      %2108 = vmatmul.mubr.bf16.gmra.mrb[0].mxu0 %v1977
      %v2109 = vpop.f32.mrb[0].mxu0
      %v2110 = vadd.f32 0.0, %v2109
      %v2111 = vpop.f32.mrb[0].mxu0
      %v2112 = vpop.f32.mrb[0].mxu0
      %v2113 = vadd.f32 0.0, %v2112
      %v2114 = vpop.f32.mrb[0].mxu0
      %2115 = vdwg.mxu0
      %v2116 = vadd.f32 %v1925, %v2078
      %v2117 = vadd.f32 %v1928, %v2081
      %v2118 = vadd.f32 %v1933, %v2086
      %v2119 = vadd.f32 %v1936, %v2089
      %v2120 = vadd.f32 %v1941, %v2094
      %v2121 = vadd.f32 %v1944, %v2097
      %v2122 = vadd.f32 %v1949, %v2102
      %v2123 = vadd.f32 %v1952, %v2105
      %v2124 = vadd.f32 %v1957, %v2110
      %v2125 = vadd.f32 %v1960, %v2113
      %v2126 = vld [vmem:[%s199 + $0x15] sm:$0xff]
      %v2127 = vld [vmem:[%s199 + $0x1d] sm:$0xff]
      %v2128 = vld [vmem:[%s199 + $0x25] sm:$0xff]
      %v2129 = vld [vmem:[%s199 + $0x2d] sm:$0xff]
      %v2130 = vld [vmem:[%s199 + $0x35] sm:$0xff]
      %v2131 = vld [vmem:[%s199 + $0x3d] sm:$0xff]
      %v2132 = vld [vmem:[%s199 + $0x45] sm:$0xff]
      %v2133 = vld [vmem:[%s199 + $0x4d] sm:$0xff]
      %v2134 = vld [vmem:[%s199 + $0x55] sm:$0xff]
      %v2135 = vld [vmem:[%s199 + $0x5d] sm:$0xff]
      %v2136 = vpack.c.bf16 %v2127, %v2126
      %v2137 = vpack.c.bf16 %v2129, %v2128
      %v2138 = vpack.c.bf16 %v2131, %v2130
      %v2139 = vpack.c.bf16 %v2133, %v2132
      %v2140 = vpack.c.bf16 %v2135, %v2134
      %s2141 = scalar_lea.vmem %s2, 704
      %v2142 = vld [vmem:[%s2141] sm:$0xf]
      %v2143 = vld [vmem:[%s2141 + $0x4] sm:$0xf]
      %v2144 = vld [vmem:[%s2141 + $0x8] sm:$0xf]
      %v2145 = vld [vmem:[%s2141 + $0xc] sm:$0xf]
      %v2146 = vld [vmem:[%s2141 + $0x10] sm:$0xf]
      %v2147 = vld [vmem:[%s2141 + $0x14] sm:$0xf]
      %v2148 = vld [vmem:[%s2141 + $0x18] sm:$0xf]
      %v2149 = vld [vmem:[%s2141 + $0x1c] sm:$0xf]
      %v2150 = vld [vmem:[%s2141 + $0x20] sm:$0xf]
      %v2151 = vld [vmem:[%s2141 + $0x24] sm:$0xf]
      %v2152 = vld [vmem:[%s2141 + $0x28] sm:$0xf]
      %v2153 = vld [vmem:[%s2141 + $0x2c] sm:$0xf]
      %v2154 = vld [vmem:[%s2141 + $0x30] sm:$0xf]
      %v2155 = vld [vmem:[%s2141 + $0x34] sm:$0xf]
      %v2156 = vld [vmem:[%s2141 + $0x38] sm:$0xf]
      %v2157 = vld [vmem:[%s2141 + $0x3c] sm:$0xf]
      %v2174 = vunpack.c.l.b16 %v2142
      %v2175 = vunpack.c.l.b16 %v2143
      %v2176 = vunpack.c.l.b16 %v2144
      %v2177 = vunpack.c.l.b16 %v2145
      %v2178 = vunpack.c.l.b16 %v2146
      %v2179 = vunpack.c.l.b16 %v2147
      %v2180 = vunpack.c.l.b16 %v2148
      %v2181 = vunpack.c.l.b16 %v2149
      %v2182 = vunpack.c.l.b16 %v2150
      %v2183 = vunpack.c.l.b16 %v2151
      %v2184 = vunpack.c.l.b16 %v2152
      %v2185 = vunpack.c.l.b16 %v2153
      %v2186 = vunpack.c.l.b16 %v2154
      %v2187 = vunpack.c.l.b16 %v2155
      %v2188 = vunpack.c.l.b16 %v2156
      %v2189 = vunpack.c.l.b16 %v2157
      %v2190 = vpack.c.b16 %v2175, %v2174
      %v2191 = vpack.c.b16 %v2177, %v2176
      %v2192 = vpack.c.b16 %v2179, %v2178
      %v2193 = vpack.c.b16 %v2181, %v2180
      %v2194 = vpack.c.b16 %v2183, %v2182
      %v2195 = vpack.c.b16 %v2185, %v2184
      %v2196 = vpack.c.b16 %v2187, %v2186
      %v2197 = vpack.c.b16 %v2189, %v2188
      %2206 = vmatprep.subr.bf16.mxu0 0
      %2207 = vmatpush1.bf16.msra.mxu0 %v2190
      %2208 = vmatprep.subr.bf16.mxu0 0
      %2209 = vmatpush1.bf16.msra.mxu0 %v2191
      %2210 = vmatprep.subr.bf16.mxu0 0
      %2211 = vmatpush1.bf16.msra.mxu0 %v2192
      %2212 = vmatprep.subr.bf16.mxu0 0
      %2213 = vmatpush1.bf16.msra.mxu0 %v2193
      %2214 = vmatprep.subr.bf16.mxu0 0
      %2215 = vmatpush1.bf16.msra.mxu0 %v2194
      %2216 = vmatprep.subr.bf16.mxu0 0
      %2217 = vmatpush1.bf16.msra.mxu0 %v2195
      %2218 = vmatprep.subr.bf16.mxu0 0
      %2219 = vmatpush1.bf16.msra.mxu0 %v2196
      %2220 = vmatprep.subr.bf16.mxu0 0
      %2221 = vmatpush1.bf16.msra.mxu0 %v2197
      %2222 = vmatprep.subr.bf16.mxu0 0
      %2223 = vmatpush1.bf16.msra.mxu0 0
      %2224 = vmatprep.subr.bf16.mxu0 0
      %2225 = vmatpush1.bf16.msra.mxu0 0
      %2226 = vmatprep.subr.bf16.mxu0 0
      %2227 = vmatpush1.bf16.msra.mxu0 0
      %2228 = vmatprep.subr.bf16.mxu0 0
      %2229 = vmatpush1.bf16.msra.mxu0 0
      %2230 = vmatprep.subr.bf16.mxu0 0
      %2231 = vmatpush1.bf16.msra.mxu0 0
      %2232 = vmatprep.subr.bf16.mxu0 0
      %2233 = vmatpush1.bf16.msra.mxu0 0
      %2234 = vmatprep.subr.bf16.mxu0 0
      %2235 = vmatpush1.bf16.msra.mxu0 0
      %2236 = vmatprep.subr.bf16.mxu0 0
      %2237 = vmatpush1.bf16.msra.mxu0 0
      %2238 = vmatprep.mubr.bf16.mxu0 0
      %2239 = vmatmul.mubr.bf16.gmra.mrb[0].mxu0 %v2136
      %v2240 = vpop.f32.mrb[0].mxu0
      %v2241 = vadd.f32 0.0, %v2240
      %v2242 = vpop.f32.mrb[0].mxu0
      %v2243 = vpop.f32.mrb[0].mxu0
      %v2244 = vadd.f32 0.0, %v2243
      %v2245 = vpop.f32.mrb[0].mxu0
      %2246 = vmatprep.mubr.bf16.mxu0 0
      %2247 = vmatmul.mubr.bf16.gmra.mrb[0].mxu0 %v2137
      %v2248 = vpop.f32.mrb[0].mxu0
      %v2249 = vadd.f32 0.0, %v2248
      %v2250 = vpop.f32.mrb[0].mxu0
      %v2251 = vpop.f32.mrb[0].mxu0
      %v2252 = vadd.f32 0.0, %v2251
      %v2253 = vpop.f32.mrb[0].mxu0
      %2254 = vmatprep.mubr.bf16.mxu0 0
      %2255 = vmatmul.mubr.bf16.gmra.mrb[0].mxu0 %v2138
      %v2256 = vpop.f32.mrb[0].mxu0
      %v2257 = vadd.f32 0.0, %v2256
      %v2258 = vpop.f32.mrb[0].mxu0
      %v2259 = vpop.f32.mrb[0].mxu0
      %v2260 = vadd.f32 0.0, %v2259
      %v2261 = vpop.f32.mrb[0].mxu0
      %2262 = vmatprep.mubr.bf16.mxu0 0
      %2263 = vmatmul.mubr.bf16.gmra.mrb[0].mxu0 %v2139
      %v2264 = vpop.f32.mrb[0].mxu0
      %v2265 = vadd.f32 0.0, %v2264
      %v2266 = vpop.f32.mrb[0].mxu0
      %v2267 = vpop.f32.mrb[0].mxu0
      %v2268 = vadd.f32 0.0, %v2267
      %v2269 = vpop.f32.mrb[0].mxu0
      %2270 = vmatprep.mubr.bf16.mxu0 0
      %2271 = vmatmul.mubr.bf16.gmra.mrb[0].mxu0 %v2140
      %v2272 = vpop.f32.mrb[0].mxu0
      %v2273 = vadd.f32 0.0, %v2272
      %v2274 = vpop.f32.mrb[0].mxu0
      %v2275 = vpop.f32.mrb[0].mxu0
      %v2276 = vadd.f32 0.0, %v2275
      %v2277 = vpop.f32.mrb[0].mxu0
      %2278 = vdwg.mxu0
      %v2279 = vadd.f32 %v2116, %v2241
      %v2280 = vadd.f32 %v2117, %v2244
      %v2281 = vadd.f32 %v2118, %v2249
      %v2282 = vadd.f32 %v2119, %v2252
      %v2283 = vadd.f32 %v2120, %v2257
      %v2284 = vadd.f32 %v2121, %v2260
      %v2285 = vadd.f32 %v2122, %v2265
      %v2286 = vadd.f32 %v2123, %v2268
      %v2287 = vadd.f32 %v2124, %v2273
      %v2288 = vadd.f32 %v2125, %v2276
      %2289 = vst [vmem:[%s204 + $0x10] sm:$0xff] %v2279
      %2290 = vst [vmem:[%s204 + $0x30] sm:$0xff] %v2280
      %2291 = vst [vmem:[%s204 + $0x50] sm:$0xff] %v2281
      %2292 = vst [vmem:[%s204 + $0x70] sm:$0xff] %v2282
      %2293 = vst [vmem:[%s204 + $0x90] sm:$0xff] %v2283
      %2294 = vst [vmem:[%s204 + $0xb0] sm:$0xff] %v2284
      %2295 = vst [vmem:[%s204 + $0xd0] sm:$0xff] %v2285
      %2296 = vst [vmem:[%s204 + $0xf0] sm:$0xff] %v2286
      %2297 = vst [vmem:[%s204 + $0x110] sm:$0xff] %v2287
      %2298 = vst [vmem:[%s204 + $0x130] sm:$0xff] %v2288
      %v2299 = vmul.f32 %v2279, %v864
      %v2300 = vmul.f32 %v2280, %v869
      %v2301 = vmul.f32 %v2281, %v874
      %v2302 = vmul.f32 %v2282, %v879
      %v2303 = vmul.f32 %v2283, %v884
      %v2304 = vmul.f32 %v2284, %v889
      %v2305 = vmul.f32 %v2285, %v894
      %v2306 = vmul.f32 %v2286, %v899
      %v2307 = vmul.f32 %v2287, %v904
      %v2308 = vmul.f32 %v2288, %v909
      %v2309 = vadd.f32 %v2299, %v2300
      %v2310 = vadd.f32 %v2309, %v2301
      %v2311 = vadd.f32 %v2310, %v2302
      %v2312 = vadd.f32 %v2311, %v2303
      %v2313 = vadd.f32 %v2312, %v2304
      %v2314 = vadd.f32 %v2313, %v2305
      %v2315 = vadd.f32 %v2314, %v2306
      %v2316 = vadd.f32 %v2315, %v2307
      %v2317 = vadd.f32 %v2316, %v2308
      %v2318 = vrot.slane %v2317, 4
      %v2319 = vadd.f32 %v2317, %v2318
      %v2320 = vrot.slane %v2319, 2
      %v2321 = vadd.f32 %v2319, %v2320
      %v2322 = vrot.slane %v2321, 1
      %v2323 = vadd.f32 %v2321, %v2322
      %v2324 = vadd.f32 %v1630, %v2323
      %v2325 = vmul.f32 %v2299, %v2279
      %v2326 = vmul.f32 %v2300, %v2280
      %v2327 = vmul.f32 %v2301, %v2281
      %v2328 = vmul.f32 %v2302, %v2282
      %v2329 = vmul.f32 %v2303, %v2283
      %v2330 = vmul.f32 %v2304, %v2284
      %v2331 = vmul.f32 %v2305, %v2285
      %v2332 = vmul.f32 %v2306, %v2286
      %v2333 = vmul.f32 %v2307, %v2287
      %v2334 = vmul.f32 %v2308, %v2288
      %v2335 = vadd.f32 %v2325, %v2326
      %v2336 = vadd.f32 %v2335, %v2327
      %v2337 = vadd.f32 %v2336, %v2328
      %v2338 = vadd.f32 %v2337, %v2329
      %v2339 = vadd.f32 %v2338, %v2330
      %v2340 = vadd.f32 %v2339, %v2331
      %v2341 = vadd.f32 %v2340, %v2332
      %v2342 = vadd.f32 %v2341, %v2333
      %v2343 = vadd.f32 %v2342, %v2334
      %v2344 = vrot.slane %v2343, 4
      %v2345 = vadd.f32 %v2343, %v2344
      %v2346 = vrot.slane %v2345, 2
      %v2347 = vadd.f32 %v2345, %v2346
      %v2348 = vrot.slane %v2347, 1
      %v2349 = vadd.f32 %v2347, %v2348
      %v2350 = vadd.f32 %v1656, %v2349
      %v2351 = vld [vmem:[%s199 + $0xb] sm:$0xff]
      %v2352 = vld [vmem:[%s199 + $0x13] sm:$0xff]
      %v2353 = vld [vmem:[%s199 + $0x1b] sm:$0xff]
      %v2354 = vld [vmem:[%s199 + $0x23] sm:$0xff]
      %v2355 = vld [vmem:[%s199 + $0x2b] sm:$0xff]
      %v2356 = vld [vmem:[%s199 + $0x33] sm:$0xff]
      %v2357 = vld [vmem:[%s199 + $0x3b] sm:$0xff]
      %v2358 = vld [vmem:[%s199 + $0x43] sm:$0xff]
      %v2359 = vld [vmem:[%s199 + $0x4b] sm:$0xff]
      %v2360 = vld [vmem:[%s199 + $0x53] sm:$0xff]
      %v2361 = vpack.c.bf16 %v2352, %v2351
      %v2362 = vpack.c.bf16 %v2354, %v2353
      %v2363 = vpack.c.bf16 %v2356, %v2355
      %v2364 = vpack.c.bf16 %v2358, %v2357
      %v2365 = vpack.c.bf16 %v2360, %v2359
      %s2366 = scalar_lea.vmem %s2, 768
      %v2367 = vld [vmem:[%s2366] sm:$0xf]
      %v2368 = vld [vmem:[%s2366 + $0x4] sm:$0xf]
      %v2369 = vld [vmem:[%s2366 + $0x8] sm:$0xf]
      %v2370 = vld [vmem:[%s2366 + $0xc] sm:$0xf]
      %v2371 = vld [vmem:[%s2366 + $0x10] sm:$0xf]
      %v2372 = vld [vmem:[%s2366 + $0x14] sm:$0xf]
      %v2373 = vld [vmem:[%s2366 + $0x18] sm:$0xf]
      %v2374 = vld [vmem:[%s2366 + $0x1c] sm:$0xf]
      %v2375 = vld [vmem:[%s2366 + $0x20] sm:$0xf]
      %v2376 = vld [vmem:[%s2366 + $0x24] sm:$0xf]
      %v2377 = vld [vmem:[%s2366 + $0x28] sm:$0xf]
      %v2378 = vld [vmem:[%s2366 + $0x2c] sm:$0xf]
      %v2379 = vld [vmem:[%s2366 + $0x30] sm:$0xf]
      %v2380 = vld [vmem:[%s2366 + $0x34] sm:$0xf]
      %v2381 = vld [vmem:[%s2366 + $0x38] sm:$0xf]
      %v2382 = vld [vmem:[%s2366 + $0x3c] sm:$0xf]
      %v2383 = vld [vmem:[%s199 + $0xc] sm:$0xff]
      %v2384 = vld [vmem:[%s199 + $0x14] sm:$0xff]
      %v2385 = vld [vmem:[%s199 + $0x1c] sm:$0xff]
      %v2386 = vld [vmem:[%s199 + $0x24] sm:$0xff]
      %v2387 = vld [vmem:[%s199 + $0x2c] sm:$0xff]
      %v2388 = vld [vmem:[%s199 + $0x34] sm:$0xff]
      %v2389 = vld [vmem:[%s199 + $0x3c] sm:$0xff]
      %v2390 = vld [vmem:[%s199 + $0x44] sm:$0xff]
      %v2391 = vld [vmem:[%s199 + $0x4c] sm:$0xff]
      %v2392 = vld [vmem:[%s199 + $0x54] sm:$0xff]
      %v2393 = vpack.c.bf16 %v2384, %v2383
      %v2394 = vpack.c.bf16 %v2386, %v2385
      %v2395 = vpack.c.bf16 %v2388, %v2387
      %v2396 = vpack.c.bf16 %v2390, %v2389
      %v2397 = vpack.c.bf16 %v2392, %v2391
      %s2398 = scalar_lea.vmem %s2, 832
      %v2399 = vld [vmem:[%s2398] sm:$0xf]
      %v2400 = vld [vmem:[%s2398 + $0x4] sm:$0xf]
      %v2401 = vld [vmem:[%s2398 + $0x8] sm:$0xf]
      %v2402 = vld [vmem:[%s2398 + $0xc] sm:$0xf]
      %v2403 = vld [vmem:[%s2398 + $0x10] sm:$0xf]
      %v2404 = vld [vmem:[%s2398 + $0x14] sm:$0xf]
      %v2405 = vld [vmem:[%s2398 + $0x18] sm:$0xf]
      %v2406 = vld [vmem:[%s2398 + $0x1c] sm:$0xf]
      %v2407 = vld [vmem:[%s2398 + $0x20] sm:$0xf]
      %v2408 = vld [vmem:[%s2398 + $0x24] sm:$0xf]
      %v2409 = vld [vmem:[%s2398 + $0x28] sm:$0xf]
      %v2410 = vld [vmem:[%s2398 + $0x2c] sm:$0xf]
      %v2411 = vld [vmem:[%s2398 + $0x30] sm:$0xf]
      %v2412 = vld [vmem:[%s2398 + $0x34] sm:$0xf]
      %v2413 = vld [vmem:[%s2398 + $0x38] sm:$0xf]
      %v2414 = vld [vmem:[%s2398 + $0x3c] sm:$0xf]
      %v2431 = vunpack.c.l.b16 %v2399
      %v2432 = vunpack.c.l.b16 %v2400
      %v2433 = vunpack.c.l.b16 %v2401
      %v2434 = vunpack.c.l.b16 %v2402
      %v2435 = vunpack.c.l.b16 %v2403
      %v2436 = vunpack.c.l.b16 %v2404
      %v2437 = vunpack.c.l.b16 %v2405
      %v2438 = vunpack.c.l.b16 %v2406
      %v2439 = vunpack.c.l.b16 %v2407
      %v2440 = vunpack.c.l.b16 %v2408
      %v2441 = vunpack.c.l.b16 %v2409
      %v2442 = vunpack.c.l.b16 %v2410
      %v2443 = vunpack.c.l.b16 %v2411
      %v2444 = vunpack.c.l.b16 %v2412
      %v2445 = vunpack.c.l.b16 %v2413
      %v2446 = vunpack.c.l.b16 %v2414
      %v2447 = vpack.c.b16 %v2432, %v2431
      %v2448 = vpack.c.b16 %v2434, %v2433
      %v2449 = vpack.c.b16 %v2436, %v2435
      %v2450 = vpack.c.b16 %v2438, %v2437
      %v2451 = vpack.c.b16 %v2440, %v2439
      %v2452 = vpack.c.b16 %v2442, %v2441
      %v2453 = vpack.c.b16 %v2444, %v2443
      %v2454 = vpack.c.b16 %v2446, %v2445
      %2463 = vmatprep.subr.bf16.mxu0 0
      %2464 = vmatpush1.bf16.msra.mxu0 %v2447
      %2465 = vmatprep.subr.bf16.mxu0 0
      %2466 = vmatpush1.bf16.msra.mxu0 %v2448
      %2467 = vmatprep.subr.bf16.mxu0 0
      %2468 = vmatpush1.bf16.msra.mxu0 %v2449
      %2469 = vmatprep.subr.bf16.mxu0 0
      %2470 = vmatpush1.bf16.msra.mxu0 %v2450
      %2471 = vmatprep.subr.bf16.mxu0 0
      %2472 = vmatpush1.bf16.msra.mxu0 %v2451
      %2473 = vmatprep.subr.bf16.mxu0 0
      %2474 = vmatpush1.bf16.msra.mxu0 %v2452
      %2475 = vmatprep.subr.bf16.mxu0 0
      %2476 = vmatpush1.bf16.msra.mxu0 %v2453
      %2477 = vmatprep.subr.bf16.mxu0 0
      %2478 = vmatpush1.bf16.msra.mxu0 %v2454
      %2479 = vmatprep.subr.bf16.mxu0 0
      %2480 = vmatpush1.bf16.msra.mxu0 0
      %2481 = vmatprep.subr.bf16.mxu0 0
      %2482 = vmatpush1.bf16.msra.mxu0 0
      %2483 = vmatprep.subr.bf16.mxu0 0
      %2484 = vmatpush1.bf16.msra.mxu0 0
      %2485 = vmatprep.subr.bf16.mxu0 0
      %2486 = vmatpush1.bf16.msra.mxu0 0
      %2487 = vmatprep.subr.bf16.mxu0 0
      %2488 = vmatpush1.bf16.msra.mxu0 0
      %2489 = vmatprep.subr.bf16.mxu0 0
      %2490 = vmatpush1.bf16.msra.mxu0 0
      %2491 = vmatprep.subr.bf16.mxu0 0
      %2492 = vmatpush1.bf16.msra.mxu0 0
      %2493 = vmatprep.subr.bf16.mxu0 0
      %2494 = vmatpush1.bf16.msra.mxu0 0
      %2495 = vmatprep.mubr.bf16.mxu0 0
      %2496 = vmatmul.mubr.bf16.gmra.mrb[0].mxu0 %v2393
      %v2497 = vpop.f32.mrb[0].mxu0
      %v2498 = vadd.f32 0.0, %v2497
      %v2499 = vpop.f32.mrb[0].mxu0
      %v2500 = vpop.f32.mrb[0].mxu0
      %v2501 = vadd.f32 0.0, %v2500
      %v2502 = vpop.f32.mrb[0].mxu0
      %2503 = vmatprep.mubr.bf16.mxu0 0
      %2504 = vmatmul.mubr.bf16.gmra.mrb[0].mxu0 %v2394
      %v2505 = vpop.f32.mrb[0].mxu0
      %v2506 = vadd.f32 0.0, %v2505
      %v2507 = vpop.f32.mrb[0].mxu0
      %v2508 = vpop.f32.mrb[0].mxu0
      %v2509 = vadd.f32 0.0, %v2508
      %v2510 = vpop.f32.mrb[0].mxu0
      %2511 = vmatprep.mubr.bf16.mxu0 0
      %2512 = vmatmul.mubr.bf16.gmra.mrb[0].mxu0 %v2395
      %v2513 = vpop.f32.mrb[0].mxu0
      %v2514 = vadd.f32 0.0, %v2513
      %v2515 = vpop.f32.mrb[0].mxu0
      %v2516 = vpop.f32.mrb[0].mxu0
      %v2517 = vadd.f32 0.0, %v2516
      %v2518 = vpop.f32.mrb[0].mxu0
      %2519 = vmatprep.mubr.bf16.mxu0 0
      %2520 = vmatmul.mubr.bf16.gmra.mrb[0].mxu0 %v2396
      %v2521 = vpop.f32.mrb[0].mxu0
      %v2522 = vadd.f32 0.0, %v2521
      %v2523 = vpop.f32.mrb[0].mxu0
      %v2524 = vpop.f32.mrb[0].mxu0
      %v2525 = vadd.f32 0.0, %v2524
      %v2526 = vpop.f32.mrb[0].mxu0
      %2527 = vmatprep.mubr.bf16.mxu0 0
      %2528 = vmatmul.mubr.bf16.gmra.mrb[0].mxu0 %v2397
      %v2529 = vpop.f32.mrb[0].mxu0
      %v2530 = vadd.f32 0.0, %v2529
      %v2531 = vpop.f32.mrb[0].mxu0
      %v2532 = vpop.f32.mrb[0].mxu0
      %v2533 = vadd.f32 0.0, %v2532
      %v2534 = vpop.f32.mrb[0].mxu0
      %2535 = vdwg.mxu0
      %v2552 = vunpack.c.l.b16 %v2367
      %v2553 = vunpack.c.l.b16 %v2368
      %v2554 = vunpack.c.l.b16 %v2369
      %v2555 = vunpack.c.l.b16 %v2370
      %v2556 = vunpack.c.l.b16 %v2371
      %v2557 = vunpack.c.l.b16 %v2372
      %v2558 = vunpack.c.l.b16 %v2373
      %v2559 = vunpack.c.l.b16 %v2374
      %v2560 = vunpack.c.l.b16 %v2375
      %v2561 = vunpack.c.l.b16 %v2376
      %v2562 = vunpack.c.l.b16 %v2377
      %v2563 = vunpack.c.l.b16 %v2378
      %v2564 = vunpack.c.l.b16 %v2379
      %v2565 = vunpack.c.l.b16 %v2380
      %v2566 = vunpack.c.l.b16 %v2381
      %v2567 = vunpack.c.l.b16 %v2382
      %v2568 = vpack.c.b16 %v2553, %v2552
      %v2569 = vpack.c.b16 %v2555, %v2554
      %v2570 = vpack.c.b16 %v2557, %v2556
      %v2571 = vpack.c.b16 %v2559, %v2558
      %v2572 = vpack.c.b16 %v2561, %v2560
      %v2573 = vpack.c.b16 %v2563, %v2562
      %v2574 = vpack.c.b16 %v2565, %v2564
      %v2575 = vpack.c.b16 %v2567, %v2566
      %2584 = vmatprep.subr.bf16.mxu0 0
      %2585 = vmatpush1.bf16.msra.mxu0 %v2568
      %2586 = vmatprep.subr.bf16.mxu0 0
      %2587 = vmatpush1.bf16.msra.mxu0 %v2569
      %2588 = vmatprep.subr.bf16.mxu0 0
      %2589 = vmatpush1.bf16.msra.mxu0 %v2570
      %2590 = vmatprep.subr.bf16.mxu0 0
      %2591 = vmatpush1.bf16.msra.mxu0 %v2571
      %2592 = vmatprep.subr.bf16.mxu0 0
      %2593 = vmatpush1.bf16.msra.mxu0 %v2572
      %2594 = vmatprep.subr.bf16.mxu0 0
      %2595 = vmatpush1.bf16.msra.mxu0 %v2573
      %2596 = vmatprep.subr.bf16.mxu0 0
      %2597 = vmatpush1.bf16.msra.mxu0 %v2574
      %2598 = vmatprep.subr.bf16.mxu0 0
      %2599 = vmatpush1.bf16.msra.mxu0 %v2575
      %2600 = vmatprep.subr.bf16.mxu0 0
      %2601 = vmatpush1.bf16.msra.mxu0 0
      %2602 = vmatprep.subr.bf16.mxu0 0
      %2603 = vmatpush1.bf16.msra.mxu0 0
      %2604 = vmatprep.subr.bf16.mxu0 0
      %2605 = vmatpush1.bf16.msra.mxu0 0
      %2606 = vmatprep.subr.bf16.mxu0 0
      %2607 = vmatpush1.bf16.msra.mxu0 0
      %2608 = vmatprep.subr.bf16.mxu0 0
      %2609 = vmatpush1.bf16.msra.mxu0 0
      %2610 = vmatprep.subr.bf16.mxu0 0
      %2611 = vmatpush1.bf16.msra.mxu0 0
      %2612 = vmatprep.subr.bf16.mxu0 0
      %2613 = vmatpush1.bf16.msra.mxu0 0
      %2614 = vmatprep.subr.bf16.mxu0 0
      %2615 = vmatpush1.bf16.msra.mxu0 0
      %2616 = vmatprep.mubr.bf16.mxu0 0
      %2617 = vmatmul.mubr.bf16.gmra.mrb[0].mxu0 %v2361
      %v2618 = vpop.f32.mrb[0].mxu0
      %v2619 = vadd.f32 %v2498, %v2618
      %v2620 = vpop.f32.mrb[0].mxu0
      %v2621 = vpop.f32.mrb[0].mxu0
      %v2622 = vadd.f32 %v2501, %v2621
      %v2623 = vpop.f32.mrb[0].mxu0
      %2624 = vmatprep.mubr.bf16.mxu0 0
      %2625 = vmatmul.mubr.bf16.gmra.mrb[0].mxu0 %v2362
      %v2626 = vpop.f32.mrb[0].mxu0
      %v2627 = vadd.f32 %v2506, %v2626
      %v2628 = vpop.f32.mrb[0].mxu0
      %v2629 = vpop.f32.mrb[0].mxu0
      %v2630 = vadd.f32 %v2509, %v2629
      %v2631 = vpop.f32.mrb[0].mxu0
      %2632 = vmatprep.mubr.bf16.mxu0 0
      %2633 = vmatmul.mubr.bf16.gmra.mrb[0].mxu0 %v2363
      %v2634 = vpop.f32.mrb[0].mxu0
      %v2635 = vadd.f32 %v2514, %v2634
      %v2636 = vpop.f32.mrb[0].mxu0
      %v2637 = vpop.f32.mrb[0].mxu0
      %v2638 = vadd.f32 %v2517, %v2637
      %v2639 = vpop.f32.mrb[0].mxu0
      %2640 = vmatprep.mubr.bf16.mxu0 0
      %2641 = vmatmul.mubr.bf16.gmra.mrb[0].mxu0 %v2364
      %v2642 = vpop.f32.mrb[0].mxu0
      %v2643 = vadd.f32 %v2522, %v2642
      %v2644 = vpop.f32.mrb[0].mxu0
      %v2645 = vpop.f32.mrb[0].mxu0
      %v2646 = vadd.f32 %v2525, %v2645
      %v2647 = vpop.f32.mrb[0].mxu0
      %2648 = vmatprep.mubr.bf16.mxu0 0
      %2649 = vmatmul.mubr.bf16.gmra.mrb[0].mxu0 %v2365
      %v2650 = vpop.f32.mrb[0].mxu0
      %v2651 = vadd.f32 %v2530, %v2650
      %v2652 = vpop.f32.mrb[0].mxu0
      %v2653 = vpop.f32.mrb[0].mxu0
      %v2654 = vadd.f32 %v2533, %v2653
      %v2655 = vpop.f32.mrb[0].mxu0
      %2656 = vdwg.mxu0
      %v2657 = vld [vmem:[%s199 + $0x15] sm:$0xff]
      %v2658 = vld [vmem:[%s199 + $0x1d] sm:$0xff]
      %v2659 = vld [vmem:[%s199 + $0x25] sm:$0xff]
      %v2660 = vld [vmem:[%s199 + $0x2d] sm:$0xff]
      %v2661 = vld [vmem:[%s199 + $0x35] sm:$0xff]
      %v2662 = vld [vmem:[%s199 + $0x3d] sm:$0xff]
      %v2663 = vld [vmem:[%s199 + $0x45] sm:$0xff]
      %v2664 = vld [vmem:[%s199 + $0x4d] sm:$0xff]
      %v2665 = vld [vmem:[%s199 + $0x55] sm:$0xff]
      %v2666 = vld [vmem:[%s199 + $0x5d] sm:$0xff]
      %v2667 = vpack.c.bf16 %v2658, %v2657
      %v2668 = vpack.c.bf16 %v2660, %v2659
      %v2669 = vpack.c.bf16 %v2662, %v2661
      %v2670 = vpack.c.bf16 %v2664, %v2663
      %v2671 = vpack.c.bf16 %v2666, %v2665
      %s2672 = scalar_lea.vmem %s2, 896
      %v2673 = vld [vmem:[%s2672] sm:$0xf]
      %v2674 = vld [vmem:[%s2672 + $0x4] sm:$0xf]
      %v2675 = vld [vmem:[%s2672 + $0x8] sm:$0xf]
      %v2676 = vld [vmem:[%s2672 + $0xc] sm:$0xf]
      %v2677 = vld [vmem:[%s2672 + $0x10] sm:$0xf]
      %v2678 = vld [vmem:[%s2672 + $0x14] sm:$0xf]
      %v2679 = vld [vmem:[%s2672 + $0x18] sm:$0xf]
      %v2680 = vld [vmem:[%s2672 + $0x1c] sm:$0xf]
      %v2681 = vld [vmem:[%s2672 + $0x20] sm:$0xf]
      %v2682 = vld [vmem:[%s2672 + $0x24] sm:$0xf]
      %v2683 = vld [vmem:[%s2672 + $0x28] sm:$0xf]
      %v2684 = vld [vmem:[%s2672 + $0x2c] sm:$0xf]
      %v2685 = vld [vmem:[%s2672 + $0x30] sm:$0xf]
      %v2686 = vld [vmem:[%s2672 + $0x34] sm:$0xf]
      %v2687 = vld [vmem:[%s2672 + $0x38] sm:$0xf]
      %v2688 = vld [vmem:[%s2672 + $0x3c] sm:$0xf]
      %v2705 = vunpack.c.l.b16 %v2673
      %v2706 = vunpack.c.l.b16 %v2674
      %v2707 = vunpack.c.l.b16 %v2675
      %v2708 = vunpack.c.l.b16 %v2676
      %v2709 = vunpack.c.l.b16 %v2677
      %v2710 = vunpack.c.l.b16 %v2678
      %v2711 = vunpack.c.l.b16 %v2679
      %v2712 = vunpack.c.l.b16 %v2680
      %v2713 = vunpack.c.l.b16 %v2681
      %v2714 = vunpack.c.l.b16 %v2682
      %v2715 = vunpack.c.l.b16 %v2683
      %v2716 = vunpack.c.l.b16 %v2684
      %v2717 = vunpack.c.l.b16 %v2685
      %v2718 = vunpack.c.l.b16 %v2686
      %v2719 = vunpack.c.l.b16 %v2687
      %v2720 = vunpack.c.l.b16 %v2688
      %v2721 = vpack.c.b16 %v2706, %v2705
      %v2722 = vpack.c.b16 %v2708, %v2707
      %v2723 = vpack.c.b16 %v2710, %v2709
      %v2724 = vpack.c.b16 %v2712, %v2711
      %v2725 = vpack.c.b16 %v2714, %v2713
      %v2726 = vpack.c.b16 %v2716, %v2715
      %v2727 = vpack.c.b16 %v2718, %v2717
      %v2728 = vpack.c.b16 %v2720, %v2719
      %2737 = vmatprep.subr.bf16.mxu0 0
      %2738 = vmatpush1.bf16.msra.mxu0 %v2721
      %2739 = vmatprep.subr.bf16.mxu0 0
      %2740 = vmatpush1.bf16.msra.mxu0 %v2722
      %2741 = vmatprep.subr.bf16.mxu0 0
      %2742 = vmatpush1.bf16.msra.mxu0 %v2723
      %2743 = vmatprep.subr.bf16.mxu0 0
      %2744 = vmatpush1.bf16.msra.mxu0 %v2724
      %2745 = vmatprep.subr.bf16.mxu0 0
      %2746 = vmatpush1.bf16.msra.mxu0 %v2725
      %2747 = vmatprep.subr.bf16.mxu0 0
      %2748 = vmatpush1.bf16.msra.mxu0 %v2726
      %2749 = vmatprep.subr.bf16.mxu0 0
      %2750 = vmatpush1.bf16.msra.mxu0 %v2727
      %2751 = vmatprep.subr.bf16.mxu0 0
      %2752 = vmatpush1.bf16.msra.mxu0 %v2728
      %2753 = vmatprep.subr.bf16.mxu0 0
      %2754 = vmatpush1.bf16.msra.mxu0 0
      %2755 = vmatprep.subr.bf16.mxu0 0
      %2756 = vmatpush1.bf16.msra.mxu0 0
      %2757 = vmatprep.subr.bf16.mxu0 0
      %2758 = vmatpush1.bf16.msra.mxu0 0
      %2759 = vmatprep.subr.bf16.mxu0 0
      %2760 = vmatpush1.bf16.msra.mxu0 0
      %2761 = vmatprep.subr.bf16.mxu0 0
      %2762 = vmatpush1.bf16.msra.mxu0 0
      %2763 = vmatprep.subr.bf16.mxu0 0
      %2764 = vmatpush1.bf16.msra.mxu0 0
      %2765 = vmatprep.subr.bf16.mxu0 0
      %2766 = vmatpush1.bf16.msra.mxu0 0
      %2767 = vmatprep.subr.bf16.mxu0 0
      %2768 = vmatpush1.bf16.msra.mxu0 0
      %2769 = vmatprep.mubr.bf16.mxu0 0
      %2770 = vmatmul.mubr.bf16.gmra.mrb[0].mxu0 %v2667
      %v2771 = vpop.f32.mrb[0].mxu0
      %v2772 = vadd.f32 0.0, %v2771
      %v2773 = vpop.f32.mrb[0].mxu0
      %v2774 = vpop.f32.mrb[0].mxu0
      %v2775 = vadd.f32 0.0, %v2774
      %v2776 = vpop.f32.mrb[0].mxu0
      %2777 = vmatprep.mubr.bf16.mxu0 0
      %2778 = vmatmul.mubr.bf16.gmra.mrb[0].mxu0 %v2668
      %v2779 = vpop.f32.mrb[0].mxu0
      %v2780 = vadd.f32 0.0, %v2779
      %v2781 = vpop.f32.mrb[0].mxu0
      %v2782 = vpop.f32.mrb[0].mxu0
      %v2783 = vadd.f32 0.0, %v2782
      %v2784 = vpop.f32.mrb[0].mxu0
      %2785 = vmatprep.mubr.bf16.mxu0 0
      %2786 = vmatmul.mubr.bf16.gmra.mrb[0].mxu0 %v2669
      %v2787 = vpop.f32.mrb[0].mxu0
      %v2788 = vadd.f32 0.0, %v2787
      %v2789 = vpop.f32.mrb[0].mxu0
      %v2790 = vpop.f32.mrb[0].mxu0
      %v2791 = vadd.f32 0.0, %v2790
      %v2792 = vpop.f32.mrb[0].mxu0
      %2793 = vmatprep.mubr.bf16.mxu0 0
      %2794 = vmatmul.mubr.bf16.gmra.mrb[0].mxu0 %v2670
      %v2795 = vpop.f32.mrb[0].mxu0
      %v2796 = vadd.f32 0.0, %v2795
      %v2797 = vpop.f32.mrb[0].mxu0
      %v2798 = vpop.f32.mrb[0].mxu0
      %v2799 = vadd.f32 0.0, %v2798
      %v2800 = vpop.f32.mrb[0].mxu0
      %2801 = vmatprep.mubr.bf16.mxu0 0
      %2802 = vmatmul.mubr.bf16.gmra.mrb[0].mxu0 %v2671
      %v2803 = vpop.f32.mrb[0].mxu0
      %v2804 = vadd.f32 0.0, %v2803
      %v2805 = vpop.f32.mrb[0].mxu0
      %v2806 = vpop.f32.mrb[0].mxu0
      %v2807 = vadd.f32 0.0, %v2806
      %v2808 = vpop.f32.mrb[0].mxu0
      %2809 = vdwg.mxu0
      %v2810 = vadd.f32 %v2619, %v2772
      %v2811 = vadd.f32 %v2622, %v2775
      %v2812 = vadd.f32 %v2627, %v2780
      %v2813 = vadd.f32 %v2630, %v2783
      %v2814 = vadd.f32 %v2635, %v2788
      %v2815 = vadd.f32 %v2638, %v2791
      %v2816 = vadd.f32 %v2643, %v2796
      %v2817 = vadd.f32 %v2646, %v2799
      %v2818 = vadd.f32 %v2651, %v2804
      %v2819 = vadd.f32 %v2654, %v2807
      %v2820 = vld [vmem:[%s199 + $0x16] sm:$0xff]
      %v2821 = vld [vmem:[%s199 + $0x1e] sm:$0xff]
      %v2822 = vld [vmem:[%s199 + $0x26] sm:$0xff]
      %v2823 = vld [vmem:[%s199 + $0x2e] sm:$0xff]
      %v2824 = vld [vmem:[%s199 + $0x36] sm:$0xff]
      %v2825 = vld [vmem:[%s199 + $0x3e] sm:$0xff]
      %v2826 = vld [vmem:[%s199 + $0x46] sm:$0xff]
      %v2827 = vld [vmem:[%s199 + $0x4e] sm:$0xff]
      %v2828 = vld [vmem:[%s199 + $0x56] sm:$0xff]
      %v2829 = vld [vmem:[%s199 + $0x5e] sm:$0xff]
      %v2830 = vpack.c.bf16 %v2821, %v2820
      %v2831 = vpack.c.bf16 %v2823, %v2822
      %v2832 = vpack.c.bf16 %v2825, %v2824
      %v2833 = vpack.c.bf16 %v2827, %v2826
      %v2834 = vpack.c.bf16 %v2829, %v2828
      %s2835 = scalar_lea.vmem %s2, 960
      %v2836 = vld [vmem:[%s2835] sm:$0xf]
      %v2837 = vld [vmem:[%s2835 + $0x4] sm:$0xf]
      %v2838 = vld [vmem:[%s2835 + $0x8] sm:$0xf]
      %v2839 = vld [vmem:[%s2835 + $0xc] sm:$0xf]
      %v2840 = vld [vmem:[%s2835 + $0x10] sm:$0xf]
      %v2841 = vld [vmem:[%s2835 + $0x14] sm:$0xf]
      %v2842 = vld [vmem:[%s2835 + $0x18] sm:$0xf]
      %v2843 = vld [vmem:[%s2835 + $0x1c] sm:$0xf]
      %v2844 = vld [vmem:[%s2835 + $0x20] sm:$0xf]
      %v2845 = vld [vmem:[%s2835 + $0x24] sm:$0xf]
      %v2846 = vld [vmem:[%s2835 + $0x28] sm:$0xf]
      %v2847 = vld [vmem:[%s2835 + $0x2c] sm:$0xf]
      %v2848 = vld [vmem:[%s2835 + $0x30] sm:$0xf]
      %v2849 = vld [vmem:[%s2835 + $0x34] sm:$0xf]
      %v2850 = vld [vmem:[%s2835 + $0x38] sm:$0xf]
      %v2851 = vld [vmem:[%s2835 + $0x3c] sm:$0xf]
      %v2868 = vunpack.c.l.b16 %v2836
      %v2869 = vunpack.c.l.b16 %v2837
      %v2870 = vunpack.c.l.b16 %v2838
      %v2871 = vunpack.c.l.b16 %v2839
      %v2872 = vunpack.c.l.b16 %v2840
      %v2873 = vunpack.c.l.b16 %v2841
      %v2874 = vunpack.c.l.b16 %v2842
      %v2875 = vunpack.c.l.b16 %v2843
      %v2876 = vunpack.c.l.b16 %v2844
      %v2877 = vunpack.c.l.b16 %v2845
      %v2878 = vunpack.c.l.b16 %v2846
      %v2879 = vunpack.c.l.b16 %v2847
      %v2880 = vunpack.c.l.b16 %v2848
      %v2881 = vunpack.c.l.b16 %v2849
      %v2882 = vunpack.c.l.b16 %v2850
      %v2883 = vunpack.c.l.b16 %v2851
      %v2884 = vpack.c.b16 %v2869, %v2868
      %v2885 = vpack.c.b16 %v2871, %v2870
      %v2886 = vpack.c.b16 %v2873, %v2872
      %v2887 = vpack.c.b16 %v2875, %v2874
      %v2888 = vpack.c.b16 %v2877, %v2876
      %v2889 = vpack.c.b16 %v2879, %v2878
      %v2890 = vpack.c.b16 %v2881, %v2880
      %v2891 = vpack.c.b16 %v2883, %v2882
      %2900 = vmatprep.subr.bf16.mxu0 0
      %2901 = vmatpush1.bf16.msra.mxu0 %v2884
      %2902 = vmatprep.subr.bf16.mxu0 0
      %2903 = vmatpush1.bf16.msra.mxu0 %v2885
      %2904 = vmatprep.subr.bf16.mxu0 0
      %2905 = vmatpush1.bf16.msra.mxu0 %v2886
      %2906 = vmatprep.subr.bf16.mxu0 0
      %2907 = vmatpush1.bf16.msra.mxu0 %v2887
      %2908 = vmatprep.subr.bf16.mxu0 0
      %2909 = vmatpush1.bf16.msra.mxu0 %v2888
      %2910 = vmatprep.subr.bf16.mxu0 0
      %2911 = vmatpush1.bf16.msra.mxu0 %v2889
      %2912 = vmatprep.subr.bf16.mxu0 0
      %2913 = vmatpush1.bf16.msra.mxu0 %v2890
      %2914 = vmatprep.subr.bf16.mxu0 0
      %2915 = vmatpush1.bf16.msra.mxu0 %v2891
      %2916 = vmatprep.subr.bf16.mxu0 0
      %2917 = vmatpush1.bf16.msra.mxu0 0
      %2918 = vmatprep.subr.bf16.mxu0 0
      %2919 = vmatpush1.bf16.msra.mxu0 0
      %2920 = vmatprep.subr.bf16.mxu0 0
      %2921 = vmatpush1.bf16.msra.mxu0 0
      %2922 = vmatprep.subr.bf16.mxu0 0
      %2923 = vmatpush1.bf16.msra.mxu0 0
      %2924 = vmatprep.subr.bf16.mxu0 0
      %2925 = vmatpush1.bf16.msra.mxu0 0
      %2926 = vmatprep.subr.bf16.mxu0 0
      %2927 = vmatpush1.bf16.msra.mxu0 0
      %2928 = vmatprep.subr.bf16.mxu0 0
      %2929 = vmatpush1.bf16.msra.mxu0 0
      %2930 = vmatprep.subr.bf16.mxu0 0
      %2931 = vmatpush1.bf16.msra.mxu0 0
      %2932 = vmatprep.mubr.bf16.mxu0 0
      %2933 = vmatmul.mubr.bf16.gmra.mrb[0].mxu0 %v2830
      %v2934 = vpop.f32.mrb[0].mxu0
      %v2935 = vadd.f32 0.0, %v2934
      %v2936 = vpop.f32.mrb[0].mxu0
      %v2937 = vpop.f32.mrb[0].mxu0
      %v2938 = vadd.f32 0.0, %v2937
      %v2939 = vpop.f32.mrb[0].mxu0
      %2940 = vmatprep.mubr.bf16.mxu0 0
      %2941 = vmatmul.mubr.bf16.gmra.mrb[0].mxu0 %v2831
      %v2942 = vpop.f32.mrb[0].mxu0
      %v2943 = vadd.f32 0.0, %v2942
      %v2944 = vpop.f32.mrb[0].mxu0
      %v2945 = vpop.f32.mrb[0].mxu0
      %v2946 = vadd.f32 0.0, %v2945
      %v2947 = vpop.f32.mrb[0].mxu0
      %2948 = vmatprep.mubr.bf16.mxu0 0
      %2949 = vmatmul.mubr.bf16.gmra.mrb[0].mxu0 %v2832
      %v2950 = vpop.f32.mrb[0].mxu0
      %v2951 = vadd.f32 0.0, %v2950
      %v2952 = vpop.f32.mrb[0].mxu0
      %v2953 = vpop.f32.mrb[0].mxu0
      %v2954 = vadd.f32 0.0, %v2953
      %v2955 = vpop.f32.mrb[0].mxu0
      %2956 = vmatprep.mubr.bf16.mxu0 0
      %2957 = vmatmul.mubr.bf16.gmra.mrb[0].mxu0 %v2833
      %v2958 = vpop.f32.mrb[0].mxu0
      %v2959 = vadd.f32 0.0, %v2958
      %v2960 = vpop.f32.mrb[0].mxu0
      %v2961 = vpop.f32.mrb[0].mxu0
      %v2962 = vadd.f32 0.0, %v2961
      %v2963 = vpop.f32.mrb[0].mxu0
      %2964 = vmatprep.mubr.bf16.mxu0 0
      %2965 = vmatmul.mubr.bf16.gmra.mrb[0].mxu0 %v2834
      %v2966 = vpop.f32.mrb[0].mxu0
      %v2967 = vadd.f32 0.0, %v2966
      %v2968 = vpop.f32.mrb[0].mxu0
      %v2969 = vpop.f32.mrb[0].mxu0
      %v2970 = vadd.f32 0.0, %v2969
      %v2971 = vpop.f32.mrb[0].mxu0
      %2972 = vdwg.mxu0
      %v2973 = vadd.f32 %v2810, %v2935
      %v2974 = vadd.f32 %v2811, %v2938
      %v2975 = vadd.f32 %v2812, %v2943
      %v2976 = vadd.f32 %v2813, %v2946
      %v2977 = vadd.f32 %v2814, %v2951
      %v2978 = vadd.f32 %v2815, %v2954
      %v2979 = vadd.f32 %v2816, %v2959
      %v2980 = vadd.f32 %v2817, %v2962
      %v2981 = vadd.f32 %v2818, %v2967
      %v2982 = vadd.f32 %v2819, %v2970
      %2983 = vst [vmem:[%s204 + $0x18] sm:$0xff] %v2973
      %2984 = vst [vmem:[%s204 + $0x38] sm:$0xff] %v2974
      %2985 = vst [vmem:[%s204 + $0x58] sm:$0xff] %v2975
      %2986 = vst [vmem:[%s204 + $0x78] sm:$0xff] %v2976
      %2987 = vst [vmem:[%s204 + $0x98] sm:$0xff] %v2977
      %2988 = vst [vmem:[%s204 + $0xb8] sm:$0xff] %v2978
      %2989 = vst [vmem:[%s204 + $0xd8] sm:$0xff] %v2979
      %2990 = vst [vmem:[%s204 + $0xf8] sm:$0xff] %v2980
      %2991 = vst [vmem:[%s204 + $0x118] sm:$0xff] %v2981
      %2992 = vst [vmem:[%s204 + $0x138] sm:$0xff] %v2982
      %v2993 = vmul.f32 %v2973, %v864
      %v2994 = vmul.f32 %v2974, %v869
      %v2995 = vmul.f32 %v2975, %v874
      %v2996 = vmul.f32 %v2976, %v879
      %v2997 = vmul.f32 %v2977, %v884
      %v2998 = vmul.f32 %v2978, %v889
      %v2999 = vmul.f32 %v2979, %v894
      %v3000 = vmul.f32 %v2980, %v899
      %v3001 = vmul.f32 %v2981, %v904
      %v3002 = vmul.f32 %v2982, %v909
      %v3003 = vadd.f32 %v2993, %v2994
      %v3004 = vadd.f32 %v3003, %v2995
      %v3005 = vadd.f32 %v3004, %v2996
      %v3006 = vadd.f32 %v3005, %v2997
      %v3007 = vadd.f32 %v3006, %v2998
      %v3008 = vadd.f32 %v3007, %v2999
      %v3009 = vadd.f32 %v3008, %v3000
      %v3010 = vadd.f32 %v3009, %v3001
      %v3011 = vadd.f32 %v3010, %v3002
      %v3012 = vrot.slane %v3011, 4
      %v3013 = vadd.f32 %v3011, %v3012
      %v3014 = vrot.slane %v3013, 2
      %v3015 = vadd.f32 %v3013, %v3014
      %v3016 = vrot.slane %v3015, 1
      %v3017 = vadd.f32 %v3015, %v3016
      %v3018 = vadd.f32 %v2324, %v3017
      %v3019 = vmul.f32 %v2993, %v2973
      %v3020 = vmul.f32 %v2994, %v2974
      %v3021 = vmul.f32 %v2995, %v2975
      %v3022 = vmul.f32 %v2996, %v2976
      %v3023 = vmul.f32 %v2997, %v2977
      %v3024 = vmul.f32 %v2998, %v2978
      %v3025 = vmul.f32 %v2999, %v2979
      %v3026 = vmul.f32 %v3000, %v2980
      %v3027 = vmul.f32 %v3001, %v2981
      %v3028 = vmul.f32 %v3002, %v2982
      %v3029 = vadd.f32 %v3019, %v3020
      %v3030 = vadd.f32 %v3029, %v3021
      %v3031 = vadd.f32 %v3030, %v3022
      %v3032 = vadd.f32 %v3031, %v3023
      %v3033 = vadd.f32 %v3032, %v3024
      %v3034 = vadd.f32 %v3033, %v3025
      %v3035 = vadd.f32 %v3034, %v3026
      %v3036 = vadd.f32 %v3035, %v3027
      %v3037 = vadd.f32 %v3036, %v3028
      %v3038 = vrot.slane %v3037, 4
      %v3039 = vadd.f32 %v3037, %v3038
      %v3040 = vrot.slane %v3039, 2
      %v3041 = vadd.f32 %v3039, %v3040
      %v3042 = vrot.slane %v3041, 1
      %v3043 = vadd.f32 %v3041, %v3042
      %v3044 = vadd.f32 %v2350, %v3043
      %3045 = vst [vmem:[%s208] sm:$0x1] %v3018
      %3046 = vst [vmem:[%s208 + $0x1] sm:$0x1] %v3044
      %p3047 = scmp.lt.s32.totalorder %s16, 1
      %s3048 = scalar_select %p3047, %s16, 1
      %s3049 = smul.addr %s3048, 40
      %s3050 = smul.addr %s3049, 8
      %s3051 = scalar_lea.vmem %s3, %s3050
      %p3052 = scmp.lt.s32.totalorder %s16, 1
      %s3053 = scalar_select %p3052, %s16, 1
      %s3054 = smul.addr %s3053, 2
      %s3055 = scalar_lea.vmem %s4, %s3054
      // Predicated region
      $region33: #{generator_forward.6} parent=31 // pred_check
        %p3056 = pneg %p102
      $region34: #{generator_forward.6} parent=31 // pred_check_branch
        %3058 = sbr.rel (%p3056) target = $region36
      $region35: #{generator_forward.6} parent=31 // pred_region
        _
      $region36: #{generator_forward.6} parent=31 // pred_fallthru
        _
      // Predicated region
      $region37: #{generator_forward.6} parent=31 // pred_check
        %p3059 = pneg %p128
      $region38: #{generator_forward.6} parent=31 // pred_check_branch
        %3061 = sbr.rel (%p3059) target = $region40
      $region39: #{generator_forward.6} parent=31 // pred_region
        _
      $region40: #{generator_forward.6} parent=31 // pred_fallthru
        _
    $region32: #{generator_forward.6} parent=5 // pred_fallthru
      _
    %p3062 = scmp.le.s32.totalorder 2, %s11
    // Predicated region
    $region41: #{generator_forward.6} parent=5 // pred_check
      %p3063 = pneg %p3062
    $region42: #{generator_forward.6} parent=5 // pred_check_branch
      %3065 = sbr.rel (%p3063) target = $region44
    $region43: #{generator_forward.6} parent=5 // pred_region
      %s3066 = ssub.s32 %s11, 2
      // Predicated region
      $region45: #{generator_forward.6} parent=43 // pred_check
        %p3067 = pneg %p108
      $region46: #{generator_forward.6} parent=43 // pred_check_branch
        %3069 = sbr.rel (%p3067) target = $region48
      $region47: #{generator_forward.6} parent=43 // pred_region
        %p3070 = scmp.lt.s32.totalorder %s17, 1
        %s3071 = scalar_select %p3070, %s17, 1
        %s3072 = smul.addr %s3071, 40
        %s3073 = smul.addr %s3072, 8
        %s3074 = scalar_lea.vmem %s3, %s3073
      $region48: #{generator_forward.6} parent=43 // pred_fallthru
        _
      // Predicated region
      $region49: #{generator_forward.6} parent=43 // pred_check
        %p3075 = pneg %p134
      $region50: #{generator_forward.6} parent=43 // pred_check_branch
        %3077 = sbr.rel (%p3075) target = $region52
      $region51: #{generator_forward.6} parent=43 // pred_region
        %p3078 = scmp.lt.s32.totalorder %s17, 1
        %s3079 = scalar_select %p3078, %s17, 1
        %s3080 = smul.addr %s3079, 2
        %s3081 = scalar_lea.vmem %s4, %s3080
      $region52: #{generator_forward.6} parent=43 // pred_fallthru
        _
    $region44: #{generator_forward.6} parent=5 // pred_fallthru
      _
  $region6: #{generator_forward.6} parent=0 // loop_footer
    %s15 = sadd.s32 1, %s11
  $region7: #{generator_forward.6} parent=0 // loop_footer_branch
    %10 = sbr.rel target = $region3
  $region8: #{generator_forward.6} parent=0 // loop_exit
    _

// kernel: generator_forward.7
$region0: #{generator_forward.7}
  #allocation0 [shape = 'u32[]', space=smem, size = 0x4, offset = 0x4, fixed_abs, tag = 'smem constant byte address 0x4 - core index']
  #allocation1 [shape = 'u32[144,128]{1,0:T(1,128)}', space=vmem, size = 0x12000, scoped, tag = 'internal scratch']
  %s0 = inlined_call_operand.vmem [shape: f32[2,342,128], index: 0, kind: input, shape index: {}]
  %s1 = inlined_call_operand.vmem [shape: bf16[9,128,128], index: 1, kind: input, shape index: {}]
  %s2 = inlined_call_operand.vmem [shape: f32[1,128], index: 2, kind: input, shape index: {}]
  %s3 = inlined_call_operand.vmem [shape: f32[2,288,128], index: 3, kind: output, shape index: {}]
  %s4 = sld [smem:[#allocation0]]
  $region45: #{generator_forward.7} parent=0
    _
  %s6 = ssub.s32 1, %s4
  %s7 = scalar_select 0, %s6, %s4
  loop: start=0, step=1, limit=4
  $region2: #{generator_forward.7} parent=0 // loop_pre_header
    _
  $region3: #{generator_forward.7} parent=0 // loop_header
    %s9 = sphi 0, %s13
    %p10 = scmp.ge.s32.totalorder %s9, 4
    %s19 = sphi 0, %s21
    %s22 = sphi 0, %s19
    %s23 = sphi 0, %s22
    %s39 = sphi 0, %s23
    %s43 = sphi 0, %s43
    %s45 = sphi 0, %s43
    %s46 = sphi 0, %s45
    %s60 = sphi 0, %s46
    %s64 = sphi 0, %s64
    %s66 = sphi 0, %s64
    %s67 = sphi 0, %s66
    %s81 = sphi 0, %s67
    %s87 = sphi 0, %s89
    %s90 = sphi 0, %s87
    %s91 = sphi 0, %s90
    %s107 = sphi 0, %s91
  $region4: #{generator_forward.7} parent=0 // loop_header_branch
    %12 = sbr.rel (%p10) target = $region8
  $region5: #{generator_forward.7} parent=0 // loop_body
    %s14 = ssub.s32 %s9, 1
    %s15 = ssub.s32 %s9, 2
    %s16 = sadd.s32 %s9, 1
    %s17 = ssub.s32 %s9, %s16
    %p18 = scmp.eq.s32.totalorder %s17, 0
    %s20 = sadd.s32 %s19, 1
    %s21 = scalar_select %p18, %s19, %s20
    %p24 = pneg %p18
    %p25 = scmp.eq.s32.totalorder %s9, 1
    %p26 = por %p24, %p25
    %p27 = scmp.ne.s32.totalorder %s19, %s22
    %p28 = scmp.eq.s32.totalorder %s9, 0
    %p29 = por %p27, %p28
    %p30 = scmp.ne.s32.totalorder %s19, %s22
    %p31 = scmp.eq.s32.totalorder %s14, 1
    %p32 = por %p30, %p31
    %p33 = scmp.ne.s32.totalorder %s22, %s23
    %p34 = scmp.eq.s32.totalorder %s14, 0
    %p35 = por %p33, %p34
    %p36 = scmp.ne.s32.totalorder %s22, %s23
    %p37 = scmp.eq.s32.totalorder %s15, 1
    %p38 = por %p36, %p37
    %p40 = scmp.ne.s32.totalorder %s23, %s39
    %p41 = scmp.eq.s32.totalorder %s15, 0
    %p42 = por %p40, %p41
    %s44 = sadd.s32 %s43, 1
    %p47 = scmp.eq.s32.totalorder %s9, 1
    %p48 = scmp.ne.s32.totalorder %s43, %s45
    %p49 = scmp.eq.s32.totalorder %s9, 0
    %p50 = por %p48, %p49
    %p51 = scmp.ne.s32.totalorder %s43, %s45
    %p52 = scmp.eq.s32.totalorder %s14, 1
    %p53 = por %p51, %p52
    %p54 = scmp.ne.s32.totalorder %s45, %s46
    %p55 = scmp.eq.s32.totalorder %s14, 0
    %p56 = por %p54, %p55
    %p57 = scmp.ne.s32.totalorder %s45, %s46
    %p58 = scmp.eq.s32.totalorder %s15, 1
    %p59 = por %p57, %p58
    %p61 = scmp.ne.s32.totalorder %s46, %s60
    %p62 = scmp.eq.s32.totalorder %s15, 0
    %p63 = por %p61, %p62
    %s65 = sadd.s32 %s64, 1
    %p68 = scmp.eq.s32.totalorder %s9, 1
    %p69 = scmp.ne.s32.totalorder %s64, %s66
    %p70 = scmp.eq.s32.totalorder %s9, 0
    %p71 = por %p69, %p70
    %p72 = scmp.ne.s32.totalorder %s64, %s66
    %p73 = scmp.eq.s32.totalorder %s14, 1
    %p74 = por %p72, %p73
    %p75 = scmp.ne.s32.totalorder %s66, %s67
    %p76 = scmp.eq.s32.totalorder %s14, 0
    %p77 = por %p75, %p76
    %p78 = scmp.ne.s32.totalorder %s66, %s67
    %p79 = scmp.eq.s32.totalorder %s15, 1
    %p80 = por %p78, %p79
    %p82 = scmp.ne.s32.totalorder %s67, %s81
    %p83 = scmp.eq.s32.totalorder %s15, 0
    %p84 = por %p82, %p83
    %s85 = ssub.s32 %s9, %s16
    %p86 = scmp.eq.s32.totalorder %s85, 0
    %s88 = sadd.s32 %s87, 1
    %s89 = scalar_select %p86, %s87, %s88
    %p92 = pneg %p86
    %p93 = scmp.eq.s32.totalorder %s9, 1
    %p94 = por %p92, %p93
    %p95 = scmp.ne.s32.totalorder %s87, %s90
    %p96 = scmp.eq.s32.totalorder %s9, 0
    %p97 = por %p95, %p96
    %p98 = scmp.ne.s32.totalorder %s87, %s90
    %p99 = scmp.eq.s32.totalorder %s14, 1
    %p100 = por %p98, %p99
    %p101 = scmp.ne.s32.totalorder %s90, %s91
    %p102 = scmp.eq.s32.totalorder %s14, 0
    %p103 = por %p101, %p102
    %p104 = scmp.ne.s32.totalorder %s90, %s91
    %p105 = scmp.eq.s32.totalorder %s15, 1
    %p106 = por %p104, %p105
    %p108 = scmp.ne.s32.totalorder %s91, %s107
    %p109 = scmp.eq.s32.totalorder %s15, 0
    %p110 = por %p108, %p109
    %p111 = scmp.le.s32.totalorder 1, %s9
    %p112 = scmp.lt.s32.totalorder %s9, 3
    %p113 = pnand %p111, %p112
    %p114 = pneg %p113
    // Predicated region
    $region9: #{generator_forward.7} parent=5 // pred_check
      _
    $region10: #{generator_forward.7} parent=5 // pred_check_branch
      %116 = sbr.rel (%p113) target = $region12
    $region11: #{generator_forward.7} parent=5 // pred_region
      %s117 = ssub.s32 %s9, 1
      // Predicated region
      $region13: #{generator_forward.7} parent=11 // pred_check
        %p118 = pneg %p56
      $region14: #{generator_forward.7} parent=11 // pred_check_branch
        %120 = sbr.rel (%p118) target = $region16
      $region15: #{generator_forward.7} parent=11 // pred_region
        _
      $region16: #{generator_forward.7} parent=11 // pred_fallthru
        _
      // Predicated region
      $region17: #{generator_forward.7} parent=11 // pred_check
        %p121 = pneg %p77
      $region18: #{generator_forward.7} parent=11 // pred_check_branch
        %123 = sbr.rel (%p121) target = $region20
      $region19: #{generator_forward.7} parent=11 // pred_region
        _
      $region20: #{generator_forward.7} parent=11 // pred_fallthru
        _
    $region12: #{generator_forward.7} parent=5 // pred_fallthru
      _
    %p124 = scmp.lt.s32.totalorder %s9, 2
    // Predicated region
    $region21: #{generator_forward.7} parent=5 // pred_check
      %p125 = pneg %p124
    $region22: #{generator_forward.7} parent=5 // pred_check_branch
      %127 = sbr.rel (%p125) target = $region24
    $region23: #{generator_forward.7} parent=5 // pred_region
      // Predicated region
      $region25: #{generator_forward.7} parent=23 // pred_check
        %p128 = pneg %p29
      $region26: #{generator_forward.7} parent=23 // pred_check_branch
        %130 = sbr.rel (%p128) target = $region28
      $region27: #{generator_forward.7} parent=23 // pred_region
        %p131 = scmp.lt.s32.totalorder %s9, 1
        %s132 = scalar_select %p131, %s9, 1
        %s133 = smul.addr %s132, 43
        %s134 = smul.addr %s133, 8
        %s135 = scalar_lea.vmem %s0, %s134
      $region28: #{generator_forward.7} parent=23 // pred_fallthru
        _
    $region24: #{generator_forward.7} parent=5 // pred_fallthru
      _
    %p136 = scmp.le.s32.totalorder 1, %s9
    %p137 = scmp.lt.s32.totalorder %s9, 3
    %p138 = pnand %p136, %p137
    %p139 = pneg %p138
    // Predicated region
    $region29: #{generator_forward.7} parent=5 // pred_check
      _
    $region30: #{generator_forward.7} parent=5 // pred_check_branch
      %141 = sbr.rel (%p138) target = $region32
    $region31: #{generator_forward.7} parent=5 // pred_region
      %s142 = ssub.s32 %s9, 1
      %p143 = scmp.lt.s32.totalorder %s14, 1
      %s144 = scalar_select %p143, %s14, 1
      %s145 = smul.addr %s144, 43
      %s146 = smul.addr %s145, 8
      %s147 = scalar_lea.vmem %s0, %s146
      %p148 = pneg %p35
      %p149 = pneg %p32
      %p150 = pneg %p56
      %p151 = pneg %p53
      %p152 = pneg %p77
      %p153 = pneg %p74
      %p154 = pneg %p103
      %p155 = pneg %p100
      %p156 = scmp.lt.s32.totalorder %s14, 1
      %s157 = scalar_select %p156, %s14, 1
      %s158 = smul.addr %s157, 36
      %s159 = smul.addr %s158, 8
      %s160 = scalar_lea.vmem %s3, %s159
      %p161 = scmp.lt.s32.totalorder %s14, 1
      %s162 = scalar_select %p161, %s14, 1
      %s163 = smul.addr %s162, 43
      %s164 = smul.addr %s163, 8
      %s165 = scalar_lea.vmem %s0, %s164
      %p166 = scmp.lt.s32.totalorder %s14, 1
      %s167 = scalar_select %p166, %s14, 1
      %s168 = smul.addr %s167, 36
      %s169 = smul.addr %s168, 8
      %s170 = scalar_lea.vmem %s3, %s169
      %v172 = vld [vmem:[%s165] sm:$0xff]
      %v173 = vld [vmem:[%s165 + $0x8] sm:$0xff]
      %v174 = vld [vmem:[%s165 + $0x10] sm:$0xff]
      %v175 = vld [vmem:[%s165 + $0x18] sm:$0xff]
      %v176 = vld [vmem:[%s165 + $0x20] sm:$0xff]
      %v177 = vld [vmem:[%s165 + $0x28] sm:$0xff]
      %v178 = vld [vmem:[%s165 + $0x30] sm:$0xff]
      %v179 = vld [vmem:[%s165 + $0x38] sm:$0xff]
      %v180 = vld [vmem:[%s165 + $0x40] sm:$0xff]
      %v181 = vld [vmem:[%s165 + $0x48] sm:$0xff]
      %v182 = vld [vmem:[%s165 + $0x50] sm:$0xff]
      %v183 = vld [vmem:[%s165 + $0x58] sm:$0xff]
      %v184 = vld [vmem:[%s165 + $0x60] sm:$0xff]
      %v185 = vld [vmem:[%s165 + $0x68] sm:$0xff]
      %v186 = vld [vmem:[%s165 + $0x70] sm:$0xff]
      %v187 = vld [vmem:[%s165 + $0x78] sm:$0xff]
      %v188 = vld [vmem:[%s165 + $0x80] sm:$0xff]
      %v189 = vld [vmem:[%s165 + $0x88] sm:$0xff]
      %v190 = vld [vmem:[%s165 + $0x90] sm:$0xff]
      %v191 = vld [vmem:[%s165 + $0x98] sm:$0xff]
      %v192 = vld [vmem:[%s165 + $0xa0] sm:$0xff]
      %v193 = vld [vmem:[%s165 + $0xa8] sm:$0xff]
      %v194 = vld [vmem:[%s165 + $0xb0] sm:$0xff]
      %v195 = vld [vmem:[%s165 + $0xb8] sm:$0xff]
      %v196 = vld [vmem:[%s165 + $0xc0] sm:$0xff]
      %v197 = vld [vmem:[%s165 + $0xc8] sm:$0xff]
      %v198 = vld [vmem:[%s165 + $0xd0] sm:$0xff]
      %v199 = vld [vmem:[%s165 + $0xd8] sm:$0xff]
      %v200 = vld [vmem:[%s165 + $0xe0] sm:$0xff]
      %v201 = vld [vmem:[%s165 + $0xe8] sm:$0xff]
      %v202 = vld [vmem:[%s165 + $0xf0] sm:$0xff]
      %v203 = vld [vmem:[%s165 + $0xf8] sm:$0xff]
      %v204 = vld [vmem:[%s165 + $0x100] sm:$0xff]
      %v205 = vld [vmem:[%s165 + $0x108] sm:$0xff]
      %v206 = vld [vmem:[%s165 + $0x110] sm:$0xff]
      %v207 = vld [vmem:[%s165 + $0x118] sm:$0xff]
      %v208 = vpack.c.bf16 %v173, %v172
      %v209 = vpack.c.bf16 %v175, %v174
      %v210 = vpack.c.bf16 %v177, %v176
      %v211 = vpack.c.bf16 %v179, %v178
      %v212 = vpack.c.bf16 %v181, %v180
      %v213 = vpack.c.bf16 %v183, %v182
      %v214 = vpack.c.bf16 %v185, %v184
      %v215 = vpack.c.bf16 %v187, %v186
      %v216 = vpack.c.bf16 %v189, %v188
      %v217 = vpack.c.bf16 %v191, %v190
      %v218 = vpack.c.bf16 %v193, %v192
      %v219 = vpack.c.bf16 %v195, %v194
      %v220 = vpack.c.bf16 %v197, %v196
      %v221 = vpack.c.bf16 %v199, %v198
      %v222 = vpack.c.bf16 %v201, %v200
      %v223 = vpack.c.bf16 %v203, %v202
      %v224 = vpack.c.bf16 %v205, %v204
      %v225 = vpack.c.bf16 %v207, %v206
      %v226 = vld [vmem:[%s1] sm:$0xf]
      %v227 = vld [vmem:[%s1 + $0x4] sm:$0xf]
      %v228 = vld [vmem:[%s1 + $0x8] sm:$0xf]
      %v229 = vld [vmem:[%s1 + $0xc] sm:$0xf]
      %v230 = vld [vmem:[%s1 + $0x10] sm:$0xf]
      %v231 = vld [vmem:[%s1 + $0x14] sm:$0xf]
      %v232 = vld [vmem:[%s1 + $0x18] sm:$0xf]
      %v233 = vld [vmem:[%s1 + $0x1c] sm:$0xf]
      %v234 = vld [vmem:[%s1 + $0x20] sm:$0xf]
      %v235 = vld [vmem:[%s1 + $0x24] sm:$0xf]
      %v236 = vld [vmem:[%s1 + $0x28] sm:$0xf]
      %v237 = vld [vmem:[%s1 + $0x2c] sm:$0xf]
      %v238 = vld [vmem:[%s1 + $0x30] sm:$0xf]
      %v239 = vld [vmem:[%s1 + $0x34] sm:$0xf]
      %v240 = vld [vmem:[%s1 + $0x38] sm:$0xf]
      %v241 = vld [vmem:[%s1 + $0x3c] sm:$0xf]
      %v242 = vld [vmem:[%s165 + $0x1] sm:$0xff]
      %v243 = vld [vmem:[%s165 + $0x9] sm:$0xff]
      %v244 = vld [vmem:[%s165 + $0x11] sm:$0xff]
      %v245 = vld [vmem:[%s165 + $0x19] sm:$0xff]
      %v246 = vld [vmem:[%s165 + $0x21] sm:$0xff]
      %v247 = vld [vmem:[%s165 + $0x29] sm:$0xff]
      %v248 = vld [vmem:[%s165 + $0x31] sm:$0xff]
      %v249 = vld [vmem:[%s165 + $0x39] sm:$0xff]
      %v250 = vld [vmem:[%s165 + $0x41] sm:$0xff]
      %v251 = vld [vmem:[%s165 + $0x49] sm:$0xff]
      %v252 = vld [vmem:[%s165 + $0x51] sm:$0xff]
      %v253 = vld [vmem:[%s165 + $0x59] sm:$0xff]
      %v254 = vld [vmem:[%s165 + $0x61] sm:$0xff]
      %v255 = vld [vmem:[%s165 + $0x69] sm:$0xff]
      %v256 = vld [vmem:[%s165 + $0x71] sm:$0xff]
      %v257 = vld [vmem:[%s165 + $0x79] sm:$0xff]
      %v258 = vld [vmem:[%s165 + $0x81] sm:$0xff]
      %v259 = vld [vmem:[%s165 + $0x89] sm:$0xff]
      %v260 = vld [vmem:[%s165 + $0x91] sm:$0xff]
      %v261 = vld [vmem:[%s165 + $0x99] sm:$0xff]
      %v262 = vld [vmem:[%s165 + $0xa1] sm:$0xff]
      %v263 = vld [vmem:[%s165 + $0xa9] sm:$0xff]
      %v264 = vld [vmem:[%s165 + $0xb1] sm:$0xff]
      %v265 = vld [vmem:[%s165 + $0xb9] sm:$0xff]
      %v266 = vld [vmem:[%s165 + $0xc1] sm:$0xff]
      %v267 = vld [vmem:[%s165 + $0xc9] sm:$0xff]
      %v268 = vld [vmem:[%s165 + $0xd1] sm:$0xff]
      %v269 = vld [vmem:[%s165 + $0xd9] sm:$0xff]
      %v270 = vld [vmem:[%s165 + $0xe1] sm:$0xff]
      %v271 = vld [vmem:[%s165 + $0xe9] sm:$0xff]
      %v272 = vld [vmem:[%s165 + $0xf1] sm:$0xff]
      %v273 = vld [vmem:[%s165 + $0xf9] sm:$0xff]
      %v274 = vld [vmem:[%s165 + $0x101] sm:$0xff]
      %v275 = vld [vmem:[%s165 + $0x109] sm:$0xff]
      %v276 = vld [vmem:[%s165 + $0x111] sm:$0xff]
      %v277 = vld [vmem:[%s165 + $0x119] sm:$0xff]
      %v278 = vpack.c.bf16 %v243, %v242
      %v279 = vpack.c.bf16 %v245, %v244
      %v280 = vpack.c.bf16 %v247, %v246
      %v281 = vpack.c.bf16 %v249, %v248
      %v282 = vpack.c.bf16 %v251, %v250
      %v283 = vpack.c.bf16 %v253, %v252
      %v284 = vpack.c.bf16 %v255, %v254
      %v285 = vpack.c.bf16 %v257, %v256
      %v286 = vpack.c.bf16 %v259, %v258
      %v287 = vpack.c.bf16 %v261, %v260
      %v288 = vpack.c.bf16 %v263, %v262
      %v289 = vpack.c.bf16 %v265, %v264
      %v290 = vpack.c.bf16 %v267, %v266
      %v291 = vpack.c.bf16 %v269, %v268
      %v292 = vpack.c.bf16 %v271, %v270
      %v293 = vpack.c.bf16 %v273, %v272
      %v294 = vpack.c.bf16 %v275, %v274
      %v295 = vpack.c.bf16 %v277, %v276
      %s296 = scalar_lea.vmem %s1, 64
      %v297 = vld [vmem:[%s296] sm:$0xf]
      %v298 = vld [vmem:[%s296 + $0x4] sm:$0xf]
      %v299 = vld [vmem:[%s296 + $0x8] sm:$0xf]
      %v300 = vld [vmem:[%s296 + $0xc] sm:$0xf]
      %v301 = vld [vmem:[%s296 + $0x10] sm:$0xf]
      %v302 = vld [vmem:[%s296 + $0x14] sm:$0xf]
      %v303 = vld [vmem:[%s296 + $0x18] sm:$0xf]
      %v304 = vld [vmem:[%s296 + $0x1c] sm:$0xf]
      %v305 = vld [vmem:[%s296 + $0x20] sm:$0xf]
      %v306 = vld [vmem:[%s296 + $0x24] sm:$0xf]
      %v307 = vld [vmem:[%s296 + $0x28] sm:$0xf]
      %v308 = vld [vmem:[%s296 + $0x2c] sm:$0xf]
      %v309 = vld [vmem:[%s296 + $0x30] sm:$0xf]
      %v310 = vld [vmem:[%s296 + $0x34] sm:$0xf]
      %v311 = vld [vmem:[%s296 + $0x38] sm:$0xf]
      %v312 = vld [vmem:[%s296 + $0x3c] sm:$0xf]
      %v329 = vunpack.c.l.b16 %v297
      %v330 = vunpack.c.l.b16 %v298
      %v331 = vunpack.c.l.b16 %v299
      %v332 = vunpack.c.l.b16 %v300
      %v333 = vunpack.c.l.b16 %v301
      %v334 = vunpack.c.l.b16 %v302
      %v335 = vunpack.c.l.b16 %v303
      %v336 = vunpack.c.l.b16 %v304
      %v337 = vunpack.c.l.b16 %v305
      %v338 = vunpack.c.l.b16 %v306
      %v339 = vunpack.c.l.b16 %v307
      %v340 = vunpack.c.l.b16 %v308
      %v341 = vunpack.c.l.b16 %v309
      %v342 = vunpack.c.l.b16 %v310
      %v343 = vunpack.c.l.b16 %v311
      %v344 = vunpack.c.l.b16 %v312
      %v345 = vpack.c.b16 %v330, %v329
      %v346 = vpack.c.b16 %v332, %v331
      %v347 = vpack.c.b16 %v334, %v333
      %v348 = vpack.c.b16 %v336, %v335
      %v349 = vpack.c.b16 %v338, %v337
      %v350 = vpack.c.b16 %v340, %v339
      %v351 = vpack.c.b16 %v342, %v341
      %v352 = vpack.c.b16 %v344, %v343
      %361 = vmatprep.subr.bf16.mxu0 0
      %362 = vmatpush1.bf16.msra.mxu0 %v345
      %363 = vmatprep.subr.bf16.mxu0 0
      %364 = vmatpush1.bf16.msra.mxu0 %v346
      %365 = vmatprep.subr.bf16.mxu0 0
      %366 = vmatpush1.bf16.msra.mxu0 %v347
      %367 = vmatprep.subr.bf16.mxu0 0
      %368 = vmatpush1.bf16.msra.mxu0 %v348
      %369 = vmatprep.subr.bf16.mxu0 0
      %370 = vmatpush1.bf16.msra.mxu0 %v349
      %371 = vmatprep.subr.bf16.mxu0 0
      %372 = vmatpush1.bf16.msra.mxu0 %v350
      %373 = vmatprep.subr.bf16.mxu0 0
      %374 = vmatpush1.bf16.msra.mxu0 %v351
      %375 = vmatprep.subr.bf16.mxu0 0
      %376 = vmatpush1.bf16.msra.mxu0 %v352
      %377 = vmatprep.subr.bf16.mxu0 0
      %378 = vmatpush1.bf16.msra.mxu0 0
      %379 = vmatprep.subr.bf16.mxu0 0
      %380 = vmatpush1.bf16.msra.mxu0 0
      %381 = vmatprep.subr.bf16.mxu0 0
      %382 = vmatpush1.bf16.msra.mxu0 0
      %383 = vmatprep.subr.bf16.mxu0 0
      %384 = vmatpush1.bf16.msra.mxu0 0
      %385 = vmatprep.subr.bf16.mxu0 0
      %386 = vmatpush1.bf16.msra.mxu0 0
      %387 = vmatprep.subr.bf16.mxu0 0
      %388 = vmatpush1.bf16.msra.mxu0 0
      %389 = vmatprep.subr.bf16.mxu0 0
      %390 = vmatpush1.bf16.msra.mxu0 0
      %391 = vmatprep.subr.bf16.mxu0 0
      %392 = vmatpush1.bf16.msra.mxu0 0
      %393 = vmatprep.mubr.bf16.mxu0 0
      %394 = vmatmul.mubr.bf16.gmra.mrb[0].mxu0 %v278
      %v395 = vpop.f32.mrb[0].mxu0
      %v396 = vadd.f32 0.0, %v395
      %v397 = vpop.f32.mrb[0].mxu0
      %v398 = vpop.f32.mrb[0].mxu0
      %v399 = vadd.f32 0.0, %v398
      %v400 = vpop.f32.mrb[0].mxu0
      %401 = vmatprep.mubr.bf16.mxu0 0
      %402 = vmatmul.mubr.bf16.gmra.mrb[0].mxu0 %v279
      %v403 = vpop.f32.mrb[0].mxu0
      %v404 = vadd.f32 0.0, %v403
      %v405 = vpop.f32.mrb[0].mxu0
      %v406 = vpop.f32.mrb[0].mxu0
      %v407 = vadd.f32 0.0, %v406
      %v408 = vpop.f32.mrb[0].mxu0
      %409 = vmatprep.mubr.bf16.mxu0 0
      %410 = vmatmul.mubr.bf16.gmra.mrb[0].mxu0 %v280
      %v411 = vpop.f32.mrb[0].mxu0
      %v412 = vadd.f32 0.0, %v411
      %v413 = vpop.f32.mrb[0].mxu0
      %v414 = vpop.f32.mrb[0].mxu0
      %v415 = vadd.f32 0.0, %v414
      %v416 = vpop.f32.mrb[0].mxu0
      %417 = vmatprep.mubr.bf16.mxu0 0
      %418 = vmatmul.mubr.bf16.gmra.mrb[0].mxu0 %v281
      %v419 = vpop.f32.mrb[0].mxu0
      %v420 = vadd.f32 0.0, %v419
      %v421 = vpop.f32.mrb[0].mxu0
      %v422 = vpop.f32.mrb[0].mxu0
      %v423 = vadd.f32 0.0, %v422
      %v424 = vpop.f32.mrb[0].mxu0
      %425 = vmatprep.mubr.bf16.mxu0 0
      %426 = vmatmul.mubr.bf16.gmra.mrb[0].mxu0 %v282
      %v427 = vpop.f32.mrb[0].mxu0
      %v428 = vadd.f32 0.0, %v427
      %v429 = vpop.f32.mrb[0].mxu0
      %v430 = vpop.f32.mrb[0].mxu0
      %v431 = vadd.f32 0.0, %v430
      %v432 = vpop.f32.mrb[0].mxu0
      %433 = vmatprep.mubr.bf16.mxu0 0
      %434 = vmatmul.mubr.bf16.gmra.mrb[0].mxu0 %v283
      %v435 = vpop.f32.mrb[0].mxu0
      %v436 = vadd.f32 0.0, %v435
      %v437 = vpop.f32.mrb[0].mxu0
      %v438 = vpop.f32.mrb[0].mxu0
      %v439 = vadd.f32 0.0, %v438
      %v440 = vpop.f32.mrb[0].mxu0
      %441 = vmatprep.mubr.bf16.mxu0 0
      %442 = vmatmul.mubr.bf16.gmra.mrb[0].mxu0 %v284
      %v443 = vpop.f32.mrb[0].mxu0
      %v444 = vadd.f32 0.0, %v443
      %v445 = vpop.f32.mrb[0].mxu0
      %v446 = vpop.f32.mrb[0].mxu0
      %v447 = vadd.f32 0.0, %v446
      %v448 = vpop.f32.mrb[0].mxu0
      %449 = vmatprep.mubr.bf16.mxu0 0
      %450 = vmatmul.mubr.bf16.gmra.mrb[0].mxu0 %v285
      %v451 = vpop.f32.mrb[0].mxu0
      %v452 = vadd.f32 0.0, %v451
      %v453 = vpop.f32.mrb[0].mxu0
      %v454 = vpop.f32.mrb[0].mxu0
      %v455 = vadd.f32 0.0, %v454
      %v456 = vpop.f32.mrb[0].mxu0
      %457 = vmatprep.mubr.bf16.mxu0 0
      %458 = vmatmul.mubr.bf16.gmra.mrb[0].mxu0 %v286
      %v459 = vpop.f32.mrb[0].mxu0
      %v460 = vadd.f32 0.0, %v459
      %v461 = vpop.f32.mrb[0].mxu0
      %v462 = vpop.f32.mrb[0].mxu0
      %v463 = vadd.f32 0.0, %v462
      %v464 = vpop.f32.mrb[0].mxu0
      %465 = vmatprep.mubr.bf16.mxu0 0
      %466 = vmatmul.mubr.bf16.gmra.mrb[0].mxu0 %v287
      %v467 = vpop.f32.mrb[0].mxu0
      %v468 = vadd.f32 0.0, %v467
      %v469 = vpop.f32.mrb[0].mxu0
      %v470 = vpop.f32.mrb[0].mxu0
      %v471 = vadd.f32 0.0, %v470
      %v472 = vpop.f32.mrb[0].mxu0
      %473 = vmatprep.mubr.bf16.mxu0 0
      %474 = vmatmul.mubr.bf16.gmra.mrb[0].mxu0 %v288
      %v475 = vpop.f32.mrb[0].mxu0
      %v476 = vadd.f32 0.0, %v475
      %v477 = vpop.f32.mrb[0].mxu0
      %v478 = vpop.f32.mrb[0].mxu0
      %v479 = vadd.f32 0.0, %v478
      %v480 = vpop.f32.mrb[0].mxu0
      %481 = vmatprep.mubr.bf16.mxu0 0
      %482 = vmatmul.mubr.bf16.gmra.mrb[0].mxu0 %v289
      %v483 = vpop.f32.mrb[0].mxu0
      %v484 = vadd.f32 0.0, %v483
      %v485 = vpop.f32.mrb[0].mxu0
      %v486 = vpop.f32.mrb[0].mxu0
      %v487 = vadd.f32 0.0, %v486
      %v488 = vpop.f32.mrb[0].mxu0
      %489 = vmatprep.mubr.bf16.mxu0 0
      %490 = vmatmul.mubr.bf16.gmra.mrb[0].mxu0 %v290
      %v491 = vpop.f32.mrb[0].mxu0
      %v492 = vadd.f32 0.0, %v491
      %v493 = vpop.f32.mrb[0].mxu0
      %v494 = vpop.f32.mrb[0].mxu0
      %v495 = vadd.f32 0.0, %v494
      %v496 = vpop.f32.mrb[0].mxu0
      %497 = vmatprep.mubr.bf16.mxu0 0
      %498 = vmatmul.mubr.bf16.gmra.mrb[0].mxu0 %v291
      %v499 = vpop.f32.mrb[0].mxu0
      %v500 = vadd.f32 0.0, %v499
      %v501 = vpop.f32.mrb[0].mxu0
      %v502 = vpop.f32.mrb[0].mxu0
      %v503 = vadd.f32 0.0, %v502
      %v504 = vpop.f32.mrb[0].mxu0
      %505 = vmatprep.mubr.bf16.mxu0 0
      %506 = vmatmul.mubr.bf16.gmra.mrb[0].mxu0 %v292
      %v507 = vpop.f32.mrb[0].mxu0
      %v508 = vadd.f32 0.0, %v507
      %v509 = vpop.f32.mrb[0].mxu0
      %v510 = vpop.f32.mrb[0].mxu0
      %v511 = vadd.f32 0.0, %v510
      %v512 = vpop.f32.mrb[0].mxu0
      %513 = vmatprep.mubr.bf16.mxu0 0
      %514 = vmatmul.mubr.bf16.gmra.mrb[0].mxu0 %v293
      %v515 = vpop.f32.mrb[0].mxu0
      %v516 = vadd.f32 0.0, %v515
      %v517 = vpop.f32.mrb[0].mxu0
      %v518 = vpop.f32.mrb[0].mxu0
      %v519 = vadd.f32 0.0, %v518
      %v520 = vpop.f32.mrb[0].mxu0
      %521 = vmatprep.mubr.bf16.mxu0 0
      %522 = vmatmul.mubr.bf16.gmra.mrb[0].mxu0 %v294
      %v523 = vpop.f32.mrb[0].mxu0
      %v524 = vadd.f32 0.0, %v523
      %v525 = vpop.f32.mrb[0].mxu0
      %v526 = vpop.f32.mrb[0].mxu0
      %v527 = vadd.f32 0.0, %v526
      %v528 = vpop.f32.mrb[0].mxu0
      %529 = vmatprep.mubr.bf16.mxu0 0
      %530 = vmatmul.mubr.bf16.gmra.mrb[0].mxu0 %v295
      %v531 = vpop.f32.mrb[0].mxu0
      %v532 = vadd.f32 0.0, %v531
      %v533 = vpop.f32.mrb[0].mxu0
      %v534 = vpop.f32.mrb[0].mxu0
      %v535 = vadd.f32 0.0, %v534
      %v536 = vpop.f32.mrb[0].mxu0
      %537 = vdwg.mxu0
      %v554 = vunpack.c.l.b16 %v226
      %v555 = vunpack.c.l.b16 %v227
      %v556 = vunpack.c.l.b16 %v228
      %v557 = vunpack.c.l.b16 %v229
      %v558 = vunpack.c.l.b16 %v230
      %v559 = vunpack.c.l.b16 %v231
      %v560 = vunpack.c.l.b16 %v232
      %v561 = vunpack.c.l.b16 %v233
      %v562 = vunpack.c.l.b16 %v234
      %v563 = vunpack.c.l.b16 %v235
      %v564 = vunpack.c.l.b16 %v236
      %v565 = vunpack.c.l.b16 %v237
      %v566 = vunpack.c.l.b16 %v238
      %v567 = vunpack.c.l.b16 %v239
      %v568 = vunpack.c.l.b16 %v240
      %v569 = vunpack.c.l.b16 %v241
      %v570 = vpack.c.b16 %v555, %v554
      %v571 = vpack.c.b16 %v557, %v556
      %v572 = vpack.c.b16 %v559, %v558
      %v573 = vpack.c.b16 %v561, %v560
      %v574 = vpack.c.b16 %v563, %v562
      %v575 = vpack.c.b16 %v565, %v564
      %v576 = vpack.c.b16 %v567, %v566
      %v577 = vpack.c.b16 %v569, %v568
      %586 = vmatprep.subr.bf16.mxu0 0
      %587 = vmatpush1.bf16.msra.mxu0 %v570
      %588 = vmatprep.subr.bf16.mxu0 0
      %589 = vmatpush1.bf16.msra.mxu0 %v571
      %590 = vmatprep.subr.bf16.mxu0 0
      %591 = vmatpush1.bf16.msra.mxu0 %v572
      %592 = vmatprep.subr.bf16.mxu0 0
      %593 = vmatpush1.bf16.msra.mxu0 %v573
      %594 = vmatprep.subr.bf16.mxu0 0
      %595 = vmatpush1.bf16.msra.mxu0 %v574
      %596 = vmatprep.subr.bf16.mxu0 0
      %597 = vmatpush1.bf16.msra.mxu0 %v575
      %598 = vmatprep.subr.bf16.mxu0 0
      %599 = vmatpush1.bf16.msra.mxu0 %v576
      %600 = vmatprep.subr.bf16.mxu0 0
      %601 = vmatpush1.bf16.msra.mxu0 %v577
      %602 = vmatprep.subr.bf16.mxu0 0
      %603 = vmatpush1.bf16.msra.mxu0 0
      %604 = vmatprep.subr.bf16.mxu0 0
      %605 = vmatpush1.bf16.msra.mxu0 0
      %606 = vmatprep.subr.bf16.mxu0 0
      %607 = vmatpush1.bf16.msra.mxu0 0
      %608 = vmatprep.subr.bf16.mxu0 0
      %609 = vmatpush1.bf16.msra.mxu0 0
      %610 = vmatprep.subr.bf16.mxu0 0
      %611 = vmatpush1.bf16.msra.mxu0 0
      %612 = vmatprep.subr.bf16.mxu0 0
      %613 = vmatpush1.bf16.msra.mxu0 0
      %614 = vmatprep.subr.bf16.mxu0 0
      %615 = vmatpush1.bf16.msra.mxu0 0
      %616 = vmatprep.subr.bf16.mxu0 0
      %617 = vmatpush1.bf16.msra.mxu0 0
      %618 = vmatprep.mubr.bf16.mxu0 0
      %619 = vmatmul.mubr.bf16.gmra.mrb[0].mxu0 %v208
      %v620 = vpop.f32.mrb[0].mxu0
      %v621 = vadd.f32 %v396, %v620
      %v622 = vpop.f32.mrb[0].mxu0
      %v623 = vpop.f32.mrb[0].mxu0
      %v624 = vadd.f32 %v399, %v623
      %v625 = vpop.f32.mrb[0].mxu0
      %626 = vmatprep.mubr.bf16.mxu0 0
      %627 = vmatmul.mubr.bf16.gmra.mrb[0].mxu0 %v209
      %v628 = vpop.f32.mrb[0].mxu0
      %v629 = vadd.f32 %v404, %v628
      %v630 = vpop.f32.mrb[0].mxu0
      %v631 = vpop.f32.mrb[0].mxu0
      %v632 = vadd.f32 %v407, %v631
      %v633 = vpop.f32.mrb[0].mxu0
      %634 = vmatprep.mubr.bf16.mxu0 0
      %635 = vmatmul.mubr.bf16.gmra.mrb[0].mxu0 %v210
      %v636 = vpop.f32.mrb[0].mxu0
      %v637 = vadd.f32 %v412, %v636
      %v638 = vpop.f32.mrb[0].mxu0
      %v639 = vpop.f32.mrb[0].mxu0
      %v640 = vadd.f32 %v415, %v639
      %v641 = vpop.f32.mrb[0].mxu0
      %642 = vmatprep.mubr.bf16.mxu0 0
      %643 = vmatmul.mubr.bf16.gmra.mrb[0].mxu0 %v211
      %v644 = vpop.f32.mrb[0].mxu0
      %v645 = vadd.f32 %v420, %v644
      %v646 = vpop.f32.mrb[0].mxu0
      %v647 = vpop.f32.mrb[0].mxu0
      %v648 = vadd.f32 %v423, %v647
      %v649 = vpop.f32.mrb[0].mxu0
      %650 = vmatprep.mubr.bf16.mxu0 0
      %651 = vmatmul.mubr.bf16.gmra.mrb[0].mxu0 %v212
      %v652 = vpop.f32.mrb[0].mxu0
      %v653 = vadd.f32 %v428, %v652
      %v654 = vpop.f32.mrb[0].mxu0
      %v655 = vpop.f32.mrb[0].mxu0
      %v656 = vadd.f32 %v431, %v655
      %v657 = vpop.f32.mrb[0].mxu0
      %658 = vmatprep.mubr.bf16.mxu0 0
      %659 = vmatmul.mubr.bf16.gmra.mrb[0].mxu0 %v213
      %v660 = vpop.f32.mrb[0].mxu0
      %v661 = vadd.f32 %v436, %v660
      %v662 = vpop.f32.mrb[0].mxu0
      %v663 = vpop.f32.mrb[0].mxu0
      %v664 = vadd.f32 %v439, %v663
      %v665 = vpop.f32.mrb[0].mxu0
      %666 = vmatprep.mubr.bf16.mxu0 0
      %667 = vmatmul.mubr.bf16.gmra.mrb[0].mxu0 %v214
      %v668 = vpop.f32.mrb[0].mxu0
      %v669 = vadd.f32 %v444, %v668
      %v670 = vpop.f32.mrb[0].mxu0
      %v671 = vpop.f32.mrb[0].mxu0
      %v672 = vadd.f32 %v447, %v671
      %v673 = vpop.f32.mrb[0].mxu0
      %674 = vmatprep.mubr.bf16.mxu0 0
      %675 = vmatmul.mubr.bf16.gmra.mrb[0].mxu0 %v215
      %v676 = vpop.f32.mrb[0].mxu0
      %v677 = vadd.f32 %v452, %v676
      %v678 = vpop.f32.mrb[0].mxu0
      %v679 = vpop.f32.mrb[0].mxu0
      %v680 = vadd.f32 %v455, %v679
      %v681 = vpop.f32.mrb[0].mxu0
      %682 = vmatprep.mubr.bf16.mxu0 0
      %683 = vmatmul.mubr.bf16.gmra.mrb[0].mxu0 %v216
      %v684 = vpop.f32.mrb[0].mxu0
      %v685 = vadd.f32 %v460, %v684
      %v686 = vpop.f32.mrb[0].mxu0
      %v687 = vpop.f32.mrb[0].mxu0
      %v688 = vadd.f32 %v463, %v687
      %v689 = vpop.f32.mrb[0].mxu0
      %690 = vmatprep.mubr.bf16.mxu0 0
      %691 = vmatmul.mubr.bf16.gmra.mrb[0].mxu0 %v217
      %v692 = vpop.f32.mrb[0].mxu0
      %v693 = vadd.f32 %v468, %v692
      %v694 = vpop.f32.mrb[0].mxu0
      %v695 = vpop.f32.mrb[0].mxu0
      %v696 = vadd.f32 %v471, %v695
      %v697 = vpop.f32.mrb[0].mxu0
      %698 = vmatprep.mubr.bf16.mxu0 0
      %699 = vmatmul.mubr.bf16.gmra.mrb[0].mxu0 %v218
      %v700 = vpop.f32.mrb[0].mxu0
      %v701 = vadd.f32 %v476, %v700
      %v702 = vpop.f32.mrb[0].mxu0
      %v703 = vpop.f32.mrb[0].mxu0
      %v704 = vadd.f32 %v479, %v703
      %v705 = vpop.f32.mrb[0].mxu0
      %706 = vmatprep.mubr.bf16.mxu0 0
      %707 = vmatmul.mubr.bf16.gmra.mrb[0].mxu0 %v219
      %v708 = vpop.f32.mrb[0].mxu0
      %v709 = vadd.f32 %v484, %v708
      %v710 = vpop.f32.mrb[0].mxu0
      %v711 = vpop.f32.mrb[0].mxu0
      %v712 = vadd.f32 %v487, %v711
      %v713 = vpop.f32.mrb[0].mxu0
      %714 = vmatprep.mubr.bf16.mxu0 0
      %715 = vmatmul.mubr.bf16.gmra.mrb[0].mxu0 %v220
      %v716 = vpop.f32.mrb[0].mxu0
      %v717 = vadd.f32 %v492, %v716
      %v718 = vpop.f32.mrb[0].mxu0
      %v719 = vpop.f32.mrb[0].mxu0
      %v720 = vadd.f32 %v495, %v719
      %v721 = vpop.f32.mrb[0].mxu0
      %722 = vmatprep.mubr.bf16.mxu0 0
      %723 = vmatmul.mubr.bf16.gmra.mrb[0].mxu0 %v221
      %v724 = vpop.f32.mrb[0].mxu0
      %v725 = vadd.f32 %v500, %v724
      %v726 = vpop.f32.mrb[0].mxu0
      %v727 = vpop.f32.mrb[0].mxu0
      %v728 = vadd.f32 %v503, %v727
      %v729 = vpop.f32.mrb[0].mxu0
      %730 = vmatprep.mubr.bf16.mxu0 0
      %731 = vmatmul.mubr.bf16.gmra.mrb[0].mxu0 %v222
      %v732 = vpop.f32.mrb[0].mxu0
      %v733 = vadd.f32 %v508, %v732
      %v734 = vpop.f32.mrb[0].mxu0
      %v735 = vpop.f32.mrb[0].mxu0
      %v736 = vadd.f32 %v511, %v735
      %v737 = vpop.f32.mrb[0].mxu0
      %738 = vmatprep.mubr.bf16.mxu0 0
      %739 = vmatmul.mubr.bf16.gmra.mrb[0].mxu0 %v223
      %v740 = vpop.f32.mrb[0].mxu0
      %v741 = vadd.f32 %v516, %v740
      %v742 = vpop.f32.mrb[0].mxu0
      %v743 = vpop.f32.mrb[0].mxu0
      %v744 = vadd.f32 %v519, %v743
      %v745 = vpop.f32.mrb[0].mxu0
      %746 = vmatprep.mubr.bf16.mxu0 0
      %747 = vmatmul.mubr.bf16.gmra.mrb[0].mxu0 %v224
      %v748 = vpop.f32.mrb[0].mxu0
      %v749 = vadd.f32 %v524, %v748
      %v750 = vpop.f32.mrb[0].mxu0
      %v751 = vpop.f32.mrb[0].mxu0
      %v752 = vadd.f32 %v527, %v751
      %v753 = vpop.f32.mrb[0].mxu0
      %754 = vmatprep.mubr.bf16.mxu0 0
      %755 = vmatmul.mubr.bf16.gmra.mrb[0].mxu0 %v225
      %v756 = vpop.f32.mrb[0].mxu0
      %v757 = vadd.f32 %v532, %v756
      %v758 = vpop.f32.mrb[0].mxu0
      %v759 = vpop.f32.mrb[0].mxu0
      %v760 = vadd.f32 %v535, %v759
      %v761 = vpop.f32.mrb[0].mxu0
      %762 = vdwg.mxu0
      %v763 = vld [vmem:[%s165 + $0x2] sm:$0xff]
      %v764 = vld [vmem:[%s165 + $0xa] sm:$0xff]
      %v765 = vld [vmem:[%s165 + $0x12] sm:$0xff]
      %v766 = vld [vmem:[%s165 + $0x1a] sm:$0xff]
      %v767 = vld [vmem:[%s165 + $0x22] sm:$0xff]
      %v768 = vld [vmem:[%s165 + $0x2a] sm:$0xff]
      %v769 = vld [vmem:[%s165 + $0x32] sm:$0xff]
      %v770 = vld [vmem:[%s165 + $0x3a] sm:$0xff]
      %v771 = vld [vmem:[%s165 + $0x42] sm:$0xff]
      %v772 = vld [vmem:[%s165 + $0x4a] sm:$0xff]
      %v773 = vld [vmem:[%s165 + $0x52] sm:$0xff]
      %v774 = vld [vmem:[%s165 + $0x5a] sm:$0xff]
      %v775 = vld [vmem:[%s165 + $0x62] sm:$0xff]
      %v776 = vld [vmem:[%s165 + $0x6a] sm:$0xff]
      %v777 = vld [vmem:[%s165 + $0x72] sm:$0xff]
      %v778 = vld [vmem:[%s165 + $0x7a] sm:$0xff]
      %v779 = vld [vmem:[%s165 + $0x82] sm:$0xff]
      %v780 = vld [vmem:[%s165 + $0x8a] sm:$0xff]
      %v781 = vld [vmem:[%s165 + $0x92] sm:$0xff]
      %v782 = vld [vmem:[%s165 + $0x9a] sm:$0xff]
      %v783 = vld [vmem:[%s165 + $0xa2] sm:$0xff]
      %v784 = vld [vmem:[%s165 + $0xaa] sm:$0xff]
      %v785 = vld [vmem:[%s165 + $0xb2] sm:$0xff]
      %v786 = vld [vmem:[%s165 + $0xba] sm:$0xff]
      %v787 = vld [vmem:[%s165 + $0xc2] sm:$0xff]
      %v788 = vld [vmem:[%s165 + $0xca] sm:$0xff]
      %v789 = vld [vmem:[%s165 + $0xd2] sm:$0xff]
      %v790 = vld [vmem:[%s165 + $0xda] sm:$0xff]
      %v791 = vld [vmem:[%s165 + $0xe2] sm:$0xff]
      %v792 = vld [vmem:[%s165 + $0xea] sm:$0xff]
      %v793 = vld [vmem:[%s165 + $0xf2] sm:$0xff]
      %v794 = vld [vmem:[%s165 + $0xfa] sm:$0xff]
      %v795 = vld [vmem:[%s165 + $0x102] sm:$0xff]
      %v796 = vld [vmem:[%s165 + $0x10a] sm:$0xff]
      %v797 = vld [vmem:[%s165 + $0x112] sm:$0xff]
      %v798 = vld [vmem:[%s165 + $0x11a] sm:$0xff]
      %v799 = vpack.c.bf16 %v764, %v763
      %v800 = vpack.c.bf16 %v766, %v765
      %v801 = vpack.c.bf16 %v768, %v767
      %v802 = vpack.c.bf16 %v770, %v769
      %v803 = vpack.c.bf16 %v772, %v771
      %v804 = vpack.c.bf16 %v774, %v773
      %v805 = vpack.c.bf16 %v776, %v775
      %v806 = vpack.c.bf16 %v778, %v777
      %v807 = vpack.c.bf16 %v780, %v779
      %v808 = vpack.c.bf16 %v782, %v781
      %v809 = vpack.c.bf16 %v784, %v783
      %v810 = vpack.c.bf16 %v786, %v785
      %v811 = vpack.c.bf16 %v788, %v787
      %v812 = vpack.c.bf16 %v790, %v789
      %v813 = vpack.c.bf16 %v792, %v791
      %v814 = vpack.c.bf16 %v794, %v793
      %v815 = vpack.c.bf16 %v796, %v795
      %v816 = vpack.c.bf16 %v798, %v797
      %s817 = scalar_lea.vmem %s1, 128
      %v818 = vld [vmem:[%s817] sm:$0xf]
      %v819 = vld [vmem:[%s817 + $0x4] sm:$0xf]
      %v820 = vld [vmem:[%s817 + $0x8] sm:$0xf]
      %v821 = vld [vmem:[%s817 + $0xc] sm:$0xf]
      %v822 = vld [vmem:[%s817 + $0x10] sm:$0xf]
      %v823 = vld [vmem:[%s817 + $0x14] sm:$0xf]
      %v824 = vld [vmem:[%s817 + $0x18] sm:$0xf]
      %v825 = vld [vmem:[%s817 + $0x1c] sm:$0xf]
      %v826 = vld [vmem:[%s817 + $0x20] sm:$0xf]
      %v827 = vld [vmem:[%s817 + $0x24] sm:$0xf]
      %v828 = vld [vmem:[%s817 + $0x28] sm:$0xf]
      %v829 = vld [vmem:[%s817 + $0x2c] sm:$0xf]
      %v830 = vld [vmem:[%s817 + $0x30] sm:$0xf]
      %v831 = vld [vmem:[%s817 + $0x34] sm:$0xf]
      %v832 = vld [vmem:[%s817 + $0x38] sm:$0xf]
      %v833 = vld [vmem:[%s817 + $0x3c] sm:$0xf]
      %v850 = vunpack.c.l.b16 %v818
      %v851 = vunpack.c.l.b16 %v819
      %v852 = vunpack.c.l.b16 %v820
      %v853 = vunpack.c.l.b16 %v821
      %v854 = vunpack.c.l.b16 %v822
      %v855 = vunpack.c.l.b16 %v823
      %v856 = vunpack.c.l.b16 %v824
      %v857 = vunpack.c.l.b16 %v825
      %v858 = vunpack.c.l.b16 %v826
      %v859 = vunpack.c.l.b16 %v827
      %v860 = vunpack.c.l.b16 %v828
      %v861 = vunpack.c.l.b16 %v829
      %v862 = vunpack.c.l.b16 %v830
      %v863 = vunpack.c.l.b16 %v831
      %v864 = vunpack.c.l.b16 %v832
      %v865 = vunpack.c.l.b16 %v833
      %v866 = vpack.c.b16 %v851, %v850
      %v867 = vpack.c.b16 %v853, %v852
      %v868 = vpack.c.b16 %v855, %v854
      %v869 = vpack.c.b16 %v857, %v856
      %v870 = vpack.c.b16 %v859, %v858
      %v871 = vpack.c.b16 %v861, %v860
      %v872 = vpack.c.b16 %v863, %v862
      %v873 = vpack.c.b16 %v865, %v864
      %882 = vmatprep.subr.bf16.mxu0 0
      %883 = vmatpush1.bf16.msra.mxu0 %v866
      %884 = vmatprep.subr.bf16.mxu0 0
      %885 = vmatpush1.bf16.msra.mxu0 %v867
      %886 = vmatprep.subr.bf16.mxu0 0
      %887 = vmatpush1.bf16.msra.mxu0 %v868
      %888 = vmatprep.subr.bf16.mxu0 0
      %889 = vmatpush1.bf16.msra.mxu0 %v869
      %890 = vmatprep.subr.bf16.mxu0 0
      %891 = vmatpush1.bf16.msra.mxu0 %v870
      %892 = vmatprep.subr.bf16.mxu0 0
      %893 = vmatpush1.bf16.msra.mxu0 %v871
      %894 = vmatprep.subr.bf16.mxu0 0
      %895 = vmatpush1.bf16.msra.mxu0 %v872
      %896 = vmatprep.subr.bf16.mxu0 0
      %897 = vmatpush1.bf16.msra.mxu0 %v873
      %898 = vmatprep.subr.bf16.mxu0 0
      %899 = vmatpush1.bf16.msra.mxu0 0
      %900 = vmatprep.subr.bf16.mxu0 0
      %901 = vmatpush1.bf16.msra.mxu0 0
      %902 = vmatprep.subr.bf16.mxu0 0
      %903 = vmatpush1.bf16.msra.mxu0 0
      %904 = vmatprep.subr.bf16.mxu0 0
      %905 = vmatpush1.bf16.msra.mxu0 0
      %906 = vmatprep.subr.bf16.mxu0 0
      %907 = vmatpush1.bf16.msra.mxu0 0
      %908 = vmatprep.subr.bf16.mxu0 0
      %909 = vmatpush1.bf16.msra.mxu0 0
      %910 = vmatprep.subr.bf16.mxu0 0
      %911 = vmatpush1.bf16.msra.mxu0 0
      %912 = vmatprep.subr.bf16.mxu0 0
      %913 = vmatpush1.bf16.msra.mxu0 0
      %914 = vmatprep.mubr.bf16.mxu0 0
      %915 = vmatmul.mubr.bf16.gmra.mrb[0].mxu0 %v799
      %v916 = vpop.f32.mrb[0].mxu0
      %v917 = vadd.f32 0.0, %v916
      %v918 = vpop.f32.mrb[0].mxu0
      %v919 = vpop.f32.mrb[0].mxu0
      %v920 = vadd.f32 0.0, %v919
      %v921 = vpop.f32.mrb[0].mxu0
      %922 = vmatprep.mubr.bf16.mxu0 0
      %923 = vmatmul.mubr.bf16.gmra.mrb[0].mxu0 %v800
      %v924 = vpop.f32.mrb[0].mxu0
      %v925 = vadd.f32 0.0, %v924
      %v926 = vpop.f32.mrb[0].mxu0
      %v927 = vpop.f32.mrb[0].mxu0
      %v928 = vadd.f32 0.0, %v927
      %v929 = vpop.f32.mrb[0].mxu0
      %930 = vmatprep.mubr.bf16.mxu0 0
      %931 = vmatmul.mubr.bf16.gmra.mrb[0].mxu0 %v801
      %v932 = vpop.f32.mrb[0].mxu0
      %v933 = vadd.f32 0.0, %v932
      %v934 = vpop.f32.mrb[0].mxu0
      %v935 = vpop.f32.mrb[0].mxu0
      %v936 = vadd.f32 0.0, %v935
      %v937 = vpop.f32.mrb[0].mxu0
      %938 = vmatprep.mubr.bf16.mxu0 0
      %939 = vmatmul.mubr.bf16.gmra.mrb[0].mxu0 %v802
      %v940 = vpop.f32.mrb[0].mxu0
      %v941 = vadd.f32 0.0, %v940
      %v942 = vpop.f32.mrb[0].mxu0
      %v943 = vpop.f32.mrb[0].mxu0
      %v944 = vadd.f32 0.0, %v943
      %v945 = vpop.f32.mrb[0].mxu0
      %946 = vmatprep.mubr.bf16.mxu0 0
      %947 = vmatmul.mubr.bf16.gmra.mrb[0].mxu0 %v803
      %v948 = vpop.f32.mrb[0].mxu0
      %v949 = vadd.f32 0.0, %v948
      %v950 = vpop.f32.mrb[0].mxu0
      %v951 = vpop.f32.mrb[0].mxu0
      %v952 = vadd.f32 0.0, %v951
      %v953 = vpop.f32.mrb[0].mxu0
      %954 = vmatprep.mubr.bf16.mxu0 0
      %955 = vmatmul.mubr.bf16.gmra.mrb[0].mxu0 %v804
      %v956 = vpop.f32.mrb[0].mxu0
      %v957 = vadd.f32 0.0, %v956
      %v958 = vpop.f32.mrb[0].mxu0
      %v959 = vpop.f32.mrb[0].mxu0
      %v960 = vadd.f32 0.0, %v959
      %v961 = vpop.f32.mrb[0].mxu0
      %962 = vmatprep.mubr.bf16.mxu0 0
      %963 = vmatmul.mubr.bf16.gmra.mrb[0].mxu0 %v805
      %v964 = vpop.f32.mrb[0].mxu0
      %v965 = vadd.f32 0.0, %v964
      %v966 = vpop.f32.mrb[0].mxu0
      %v967 = vpop.f32.mrb[0].mxu0
      %v968 = vadd.f32 0.0, %v967
      %v969 = vpop.f32.mrb[0].mxu0
      %970 = vmatprep.mubr.bf16.mxu0 0
      %971 = vmatmul.mubr.bf16.gmra.mrb[0].mxu0 %v806
      %v972 = vpop.f32.mrb[0].mxu0
      %v973 = vadd.f32 0.0, %v972
      %v974 = vpop.f32.mrb[0].mxu0
      %v975 = vpop.f32.mrb[0].mxu0
      %v976 = vadd.f32 0.0, %v975
      %v977 = vpop.f32.mrb[0].mxu0
      %978 = vmatprep.mubr.bf16.mxu0 0
      %979 = vmatmul.mubr.bf16.gmra.mrb[0].mxu0 %v807
      %v980 = vpop.f32.mrb[0].mxu0
      %v981 = vadd.f32 0.0, %v980
      %v982 = vpop.f32.mrb[0].mxu0
      %v983 = vpop.f32.mrb[0].mxu0
      %v984 = vadd.f32 0.0, %v983
      %v985 = vpop.f32.mrb[0].mxu0
      %986 = vmatprep.mubr.bf16.mxu0 0
      %987 = vmatmul.mubr.bf16.gmra.mrb[0].mxu0 %v808
      %v988 = vpop.f32.mrb[0].mxu0
      %v989 = vadd.f32 0.0, %v988
      %v990 = vpop.f32.mrb[0].mxu0
      %v991 = vpop.f32.mrb[0].mxu0
      %v992 = vadd.f32 0.0, %v991
      %v993 = vpop.f32.mrb[0].mxu0
      %994 = vmatprep.mubr.bf16.mxu0 0
      %995 = vmatmul.mubr.bf16.gmra.mrb[0].mxu0 %v809
      %v996 = vpop.f32.mrb[0].mxu0
      %v997 = vadd.f32 0.0, %v996
      %v998 = vpop.f32.mrb[0].mxu0
      %v999 = vpop.f32.mrb[0].mxu0
      %v1000 = vadd.f32 0.0, %v999
      %v1001 = vpop.f32.mrb[0].mxu0
      %1002 = vmatprep.mubr.bf16.mxu0 0
      %1003 = vmatmul.mubr.bf16.gmra.mrb[0].mxu0 %v810
      %v1004 = vpop.f32.mrb[0].mxu0
      %v1005 = vadd.f32 0.0, %v1004
      %v1006 = vpop.f32.mrb[0].mxu0
      %v1007 = vpop.f32.mrb[0].mxu0
      %v1008 = vadd.f32 0.0, %v1007
      %v1009 = vpop.f32.mrb[0].mxu0
      %1010 = vmatprep.mubr.bf16.mxu0 0
      %1011 = vmatmul.mubr.bf16.gmra.mrb[0].mxu0 %v811
      %v1012 = vpop.f32.mrb[0].mxu0
      %v1013 = vadd.f32 0.0, %v1012
      %v1014 = vpop.f32.mrb[0].mxu0
      %v1015 = vpop.f32.mrb[0].mxu0
      %v1016 = vadd.f32 0.0, %v1015
      %v1017 = vpop.f32.mrb[0].mxu0
      %1018 = vmatprep.mubr.bf16.mxu0 0
      %1019 = vmatmul.mubr.bf16.gmra.mrb[0].mxu0 %v812
      %v1020 = vpop.f32.mrb[0].mxu0
      %v1021 = vadd.f32 0.0, %v1020
      %v1022 = vpop.f32.mrb[0].mxu0
      %v1023 = vpop.f32.mrb[0].mxu0
      %v1024 = vadd.f32 0.0, %v1023
      %v1025 = vpop.f32.mrb[0].mxu0
      %1026 = vmatprep.mubr.bf16.mxu0 0
      %1027 = vmatmul.mubr.bf16.gmra.mrb[0].mxu0 %v813
      %v1028 = vpop.f32.mrb[0].mxu0
      %v1029 = vadd.f32 0.0, %v1028
      %v1030 = vpop.f32.mrb[0].mxu0
      %v1031 = vpop.f32.mrb[0].mxu0
      %v1032 = vadd.f32 0.0, %v1031
      %v1033 = vpop.f32.mrb[0].mxu0
      %1034 = vmatprep.mubr.bf16.mxu0 0
      %1035 = vmatmul.mubr.bf16.gmra.mrb[0].mxu0 %v814
      %v1036 = vpop.f32.mrb[0].mxu0
      %v1037 = vadd.f32 0.0, %v1036
      %v1038 = vpop.f32.mrb[0].mxu0
      %v1039 = vpop.f32.mrb[0].mxu0
      %v1040 = vadd.f32 0.0, %v1039
      %v1041 = vpop.f32.mrb[0].mxu0
      %1042 = vmatprep.mubr.bf16.mxu0 0
      %1043 = vmatmul.mubr.bf16.gmra.mrb[0].mxu0 %v815
      %v1044 = vpop.f32.mrb[0].mxu0
      %v1045 = vadd.f32 0.0, %v1044
      %v1046 = vpop.f32.mrb[0].mxu0
      %v1047 = vpop.f32.mrb[0].mxu0
      %v1048 = vadd.f32 0.0, %v1047
      %v1049 = vpop.f32.mrb[0].mxu0
      %1050 = vmatprep.mubr.bf16.mxu0 0
      %1051 = vmatmul.mubr.bf16.gmra.mrb[0].mxu0 %v816
      %v1052 = vpop.f32.mrb[0].mxu0
      %v1053 = vadd.f32 0.0, %v1052
      %v1054 = vpop.f32.mrb[0].mxu0
      %v1055 = vpop.f32.mrb[0].mxu0
      %v1056 = vadd.f32 0.0, %v1055
      %v1057 = vpop.f32.mrb[0].mxu0
      %1058 = vdwg.mxu0
      %v1059 = vadd.f32 %v621, %v917
      %v1060 = vadd.f32 %v624, %v920
      %v1061 = vadd.f32 %v629, %v925
      %v1062 = vadd.f32 %v632, %v928
      %v1063 = vadd.f32 %v637, %v933
      %v1064 = vadd.f32 %v640, %v936
      %v1065 = vadd.f32 %v645, %v941
      %v1066 = vadd.f32 %v648, %v944
      %v1067 = vadd.f32 %v653, %v949
      %v1068 = vadd.f32 %v656, %v952
      %v1069 = vadd.f32 %v661, %v957
      %v1070 = vadd.f32 %v664, %v960
      %v1071 = vadd.f32 %v669, %v965
      %v1072 = vadd.f32 %v672, %v968
      %v1073 = vadd.f32 %v677, %v973
      %v1074 = vadd.f32 %v680, %v976
      %v1075 = vadd.f32 %v685, %v981
      %v1076 = vadd.f32 %v688, %v984
      %v1077 = vadd.f32 %v693, %v989
      %v1078 = vadd.f32 %v696, %v992
      %v1079 = vadd.f32 %v701, %v997
      %v1080 = vadd.f32 %v704, %v1000
      %v1081 = vadd.f32 %v709, %v1005
      %v1082 = vadd.f32 %v712, %v1008
      %v1083 = vadd.f32 %v717, %v1013
      %v1084 = vadd.f32 %v720, %v1016
      %v1085 = vadd.f32 %v725, %v1021
      %v1086 = vadd.f32 %v728, %v1024
      %v1087 = vadd.f32 %v733, %v1029
      %v1088 = vadd.f32 %v736, %v1032
      %v1089 = vadd.f32 %v741, %v1037
      %v1090 = vadd.f32 %v744, %v1040
      %v1091 = vadd.f32 %v749, %v1045
      %v1092 = vadd.f32 %v752, %v1048
      %v1093 = vadd.f32 %v757, %v1053
      %v1094 = vadd.f32 %v760, %v1056
      %v1095 = vld [vmem:[%s165 + $0x12] sm:$0xff]
      %v1096 = vld [vmem:[%s165 + $0x1a] sm:$0xff]
      %v1097 = vld [vmem:[%s165 + $0x22] sm:$0xff]
      %v1098 = vld [vmem:[%s165 + $0x2a] sm:$0xff]
      %v1099 = vld [vmem:[%s165 + $0x32] sm:$0xff]
      %v1100 = vld [vmem:[%s165 + $0x3a] sm:$0xff]
      %v1101 = vld [vmem:[%s165 + $0x42] sm:$0xff]
      %v1102 = vld [vmem:[%s165 + $0x4a] sm:$0xff]
      %v1103 = vld [vmem:[%s165 + $0x52] sm:$0xff]
      %v1104 = vld [vmem:[%s165 + $0x5a] sm:$0xff]
      %v1105 = vld [vmem:[%s165 + $0x62] sm:$0xff]
      %v1106 = vld [vmem:[%s165 + $0x6a] sm:$0xff]
      %v1107 = vld [vmem:[%s165 + $0x72] sm:$0xff]
      %v1108 = vld [vmem:[%s165 + $0x7a] sm:$0xff]
      %v1109 = vld [vmem:[%s165 + $0x82] sm:$0xff]
      %v1110 = vld [vmem:[%s165 + $0x8a] sm:$0xff]
      %v1111 = vld [vmem:[%s165 + $0x92] sm:$0xff]
      %v1112 = vld [vmem:[%s165 + $0x9a] sm:$0xff]
      %v1113 = vld [vmem:[%s165 + $0xa2] sm:$0xff]
      %v1114 = vld [vmem:[%s165 + $0xaa] sm:$0xff]
      %v1115 = vld [vmem:[%s165 + $0xb2] sm:$0xff]
      %v1116 = vld [vmem:[%s165 + $0xba] sm:$0xff]
      %v1117 = vld [vmem:[%s165 + $0xc2] sm:$0xff]
      %v1118 = vld [vmem:[%s165 + $0xca] sm:$0xff]
      %v1119 = vld [vmem:[%s165 + $0xd2] sm:$0xff]
      %v1120 = vld [vmem:[%s165 + $0xda] sm:$0xff]
      %v1121 = vld [vmem:[%s165 + $0xe2] sm:$0xff]
      %v1122 = vld [vmem:[%s165 + $0xea] sm:$0xff]
      %v1123 = vld [vmem:[%s165 + $0xf2] sm:$0xff]
      %v1124 = vld [vmem:[%s165 + $0xfa] sm:$0xff]
      %v1125 = vld [vmem:[%s165 + $0x102] sm:$0xff]
      %v1126 = vld [vmem:[%s165 + $0x10a] sm:$0xff]
      %v1127 = vld [vmem:[%s165 + $0x112] sm:$0xff]
      %v1128 = vld [vmem:[%s165 + $0x11a] sm:$0xff]
      %v1129 = vld [vmem:[%s165 + $0x122] sm:$0xff]
      %v1130 = vld [vmem:[%s165 + $0x12a] sm:$0xff]
      %v1131 = vpack.c.bf16 %v1096, %v1095
      %v1132 = vpack.c.bf16 %v1098, %v1097
      %v1133 = vpack.c.bf16 %v1100, %v1099
      %v1134 = vpack.c.bf16 %v1102, %v1101
      %v1135 = vpack.c.bf16 %v1104, %v1103
      %v1136 = vpack.c.bf16 %v1106, %v1105
      %v1137 = vpack.c.bf16 %v1108, %v1107
      %v1138 = vpack.c.bf16 %v1110, %v1109
      %v1139 = vpack.c.bf16 %v1112, %v1111
      %v1140 = vpack.c.bf16 %v1114, %v1113
      %v1141 = vpack.c.bf16 %v1116, %v1115
      %v1142 = vpack.c.bf16 %v1118, %v1117
      %v1143 = vpack.c.bf16 %v1120, %v1119
      %v1144 = vpack.c.bf16 %v1122, %v1121
      %v1145 = vpack.c.bf16 %v1124, %v1123
      %v1146 = vpack.c.bf16 %v1126, %v1125
      %v1147 = vpack.c.bf16 %v1128, %v1127
      %v1148 = vpack.c.bf16 %v1130, %v1129
      %s1149 = scalar_lea.vmem %s1, 192
      %v1150 = vld [vmem:[%s1149] sm:$0xf]
      %v1151 = vld [vmem:[%s1149 + $0x4] sm:$0xf]
      %v1152 = vld [vmem:[%s1149 + $0x8] sm:$0xf]
      %v1153 = vld [vmem:[%s1149 + $0xc] sm:$0xf]
      %v1154 = vld [vmem:[%s1149 + $0x10] sm:$0xf]
      %v1155 = vld [vmem:[%s1149 + $0x14] sm:$0xf]
      %v1156 = vld [vmem:[%s1149 + $0x18] sm:$0xf]
      %v1157 = vld [vmem:[%s1149 + $0x1c] sm:$0xf]
      %v1158 = vld [vmem:[%s1149 + $0x20] sm:$0xf]
      %v1159 = vld [vmem:[%s1149 + $0x24] sm:$0xf]
      %v1160 = vld [vmem:[%s1149 + $0x28] sm:$0xf]
      %v1161 = vld [vmem:[%s1149 + $0x2c] sm:$0xf]
      %v1162 = vld [vmem:[%s1149 + $0x30] sm:$0xf]
      %v1163 = vld [vmem:[%s1149 + $0x34] sm:$0xf]
      %v1164 = vld [vmem:[%s1149 + $0x38] sm:$0xf]
      %v1165 = vld [vmem:[%s1149 + $0x3c] sm:$0xf]
      %v1182 = vunpack.c.l.b16 %v1150
      %v1183 = vunpack.c.l.b16 %v1151
      %v1184 = vunpack.c.l.b16 %v1152
      %v1185 = vunpack.c.l.b16 %v1153
      %v1186 = vunpack.c.l.b16 %v1154
      %v1187 = vunpack.c.l.b16 %v1155
      %v1188 = vunpack.c.l.b16 %v1156
      %v1189 = vunpack.c.l.b16 %v1157
      %v1190 = vunpack.c.l.b16 %v1158
      %v1191 = vunpack.c.l.b16 %v1159
      %v1192 = vunpack.c.l.b16 %v1160
      %v1193 = vunpack.c.l.b16 %v1161
      %v1194 = vunpack.c.l.b16 %v1162
      %v1195 = vunpack.c.l.b16 %v1163
      %v1196 = vunpack.c.l.b16 %v1164
      %v1197 = vunpack.c.l.b16 %v1165
      %v1198 = vpack.c.b16 %v1183, %v1182
      %v1199 = vpack.c.b16 %v1185, %v1184
      %v1200 = vpack.c.b16 %v1187, %v1186
      %v1201 = vpack.c.b16 %v1189, %v1188
      %v1202 = vpack.c.b16 %v1191, %v1190
      %v1203 = vpack.c.b16 %v1193, %v1192
      %v1204 = vpack.c.b16 %v1195, %v1194
      %v1205 = vpack.c.b16 %v1197, %v1196
      %1214 = vmatprep.subr.bf16.mxu0 0
      %1215 = vmatpush1.bf16.msra.mxu0 %v1198
      %1216 = vmatprep.subr.bf16.mxu0 0
      %1217 = vmatpush1.bf16.msra.mxu0 %v1199
      %1218 = vmatprep.subr.bf16.mxu0 0
      %1219 = vmatpush1.bf16.msra.mxu0 %v1200
      %1220 = vmatprep.subr.bf16.mxu0 0
      %1221 = vmatpush1.bf16.msra.mxu0 %v1201
      %1222 = vmatprep.subr.bf16.mxu0 0
      %1223 = vmatpush1.bf16.msra.mxu0 %v1202
      %1224 = vmatprep.subr.bf16.mxu0 0
      %1225 = vmatpush1.bf16.msra.mxu0 %v1203
      %1226 = vmatprep.subr.bf16.mxu0 0
      %1227 = vmatpush1.bf16.msra.mxu0 %v1204
      %1228 = vmatprep.subr.bf16.mxu0 0
      %1229 = vmatpush1.bf16.msra.mxu0 %v1205
      %1230 = vmatprep.subr.bf16.mxu0 0
      %1231 = vmatpush1.bf16.msra.mxu0 0
      %1232 = vmatprep.subr.bf16.mxu0 0
      %1233 = vmatpush1.bf16.msra.mxu0 0
      %1234 = vmatprep.subr.bf16.mxu0 0
      %1235 = vmatpush1.bf16.msra.mxu0 0
      %1236 = vmatprep.subr.bf16.mxu0 0
      %1237 = vmatpush1.bf16.msra.mxu0 0
      %1238 = vmatprep.subr.bf16.mxu0 0
      %1239 = vmatpush1.bf16.msra.mxu0 0
      %1240 = vmatprep.subr.bf16.mxu0 0
      %1241 = vmatpush1.bf16.msra.mxu0 0
      %1242 = vmatprep.subr.bf16.mxu0 0
      %1243 = vmatpush1.bf16.msra.mxu0 0
      %1244 = vmatprep.subr.bf16.mxu0 0
      %1245 = vmatpush1.bf16.msra.mxu0 0
      %1246 = vmatprep.mubr.bf16.mxu0 0
      %1247 = vmatmul.mubr.bf16.gmra.mrb[0].mxu0 %v1131
      %v1248 = vpop.f32.mrb[0].mxu0
      %v1249 = vadd.f32 0.0, %v1248
      %v1250 = vpop.f32.mrb[0].mxu0
      %v1251 = vpop.f32.mrb[0].mxu0
      %v1252 = vadd.f32 0.0, %v1251
      %v1253 = vpop.f32.mrb[0].mxu0
      %1254 = vmatprep.mubr.bf16.mxu0 0
      %1255 = vmatmul.mubr.bf16.gmra.mrb[0].mxu0 %v1132
      %v1256 = vpop.f32.mrb[0].mxu0
      %v1257 = vadd.f32 0.0, %v1256
      %v1258 = vpop.f32.mrb[0].mxu0
      %v1259 = vpop.f32.mrb[0].mxu0
      %v1260 = vadd.f32 0.0, %v1259
      %v1261 = vpop.f32.mrb[0].mxu0
      %1262 = vmatprep.mubr.bf16.mxu0 0
      %1263 = vmatmul.mubr.bf16.gmra.mrb[0].mxu0 %v1133
      %v1264 = vpop.f32.mrb[0].mxu0
      %v1265 = vadd.f32 0.0, %v1264
      %v1266 = vpop.f32.mrb[0].mxu0
      %v1267 = vpop.f32.mrb[0].mxu0
      %v1268 = vadd.f32 0.0, %v1267
      %v1269 = vpop.f32.mrb[0].mxu0
      %1270 = vmatprep.mubr.bf16.mxu0 0
      %1271 = vmatmul.mubr.bf16.gmra.mrb[0].mxu0 %v1134
      %v1272 = vpop.f32.mrb[0].mxu0
      %v1273 = vadd.f32 0.0, %v1272
      %v1274 = vpop.f32.mrb[0].mxu0
      %v1275 = vpop.f32.mrb[0].mxu0
      %v1276 = vadd.f32 0.0, %v1275
      %v1277 = vpop.f32.mrb[0].mxu0
      %1278 = vmatprep.mubr.bf16.mxu0 0
      %1279 = vmatmul.mubr.bf16.gmra.mrb[0].mxu0 %v1135
      %v1280 = vpop.f32.mrb[0].mxu0
      %v1281 = vadd.f32 0.0, %v1280
      %v1282 = vpop.f32.mrb[0].mxu0
      %v1283 = vpop.f32.mrb[0].mxu0
      %v1284 = vadd.f32 0.0, %v1283
      %v1285 = vpop.f32.mrb[0].mxu0
      %1286 = vmatprep.mubr.bf16.mxu0 0
      %1287 = vmatmul.mubr.bf16.gmra.mrb[0].mxu0 %v1136
      %v1288 = vpop.f32.mrb[0].mxu0
      %v1289 = vadd.f32 0.0, %v1288
      %v1290 = vpop.f32.mrb[0].mxu0
      %v1291 = vpop.f32.mrb[0].mxu0
      %v1292 = vadd.f32 0.0, %v1291
      %v1293 = vpop.f32.mrb[0].mxu0
      %1294 = vmatprep.mubr.bf16.mxu0 0
      %1295 = vmatmul.mubr.bf16.gmra.mrb[0].mxu0 %v1137
      %v1296 = vpop.f32.mrb[0].mxu0
      %v1297 = vadd.f32 0.0, %v1296
      %v1298 = vpop.f32.mrb[0].mxu0
      %v1299 = vpop.f32.mrb[0].mxu0
      %v1300 = vadd.f32 0.0, %v1299
      %v1301 = vpop.f32.mrb[0].mxu0
      %1302 = vmatprep.mubr.bf16.mxu0 0
      %1303 = vmatmul.mubr.bf16.gmra.mrb[0].mxu0 %v1138
      %v1304 = vpop.f32.mrb[0].mxu0
      %v1305 = vadd.f32 0.0, %v1304
      %v1306 = vpop.f32.mrb[0].mxu0
      %v1307 = vpop.f32.mrb[0].mxu0
      %v1308 = vadd.f32 0.0, %v1307
      %v1309 = vpop.f32.mrb[0].mxu0
      %1310 = vmatprep.mubr.bf16.mxu0 0
      %1311 = vmatmul.mubr.bf16.gmra.mrb[0].mxu0 %v1139
      %v1312 = vpop.f32.mrb[0].mxu0
      %v1313 = vadd.f32 0.0, %v1312
      %v1314 = vpop.f32.mrb[0].mxu0
      %v1315 = vpop.f32.mrb[0].mxu0
      %v1316 = vadd.f32 0.0, %v1315
      %v1317 = vpop.f32.mrb[0].mxu0
      %1318 = vmatprep.mubr.bf16.mxu0 0
      %1319 = vmatmul.mubr.bf16.gmra.mrb[0].mxu0 %v1140
      %v1320 = vpop.f32.mrb[0].mxu0
      %v1321 = vadd.f32 0.0, %v1320
      %v1322 = vpop.f32.mrb[0].mxu0
      %v1323 = vpop.f32.mrb[0].mxu0
      %v1324 = vadd.f32 0.0, %v1323
      %v1325 = vpop.f32.mrb[0].mxu0
      %1326 = vmatprep.mubr.bf16.mxu0 0
      %1327 = vmatmul.mubr.bf16.gmra.mrb[0].mxu0 %v1141
      %v1328 = vpop.f32.mrb[0].mxu0
      %v1329 = vadd.f32 0.0, %v1328
      %v1330 = vpop.f32.mrb[0].mxu0
      %v1331 = vpop.f32.mrb[0].mxu0
      %v1332 = vadd.f32 0.0, %v1331
      %v1333 = vpop.f32.mrb[0].mxu0
      %1334 = vmatprep.mubr.bf16.mxu0 0
      %1335 = vmatmul.mubr.bf16.gmra.mrb[0].mxu0 %v1142
      %v1336 = vpop.f32.mrb[0].mxu0
      %v1337 = vadd.f32 0.0, %v1336
      %v1338 = vpop.f32.mrb[0].mxu0
      %v1339 = vpop.f32.mrb[0].mxu0
      %v1340 = vadd.f32 0.0, %v1339
      %v1341 = vpop.f32.mrb[0].mxu0
      %1342 = vmatprep.mubr.bf16.mxu0 0
      %1343 = vmatmul.mubr.bf16.gmra.mrb[0].mxu0 %v1143
      %v1344 = vpop.f32.mrb[0].mxu0
      %v1345 = vadd.f32 0.0, %v1344
      %v1346 = vpop.f32.mrb[0].mxu0
      %v1347 = vpop.f32.mrb[0].mxu0
      %v1348 = vadd.f32 0.0, %v1347
      %v1349 = vpop.f32.mrb[0].mxu0
      %1350 = vmatprep.mubr.bf16.mxu0 0
      %1351 = vmatmul.mubr.bf16.gmra.mrb[0].mxu0 %v1144
      %v1352 = vpop.f32.mrb[0].mxu0
      %v1353 = vadd.f32 0.0, %v1352
      %v1354 = vpop.f32.mrb[0].mxu0
      %v1355 = vpop.f32.mrb[0].mxu0
      %v1356 = vadd.f32 0.0, %v1355
      %v1357 = vpop.f32.mrb[0].mxu0
      %1358 = vmatprep.mubr.bf16.mxu0 0
      %1359 = vmatmul.mubr.bf16.gmra.mrb[0].mxu0 %v1145
      %v1360 = vpop.f32.mrb[0].mxu0
      %v1361 = vadd.f32 0.0, %v1360
      %v1362 = vpop.f32.mrb[0].mxu0
      %v1363 = vpop.f32.mrb[0].mxu0
      %v1364 = vadd.f32 0.0, %v1363
      %v1365 = vpop.f32.mrb[0].mxu0
      %1366 = vmatprep.mubr.bf16.mxu0 0
      %1367 = vmatmul.mubr.bf16.gmra.mrb[0].mxu0 %v1146
      %v1368 = vpop.f32.mrb[0].mxu0
      %v1369 = vadd.f32 0.0, %v1368
      %v1370 = vpop.f32.mrb[0].mxu0
      %v1371 = vpop.f32.mrb[0].mxu0
      %v1372 = vadd.f32 0.0, %v1371
      %v1373 = vpop.f32.mrb[0].mxu0
      %1374 = vmatprep.mubr.bf16.mxu0 0
      %1375 = vmatmul.mubr.bf16.gmra.mrb[0].mxu0 %v1147
      %v1376 = vpop.f32.mrb[0].mxu0
      %v1377 = vadd.f32 0.0, %v1376
      %v1378 = vpop.f32.mrb[0].mxu0
      %v1379 = vpop.f32.mrb[0].mxu0
      %v1380 = vadd.f32 0.0, %v1379
      %v1381 = vpop.f32.mrb[0].mxu0
      %1382 = vmatprep.mubr.bf16.mxu0 0
      %1383 = vmatmul.mubr.bf16.gmra.mrb[0].mxu0 %v1148
      %v1384 = vpop.f32.mrb[0].mxu0
      %v1385 = vadd.f32 0.0, %v1384
      %v1386 = vpop.f32.mrb[0].mxu0
      %v1387 = vpop.f32.mrb[0].mxu0
      %v1388 = vadd.f32 0.0, %v1387
      %v1389 = vpop.f32.mrb[0].mxu0
      %1390 = vdwg.mxu0
      %v1391 = vadd.f32 %v1059, %v1249
      %v1392 = vadd.f32 %v1060, %v1252
      %v1393 = vadd.f32 %v1061, %v1257
      %v1394 = vadd.f32 %v1062, %v1260
      %v1395 = vadd.f32 %v1063, %v1265
      %v1396 = vadd.f32 %v1064, %v1268
      %v1397 = vadd.f32 %v1065, %v1273
      %v1398 = vadd.f32 %v1066, %v1276
      %v1399 = vadd.f32 %v1067, %v1281
      %v1400 = vadd.f32 %v1068, %v1284
      %v1401 = vadd.f32 %v1069, %v1289
      %v1402 = vadd.f32 %v1070, %v1292
      %v1403 = vadd.f32 %v1071, %v1297
      %v1404 = vadd.f32 %v1072, %v1300
      %v1405 = vadd.f32 %v1073, %v1305
      %v1406 = vadd.f32 %v1074, %v1308
      %v1407 = vadd.f32 %v1075, %v1313
      %v1408 = vadd.f32 %v1076, %v1316
      %v1409 = vadd.f32 %v1077, %v1321
      %v1410 = vadd.f32 %v1078, %v1324
      %v1411 = vadd.f32 %v1079, %v1329
      %v1412 = vadd.f32 %v1080, %v1332
      %v1413 = vadd.f32 %v1081, %v1337
      %v1414 = vadd.f32 %v1082, %v1340
      %v1415 = vadd.f32 %v1083, %v1345
      %v1416 = vadd.f32 %v1084, %v1348
      %v1417 = vadd.f32 %v1085, %v1353
      %v1418 = vadd.f32 %v1086, %v1356
      %v1419 = vadd.f32 %v1087, %v1361
      %v1420 = vadd.f32 %v1088, %v1364
      %v1421 = vadd.f32 %v1089, %v1369
      %v1422 = vadd.f32 %v1090, %v1372
      %v1423 = vadd.f32 %v1091, %v1377
      %v1424 = vadd.f32 %v1092, %v1380
      %v1425 = vadd.f32 %v1093, %v1385
      %v1426 = vadd.f32 %v1094, %v1388
      %v1427 = vld [vmem:[%s165 + $0x13] sm:$0xff]
      %v1428 = vld [vmem:[%s165 + $0x1b] sm:$0xff]
      %v1429 = vld [vmem:[%s165 + $0x23] sm:$0xff]
      %v1430 = vld [vmem:[%s165 + $0x2b] sm:$0xff]
      %v1431 = vld [vmem:[%s165 + $0x33] sm:$0xff]
      %v1432 = vld [vmem:[%s165 + $0x3b] sm:$0xff]
      %v1433 = vld [vmem:[%s165 + $0x43] sm:$0xff]
      %v1434 = vld [vmem:[%s165 + $0x4b] sm:$0xff]
      %v1435 = vld [vmem:[%s165 + $0x53] sm:$0xff]
      %v1436 = vld [vmem:[%s165 + $0x5b] sm:$0xff]
      %v1437 = vld [vmem:[%s165 + $0x63] sm:$0xff]
      %v1438 = vld [vmem:[%s165 + $0x6b] sm:$0xff]
      %v1439 = vld [vmem:[%s165 + $0x73] sm:$0xff]
      %v1440 = vld [vmem:[%s165 + $0x7b] sm:$0xff]
      %v1441 = vld [vmem:[%s165 + $0x83] sm:$0xff]
      %v1442 = vld [vmem:[%s165 + $0x8b] sm:$0xff]
      %v1443 = vld [vmem:[%s165 + $0x93] sm:$0xff]
      %v1444 = vld [vmem:[%s165 + $0x9b] sm:$0xff]
      %v1445 = vld [vmem:[%s165 + $0xa3] sm:$0xff]
      %v1446 = vld [vmem:[%s165 + $0xab] sm:$0xff]
      %v1447 = vld [vmem:[%s165 + $0xb3] sm:$0xff]
      %v1448 = vld [vmem:[%s165 + $0xbb] sm:$0xff]
      %v1449 = vld [vmem:[%s165 + $0xc3] sm:$0xff]
      %v1450 = vld [vmem:[%s165 + $0xcb] sm:$0xff]
      %v1451 = vld [vmem:[%s165 + $0xd3] sm:$0xff]
      %v1452 = vld [vmem:[%s165 + $0xdb] sm:$0xff]
      %v1453 = vld [vmem:[%s165 + $0xe3] sm:$0xff]
      %v1454 = vld [vmem:[%s165 + $0xeb] sm:$0xff]
      %v1455 = vld [vmem:[%s165 + $0xf3] sm:$0xff]
      %v1456 = vld [vmem:[%s165 + $0xfb] sm:$0xff]
      %v1457 = vld [vmem:[%s165 + $0x103] sm:$0xff]
      %v1458 = vld [vmem:[%s165 + $0x10b] sm:$0xff]
      %v1459 = vld [vmem:[%s165 + $0x113] sm:$0xff]
      %v1460 = vld [vmem:[%s165 + $0x11b] sm:$0xff]
      %v1461 = vld [vmem:[%s165 + $0x123] sm:$0xff]
      %v1462 = vld [vmem:[%s165 + $0x12b] sm:$0xff]
      %v1463 = vpack.c.bf16 %v1428, %v1427
      %v1464 = vpack.c.bf16 %v1430, %v1429
      %v1465 = vpack.c.bf16 %v1432, %v1431
      %v1466 = vpack.c.bf16 %v1434, %v1433
      %v1467 = vpack.c.bf16 %v1436, %v1435
      %v1468 = vpack.c.bf16 %v1438, %v1437
      %v1469 = vpack.c.bf16 %v1440, %v1439
      %v1470 = vpack.c.bf16 %v1442, %v1441
      %v1471 = vpack.c.bf16 %v1444, %v1443
      %v1472 = vpack.c.bf16 %v1446, %v1445
      %v1473 = vpack.c.bf16 %v1448, %v1447
      %v1474 = vpack.c.bf16 %v1450, %v1449
      %v1475 = vpack.c.bf16 %v1452, %v1451
      %v1476 = vpack.c.bf16 %v1454, %v1453
      %v1477 = vpack.c.bf16 %v1456, %v1455
      %v1478 = vpack.c.bf16 %v1458, %v1457
      %v1479 = vpack.c.bf16 %v1460, %v1459
      %v1480 = vpack.c.bf16 %v1462, %v1461
      %s1481 = scalar_lea.vmem %s1, 256
      %v1482 = vld [vmem:[%s1481] sm:$0xf]
      %v1483 = vld [vmem:[%s1481 + $0x4] sm:$0xf]
      %v1484 = vld [vmem:[%s1481 + $0x8] sm:$0xf]
      %v1485 = vld [vmem:[%s1481 + $0xc] sm:$0xf]
      %v1486 = vld [vmem:[%s1481 + $0x10] sm:$0xf]
      %v1487 = vld [vmem:[%s1481 + $0x14] sm:$0xf]
      %v1488 = vld [vmem:[%s1481 + $0x18] sm:$0xf]
      %v1489 = vld [vmem:[%s1481 + $0x1c] sm:$0xf]
      %v1490 = vld [vmem:[%s1481 + $0x20] sm:$0xf]
      %v1491 = vld [vmem:[%s1481 + $0x24] sm:$0xf]
      %v1492 = vld [vmem:[%s1481 + $0x28] sm:$0xf]
      %v1493 = vld [vmem:[%s1481 + $0x2c] sm:$0xf]
      %v1494 = vld [vmem:[%s1481 + $0x30] sm:$0xf]
      %v1495 = vld [vmem:[%s1481 + $0x34] sm:$0xf]
      %v1496 = vld [vmem:[%s1481 + $0x38] sm:$0xf]
      %v1497 = vld [vmem:[%s1481 + $0x3c] sm:$0xf]
      %v1514 = vunpack.c.l.b16 %v1482
      %v1515 = vunpack.c.l.b16 %v1483
      %v1516 = vunpack.c.l.b16 %v1484
      %v1517 = vunpack.c.l.b16 %v1485
      %v1518 = vunpack.c.l.b16 %v1486
      %v1519 = vunpack.c.l.b16 %v1487
      %v1520 = vunpack.c.l.b16 %v1488
      %v1521 = vunpack.c.l.b16 %v1489
      %v1522 = vunpack.c.l.b16 %v1490
      %v1523 = vunpack.c.l.b16 %v1491
      %v1524 = vunpack.c.l.b16 %v1492
      %v1525 = vunpack.c.l.b16 %v1493
      %v1526 = vunpack.c.l.b16 %v1494
      %v1527 = vunpack.c.l.b16 %v1495
      %v1528 = vunpack.c.l.b16 %v1496
      %v1529 = vunpack.c.l.b16 %v1497
      %v1530 = vpack.c.b16 %v1515, %v1514
      %v1531 = vpack.c.b16 %v1517, %v1516
      %v1532 = vpack.c.b16 %v1519, %v1518
      %v1533 = vpack.c.b16 %v1521, %v1520
      %v1534 = vpack.c.b16 %v1523, %v1522
      %v1535 = vpack.c.b16 %v1525, %v1524
      %v1536 = vpack.c.b16 %v1527, %v1526
      %v1537 = vpack.c.b16 %v1529, %v1528
      %1546 = vmatprep.subr.bf16.mxu0 0
      %1547 = vmatpush1.bf16.msra.mxu0 %v1530
      %1548 = vmatprep.subr.bf16.mxu0 0
      %1549 = vmatpush1.bf16.msra.mxu0 %v1531
      %1550 = vmatprep.subr.bf16.mxu0 0
      %1551 = vmatpush1.bf16.msra.mxu0 %v1532
      %1552 = vmatprep.subr.bf16.mxu0 0
      %1553 = vmatpush1.bf16.msra.mxu0 %v1533
      %1554 = vmatprep.subr.bf16.mxu0 0
      %1555 = vmatpush1.bf16.msra.mxu0 %v1534
      %1556 = vmatprep.subr.bf16.mxu0 0
      %1557 = vmatpush1.bf16.msra.mxu0 %v1535
      %1558 = vmatprep.subr.bf16.mxu0 0
      %1559 = vmatpush1.bf16.msra.mxu0 %v1536
      %1560 = vmatprep.subr.bf16.mxu0 0
      %1561 = vmatpush1.bf16.msra.mxu0 %v1537
      %1562 = vmatprep.subr.bf16.mxu0 0
      %1563 = vmatpush1.bf16.msra.mxu0 0
      %1564 = vmatprep.subr.bf16.mxu0 0
      %1565 = vmatpush1.bf16.msra.mxu0 0
      %1566 = vmatprep.subr.bf16.mxu0 0
      %1567 = vmatpush1.bf16.msra.mxu0 0
      %1568 = vmatprep.subr.bf16.mxu0 0
      %1569 = vmatpush1.bf16.msra.mxu0 0
      %1570 = vmatprep.subr.bf16.mxu0 0
      %1571 = vmatpush1.bf16.msra.mxu0 0
      %1572 = vmatprep.subr.bf16.mxu0 0
      %1573 = vmatpush1.bf16.msra.mxu0 0
      %1574 = vmatprep.subr.bf16.mxu0 0
      %1575 = vmatpush1.bf16.msra.mxu0 0
      %1576 = vmatprep.subr.bf16.mxu0 0
      %1577 = vmatpush1.bf16.msra.mxu0 0
      %1578 = vmatprep.mubr.bf16.mxu0 0
      %1579 = vmatmul.mubr.bf16.gmra.mrb[0].mxu0 %v1463
      %v1580 = vpop.f32.mrb[0].mxu0
      %v1581 = vadd.f32 0.0, %v1580
      %v1582 = vpop.f32.mrb[0].mxu0
      %v1583 = vpop.f32.mrb[0].mxu0
      %v1584 = vadd.f32 0.0, %v1583
      %v1585 = vpop.f32.mrb[0].mxu0
      %1586 = vmatprep.mubr.bf16.mxu0 0
      %1587 = vmatmul.mubr.bf16.gmra.mrb[0].mxu0 %v1464
      %v1588 = vpop.f32.mrb[0].mxu0
      %v1589 = vadd.f32 0.0, %v1588
      %v1590 = vpop.f32.mrb[0].mxu0
      %v1591 = vpop.f32.mrb[0].mxu0
      %v1592 = vadd.f32 0.0, %v1591
      %v1593 = vpop.f32.mrb[0].mxu0
      %1594 = vmatprep.mubr.bf16.mxu0 0
      %1595 = vmatmul.mubr.bf16.gmra.mrb[0].mxu0 %v1465
      %v1596 = vpop.f32.mrb[0].mxu0
      %v1597 = vadd.f32 0.0, %v1596
      %v1598 = vpop.f32.mrb[0].mxu0
      %v1599 = vpop.f32.mrb[0].mxu0
      %v1600 = vadd.f32 0.0, %v1599
      %v1601 = vpop.f32.mrb[0].mxu0
      %1602 = vmatprep.mubr.bf16.mxu0 0
      %1603 = vmatmul.mubr.bf16.gmra.mrb[0].mxu0 %v1466
      %v1604 = vpop.f32.mrb[0].mxu0
      %v1605 = vadd.f32 0.0, %v1604
      %v1606 = vpop.f32.mrb[0].mxu0
      %v1607 = vpop.f32.mrb[0].mxu0
      %v1608 = vadd.f32 0.0, %v1607
      %v1609 = vpop.f32.mrb[0].mxu0
      %1610 = vmatprep.mubr.bf16.mxu0 0
      %1611 = vmatmul.mubr.bf16.gmra.mrb[0].mxu0 %v1467
      %v1612 = vpop.f32.mrb[0].mxu0
      %v1613 = vadd.f32 0.0, %v1612
      %v1614 = vpop.f32.mrb[0].mxu0
      %v1615 = vpop.f32.mrb[0].mxu0
      %v1616 = vadd.f32 0.0, %v1615
      %v1617 = vpop.f32.mrb[0].mxu0
      %1618 = vmatprep.mubr.bf16.mxu0 0
      %1619 = vmatmul.mubr.bf16.gmra.mrb[0].mxu0 %v1468
      %v1620 = vpop.f32.mrb[0].mxu0
      %v1621 = vadd.f32 0.0, %v1620
      %v1622 = vpop.f32.mrb[0].mxu0
      %v1623 = vpop.f32.mrb[0].mxu0
      %v1624 = vadd.f32 0.0, %v1623
      %v1625 = vpop.f32.mrb[0].mxu0
      %1626 = vmatprep.mubr.bf16.mxu0 0
      %1627 = vmatmul.mubr.bf16.gmra.mrb[0].mxu0 %v1469
      %v1628 = vpop.f32.mrb[0].mxu0
      %v1629 = vadd.f32 0.0, %v1628
      %v1630 = vpop.f32.mrb[0].mxu0
      %v1631 = vpop.f32.mrb[0].mxu0
      %v1632 = vadd.f32 0.0, %v1631
      %v1633 = vpop.f32.mrb[0].mxu0
      %1634 = vmatprep.mubr.bf16.mxu0 0
      %1635 = vmatmul.mubr.bf16.gmra.mrb[0].mxu0 %v1470
      %v1636 = vpop.f32.mrb[0].mxu0
      %v1637 = vadd.f32 0.0, %v1636
      %v1638 = vpop.f32.mrb[0].mxu0
      %v1639 = vpop.f32.mrb[0].mxu0
      %v1640 = vadd.f32 0.0, %v1639
      %v1641 = vpop.f32.mrb[0].mxu0
      %1642 = vmatprep.mubr.bf16.mxu0 0
      %1643 = vmatmul.mubr.bf16.gmra.mrb[0].mxu0 %v1471
      %v1644 = vpop.f32.mrb[0].mxu0
      %v1645 = vadd.f32 0.0, %v1644
      %v1646 = vpop.f32.mrb[0].mxu0
      %v1647 = vpop.f32.mrb[0].mxu0
      %v1648 = vadd.f32 0.0, %v1647
      %v1649 = vpop.f32.mrb[0].mxu0
      %1650 = vmatprep.mubr.bf16.mxu0 0
      %1651 = vmatmul.mubr.bf16.gmra.mrb[0].mxu0 %v1472
      %v1652 = vpop.f32.mrb[0].mxu0
      %v1653 = vadd.f32 0.0, %v1652
      %v1654 = vpop.f32.mrb[0].mxu0
      %v1655 = vpop.f32.mrb[0].mxu0
      %v1656 = vadd.f32 0.0, %v1655
      %v1657 = vpop.f32.mrb[0].mxu0
      %1658 = vmatprep.mubr.bf16.mxu0 0
      %1659 = vmatmul.mubr.bf16.gmra.mrb[0].mxu0 %v1473
      %v1660 = vpop.f32.mrb[0].mxu0
      %v1661 = vadd.f32 0.0, %v1660
      %v1662 = vpop.f32.mrb[0].mxu0
      %v1663 = vpop.f32.mrb[0].mxu0
      %v1664 = vadd.f32 0.0, %v1663
      %v1665 = vpop.f32.mrb[0].mxu0
      %1666 = vmatprep.mubr.bf16.mxu0 0
      %1667 = vmatmul.mubr.bf16.gmra.mrb[0].mxu0 %v1474
      %v1668 = vpop.f32.mrb[0].mxu0
      %v1669 = vadd.f32 0.0, %v1668
      %v1670 = vpop.f32.mrb[0].mxu0
      %v1671 = vpop.f32.mrb[0].mxu0
      %v1672 = vadd.f32 0.0, %v1671
      %v1673 = vpop.f32.mrb[0].mxu0
      %1674 = vmatprep.mubr.bf16.mxu0 0
      %1675 = vmatmul.mubr.bf16.gmra.mrb[0].mxu0 %v1475
      %v1676 = vpop.f32.mrb[0].mxu0
      %v1677 = vadd.f32 0.0, %v1676
      %v1678 = vpop.f32.mrb[0].mxu0
      %v1679 = vpop.f32.mrb[0].mxu0
      %v1680 = vadd.f32 0.0, %v1679
      %v1681 = vpop.f32.mrb[0].mxu0
      %1682 = vmatprep.mubr.bf16.mxu0 0
      %1683 = vmatmul.mubr.bf16.gmra.mrb[0].mxu0 %v1476
      %v1684 = vpop.f32.mrb[0].mxu0
      %v1685 = vadd.f32 0.0, %v1684
      %v1686 = vpop.f32.mrb[0].mxu0
      %v1687 = vpop.f32.mrb[0].mxu0
      %v1688 = vadd.f32 0.0, %v1687
      %v1689 = vpop.f32.mrb[0].mxu0
      %1690 = vmatprep.mubr.bf16.mxu0 0
      %1691 = vmatmul.mubr.bf16.gmra.mrb[0].mxu0 %v1477
      %v1692 = vpop.f32.mrb[0].mxu0
      %v1693 = vadd.f32 0.0, %v1692
      %v1694 = vpop.f32.mrb[0].mxu0
      %v1695 = vpop.f32.mrb[0].mxu0
      %v1696 = vadd.f32 0.0, %v1695
      %v1697 = vpop.f32.mrb[0].mxu0
      %1698 = vmatprep.mubr.bf16.mxu0 0
      %1699 = vmatmul.mubr.bf16.gmra.mrb[0].mxu0 %v1478
      %v1700 = vpop.f32.mrb[0].mxu0
      %v1701 = vadd.f32 0.0, %v1700
      %v1702 = vpop.f32.mrb[0].mxu0
      %v1703 = vpop.f32.mrb[0].mxu0
      %v1704 = vadd.f32 0.0, %v1703
      %v1705 = vpop.f32.mrb[0].mxu0
      %1706 = vmatprep.mubr.bf16.mxu0 0
      %1707 = vmatmul.mubr.bf16.gmra.mrb[0].mxu0 %v1479
      %v1708 = vpop.f32.mrb[0].mxu0
      %v1709 = vadd.f32 0.0, %v1708
      %v1710 = vpop.f32.mrb[0].mxu0
      %v1711 = vpop.f32.mrb[0].mxu0
      %v1712 = vadd.f32 0.0, %v1711
      %v1713 = vpop.f32.mrb[0].mxu0
      %1714 = vmatprep.mubr.bf16.mxu0 0
      %1715 = vmatmul.mubr.bf16.gmra.mrb[0].mxu0 %v1480
      %v1716 = vpop.f32.mrb[0].mxu0
      %v1717 = vadd.f32 0.0, %v1716
      %v1718 = vpop.f32.mrb[0].mxu0
      %v1719 = vpop.f32.mrb[0].mxu0
      %v1720 = vadd.f32 0.0, %v1719
      %v1721 = vpop.f32.mrb[0].mxu0
      %1722 = vdwg.mxu0
      %v1723 = vadd.f32 %v1391, %v1581
      %v1724 = vadd.f32 %v1392, %v1584
      %v1725 = vadd.f32 %v1393, %v1589
      %v1726 = vadd.f32 %v1394, %v1592
      %v1727 = vadd.f32 %v1395, %v1597
      %v1728 = vadd.f32 %v1396, %v1600
      %v1729 = vadd.f32 %v1397, %v1605
      %v1730 = vadd.f32 %v1398, %v1608
      %v1731 = vadd.f32 %v1399, %v1613
      %v1732 = vadd.f32 %v1400, %v1616
      %v1733 = vadd.f32 %v1401, %v1621
      %v1734 = vadd.f32 %v1402, %v1624
      %v1735 = vadd.f32 %v1403, %v1629
      %v1736 = vadd.f32 %v1404, %v1632
      %v1737 = vadd.f32 %v1405, %v1637
      %v1738 = vadd.f32 %v1406, %v1640
      %v1739 = vadd.f32 %v1407, %v1645
      %v1740 = vadd.f32 %v1408, %v1648
      %v1741 = vadd.f32 %v1409, %v1653
      %v1742 = vadd.f32 %v1410, %v1656
      %v1743 = vadd.f32 %v1411, %v1661
      %v1744 = vadd.f32 %v1412, %v1664
      %v1745 = vadd.f32 %v1413, %v1669
      %v1746 = vadd.f32 %v1414, %v1672
      %v1747 = vadd.f32 %v1415, %v1677
      %v1748 = vadd.f32 %v1416, %v1680
      %v1749 = vadd.f32 %v1417, %v1685
      %v1750 = vadd.f32 %v1418, %v1688
      %v1751 = vadd.f32 %v1419, %v1693
      %v1752 = vadd.f32 %v1420, %v1696
      %v1753 = vadd.f32 %v1421, %v1701
      %v1754 = vadd.f32 %v1422, %v1704
      %v1755 = vadd.f32 %v1423, %v1709
      %v1756 = vadd.f32 %v1424, %v1712
      %v1757 = vadd.f32 %v1425, %v1717
      %v1758 = vadd.f32 %v1426, %v1720
      %v1759 = vld [vmem:[%s165 + $0x14] sm:$0xff]
      %v1760 = vld [vmem:[%s165 + $0x1c] sm:$0xff]
      %v1761 = vld [vmem:[%s165 + $0x24] sm:$0xff]
      %v1762 = vld [vmem:[%s165 + $0x2c] sm:$0xff]
      %v1763 = vld [vmem:[%s165 + $0x34] sm:$0xff]
      %v1764 = vld [vmem:[%s165 + $0x3c] sm:$0xff]
      %v1765 = vld [vmem:[%s165 + $0x44] sm:$0xff]
      %v1766 = vld [vmem:[%s165 + $0x4c] sm:$0xff]
      %v1767 = vld [vmem:[%s165 + $0x54] sm:$0xff]
      %v1768 = vld [vmem:[%s165 + $0x5c] sm:$0xff]
      %v1769 = vld [vmem:[%s165 + $0x64] sm:$0xff]
      %v1770 = vld [vmem:[%s165 + $0x6c] sm:$0xff]
      %v1771 = vld [vmem:[%s165 + $0x74] sm:$0xff]
      %v1772 = vld [vmem:[%s165 + $0x7c] sm:$0xff]
      %v1773 = vld [vmem:[%s165 + $0x84] sm:$0xff]
      %v1774 = vld [vmem:[%s165 + $0x8c] sm:$0xff]
      %v1775 = vld [vmem:[%s165 + $0x94] sm:$0xff]
      %v1776 = vld [vmem:[%s165 + $0x9c] sm:$0xff]
      %v1777 = vld [vmem:[%s165 + $0xa4] sm:$0xff]
      %v1778 = vld [vmem:[%s165 + $0xac] sm:$0xff]
      %v1779 = vld [vmem:[%s165 + $0xb4] sm:$0xff]
      %v1780 = vld [vmem:[%s165 + $0xbc] sm:$0xff]
      %v1781 = vld [vmem:[%s165 + $0xc4] sm:$0xff]
      %v1782 = vld [vmem:[%s165 + $0xcc] sm:$0xff]
      %v1783 = vld [vmem:[%s165 + $0xd4] sm:$0xff]
      %v1784 = vld [vmem:[%s165 + $0xdc] sm:$0xff]
      %v1785 = vld [vmem:[%s165 + $0xe4] sm:$0xff]
      %v1786 = vld [vmem:[%s165 + $0xec] sm:$0xff]
      %v1787 = vld [vmem:[%s165 + $0xf4] sm:$0xff]
      %v1788 = vld [vmem:[%s165 + $0xfc] sm:$0xff]
      %v1789 = vld [vmem:[%s165 + $0x104] sm:$0xff]
      %v1790 = vld [vmem:[%s165 + $0x10c] sm:$0xff]
      %v1791 = vld [vmem:[%s165 + $0x114] sm:$0xff]
      %v1792 = vld [vmem:[%s165 + $0x11c] sm:$0xff]
      %v1793 = vld [vmem:[%s165 + $0x124] sm:$0xff]
      %v1794 = vld [vmem:[%s165 + $0x12c] sm:$0xff]
      %v1795 = vpack.c.bf16 %v1760, %v1759
      %v1796 = vpack.c.bf16 %v1762, %v1761
      %v1797 = vpack.c.bf16 %v1764, %v1763
      %v1798 = vpack.c.bf16 %v1766, %v1765
      %v1799 = vpack.c.bf16 %v1768, %v1767
      %v1800 = vpack.c.bf16 %v1770, %v1769
      %v1801 = vpack.c.bf16 %v1772, %v1771
      %v1802 = vpack.c.bf16 %v1774, %v1773
      %v1803 = vpack.c.bf16 %v1776, %v1775
      %v1804 = vpack.c.bf16 %v1778, %v1777
      %v1805 = vpack.c.bf16 %v1780, %v1779
      %v1806 = vpack.c.bf16 %v1782, %v1781
      %v1807 = vpack.c.bf16 %v1784, %v1783
      %v1808 = vpack.c.bf16 %v1786, %v1785
      %v1809 = vpack.c.bf16 %v1788, %v1787
      %v1810 = vpack.c.bf16 %v1790, %v1789
      %v1811 = vpack.c.bf16 %v1792, %v1791
      %v1812 = vpack.c.bf16 %v1794, %v1793
      %s1813 = scalar_lea.vmem %s1, 320
      %v1814 = vld [vmem:[%s1813] sm:$0xf]
      %v1815 = vld [vmem:[%s1813 + $0x4] sm:$0xf]
      %v1816 = vld [vmem:[%s1813 + $0x8] sm:$0xf]
      %v1817 = vld [vmem:[%s1813 + $0xc] sm:$0xf]
      %v1818 = vld [vmem:[%s1813 + $0x10] sm:$0xf]
      %v1819 = vld [vmem:[%s1813 + $0x14] sm:$0xf]
      %v1820 = vld [vmem:[%s1813 + $0x18] sm:$0xf]
      %v1821 = vld [vmem:[%s1813 + $0x1c] sm:$0xf]
      %v1822 = vld [vmem:[%s1813 + $0x20] sm:$0xf]
      %v1823 = vld [vmem:[%s1813 + $0x24] sm:$0xf]
      %v1824 = vld [vmem:[%s1813 + $0x28] sm:$0xf]
      %v1825 = vld [vmem:[%s1813 + $0x2c] sm:$0xf]
      %v1826 = vld [vmem:[%s1813 + $0x30] sm:$0xf]
      %v1827 = vld [vmem:[%s1813 + $0x34] sm:$0xf]
      %v1828 = vld [vmem:[%s1813 + $0x38] sm:$0xf]
      %v1829 = vld [vmem:[%s1813 + $0x3c] sm:$0xf]
      %v1846 = vunpack.c.l.b16 %v1814
      %v1847 = vunpack.c.l.b16 %v1815
      %v1848 = vunpack.c.l.b16 %v1816
      %v1849 = vunpack.c.l.b16 %v1817
      %v1850 = vunpack.c.l.b16 %v1818
      %v1851 = vunpack.c.l.b16 %v1819
      %v1852 = vunpack.c.l.b16 %v1820
      %v1853 = vunpack.c.l.b16 %v1821
      %v1854 = vunpack.c.l.b16 %v1822
      %v1855 = vunpack.c.l.b16 %v1823
      %v1856 = vunpack.c.l.b16 %v1824
      %v1857 = vunpack.c.l.b16 %v1825
      %v1858 = vunpack.c.l.b16 %v1826
      %v1859 = vunpack.c.l.b16 %v1827
      %v1860 = vunpack.c.l.b16 %v1828
      %v1861 = vunpack.c.l.b16 %v1829
      %v1862 = vpack.c.b16 %v1847, %v1846
      %v1863 = vpack.c.b16 %v1849, %v1848
      %v1864 = vpack.c.b16 %v1851, %v1850
      %v1865 = vpack.c.b16 %v1853, %v1852
      %v1866 = vpack.c.b16 %v1855, %v1854
      %v1867 = vpack.c.b16 %v1857, %v1856
      %v1868 = vpack.c.b16 %v1859, %v1858
      %v1869 = vpack.c.b16 %v1861, %v1860
      %1878 = vmatprep.subr.bf16.mxu0 0
      %1879 = vmatpush1.bf16.msra.mxu0 %v1862
      %1880 = vmatprep.subr.bf16.mxu0 0
      %1881 = vmatpush1.bf16.msra.mxu0 %v1863
      %1882 = vmatprep.subr.bf16.mxu0 0
      %1883 = vmatpush1.bf16.msra.mxu0 %v1864
      %1884 = vmatprep.subr.bf16.mxu0 0
      %1885 = vmatpush1.bf16.msra.mxu0 %v1865
      %1886 = vmatprep.subr.bf16.mxu0 0
      %1887 = vmatpush1.bf16.msra.mxu0 %v1866
      %1888 = vmatprep.subr.bf16.mxu0 0
      %1889 = vmatpush1.bf16.msra.mxu0 %v1867
      %1890 = vmatprep.subr.bf16.mxu0 0
      %1891 = vmatpush1.bf16.msra.mxu0 %v1868
      %1892 = vmatprep.subr.bf16.mxu0 0
      %1893 = vmatpush1.bf16.msra.mxu0 %v1869
      %1894 = vmatprep.subr.bf16.mxu0 0
      %1895 = vmatpush1.bf16.msra.mxu0 0
      %1896 = vmatprep.subr.bf16.mxu0 0
      %1897 = vmatpush1.bf16.msra.mxu0 0
      %1898 = vmatprep.subr.bf16.mxu0 0
      %1899 = vmatpush1.bf16.msra.mxu0 0
      %1900 = vmatprep.subr.bf16.mxu0 0
      %1901 = vmatpush1.bf16.msra.mxu0 0
      %1902 = vmatprep.subr.bf16.mxu0 0
      %1903 = vmatpush1.bf16.msra.mxu0 0
      %1904 = vmatprep.subr.bf16.mxu0 0
      %1905 = vmatpush1.bf16.msra.mxu0 0
      %1906 = vmatprep.subr.bf16.mxu0 0
      %1907 = vmatpush1.bf16.msra.mxu0 0
      %1908 = vmatprep.subr.bf16.mxu0 0
      %1909 = vmatpush1.bf16.msra.mxu0 0
      %1910 = vmatprep.mubr.bf16.mxu0 0
      %1911 = vmatmul.mubr.bf16.gmra.mrb[0].mxu0 %v1795
      %v1912 = vpop.f32.mrb[0].mxu0
      %v1913 = vadd.f32 0.0, %v1912
      %v1914 = vpop.f32.mrb[0].mxu0
      %v1915 = vpop.f32.mrb[0].mxu0
      %v1916 = vadd.f32 0.0, %v1915
      %v1917 = vpop.f32.mrb[0].mxu0
      %1918 = vmatprep.mubr.bf16.mxu0 0
      %1919 = vmatmul.mubr.bf16.gmra.mrb[0].mxu0 %v1796
      %v1920 = vpop.f32.mrb[0].mxu0
      %v1921 = vadd.f32 0.0, %v1920
      %v1922 = vpop.f32.mrb[0].mxu0
      %v1923 = vpop.f32.mrb[0].mxu0
      %v1924 = vadd.f32 0.0, %v1923
      %v1925 = vpop.f32.mrb[0].mxu0
      %1926 = vmatprep.mubr.bf16.mxu0 0
      %1927 = vmatmul.mubr.bf16.gmra.mrb[0].mxu0 %v1797
      %v1928 = vpop.f32.mrb[0].mxu0
      %v1929 = vadd.f32 0.0, %v1928
      %v1930 = vpop.f32.mrb[0].mxu0
      %v1931 = vpop.f32.mrb[0].mxu0
      %v1932 = vadd.f32 0.0, %v1931
      %v1933 = vpop.f32.mrb[0].mxu0
      %1934 = vmatprep.mubr.bf16.mxu0 0
      %1935 = vmatmul.mubr.bf16.gmra.mrb[0].mxu0 %v1798
      %v1936 = vpop.f32.mrb[0].mxu0
      %v1937 = vadd.f32 0.0, %v1936
      %v1938 = vpop.f32.mrb[0].mxu0
      %v1939 = vpop.f32.mrb[0].mxu0
      %v1940 = vadd.f32 0.0, %v1939
      %v1941 = vpop.f32.mrb[0].mxu0
      %1942 = vmatprep.mubr.bf16.mxu0 0
      %1943 = vmatmul.mubr.bf16.gmra.mrb[0].mxu0 %v1799
      %v1944 = vpop.f32.mrb[0].mxu0
      %v1945 = vadd.f32 0.0, %v1944
      %v1946 = vpop.f32.mrb[0].mxu0
      %v1947 = vpop.f32.mrb[0].mxu0
      %v1948 = vadd.f32 0.0, %v1947
      %v1949 = vpop.f32.mrb[0].mxu0
      %1950 = vmatprep.mubr.bf16.mxu0 0
      %1951 = vmatmul.mubr.bf16.gmra.mrb[0].mxu0 %v1800
      %v1952 = vpop.f32.mrb[0].mxu0
      %v1953 = vadd.f32 0.0, %v1952
      %v1954 = vpop.f32.mrb[0].mxu0
      %v1955 = vpop.f32.mrb[0].mxu0
      %v1956 = vadd.f32 0.0, %v1955
      %v1957 = vpop.f32.mrb[0].mxu0
      %1958 = vmatprep.mubr.bf16.mxu0 0
      %1959 = vmatmul.mubr.bf16.gmra.mrb[0].mxu0 %v1801
      %v1960 = vpop.f32.mrb[0].mxu0
      %v1961 = vadd.f32 0.0, %v1960
      %v1962 = vpop.f32.mrb[0].mxu0
      %v1963 = vpop.f32.mrb[0].mxu0
      %v1964 = vadd.f32 0.0, %v1963
      %v1965 = vpop.f32.mrb[0].mxu0
      %1966 = vmatprep.mubr.bf16.mxu0 0
      %1967 = vmatmul.mubr.bf16.gmra.mrb[0].mxu0 %v1802
      %v1968 = vpop.f32.mrb[0].mxu0
      %v1969 = vadd.f32 0.0, %v1968
      %v1970 = vpop.f32.mrb[0].mxu0
      %v1971 = vpop.f32.mrb[0].mxu0
      %v1972 = vadd.f32 0.0, %v1971
      %v1973 = vpop.f32.mrb[0].mxu0
      %1974 = vmatprep.mubr.bf16.mxu0 0
      %1975 = vmatmul.mubr.bf16.gmra.mrb[0].mxu0 %v1803
      %v1976 = vpop.f32.mrb[0].mxu0
      %v1977 = vadd.f32 0.0, %v1976
      %v1978 = vpop.f32.mrb[0].mxu0
      %v1979 = vpop.f32.mrb[0].mxu0
      %v1980 = vadd.f32 0.0, %v1979
      %v1981 = vpop.f32.mrb[0].mxu0
      %1982 = vmatprep.mubr.bf16.mxu0 0
      %1983 = vmatmul.mubr.bf16.gmra.mrb[0].mxu0 %v1804
      %v1984 = vpop.f32.mrb[0].mxu0
      %v1985 = vadd.f32 0.0, %v1984
      %v1986 = vpop.f32.mrb[0].mxu0
      %v1987 = vpop.f32.mrb[0].mxu0
      %v1988 = vadd.f32 0.0, %v1987
      %v1989 = vpop.f32.mrb[0].mxu0
      %1990 = vmatprep.mubr.bf16.mxu0 0
      %1991 = vmatmul.mubr.bf16.gmra.mrb[0].mxu0 %v1805
      %v1992 = vpop.f32.mrb[0].mxu0
      %v1993 = vadd.f32 0.0, %v1992
      %v1994 = vpop.f32.mrb[0].mxu0
      %v1995 = vpop.f32.mrb[0].mxu0
      %v1996 = vadd.f32 0.0, %v1995
      %v1997 = vpop.f32.mrb[0].mxu0
      %1998 = vmatprep.mubr.bf16.mxu0 0
      %1999 = vmatmul.mubr.bf16.gmra.mrb[0].mxu0 %v1806
      %v2000 = vpop.f32.mrb[0].mxu0
      %v2001 = vadd.f32 0.0, %v2000
      %v2002 = vpop.f32.mrb[0].mxu0
      %v2003 = vpop.f32.mrb[0].mxu0
      %v2004 = vadd.f32 0.0, %v2003
      %v2005 = vpop.f32.mrb[0].mxu0
      %2006 = vmatprep.mubr.bf16.mxu0 0
      %2007 = vmatmul.mubr.bf16.gmra.mrb[0].mxu0 %v1807
      %v2008 = vpop.f32.mrb[0].mxu0
      %v2009 = vadd.f32 0.0, %v2008
      %v2010 = vpop.f32.mrb[0].mxu0
      %v2011 = vpop.f32.mrb[0].mxu0
      %v2012 = vadd.f32 0.0, %v2011
      %v2013 = vpop.f32.mrb[0].mxu0
      %2014 = vmatprep.mubr.bf16.mxu0 0
      %2015 = vmatmul.mubr.bf16.gmra.mrb[0].mxu0 %v1808
      %v2016 = vpop.f32.mrb[0].mxu0
      %v2017 = vadd.f32 0.0, %v2016
      %v2018 = vpop.f32.mrb[0].mxu0
      %v2019 = vpop.f32.mrb[0].mxu0
      %v2020 = vadd.f32 0.0, %v2019
      %v2021 = vpop.f32.mrb[0].mxu0
      %2022 = vmatprep.mubr.bf16.mxu0 0
      %2023 = vmatmul.mubr.bf16.gmra.mrb[0].mxu0 %v1809
      %v2024 = vpop.f32.mrb[0].mxu0
      %v2025 = vadd.f32 0.0, %v2024
      %v2026 = vpop.f32.mrb[0].mxu0
      %v2027 = vpop.f32.mrb[0].mxu0
      %v2028 = vadd.f32 0.0, %v2027
      %v2029 = vpop.f32.mrb[0].mxu0
      %2030 = vmatprep.mubr.bf16.mxu0 0
      %2031 = vmatmul.mubr.bf16.gmra.mrb[0].mxu0 %v1810
      %v2032 = vpop.f32.mrb[0].mxu0
      %v2033 = vadd.f32 0.0, %v2032
      %v2034 = vpop.f32.mrb[0].mxu0
      %v2035 = vpop.f32.mrb[0].mxu0
      %v2036 = vadd.f32 0.0, %v2035
      %v2037 = vpop.f32.mrb[0].mxu0
      %2038 = vmatprep.mubr.bf16.mxu0 0
      %2039 = vmatmul.mubr.bf16.gmra.mrb[0].mxu0 %v1811
      %v2040 = vpop.f32.mrb[0].mxu0
      %v2041 = vadd.f32 0.0, %v2040
      %v2042 = vpop.f32.mrb[0].mxu0
      %v2043 = vpop.f32.mrb[0].mxu0
      %v2044 = vadd.f32 0.0, %v2043
      %v2045 = vpop.f32.mrb[0].mxu0
      %2046 = vmatprep.mubr.bf16.mxu0 0
      %2047 = vmatmul.mubr.bf16.gmra.mrb[0].mxu0 %v1812
      %v2048 = vpop.f32.mrb[0].mxu0
      %v2049 = vadd.f32 0.0, %v2048
      %v2050 = vpop.f32.mrb[0].mxu0
      %v2051 = vpop.f32.mrb[0].mxu0
      %v2052 = vadd.f32 0.0, %v2051
      %v2053 = vpop.f32.mrb[0].mxu0
      %2054 = vdwg.mxu0
      %v2055 = vadd.f32 %v1723, %v1913
      %v2056 = vadd.f32 %v1724, %v1916
      %v2057 = vadd.f32 %v1725, %v1921
      %v2058 = vadd.f32 %v1726, %v1924
      %v2059 = vadd.f32 %v1727, %v1929
      %v2060 = vadd.f32 %v1728, %v1932
      %v2061 = vadd.f32 %v1729, %v1937
      %v2062 = vadd.f32 %v1730, %v1940
      %v2063 = vadd.f32 %v1731, %v1945
      %v2064 = vadd.f32 %v1732, %v1948
      %v2065 = vadd.f32 %v1733, %v1953
      %v2066 = vadd.f32 %v1734, %v1956
      %v2067 = vadd.f32 %v1735, %v1961
      %v2068 = vadd.f32 %v1736, %v1964
      %v2069 = vadd.f32 %v1737, %v1969
      %v2070 = vadd.f32 %v1738, %v1972
      %v2071 = vadd.f32 %v1739, %v1977
      %v2072 = vadd.f32 %v1740, %v1980
      %v2073 = vadd.f32 %v1741, %v1985
      %v2074 = vadd.f32 %v1742, %v1988
      %v2075 = vadd.f32 %v1743, %v1993
      %v2076 = vadd.f32 %v1744, %v1996
      %v2077 = vadd.f32 %v1745, %v2001
      %v2078 = vadd.f32 %v1746, %v2004
      %v2079 = vadd.f32 %v1747, %v2009
      %v2080 = vadd.f32 %v1748, %v2012
      %v2081 = vadd.f32 %v1749, %v2017
      %v2082 = vadd.f32 %v1750, %v2020
      %v2083 = vadd.f32 %v1751, %v2025
      %v2084 = vadd.f32 %v1752, %v2028
      %v2085 = vadd.f32 %v1753, %v2033
      %v2086 = vadd.f32 %v1754, %v2036
      %v2087 = vadd.f32 %v1755, %v2041
      %v2088 = vadd.f32 %v1756, %v2044
      %v2089 = vadd.f32 %v1757, %v2049
      %v2090 = vadd.f32 %v1758, %v2052
      %v2091 = vld [vmem:[%s165 + $0x24] sm:$0xff]
      %v2092 = vld [vmem:[%s165 + $0x2c] sm:$0xff]
      %v2093 = vld [vmem:[%s165 + $0x34] sm:$0xff]
      %v2094 = vld [vmem:[%s165 + $0x3c] sm:$0xff]
      %v2095 = vld [vmem:[%s165 + $0x44] sm:$0xff]
      %v2096 = vld [vmem:[%s165 + $0x4c] sm:$0xff]
      %v2097 = vld [vmem:[%s165 + $0x54] sm:$0xff]
      %v2098 = vld [vmem:[%s165 + $0x5c] sm:$0xff]
      %v2099 = vld [vmem:[%s165 + $0x64] sm:$0xff]
      %v2100 = vld [vmem:[%s165 + $0x6c] sm:$0xff]
      %v2101 = vld [vmem:[%s165 + $0x74] sm:$0xff]
      %v2102 = vld [vmem:[%s165 + $0x7c] sm:$0xff]
      %v2103 = vld [vmem:[%s165 + $0x84] sm:$0xff]
      %v2104 = vld [vmem:[%s165 + $0x8c] sm:$0xff]
      %v2105 = vld [vmem:[%s165 + $0x94] sm:$0xff]
      %v2106 = vld [vmem:[%s165 + $0x9c] sm:$0xff]
      %v2107 = vld [vmem:[%s165 + $0xa4] sm:$0xff]
      %v2108 = vld [vmem:[%s165 + $0xac] sm:$0xff]
      %v2109 = vld [vmem:[%s165 + $0xb4] sm:$0xff]
      %v2110 = vld [vmem:[%s165 + $0xbc] sm:$0xff]
      %v2111 = vld [vmem:[%s165 + $0xc4] sm:$0xff]
      %v2112 = vld [vmem:[%s165 + $0xcc] sm:$0xff]
      %v2113 = vld [vmem:[%s165 + $0xd4] sm:$0xff]
      %v2114 = vld [vmem:[%s165 + $0xdc] sm:$0xff]
      %v2115 = vld [vmem:[%s165 + $0xe4] sm:$0xff]
      %v2116 = vld [vmem:[%s165 + $0xec] sm:$0xff]
      %v2117 = vld [vmem:[%s165 + $0xf4] sm:$0xff]
      %v2118 = vld [vmem:[%s165 + $0xfc] sm:$0xff]
      %v2119 = vld [vmem:[%s165 + $0x104] sm:$0xff]
      %v2120 = vld [vmem:[%s165 + $0x10c] sm:$0xff]
      %v2121 = vld [vmem:[%s165 + $0x114] sm:$0xff]
      %v2122 = vld [vmem:[%s165 + $0x11c] sm:$0xff]
      %v2123 = vld [vmem:[%s165 + $0x124] sm:$0xff]
      %v2124 = vld [vmem:[%s165 + $0x12c] sm:$0xff]
      %v2125 = vld [vmem:[%s165 + $0x134] sm:$0xff]
      %v2126 = vld [vmem:[%s165 + $0x13c] sm:$0xff]
      %v2127 = vpack.c.bf16 %v2092, %v2091
      %v2128 = vpack.c.bf16 %v2094, %v2093
      %v2129 = vpack.c.bf16 %v2096, %v2095
      %v2130 = vpack.c.bf16 %v2098, %v2097
      %v2131 = vpack.c.bf16 %v2100, %v2099
      %v2132 = vpack.c.bf16 %v2102, %v2101
      %v2133 = vpack.c.bf16 %v2104, %v2103
      %v2134 = vpack.c.bf16 %v2106, %v2105
      %v2135 = vpack.c.bf16 %v2108, %v2107
      %v2136 = vpack.c.bf16 %v2110, %v2109
      %v2137 = vpack.c.bf16 %v2112, %v2111
      %v2138 = vpack.c.bf16 %v2114, %v2113
      %v2139 = vpack.c.bf16 %v2116, %v2115
      %v2140 = vpack.c.bf16 %v2118, %v2117
      %v2141 = vpack.c.bf16 %v2120, %v2119
      %v2142 = vpack.c.bf16 %v2122, %v2121
      %v2143 = vpack.c.bf16 %v2124, %v2123
      %v2144 = vpack.c.bf16 %v2126, %v2125
      %s2145 = scalar_lea.vmem %s1, 384
      %v2146 = vld [vmem:[%s2145] sm:$0xf]
      %v2147 = vld [vmem:[%s2145 + $0x4] sm:$0xf]
      %v2148 = vld [vmem:[%s2145 + $0x8] sm:$0xf]
      %v2149 = vld [vmem:[%s2145 + $0xc] sm:$0xf]
      %v2150 = vld [vmem:[%s2145 + $0x10] sm:$0xf]
      %v2151 = vld [vmem:[%s2145 + $0x14] sm:$0xf]
      %v2152 = vld [vmem:[%s2145 + $0x18] sm:$0xf]
      %v2153 = vld [vmem:[%s2145 + $0x1c] sm:$0xf]
      %v2154 = vld [vmem:[%s2145 + $0x20] sm:$0xf]
      %v2155 = vld [vmem:[%s2145 + $0x24] sm:$0xf]
      %v2156 = vld [vmem:[%s2145 + $0x28] sm:$0xf]
      %v2157 = vld [vmem:[%s2145 + $0x2c] sm:$0xf]
      %v2158 = vld [vmem:[%s2145 + $0x30] sm:$0xf]
      %v2159 = vld [vmem:[%s2145 + $0x34] sm:$0xf]
      %v2160 = vld [vmem:[%s2145 + $0x38] sm:$0xf]
      %v2161 = vld [vmem:[%s2145 + $0x3c] sm:$0xf]
      %v2178 = vunpack.c.l.b16 %v2146
      %v2179 = vunpack.c.l.b16 %v2147
      %v2180 = vunpack.c.l.b16 %v2148
      %v2181 = vunpack.c.l.b16 %v2149
      %v2182 = vunpack.c.l.b16 %v2150
      %v2183 = vunpack.c.l.b16 %v2151
      %v2184 = vunpack.c.l.b16 %v2152
      %v2185 = vunpack.c.l.b16 %v2153
      %v2186 = vunpack.c.l.b16 %v2154
      %v2187 = vunpack.c.l.b16 %v2155
      %v2188 = vunpack.c.l.b16 %v2156
      %v2189 = vunpack.c.l.b16 %v2157
      %v2190 = vunpack.c.l.b16 %v2158
      %v2191 = vunpack.c.l.b16 %v2159
      %v2192 = vunpack.c.l.b16 %v2160
      %v2193 = vunpack.c.l.b16 %v2161
      %v2194 = vpack.c.b16 %v2179, %v2178
      %v2195 = vpack.c.b16 %v2181, %v2180
      %v2196 = vpack.c.b16 %v2183, %v2182
      %v2197 = vpack.c.b16 %v2185, %v2184
      %v2198 = vpack.c.b16 %v2187, %v2186
      %v2199 = vpack.c.b16 %v2189, %v2188
      %v2200 = vpack.c.b16 %v2191, %v2190
      %v2201 = vpack.c.b16 %v2193, %v2192
      %2210 = vmatprep.subr.bf16.mxu0 0
      %2211 = vmatpush1.bf16.msra.mxu0 %v2194
      %2212 = vmatprep.subr.bf16.mxu0 0
      %2213 = vmatpush1.bf16.msra.mxu0 %v2195
      %2214 = vmatprep.subr.bf16.mxu0 0
      %2215 = vmatpush1.bf16.msra.mxu0 %v2196
      %2216 = vmatprep.subr.bf16.mxu0 0
      %2217 = vmatpush1.bf16.msra.mxu0 %v2197
      %2218 = vmatprep.subr.bf16.mxu0 0
      %2219 = vmatpush1.bf16.msra.mxu0 %v2198
      %2220 = vmatprep.subr.bf16.mxu0 0
      %2221 = vmatpush1.bf16.msra.mxu0 %v2199
      %2222 = vmatprep.subr.bf16.mxu0 0
      %2223 = vmatpush1.bf16.msra.mxu0 %v2200
      %2224 = vmatprep.subr.bf16.mxu0 0
      %2225 = vmatpush1.bf16.msra.mxu0 %v2201
      %2226 = vmatprep.subr.bf16.mxu0 0
      %2227 = vmatpush1.bf16.msra.mxu0 0
      %2228 = vmatprep.subr.bf16.mxu0 0
      %2229 = vmatpush1.bf16.msra.mxu0 0
      %2230 = vmatprep.subr.bf16.mxu0 0
      %2231 = vmatpush1.bf16.msra.mxu0 0
      %2232 = vmatprep.subr.bf16.mxu0 0
      %2233 = vmatpush1.bf16.msra.mxu0 0
      %2234 = vmatprep.subr.bf16.mxu0 0
      %2235 = vmatpush1.bf16.msra.mxu0 0
      %2236 = vmatprep.subr.bf16.mxu0 0
      %2237 = vmatpush1.bf16.msra.mxu0 0
      %2238 = vmatprep.subr.bf16.mxu0 0
      %2239 = vmatpush1.bf16.msra.mxu0 0
      %2240 = vmatprep.subr.bf16.mxu0 0
      %2241 = vmatpush1.bf16.msra.mxu0 0
      %2242 = vmatprep.mubr.bf16.mxu0 0
      %2243 = vmatmul.mubr.bf16.gmra.mrb[0].mxu0 %v2127
      %v2244 = vpop.f32.mrb[0].mxu0
      %v2245 = vadd.f32 0.0, %v2244
      %v2246 = vpop.f32.mrb[0].mxu0
      %v2247 = vpop.f32.mrb[0].mxu0
      %v2248 = vadd.f32 0.0, %v2247
      %v2249 = vpop.f32.mrb[0].mxu0
      %2250 = vmatprep.mubr.bf16.mxu0 0
      %2251 = vmatmul.mubr.bf16.gmra.mrb[0].mxu0 %v2128
      %v2252 = vpop.f32.mrb[0].mxu0
      %v2253 = vadd.f32 0.0, %v2252
      %v2254 = vpop.f32.mrb[0].mxu0
      %v2255 = vpop.f32.mrb[0].mxu0
      %v2256 = vadd.f32 0.0, %v2255
      %v2257 = vpop.f32.mrb[0].mxu0
      %2258 = vmatprep.mubr.bf16.mxu0 0
      %2259 = vmatmul.mubr.bf16.gmra.mrb[0].mxu0 %v2129
      %v2260 = vpop.f32.mrb[0].mxu0
      %v2261 = vadd.f32 0.0, %v2260
      %v2262 = vpop.f32.mrb[0].mxu0
      %v2263 = vpop.f32.mrb[0].mxu0
      %v2264 = vadd.f32 0.0, %v2263
      %v2265 = vpop.f32.mrb[0].mxu0
      %2266 = vmatprep.mubr.bf16.mxu0 0
      %2267 = vmatmul.mubr.bf16.gmra.mrb[0].mxu0 %v2130
      %v2268 = vpop.f32.mrb[0].mxu0
      %v2269 = vadd.f32 0.0, %v2268
      %v2270 = vpop.f32.mrb[0].mxu0
      %v2271 = vpop.f32.mrb[0].mxu0
      %v2272 = vadd.f32 0.0, %v2271
      %v2273 = vpop.f32.mrb[0].mxu0
      %2274 = vmatprep.mubr.bf16.mxu0 0
      %2275 = vmatmul.mubr.bf16.gmra.mrb[0].mxu0 %v2131
      %v2276 = vpop.f32.mrb[0].mxu0
      %v2277 = vadd.f32 0.0, %v2276
      %v2278 = vpop.f32.mrb[0].mxu0
      %v2279 = vpop.f32.mrb[0].mxu0
      %v2280 = vadd.f32 0.0, %v2279
      %v2281 = vpop.f32.mrb[0].mxu0
      %2282 = vmatprep.mubr.bf16.mxu0 0
      %2283 = vmatmul.mubr.bf16.gmra.mrb[0].mxu0 %v2132
      %v2284 = vpop.f32.mrb[0].mxu0
      %v2285 = vadd.f32 0.0, %v2284
      %v2286 = vpop.f32.mrb[0].mxu0
      %v2287 = vpop.f32.mrb[0].mxu0
      %v2288 = vadd.f32 0.0, %v2287
      %v2289 = vpop.f32.mrb[0].mxu0
      %2290 = vmatprep.mubr.bf16.mxu0 0
      %2291 = vmatmul.mubr.bf16.gmra.mrb[0].mxu0 %v2133
      %v2292 = vpop.f32.mrb[0].mxu0
      %v2293 = vadd.f32 0.0, %v2292
      %v2294 = vpop.f32.mrb[0].mxu0
      %v2295 = vpop.f32.mrb[0].mxu0
      %v2296 = vadd.f32 0.0, %v2295
      %v2297 = vpop.f32.mrb[0].mxu0
      %2298 = vmatprep.mubr.bf16.mxu0 0
      %2299 = vmatmul.mubr.bf16.gmra.mrb[0].mxu0 %v2134
      %v2300 = vpop.f32.mrb[0].mxu0
      %v2301 = vadd.f32 0.0, %v2300
      %v2302 = vpop.f32.mrb[0].mxu0
      %v2303 = vpop.f32.mrb[0].mxu0
      %v2304 = vadd.f32 0.0, %v2303
      %v2305 = vpop.f32.mrb[0].mxu0
      %2306 = vmatprep.mubr.bf16.mxu0 0
      %2307 = vmatmul.mubr.bf16.gmra.mrb[0].mxu0 %v2135
      %v2308 = vpop.f32.mrb[0].mxu0
      %v2309 = vadd.f32 0.0, %v2308
      %v2310 = vpop.f32.mrb[0].mxu0
      %v2311 = vpop.f32.mrb[0].mxu0
      %v2312 = vadd.f32 0.0, %v2311
      %v2313 = vpop.f32.mrb[0].mxu0
      %2314 = vmatprep.mubr.bf16.mxu0 0
      %2315 = vmatmul.mubr.bf16.gmra.mrb[0].mxu0 %v2136
      %v2316 = vpop.f32.mrb[0].mxu0
      %v2317 = vadd.f32 0.0, %v2316
      %v2318 = vpop.f32.mrb[0].mxu0
      %v2319 = vpop.f32.mrb[0].mxu0
      %v2320 = vadd.f32 0.0, %v2319
      %v2321 = vpop.f32.mrb[0].mxu0
      %2322 = vmatprep.mubr.bf16.mxu0 0
      %2323 = vmatmul.mubr.bf16.gmra.mrb[0].mxu0 %v2137
      %v2324 = vpop.f32.mrb[0].mxu0
      %v2325 = vadd.f32 0.0, %v2324
      %v2326 = vpop.f32.mrb[0].mxu0
      %v2327 = vpop.f32.mrb[0].mxu0
      %v2328 = vadd.f32 0.0, %v2327
      %v2329 = vpop.f32.mrb[0].mxu0
      %2330 = vmatprep.mubr.bf16.mxu0 0
      %2331 = vmatmul.mubr.bf16.gmra.mrb[0].mxu0 %v2138
      %v2332 = vpop.f32.mrb[0].mxu0
      %v2333 = vadd.f32 0.0, %v2332
      %v2334 = vpop.f32.mrb[0].mxu0
      %v2335 = vpop.f32.mrb[0].mxu0
      %v2336 = vadd.f32 0.0, %v2335
      %v2337 = vpop.f32.mrb[0].mxu0
      %2338 = vmatprep.mubr.bf16.mxu0 0
      %2339 = vmatmul.mubr.bf16.gmra.mrb[0].mxu0 %v2139
      %v2340 = vpop.f32.mrb[0].mxu0
      %v2341 = vadd.f32 0.0, %v2340
      %v2342 = vpop.f32.mrb[0].mxu0
      %v2343 = vpop.f32.mrb[0].mxu0
      %v2344 = vadd.f32 0.0, %v2343
      %v2345 = vpop.f32.mrb[0].mxu0
      %2346 = vmatprep.mubr.bf16.mxu0 0
      %2347 = vmatmul.mubr.bf16.gmra.mrb[0].mxu0 %v2140
      %v2348 = vpop.f32.mrb[0].mxu0
      %v2349 = vadd.f32 0.0, %v2348
      %v2350 = vpop.f32.mrb[0].mxu0
      %v2351 = vpop.f32.mrb[0].mxu0
      %v2352 = vadd.f32 0.0, %v2351
      %v2353 = vpop.f32.mrb[0].mxu0
      %2354 = vmatprep.mubr.bf16.mxu0 0
      %2355 = vmatmul.mubr.bf16.gmra.mrb[0].mxu0 %v2141
      %v2356 = vpop.f32.mrb[0].mxu0
      %v2357 = vadd.f32 0.0, %v2356
      %v2358 = vpop.f32.mrb[0].mxu0
      %v2359 = vpop.f32.mrb[0].mxu0
      %v2360 = vadd.f32 0.0, %v2359
      %v2361 = vpop.f32.mrb[0].mxu0
      %2362 = vmatprep.mubr.bf16.mxu0 0
      %2363 = vmatmul.mubr.bf16.gmra.mrb[0].mxu0 %v2142
      %v2364 = vpop.f32.mrb[0].mxu0
      %v2365 = vadd.f32 0.0, %v2364
      %v2366 = vpop.f32.mrb[0].mxu0
      %v2367 = vpop.f32.mrb[0].mxu0
      %v2368 = vadd.f32 0.0, %v2367
      %v2369 = vpop.f32.mrb[0].mxu0
      %2370 = vmatprep.mubr.bf16.mxu0 0
      %2371 = vmatmul.mubr.bf16.gmra.mrb[0].mxu0 %v2143
      %v2372 = vpop.f32.mrb[0].mxu0
      %v2373 = vadd.f32 0.0, %v2372
      %v2374 = vpop.f32.mrb[0].mxu0
      %v2375 = vpop.f32.mrb[0].mxu0
      %v2376 = vadd.f32 0.0, %v2375
      %v2377 = vpop.f32.mrb[0].mxu0
      %2378 = vmatprep.mubr.bf16.mxu0 0
      %2379 = vmatmul.mubr.bf16.gmra.mrb[0].mxu0 %v2144
      %v2380 = vpop.f32.mrb[0].mxu0
      %v2381 = vadd.f32 0.0, %v2380
      %v2382 = vpop.f32.mrb[0].mxu0
      %v2383 = vpop.f32.mrb[0].mxu0
      %v2384 = vadd.f32 0.0, %v2383
      %v2385 = vpop.f32.mrb[0].mxu0
      %2386 = vdwg.mxu0
      %v2387 = vadd.f32 %v2055, %v2245
      %v2388 = vadd.f32 %v2056, %v2248
      %v2389 = vadd.f32 %v2057, %v2253
      %v2390 = vadd.f32 %v2058, %v2256
      %v2391 = vadd.f32 %v2059, %v2261
      %v2392 = vadd.f32 %v2060, %v2264
      %v2393 = vadd.f32 %v2061, %v2269
      %v2394 = vadd.f32 %v2062, %v2272
      %v2395 = vadd.f32 %v2063, %v2277
      %v2396 = vadd.f32 %v2064, %v2280
      %v2397 = vadd.f32 %v2065, %v2285
      %v2398 = vadd.f32 %v2066, %v2288
      %v2399 = vadd.f32 %v2067, %v2293
      %v2400 = vadd.f32 %v2068, %v2296
      %v2401 = vadd.f32 %v2069, %v2301
      %v2402 = vadd.f32 %v2070, %v2304
      %v2403 = vadd.f32 %v2071, %v2309
      %v2404 = vadd.f32 %v2072, %v2312
      %v2405 = vadd.f32 %v2073, %v2317
      %v2406 = vadd.f32 %v2074, %v2320
      %v2407 = vadd.f32 %v2075, %v2325
      %v2408 = vadd.f32 %v2076, %v2328
      %v2409 = vadd.f32 %v2077, %v2333
      %v2410 = vadd.f32 %v2078, %v2336
      %v2411 = vadd.f32 %v2079, %v2341
      %v2412 = vadd.f32 %v2080, %v2344
      %v2413 = vadd.f32 %v2081, %v2349
      %v2414 = vadd.f32 %v2082, %v2352
      %v2415 = vadd.f32 %v2083, %v2357
      %v2416 = vadd.f32 %v2084, %v2360
      %v2417 = vadd.f32 %v2085, %v2365
      %v2418 = vadd.f32 %v2086, %v2368
      %v2419 = vadd.f32 %v2087, %v2373
      %v2420 = vadd.f32 %v2088, %v2376
      %v2421 = vadd.f32 %v2089, %v2381
      %v2422 = vadd.f32 %v2090, %v2384
      %v2423 = vld [vmem:[%s165 + $0x25] sm:$0xff]
      %v2424 = vld [vmem:[%s165 + $0x2d] sm:$0xff]
      %v2425 = vld [vmem:[%s165 + $0x35] sm:$0xff]
      %v2426 = vld [vmem:[%s165 + $0x3d] sm:$0xff]
      %v2427 = vld [vmem:[%s165 + $0x45] sm:$0xff]
      %v2428 = vld [vmem:[%s165 + $0x4d] sm:$0xff]
      %v2429 = vld [vmem:[%s165 + $0x55] sm:$0xff]
      %v2430 = vld [vmem:[%s165 + $0x5d] sm:$0xff]
      %v2431 = vld [vmem:[%s165 + $0x65] sm:$0xff]
      %v2432 = vld [vmem:[%s165 + $0x6d] sm:$0xff]
      %v2433 = vld [vmem:[%s165 + $0x75] sm:$0xff]
      %v2434 = vld [vmem:[%s165 + $0x7d] sm:$0xff]
      %v2435 = vld [vmem:[%s165 + $0x85] sm:$0xff]
      %v2436 = vld [vmem:[%s165 + $0x8d] sm:$0xff]
      %v2437 = vld [vmem:[%s165 + $0x95] sm:$0xff]
      %v2438 = vld [vmem:[%s165 + $0x9d] sm:$0xff]
      %v2439 = vld [vmem:[%s165 + $0xa5] sm:$0xff]
      %v2440 = vld [vmem:[%s165 + $0xad] sm:$0xff]
      %v2441 = vld [vmem:[%s165 + $0xb5] sm:$0xff]
      %v2442 = vld [vmem:[%s165 + $0xbd] sm:$0xff]
      %v2443 = vld [vmem:[%s165 + $0xc5] sm:$0xff]
      %v2444 = vld [vmem:[%s165 + $0xcd] sm:$0xff]
      %v2445 = vld [vmem:[%s165 + $0xd5] sm:$0xff]
      %v2446 = vld [vmem:[%s165 + $0xdd] sm:$0xff]
      %v2447 = vld [vmem:[%s165 + $0xe5] sm:$0xff]
      %v2448 = vld [vmem:[%s165 + $0xed] sm:$0xff]
      %v2449 = vld [vmem:[%s165 + $0xf5] sm:$0xff]
      %v2450 = vld [vmem:[%s165 + $0xfd] sm:$0xff]
      %v2451 = vld [vmem:[%s165 + $0x105] sm:$0xff]
      %v2452 = vld [vmem:[%s165 + $0x10d] sm:$0xff]
      %v2453 = vld [vmem:[%s165 + $0x115] sm:$0xff]
      %v2454 = vld [vmem:[%s165 + $0x11d] sm:$0xff]
      %v2455 = vld [vmem:[%s165 + $0x125] sm:$0xff]
      %v2456 = vld [vmem:[%s165 + $0x12d] sm:$0xff]
      %v2457 = vld [vmem:[%s165 + $0x135] sm:$0xff]
      %v2458 = vld [vmem:[%s165 + $0x13d] sm:$0xff]
      %v2459 = vpack.c.bf16 %v2424, %v2423
      %v2460 = vpack.c.bf16 %v2426, %v2425
      %v2461 = vpack.c.bf16 %v2428, %v2427
      %v2462 = vpack.c.bf16 %v2430, %v2429
      %v2463 = vpack.c.bf16 %v2432, %v2431
      %v2464 = vpack.c.bf16 %v2434, %v2433
      %v2465 = vpack.c.bf16 %v2436, %v2435
      %v2466 = vpack.c.bf16 %v2438, %v2437
      %v2467 = vpack.c.bf16 %v2440, %v2439
      %v2468 = vpack.c.bf16 %v2442, %v2441
      %v2469 = vpack.c.bf16 %v2444, %v2443
      %v2470 = vpack.c.bf16 %v2446, %v2445
      %v2471 = vpack.c.bf16 %v2448, %v2447
      %v2472 = vpack.c.bf16 %v2450, %v2449
      %v2473 = vpack.c.bf16 %v2452, %v2451
      %v2474 = vpack.c.bf16 %v2454, %v2453
      %v2475 = vpack.c.bf16 %v2456, %v2455
      %v2476 = vpack.c.bf16 %v2458, %v2457
      %s2477 = scalar_lea.vmem %s1, 448
      %v2478 = vld [vmem:[%s2477] sm:$0xf]
      %v2479 = vld [vmem:[%s2477 + $0x4] sm:$0xf]
      %v2480 = vld [vmem:[%s2477 + $0x8] sm:$0xf]
      %v2481 = vld [vmem:[%s2477 + $0xc] sm:$0xf]
      %v2482 = vld [vmem:[%s2477 + $0x10] sm:$0xf]
      %v2483 = vld [vmem:[%s2477 + $0x14] sm:$0xf]
      %v2484 = vld [vmem:[%s2477 + $0x18] sm:$0xf]
      %v2485 = vld [vmem:[%s2477 + $0x1c] sm:$0xf]
      %v2486 = vld [vmem:[%s2477 + $0x20] sm:$0xf]
      %v2487 = vld [vmem:[%s2477 + $0x24] sm:$0xf]
      %v2488 = vld [vmem:[%s2477 + $0x28] sm:$0xf]
      %v2489 = vld [vmem:[%s2477 + $0x2c] sm:$0xf]
      %v2490 = vld [vmem:[%s2477 + $0x30] sm:$0xf]
      %v2491 = vld [vmem:[%s2477 + $0x34] sm:$0xf]
      %v2492 = vld [vmem:[%s2477 + $0x38] sm:$0xf]
      %v2493 = vld [vmem:[%s2477 + $0x3c] sm:$0xf]
      %v2510 = vunpack.c.l.b16 %v2478
      %v2511 = vunpack.c.l.b16 %v2479
      %v2512 = vunpack.c.l.b16 %v2480
      %v2513 = vunpack.c.l.b16 %v2481
      %v2514 = vunpack.c.l.b16 %v2482
      %v2515 = vunpack.c.l.b16 %v2483
      %v2516 = vunpack.c.l.b16 %v2484
      %v2517 = vunpack.c.l.b16 %v2485
      %v2518 = vunpack.c.l.b16 %v2486
      %v2519 = vunpack.c.l.b16 %v2487
      %v2520 = vunpack.c.l.b16 %v2488
      %v2521 = vunpack.c.l.b16 %v2489
      %v2522 = vunpack.c.l.b16 %v2490
      %v2523 = vunpack.c.l.b16 %v2491
      %v2524 = vunpack.c.l.b16 %v2492
      %v2525 = vunpack.c.l.b16 %v2493
      %v2526 = vpack.c.b16 %v2511, %v2510
      %v2527 = vpack.c.b16 %v2513, %v2512
      %v2528 = vpack.c.b16 %v2515, %v2514
      %v2529 = vpack.c.b16 %v2517, %v2516
      %v2530 = vpack.c.b16 %v2519, %v2518
      %v2531 = vpack.c.b16 %v2521, %v2520
      %v2532 = vpack.c.b16 %v2523, %v2522
      %v2533 = vpack.c.b16 %v2525, %v2524
      %2542 = vmatprep.subr.bf16.mxu0 0
      %2543 = vmatpush1.bf16.msra.mxu0 %v2526
      %2544 = vmatprep.subr.bf16.mxu0 0
      %2545 = vmatpush1.bf16.msra.mxu0 %v2527
      %2546 = vmatprep.subr.bf16.mxu0 0
      %2547 = vmatpush1.bf16.msra.mxu0 %v2528
      %2548 = vmatprep.subr.bf16.mxu0 0
      %2549 = vmatpush1.bf16.msra.mxu0 %v2529
      %2550 = vmatprep.subr.bf16.mxu0 0
      %2551 = vmatpush1.bf16.msra.mxu0 %v2530
      %2552 = vmatprep.subr.bf16.mxu0 0
      %2553 = vmatpush1.bf16.msra.mxu0 %v2531
      %2554 = vmatprep.subr.bf16.mxu0 0
      %2555 = vmatpush1.bf16.msra.mxu0 %v2532
      %2556 = vmatprep.subr.bf16.mxu0 0
      %2557 = vmatpush1.bf16.msra.mxu0 %v2533
      %2558 = vmatprep.subr.bf16.mxu0 0
      %2559 = vmatpush1.bf16.msra.mxu0 0
      %2560 = vmatprep.subr.bf16.mxu0 0
      %2561 = vmatpush1.bf16.msra.mxu0 0
      %2562 = vmatprep.subr.bf16.mxu0 0
      %2563 = vmatpush1.bf16.msra.mxu0 0
      %2564 = vmatprep.subr.bf16.mxu0 0
      %2565 = vmatpush1.bf16.msra.mxu0 0
      %2566 = vmatprep.subr.bf16.mxu0 0
      %2567 = vmatpush1.bf16.msra.mxu0 0
      %2568 = vmatprep.subr.bf16.mxu0 0
      %2569 = vmatpush1.bf16.msra.mxu0 0
      %2570 = vmatprep.subr.bf16.mxu0 0
      %2571 = vmatpush1.bf16.msra.mxu0 0
      %2572 = vmatprep.subr.bf16.mxu0 0
      %2573 = vmatpush1.bf16.msra.mxu0 0
      %2574 = vmatprep.mubr.bf16.mxu0 0
      %2575 = vmatmul.mubr.bf16.gmra.mrb[0].mxu0 %v2459
      %v2576 = vpop.f32.mrb[0].mxu0
      %v2577 = vadd.f32 0.0, %v2576
      %v2578 = vpop.f32.mrb[0].mxu0
      %v2579 = vpop.f32.mrb[0].mxu0
      %v2580 = vadd.f32 0.0, %v2579
      %v2581 = vpop.f32.mrb[0].mxu0
      %2582 = vmatprep.mubr.bf16.mxu0 0
      %2583 = vmatmul.mubr.bf16.gmra.mrb[0].mxu0 %v2460
      %v2584 = vpop.f32.mrb[0].mxu0
      %v2585 = vadd.f32 0.0, %v2584
      %v2586 = vpop.f32.mrb[0].mxu0
      %v2587 = vpop.f32.mrb[0].mxu0
      %v2588 = vadd.f32 0.0, %v2587
      %v2589 = vpop.f32.mrb[0].mxu0
      %2590 = vmatprep.mubr.bf16.mxu0 0
      %2591 = vmatmul.mubr.bf16.gmra.mrb[0].mxu0 %v2461
      %v2592 = vpop.f32.mrb[0].mxu0
      %v2593 = vadd.f32 0.0, %v2592
      %v2594 = vpop.f32.mrb[0].mxu0
      %v2595 = vpop.f32.mrb[0].mxu0
      %v2596 = vadd.f32 0.0, %v2595
      %v2597 = vpop.f32.mrb[0].mxu0
      %2598 = vmatprep.mubr.bf16.mxu0 0
      %2599 = vmatmul.mubr.bf16.gmra.mrb[0].mxu0 %v2462
      %v2600 = vpop.f32.mrb[0].mxu0
      %v2601 = vadd.f32 0.0, %v2600
      %v2602 = vpop.f32.mrb[0].mxu0
      %v2603 = vpop.f32.mrb[0].mxu0
      %v2604 = vadd.f32 0.0, %v2603
      %v2605 = vpop.f32.mrb[0].mxu0
      %2606 = vmatprep.mubr.bf16.mxu0 0
      %2607 = vmatmul.mubr.bf16.gmra.mrb[0].mxu0 %v2463
      %v2608 = vpop.f32.mrb[0].mxu0
      %v2609 = vadd.f32 0.0, %v2608
      %v2610 = vpop.f32.mrb[0].mxu0
      %v2611 = vpop.f32.mrb[0].mxu0
      %v2612 = vadd.f32 0.0, %v2611
      %v2613 = vpop.f32.mrb[0].mxu0
      %2614 = vmatprep.mubr.bf16.mxu0 0
      %2615 = vmatmul.mubr.bf16.gmra.mrb[0].mxu0 %v2464
      %v2616 = vpop.f32.mrb[0].mxu0
      %v2617 = vadd.f32 0.0, %v2616
      %v2618 = vpop.f32.mrb[0].mxu0
      %v2619 = vpop.f32.mrb[0].mxu0
      %v2620 = vadd.f32 0.0, %v2619
      %v2621 = vpop.f32.mrb[0].mxu0
      %2622 = vmatprep.mubr.bf16.mxu0 0
      %2623 = vmatmul.mubr.bf16.gmra.mrb[0].mxu0 %v2465
      %v2624 = vpop.f32.mrb[0].mxu0
      %v2625 = vadd.f32 0.0, %v2624
      %v2626 = vpop.f32.mrb[0].mxu0
      %v2627 = vpop.f32.mrb[0].mxu0
      %v2628 = vadd.f32 0.0, %v2627
      %v2629 = vpop.f32.mrb[0].mxu0
      %2630 = vmatprep.mubr.bf16.mxu0 0
      %2631 = vmatmul.mubr.bf16.gmra.mrb[0].mxu0 %v2466
      %v2632 = vpop.f32.mrb[0].mxu0
      %v2633 = vadd.f32 0.0, %v2632
      %v2634 = vpop.f32.mrb[0].mxu0
      %v2635 = vpop.f32.mrb[0].mxu0
      %v2636 = vadd.f32 0.0, %v2635
      %v2637 = vpop.f32.mrb[0].mxu0
      %2638 = vmatprep.mubr.bf16.mxu0 0
      %2639 = vmatmul.mubr.bf16.gmra.mrb[0].mxu0 %v2467
      %v2640 = vpop.f32.mrb[0].mxu0
      %v2641 = vadd.f32 0.0, %v2640
      %v2642 = vpop.f32.mrb[0].mxu0
      %v2643 = vpop.f32.mrb[0].mxu0
      %v2644 = vadd.f32 0.0, %v2643
      %v2645 = vpop.f32.mrb[0].mxu0
      %2646 = vmatprep.mubr.bf16.mxu0 0
      %2647 = vmatmul.mubr.bf16.gmra.mrb[0].mxu0 %v2468
      %v2648 = vpop.f32.mrb[0].mxu0
      %v2649 = vadd.f32 0.0, %v2648
      %v2650 = vpop.f32.mrb[0].mxu0
      %v2651 = vpop.f32.mrb[0].mxu0
      %v2652 = vadd.f32 0.0, %v2651
      %v2653 = vpop.f32.mrb[0].mxu0
      %2654 = vmatprep.mubr.bf16.mxu0 0
      %2655 = vmatmul.mubr.bf16.gmra.mrb[0].mxu0 %v2469
      %v2656 = vpop.f32.mrb[0].mxu0
      %v2657 = vadd.f32 0.0, %v2656
      %v2658 = vpop.f32.mrb[0].mxu0
      %v2659 = vpop.f32.mrb[0].mxu0
      %v2660 = vadd.f32 0.0, %v2659
      %v2661 = vpop.f32.mrb[0].mxu0
      %2662 = vmatprep.mubr.bf16.mxu0 0
      %2663 = vmatmul.mubr.bf16.gmra.mrb[0].mxu0 %v2470
      %v2664 = vpop.f32.mrb[0].mxu0
      %v2665 = vadd.f32 0.0, %v2664
      %v2666 = vpop.f32.mrb[0].mxu0
      %v2667 = vpop.f32.mrb[0].mxu0
      %v2668 = vadd.f32 0.0, %v2667
      %v2669 = vpop.f32.mrb[0].mxu0
      %2670 = vmatprep.mubr.bf16.mxu0 0
      %2671 = vmatmul.mubr.bf16.gmra.mrb[0].mxu0 %v2471
      %v2672 = vpop.f32.mrb[0].mxu0
      %v2673 = vadd.f32 0.0, %v2672
      %v2674 = vpop.f32.mrb[0].mxu0
      %v2675 = vpop.f32.mrb[0].mxu0
      %v2676 = vadd.f32 0.0, %v2675
      %v2677 = vpop.f32.mrb[0].mxu0
      %2678 = vmatprep.mubr.bf16.mxu0 0
      %2679 = vmatmul.mubr.bf16.gmra.mrb[0].mxu0 %v2472
      %v2680 = vpop.f32.mrb[0].mxu0
      %v2681 = vadd.f32 0.0, %v2680
      %v2682 = vpop.f32.mrb[0].mxu0
      %v2683 = vpop.f32.mrb[0].mxu0
      %v2684 = vadd.f32 0.0, %v2683
      %v2685 = vpop.f32.mrb[0].mxu0
      %2686 = vmatprep.mubr.bf16.mxu0 0
      %2687 = vmatmul.mubr.bf16.gmra.mrb[0].mxu0 %v2473
      %v2688 = vpop.f32.mrb[0].mxu0
      %v2689 = vadd.f32 0.0, %v2688
      %v2690 = vpop.f32.mrb[0].mxu0
      %v2691 = vpop.f32.mrb[0].mxu0
      %v2692 = vadd.f32 0.0, %v2691
      %v2693 = vpop.f32.mrb[0].mxu0
      %2694 = vmatprep.mubr.bf16.mxu0 0
      %2695 = vmatmul.mubr.bf16.gmra.mrb[0].mxu0 %v2474
      %v2696 = vpop.f32.mrb[0].mxu0
      %v2697 = vadd.f32 0.0, %v2696
      %v2698 = vpop.f32.mrb[0].mxu0
      %v2699 = vpop.f32.mrb[0].mxu0
      %v2700 = vadd.f32 0.0, %v2699
      %v2701 = vpop.f32.mrb[0].mxu0
      %2702 = vmatprep.mubr.bf16.mxu0 0
      %2703 = vmatmul.mubr.bf16.gmra.mrb[0].mxu0 %v2475
      %v2704 = vpop.f32.mrb[0].mxu0
      %v2705 = vadd.f32 0.0, %v2704
      %v2706 = vpop.f32.mrb[0].mxu0
      %v2707 = vpop.f32.mrb[0].mxu0
      %v2708 = vadd.f32 0.0, %v2707
      %v2709 = vpop.f32.mrb[0].mxu0
      %2710 = vmatprep.mubr.bf16.mxu0 0
      %2711 = vmatmul.mubr.bf16.gmra.mrb[0].mxu0 %v2476
      %v2712 = vpop.f32.mrb[0].mxu0
      %v2713 = vadd.f32 0.0, %v2712
      %v2714 = vpop.f32.mrb[0].mxu0
      %v2715 = vpop.f32.mrb[0].mxu0
      %v2716 = vadd.f32 0.0, %v2715
      %v2717 = vpop.f32.mrb[0].mxu0
      %2718 = vdwg.mxu0
      %v2719 = vadd.f32 %v2387, %v2577
      %v2720 = vadd.f32 %v2388, %v2580
      %v2721 = vadd.f32 %v2389, %v2585
      %v2722 = vadd.f32 %v2390, %v2588
      %v2723 = vadd.f32 %v2391, %v2593
      %v2724 = vadd.f32 %v2392, %v2596
      %v2725 = vadd.f32 %v2393, %v2601
      %v2726 = vadd.f32 %v2394, %v2604
      %v2727 = vadd.f32 %v2395, %v2609
      %v2728 = vadd.f32 %v2396, %v2612
      %v2729 = vadd.f32 %v2397, %v2617
      %v2730 = vadd.f32 %v2398, %v2620
      %v2731 = vadd.f32 %v2399, %v2625
      %v2732 = vadd.f32 %v2400, %v2628
      %v2733 = vadd.f32 %v2401, %v2633
      %v2734 = vadd.f32 %v2402, %v2636
      %v2735 = vadd.f32 %v2403, %v2641
      %v2736 = vadd.f32 %v2404, %v2644
      %v2737 = vadd.f32 %v2405, %v2649
      %v2738 = vadd.f32 %v2406, %v2652
      %v2739 = vadd.f32 %v2407, %v2657
      %v2740 = vadd.f32 %v2408, %v2660
      %v2741 = vadd.f32 %v2409, %v2665
      %v2742 = vadd.f32 %v2410, %v2668
      %v2743 = vadd.f32 %v2411, %v2673
      %v2744 = vadd.f32 %v2412, %v2676
      %v2745 = vadd.f32 %v2413, %v2681
      %v2746 = vadd.f32 %v2414, %v2684
      %v2747 = vadd.f32 %v2415, %v2689
      %v2748 = vadd.f32 %v2416, %v2692
      %v2749 = vadd.f32 %v2417, %v2697
      %v2750 = vadd.f32 %v2418, %v2700
      %v2751 = vadd.f32 %v2419, %v2705
      %v2752 = vadd.f32 %v2420, %v2708
      %v2753 = vadd.f32 %v2421, %v2713
      %v2754 = vadd.f32 %v2422, %v2716
      %v2755 = vld [vmem:[%s165 + $0x26] sm:$0xff]
      %v2756 = vld [vmem:[%s165 + $0x2e] sm:$0xff]
      %v2757 = vld [vmem:[%s165 + $0x36] sm:$0xff]
      %v2758 = vld [vmem:[%s165 + $0x3e] sm:$0xff]
      %v2759 = vld [vmem:[%s165 + $0x46] sm:$0xff]
      %v2760 = vld [vmem:[%s165 + $0x4e] sm:$0xff]
      %v2761 = vld [vmem:[%s165 + $0x56] sm:$0xff]
      %v2762 = vld [vmem:[%s165 + $0x5e] sm:$0xff]
      %v2763 = vld [vmem:[%s165 + $0x66] sm:$0xff]
      %v2764 = vld [vmem:[%s165 + $0x6e] sm:$0xff]
      %v2765 = vld [vmem:[%s165 + $0x76] sm:$0xff]
      %v2766 = vld [vmem:[%s165 + $0x7e] sm:$0xff]
      %v2767 = vld [vmem:[%s165 + $0x86] sm:$0xff]
      %v2768 = vld [vmem:[%s165 + $0x8e] sm:$0xff]
      %v2769 = vld [vmem:[%s165 + $0x96] sm:$0xff]
      %v2770 = vld [vmem:[%s165 + $0x9e] sm:$0xff]
      %v2771 = vld [vmem:[%s165 + $0xa6] sm:$0xff]
      %v2772 = vld [vmem:[%s165 + $0xae] sm:$0xff]
      %v2773 = vld [vmem:[%s165 + $0xb6] sm:$0xff]
      %v2774 = vld [vmem:[%s165 + $0xbe] sm:$0xff]
      %v2775 = vld [vmem:[%s165 + $0xc6] sm:$0xff]
      %v2776 = vld [vmem:[%s165 + $0xce] sm:$0xff]
      %v2777 = vld [vmem:[%s165 + $0xd6] sm:$0xff]
      %v2778 = vld [vmem:[%s165 + $0xde] sm:$0xff]
      %v2779 = vld [vmem:[%s165 + $0xe6] sm:$0xff]
      %v2780 = vld [vmem:[%s165 + $0xee] sm:$0xff]
      %v2781 = vld [vmem:[%s165 + $0xf6] sm:$0xff]
      %v2782 = vld [vmem:[%s165 + $0xfe] sm:$0xff]
      %v2783 = vld [vmem:[%s165 + $0x106] sm:$0xff]
      %v2784 = vld [vmem:[%s165 + $0x10e] sm:$0xff]
      %v2785 = vld [vmem:[%s165 + $0x116] sm:$0xff]
      %v2786 = vld [vmem:[%s165 + $0x11e] sm:$0xff]
      %v2787 = vld [vmem:[%s165 + $0x126] sm:$0xff]
      %v2788 = vld [vmem:[%s165 + $0x12e] sm:$0xff]
      %v2789 = vld [vmem:[%s165 + $0x136] sm:$0xff]
      %v2790 = vld [vmem:[%s165 + $0x13e] sm:$0xff]
      %v2791 = vpack.c.bf16 %v2756, %v2755
      %v2792 = vpack.c.bf16 %v2758, %v2757
      %v2793 = vpack.c.bf16 %v2760, %v2759
      %v2794 = vpack.c.bf16 %v2762, %v2761
      %v2795 = vpack.c.bf16 %v2764, %v2763
      %v2796 = vpack.c.bf16 %v2766, %v2765
      %v2797 = vpack.c.bf16 %v2768, %v2767
      %v2798 = vpack.c.bf16 %v2770, %v2769
      %v2799 = vpack.c.bf16 %v2772, %v2771
      %v2800 = vpack.c.bf16 %v2774, %v2773
      %v2801 = vpack.c.bf16 %v2776, %v2775
      %v2802 = vpack.c.bf16 %v2778, %v2777
      %v2803 = vpack.c.bf16 %v2780, %v2779
      %v2804 = vpack.c.bf16 %v2782, %v2781
      %v2805 = vpack.c.bf16 %v2784, %v2783
      %v2806 = vpack.c.bf16 %v2786, %v2785
      %v2807 = vpack.c.bf16 %v2788, %v2787
      %v2808 = vpack.c.bf16 %v2790, %v2789
      %s2809 = scalar_lea.vmem %s1, 512
      %v2810 = vld [vmem:[%s2809] sm:$0xf]
      %v2811 = vld [vmem:[%s2809 + $0x4] sm:$0xf]
      %v2812 = vld [vmem:[%s2809 + $0x8] sm:$0xf]
      %v2813 = vld [vmem:[%s2809 + $0xc] sm:$0xf]
      %v2814 = vld [vmem:[%s2809 + $0x10] sm:$0xf]
      %v2815 = vld [vmem:[%s2809 + $0x14] sm:$0xf]
      %v2816 = vld [vmem:[%s2809 + $0x18] sm:$0xf]
      %v2817 = vld [vmem:[%s2809 + $0x1c] sm:$0xf]
      %v2818 = vld [vmem:[%s2809 + $0x20] sm:$0xf]
      %v2819 = vld [vmem:[%s2809 + $0x24] sm:$0xf]
      %v2820 = vld [vmem:[%s2809 + $0x28] sm:$0xf]
      %v2821 = vld [vmem:[%s2809 + $0x2c] sm:$0xf]
      %v2822 = vld [vmem:[%s2809 + $0x30] sm:$0xf]
      %v2823 = vld [vmem:[%s2809 + $0x34] sm:$0xf]
      %v2824 = vld [vmem:[%s2809 + $0x38] sm:$0xf]
      %v2825 = vld [vmem:[%s2809 + $0x3c] sm:$0xf]
      %v2842 = vunpack.c.l.b16 %v2810
      %v2843 = vunpack.c.l.b16 %v2811
      %v2844 = vunpack.c.l.b16 %v2812
      %v2845 = vunpack.c.l.b16 %v2813
      %v2846 = vunpack.c.l.b16 %v2814
      %v2847 = vunpack.c.l.b16 %v2815
      %v2848 = vunpack.c.l.b16 %v2816
      %v2849 = vunpack.c.l.b16 %v2817
      %v2850 = vunpack.c.l.b16 %v2818
      %v2851 = vunpack.c.l.b16 %v2819
      %v2852 = vunpack.c.l.b16 %v2820
      %v2853 = vunpack.c.l.b16 %v2821
      %v2854 = vunpack.c.l.b16 %v2822
      %v2855 = vunpack.c.l.b16 %v2823
      %v2856 = vunpack.c.l.b16 %v2824
      %v2857 = vunpack.c.l.b16 %v2825
      %v2858 = vpack.c.b16 %v2843, %v2842
      %v2859 = vpack.c.b16 %v2845, %v2844
      %v2860 = vpack.c.b16 %v2847, %v2846
      %v2861 = vpack.c.b16 %v2849, %v2848
      %v2862 = vpack.c.b16 %v2851, %v2850
      %v2863 = vpack.c.b16 %v2853, %v2852
      %v2864 = vpack.c.b16 %v2855, %v2854
      %v2865 = vpack.c.b16 %v2857, %v2856
      %2874 = vmatprep.subr.bf16.mxu0 0
      %2875 = vmatpush1.bf16.msra.mxu0 %v2858
      %2876 = vmatprep.subr.bf16.mxu0 0
      %2877 = vmatpush1.bf16.msra.mxu0 %v2859
      %2878 = vmatprep.subr.bf16.mxu0 0
      %2879 = vmatpush1.bf16.msra.mxu0 %v2860
      %2880 = vmatprep.subr.bf16.mxu0 0
      %2881 = vmatpush1.bf16.msra.mxu0 %v2861
      %2882 = vmatprep.subr.bf16.mxu0 0
      %2883 = vmatpush1.bf16.msra.mxu0 %v2862
      %2884 = vmatprep.subr.bf16.mxu0 0
      %2885 = vmatpush1.bf16.msra.mxu0 %v2863
      %2886 = vmatprep.subr.bf16.mxu0 0
      %2887 = vmatpush1.bf16.msra.mxu0 %v2864
      %2888 = vmatprep.subr.bf16.mxu0 0
      %2889 = vmatpush1.bf16.msra.mxu0 %v2865
      %2890 = vmatprep.subr.bf16.mxu0 0
      %2891 = vmatpush1.bf16.msra.mxu0 0
      %2892 = vmatprep.subr.bf16.mxu0 0
      %2893 = vmatpush1.bf16.msra.mxu0 0
      %2894 = vmatprep.subr.bf16.mxu0 0
      %2895 = vmatpush1.bf16.msra.mxu0 0
      %2896 = vmatprep.subr.bf16.mxu0 0
      %2897 = vmatpush1.bf16.msra.mxu0 0
      %2898 = vmatprep.subr.bf16.mxu0 0
      %2899 = vmatpush1.bf16.msra.mxu0 0
      %2900 = vmatprep.subr.bf16.mxu0 0
      %2901 = vmatpush1.bf16.msra.mxu0 0
      %2902 = vmatprep.subr.bf16.mxu0 0
      %2903 = vmatpush1.bf16.msra.mxu0 0
      %2904 = vmatprep.subr.bf16.mxu0 0
      %2905 = vmatpush1.bf16.msra.mxu0 0
      %2906 = vmatprep.mubr.bf16.mxu0 0
      %2907 = vmatmul.mubr.bf16.gmra.mrb[0].mxu0 %v2791
      %v2908 = vpop.f32.mrb[0].mxu0
      %v2909 = vadd.f32 0.0, %v2908
      %v2910 = vpop.f32.mrb[0].mxu0
      %v2911 = vpop.f32.mrb[0].mxu0
      %v2912 = vadd.f32 0.0, %v2911
      %v2913 = vpop.f32.mrb[0].mxu0
      %2914 = vmatprep.mubr.bf16.mxu0 0
      %2915 = vmatmul.mubr.bf16.gmra.mrb[0].mxu0 %v2792
      %v2916 = vpop.f32.mrb[0].mxu0
      %v2917 = vadd.f32 0.0, %v2916
      %v2918 = vpop.f32.mrb[0].mxu0
      %v2919 = vpop.f32.mrb[0].mxu0
      %v2920 = vadd.f32 0.0, %v2919
      %v2921 = vpop.f32.mrb[0].mxu0
      %2922 = vmatprep.mubr.bf16.mxu0 0
      %2923 = vmatmul.mubr.bf16.gmra.mrb[0].mxu0 %v2793
      %v2924 = vpop.f32.mrb[0].mxu0
      %v2925 = vadd.f32 0.0, %v2924
      %v2926 = vpop.f32.mrb[0].mxu0
      %v2927 = vpop.f32.mrb[0].mxu0
      %v2928 = vadd.f32 0.0, %v2927
      %v2929 = vpop.f32.mrb[0].mxu0
      %2930 = vmatprep.mubr.bf16.mxu0 0
      %2931 = vmatmul.mubr.bf16.gmra.mrb[0].mxu0 %v2794
      %v2932 = vpop.f32.mrb[0].mxu0
      %v2933 = vadd.f32 0.0, %v2932
      %v2934 = vpop.f32.mrb[0].mxu0
      %v2935 = vpop.f32.mrb[0].mxu0
      %v2936 = vadd.f32 0.0, %v2935
      %v2937 = vpop.f32.mrb[0].mxu0
      %2938 = vmatprep.mubr.bf16.mxu0 0
      %2939 = vmatmul.mubr.bf16.gmra.mrb[0].mxu0 %v2795
      %v2940 = vpop.f32.mrb[0].mxu0
      %v2941 = vadd.f32 0.0, %v2940
      %v2942 = vpop.f32.mrb[0].mxu0
      %v2943 = vpop.f32.mrb[0].mxu0
      %v2944 = vadd.f32 0.0, %v2943
      %v2945 = vpop.f32.mrb[0].mxu0
      %2946 = vmatprep.mubr.bf16.mxu0 0
      %2947 = vmatmul.mubr.bf16.gmra.mrb[0].mxu0 %v2796
      %v2948 = vpop.f32.mrb[0].mxu0
      %v2949 = vadd.f32 0.0, %v2948
      %v2950 = vpop.f32.mrb[0].mxu0
      %v2951 = vpop.f32.mrb[0].mxu0
      %v2952 = vadd.f32 0.0, %v2951
      %v2953 = vpop.f32.mrb[0].mxu0
      %2954 = vmatprep.mubr.bf16.mxu0 0
      %2955 = vmatmul.mubr.bf16.gmra.mrb[0].mxu0 %v2797
      %v2956 = vpop.f32.mrb[0].mxu0
      %v2957 = vadd.f32 0.0, %v2956
      %v2958 = vpop.f32.mrb[0].mxu0
      %v2959 = vpop.f32.mrb[0].mxu0
      %v2960 = vadd.f32 0.0, %v2959
      %v2961 = vpop.f32.mrb[0].mxu0
      %2962 = vmatprep.mubr.bf16.mxu0 0
      %2963 = vmatmul.mubr.bf16.gmra.mrb[0].mxu0 %v2798
      %v2964 = vpop.f32.mrb[0].mxu0
      %v2965 = vadd.f32 0.0, %v2964
      %v2966 = vpop.f32.mrb[0].mxu0
      %v2967 = vpop.f32.mrb[0].mxu0
      %v2968 = vadd.f32 0.0, %v2967
      %v2969 = vpop.f32.mrb[0].mxu0
      %2970 = vmatprep.mubr.bf16.mxu0 0
      %2971 = vmatmul.mubr.bf16.gmra.mrb[0].mxu0 %v2799
      %v2972 = vpop.f32.mrb[0].mxu0
      %v2973 = vadd.f32 0.0, %v2972
      %v2974 = vpop.f32.mrb[0].mxu0
      %v2975 = vpop.f32.mrb[0].mxu0
      %v2976 = vadd.f32 0.0, %v2975
      %v2977 = vpop.f32.mrb[0].mxu0
      %2978 = vmatprep.mubr.bf16.mxu0 0
      %2979 = vmatmul.mubr.bf16.gmra.mrb[0].mxu0 %v2800
      %v2980 = vpop.f32.mrb[0].mxu0
      %v2981 = vadd.f32 0.0, %v2980
      %v2982 = vpop.f32.mrb[0].mxu0
      %v2983 = vpop.f32.mrb[0].mxu0
      %v2984 = vadd.f32 0.0, %v2983
      %v2985 = vpop.f32.mrb[0].mxu0
      %2986 = vmatprep.mubr.bf16.mxu0 0
      %2987 = vmatmul.mubr.bf16.gmra.mrb[0].mxu0 %v2801
      %v2988 = vpop.f32.mrb[0].mxu0
      %v2989 = vadd.f32 0.0, %v2988
      %v2990 = vpop.f32.mrb[0].mxu0
      %v2991 = vpop.f32.mrb[0].mxu0
      %v2992 = vadd.f32 0.0, %v2991
      %v2993 = vpop.f32.mrb[0].mxu0
      %2994 = vmatprep.mubr.bf16.mxu0 0
      %2995 = vmatmul.mubr.bf16.gmra.mrb[0].mxu0 %v2802
      %v2996 = vpop.f32.mrb[0].mxu0
      %v2997 = vadd.f32 0.0, %v2996
      %v2998 = vpop.f32.mrb[0].mxu0
      %v2999 = vpop.f32.mrb[0].mxu0
      %v3000 = vadd.f32 0.0, %v2999
      %v3001 = vpop.f32.mrb[0].mxu0
      %3002 = vmatprep.mubr.bf16.mxu0 0
      %3003 = vmatmul.mubr.bf16.gmra.mrb[0].mxu0 %v2803
      %v3004 = vpop.f32.mrb[0].mxu0
      %v3005 = vadd.f32 0.0, %v3004
      %v3006 = vpop.f32.mrb[0].mxu0
      %v3007 = vpop.f32.mrb[0].mxu0
      %v3008 = vadd.f32 0.0, %v3007
      %v3009 = vpop.f32.mrb[0].mxu0
      %3010 = vmatprep.mubr.bf16.mxu0 0
      %3011 = vmatmul.mubr.bf16.gmra.mrb[0].mxu0 %v2804
      %v3012 = vpop.f32.mrb[0].mxu0
      %v3013 = vadd.f32 0.0, %v3012
      %v3014 = vpop.f32.mrb[0].mxu0
      %v3015 = vpop.f32.mrb[0].mxu0
      %v3016 = vadd.f32 0.0, %v3015
      %v3017 = vpop.f32.mrb[0].mxu0
      %3018 = vmatprep.mubr.bf16.mxu0 0
      %3019 = vmatmul.mubr.bf16.gmra.mrb[0].mxu0 %v2805
      %v3020 = vpop.f32.mrb[0].mxu0
      %v3021 = vadd.f32 0.0, %v3020
      %v3022 = vpop.f32.mrb[0].mxu0
      %v3023 = vpop.f32.mrb[0].mxu0
      %v3024 = vadd.f32 0.0, %v3023
      %v3025 = vpop.f32.mrb[0].mxu0
      %3026 = vmatprep.mubr.bf16.mxu0 0
      %3027 = vmatmul.mubr.bf16.gmra.mrb[0].mxu0 %v2806
      %v3028 = vpop.f32.mrb[0].mxu0
      %v3029 = vadd.f32 0.0, %v3028
      %v3030 = vpop.f32.mrb[0].mxu0
      %v3031 = vpop.f32.mrb[0].mxu0
      %v3032 = vadd.f32 0.0, %v3031
      %v3033 = vpop.f32.mrb[0].mxu0
      %3034 = vmatprep.mubr.bf16.mxu0 0
      %3035 = vmatmul.mubr.bf16.gmra.mrb[0].mxu0 %v2807
      %v3036 = vpop.f32.mrb[0].mxu0
      %v3037 = vadd.f32 0.0, %v3036
      %v3038 = vpop.f32.mrb[0].mxu0
      %v3039 = vpop.f32.mrb[0].mxu0
      %v3040 = vadd.f32 0.0, %v3039
      %v3041 = vpop.f32.mrb[0].mxu0
      %3042 = vmatprep.mubr.bf16.mxu0 0
      %3043 = vmatmul.mubr.bf16.gmra.mrb[0].mxu0 %v2808
      %v3044 = vpop.f32.mrb[0].mxu0
      %v3045 = vadd.f32 0.0, %v3044
      %v3046 = vpop.f32.mrb[0].mxu0
      %v3047 = vpop.f32.mrb[0].mxu0
      %v3048 = vadd.f32 0.0, %v3047
      %v3049 = vpop.f32.mrb[0].mxu0
      %3050 = vdwg.mxu0
      %v3051 = vadd.f32 %v2719, %v2909
      %v3052 = vadd.f32 %v2720, %v2912
      %v3053 = vadd.f32 %v2721, %v2917
      %v3054 = vadd.f32 %v2722, %v2920
      %v3055 = vadd.f32 %v2723, %v2925
      %v3056 = vadd.f32 %v2724, %v2928
      %v3057 = vadd.f32 %v2725, %v2933
      %v3058 = vadd.f32 %v2726, %v2936
      %v3059 = vadd.f32 %v2727, %v2941
      %v3060 = vadd.f32 %v2728, %v2944
      %v3061 = vadd.f32 %v2729, %v2949
      %v3062 = vadd.f32 %v2730, %v2952
      %v3063 = vadd.f32 %v2731, %v2957
      %v3064 = vadd.f32 %v2732, %v2960
      %v3065 = vadd.f32 %v2733, %v2965
      %v3066 = vadd.f32 %v2734, %v2968
      %v3067 = vadd.f32 %v2735, %v2973
      %v3068 = vadd.f32 %v2736, %v2976
      %v3069 = vadd.f32 %v2737, %v2981
      %v3070 = vadd.f32 %v2738, %v2984
      %v3071 = vadd.f32 %v2739, %v2989
      %v3072 = vadd.f32 %v2740, %v2992
      %v3073 = vadd.f32 %v2741, %v2997
      %v3074 = vadd.f32 %v2742, %v3000
      %v3075 = vadd.f32 %v2743, %v3005
      %v3076 = vadd.f32 %v2744, %v3008
      %v3077 = vadd.f32 %v2745, %v3013
      %v3078 = vadd.f32 %v2746, %v3016
      %v3079 = vadd.f32 %v2747, %v3021
      %v3080 = vadd.f32 %v2748, %v3024
      %v3081 = vadd.f32 %v2749, %v3029
      %v3082 = vadd.f32 %v2750, %v3032
      %v3083 = vadd.f32 %v2751, %v3037
      %v3084 = vadd.f32 %v2752, %v3040
      %v3085 = vadd.f32 %v2753, %v3045
      %v3086 = vadd.f32 %v2754, %v3048
      %v3087 = vld [vmem:[%s2] sm:$0x1]
      %v3089 = vlaneseq
      %v3090 = vshrl.u32 %v3089, 7
      %v3091 = vsub.s32 0, %v3090
      %v3092 = vrot.slane %v3087, %v3091
      %v3094 = vadd.f32 %v3051, %v3092
      %v3095 = vadd.f32 %v3052, %v3092
      %v3096 = vadd.f32 %v3053, %v3092
      %v3097 = vadd.f32 %v3054, %v3092
      %v3098 = vadd.f32 %v3055, %v3092
      %v3099 = vadd.f32 %v3056, %v3092
      %v3100 = vadd.f32 %v3057, %v3092
      %v3101 = vadd.f32 %v3058, %v3092
      %v3102 = vadd.f32 %v3059, %v3092
      %v3103 = vadd.f32 %v3060, %v3092
      %v3104 = vadd.f32 %v3061, %v3092
      %v3105 = vadd.f32 %v3062, %v3092
      %v3106 = vadd.f32 %v3063, %v3092
      %v3107 = vadd.f32 %v3064, %v3092
      %v3108 = vadd.f32 %v3065, %v3092
      %v3109 = vadd.f32 %v3066, %v3092
      %v3110 = vadd.f32 %v3067, %v3092
      %v3111 = vadd.f32 %v3068, %v3092
      %v3112 = vadd.f32 %v3069, %v3092
      %v3113 = vadd.f32 %v3070, %v3092
      %v3114 = vadd.f32 %v3071, %v3092
      %v3115 = vadd.f32 %v3072, %v3092
      %v3116 = vadd.f32 %v3073, %v3092
      %v3117 = vadd.f32 %v3074, %v3092
      %v3118 = vadd.f32 %v3075, %v3092
      %v3119 = vadd.f32 %v3076, %v3092
      %v3120 = vadd.f32 %v3077, %v3092
      %v3121 = vadd.f32 %v3078, %v3092
      %v3122 = vadd.f32 %v3079, %v3092
      %v3123 = vadd.f32 %v3080, %v3092
      %v3124 = vadd.f32 %v3081, %v3092
      %v3125 = vadd.f32 %v3082, %v3092
      %v3126 = vadd.f32 %v3083, %v3092
      %v3127 = vadd.f32 %v3084, %v3092
      %v3128 = vadd.f32 %v3085, %v3092
      %v3129 = vadd.f32 %v3086, %v3092
      %v3130 = vxor.u32 %v3094, 2147483648
      %v3131 = vxor.u32 %v3095, 2147483648
      %v3132 = vxor.u32 %v3096, 2147483648
      %v3133 = vxor.u32 %v3097, 2147483648
      %v3134 = vxor.u32 %v3098, 2147483648
      %v3135 = vxor.u32 %v3099, 2147483648
      %v3136 = vxor.u32 %v3100, 2147483648
      %v3137 = vxor.u32 %v3101, 2147483648
      %v3138 = vxor.u32 %v3102, 2147483648
      %v3139 = vxor.u32 %v3103, 2147483648
      %v3140 = vxor.u32 %v3104, 2147483648
      %v3141 = vxor.u32 %v3105, 2147483648
      %v3142 = vxor.u32 %v3106, 2147483648
      %v3143 = vxor.u32 %v3107, 2147483648
      %v3144 = vxor.u32 %v3108, 2147483648
      %v3145 = vxor.u32 %v3109, 2147483648
      %v3146 = vxor.u32 %v3110, 2147483648
      %v3147 = vxor.u32 %v3111, 2147483648
      %v3148 = vxor.u32 %v3112, 2147483648
      %v3149 = vxor.u32 %v3113, 2147483648
      %v3150 = vxor.u32 %v3114, 2147483648
      %v3151 = vxor.u32 %v3115, 2147483648
      %v3152 = vxor.u32 %v3116, 2147483648
      %v3153 = vxor.u32 %v3117, 2147483648
      %v3154 = vxor.u32 %v3118, 2147483648
      %v3155 = vxor.u32 %v3119, 2147483648
      %v3156 = vxor.u32 %v3120, 2147483648
      %v3157 = vxor.u32 %v3121, 2147483648
      %v3158 = vxor.u32 %v3122, 2147483648
      %v3159 = vxor.u32 %v3123, 2147483648
      %v3160 = vxor.u32 %v3124, 2147483648
      %v3161 = vxor.u32 %v3125, 2147483648
      %v3162 = vxor.u32 %v3126, 2147483648
      %v3163 = vxor.u32 %v3127, 2147483648
      %v3164 = vxor.u32 %v3128, 2147483648
      %v3165 = vxor.u32 %v3129, 2147483648
      %v3166 = vmul.f32 %v3130, 1.442695
      %v3167 = vpow.pop %v3166
      %v3168 = vmul.f32 %v3131, 1.442695
      %v3169 = vpow.pop %v3168
      %v3170 = vmul.f32 %v3132, 1.442695
      %v3171 = vpow.pop %v3170
      %v3172 = vmul.f32 %v3133, 1.442695
      %v3173 = vpow.pop %v3172
      %v3174 = vmul.f32 %v3134, 1.442695
      %v3175 = vpow.pop %v3174
      %v3176 = vmul.f32 %v3135, 1.442695
      %v3177 = vpow.pop %v3176
      %v3178 = vmul.f32 %v3136, 1.442695
      %v3179 = vpow.pop %v3178
      %v3180 = vmul.f32 %v3137, 1.442695
      %v3181 = vpow.pop %v3180
      %v3182 = vmul.f32 %v3138, 1.442695
      %v3183 = vpow.pop %v3182
      %v3184 = vmul.f32 %v3139, 1.442695
      %v3185 = vpow.pop %v3184
      %v3186 = vmul.f32 %v3140, 1.442695
      %v3187 = vpow.pop %v3186
      %v3188 = vmul.f32 %v3141, 1.442695
      %v3189 = vpow.pop %v3188
      %v3190 = vmul.f32 %v3142, 1.442695
      %v3191 = vpow.pop %v3190
      %v3192 = vmul.f32 %v3143, 1.442695
      %v3193 = vpow.pop %v3192
      %v3194 = vmul.f32 %v3144, 1.442695
      %v3195 = vpow.pop %v3194
      %v3196 = vmul.f32 %v3145, 1.442695
      %v3197 = vpow.pop %v3196
      %v3198 = vmul.f32 %v3146, 1.442695
      %v3199 = vpow.pop %v3198
      %v3200 = vmul.f32 %v3147, 1.442695
      %v3201 = vpow.pop %v3200
      %v3202 = vmul.f32 %v3148, 1.442695
      %v3203 = vpow.pop %v3202
      %v3204 = vmul.f32 %v3149, 1.442695
      %v3205 = vpow.pop %v3204
      %v3206 = vmul.f32 %v3150, 1.442695
      %v3207 = vpow.pop %v3206
      %v3208 = vmul.f32 %v3151, 1.442695
      %v3209 = vpow.pop %v3208
      %v3210 = vmul.f32 %v3152, 1.442695
      %v3211 = vpow.pop %v3210
      %v3212 = vmul.f32 %v3153, 1.442695
      %v3213 = vpow.pop %v3212
      %v3214 = vmul.f32 %v3154, 1.442695
      %v3215 = vpow.pop %v3214
      %v3216 = vmul.f32 %v3155, 1.442695
      %v3217 = vpow.pop %v3216
      %v3218 = vmul.f32 %v3156, 1.442695
      %v3219 = vpow.pop %v3218
      %v3220 = vmul.f32 %v3157, 1.442695
      %v3221 = vpow.pop %v3220
      %v3222 = vmul.f32 %v3158, 1.442695
      %v3223 = vpow.pop %v3222
      %v3224 = vmul.f32 %v3159, 1.442695
      %v3225 = vpow.pop %v3224
      %v3226 = vmul.f32 %v3160, 1.442695
      %v3227 = vpow.pop %v3226
      %v3228 = vmul.f32 %v3161, 1.442695
      %v3229 = vpow.pop %v3228
      %v3230 = vmul.f32 %v3162, 1.442695
      %v3231 = vpow.pop %v3230
      %v3232 = vmul.f32 %v3163, 1.442695
      %v3233 = vpow.pop %v3232
      %v3234 = vmul.f32 %v3164, 1.442695
      %v3235 = vpow.pop %v3234
      %v3236 = vmul.f32 %v3165, 1.442695
      %v3237 = vpow.pop %v3236
      %v3238 = vadd.f32 %v3167, 1.0
      %v3239 = vadd.f32 %v3169, 1.0
      %v3240 = vadd.f32 %v3171, 1.0
      %v3241 = vadd.f32 %v3173, 1.0
      %v3242 = vadd.f32 %v3175, 1.0
      %v3243 = vadd.f32 %v3177, 1.0
      %v3244 = vadd.f32 %v3179, 1.0
      %v3245 = vadd.f32 %v3181, 1.0
      %v3246 = vadd.f32 %v3183, 1.0
      %v3247 = vadd.f32 %v3185, 1.0
      %v3248 = vadd.f32 %v3187, 1.0
      %v3249 = vadd.f32 %v3189, 1.0
      %v3250 = vadd.f32 %v3191, 1.0
      %v3251 = vadd.f32 %v3193, 1.0
      %v3252 = vadd.f32 %v3195, 1.0
      %v3253 = vadd.f32 %v3197, 1.0
      %v3254 = vadd.f32 %v3199, 1.0
      %v3255 = vadd.f32 %v3201, 1.0
      %v3256 = vadd.f32 %v3203, 1.0
      %v3257 = vadd.f32 %v3205, 1.0
      %v3258 = vadd.f32 %v3207, 1.0
      %v3259 = vadd.f32 %v3209, 1.0
      %v3260 = vadd.f32 %v3211, 1.0
      %v3261 = vadd.f32 %v3213, 1.0
      %v3262 = vadd.f32 %v3215, 1.0
      %v3263 = vadd.f32 %v3217, 1.0
      %v3264 = vadd.f32 %v3219, 1.0
      %v3265 = vadd.f32 %v3221, 1.0
      %v3266 = vadd.f32 %v3223, 1.0
      %v3267 = vadd.f32 %v3225, 1.0
      %v3268 = vadd.f32 %v3227, 1.0
      %v3269 = vadd.f32 %v3229, 1.0
      %v3270 = vadd.f32 %v3231, 1.0
      %v3271 = vadd.f32 %v3233, 1.0
      %v3272 = vadd.f32 %v3235, 1.0
      %v3273 = vadd.f32 %v3237, 1.0
      %v3274 = vrcp.pop %v3238
      %v3275 = vmul.f32 1.0, %v3274
      %v3276 = vrcp.pop %v3239
      %v3277 = vmul.f32 1.0, %v3276
      %v3278 = vrcp.pop %v3240
      %v3279 = vmul.f32 1.0, %v3278
      %v3280 = vrcp.pop %v3241
      %v3281 = vmul.f32 1.0, %v3280
      %v3282 = vrcp.pop %v3242
      %v3283 = vmul.f32 1.0, %v3282
      %v3284 = vrcp.pop %v3243
      %v3285 = vmul.f32 1.0, %v3284
      %v3286 = vrcp.pop %v3244
      %v3287 = vmul.f32 1.0, %v3286
      %v3288 = vrcp.pop %v3245
      %v3289 = vmul.f32 1.0, %v3288
      %v3290 = vrcp.pop %v3246
      %v3291 = vmul.f32 1.0, %v3290
      %v3292 = vrcp.pop %v3247
      %v3293 = vmul.f32 1.0, %v3292
      %v3294 = vrcp.pop %v3248
      %v3295 = vmul.f32 1.0, %v3294
      %v3296 = vrcp.pop %v3249
      %v3297 = vmul.f32 1.0, %v3296
      %v3298 = vrcp.pop %v3250
      %v3299 = vmul.f32 1.0, %v3298
      %v3300 = vrcp.pop %v3251
      %v3301 = vmul.f32 1.0, %v3300
      %v3302 = vrcp.pop %v3252
      %v3303 = vmul.f32 1.0, %v3302
      %v3304 = vrcp.pop %v3253
      %v3305 = vmul.f32 1.0, %v3304
      %v3306 = vrcp.pop %v3254
      %v3307 = vmul.f32 1.0, %v3306
      %v3308 = vrcp.pop %v3255
      %v3309 = vmul.f32 1.0, %v3308
      %v3310 = vrcp.pop %v3256
      %v3311 = vmul.f32 1.0, %v3310
      %v3312 = vrcp.pop %v3257
      %v3313 = vmul.f32 1.0, %v3312
      %v3314 = vrcp.pop %v3258
      %v3315 = vmul.f32 1.0, %v3314
      %v3316 = vrcp.pop %v3259
      %v3317 = vmul.f32 1.0, %v3316
      %v3318 = vrcp.pop %v3260
      %v3319 = vmul.f32 1.0, %v3318
      %v3320 = vrcp.pop %v3261
      %v3321 = vmul.f32 1.0, %v3320
      %v3322 = vrcp.pop %v3262
      %v3323 = vmul.f32 1.0, %v3322
      %v3324 = vrcp.pop %v3263
      %v3325 = vmul.f32 1.0, %v3324
      %v3326 = vrcp.pop %v3264
      %v3327 = vmul.f32 1.0, %v3326
      %v3328 = vrcp.pop %v3265
      %v3329 = vmul.f32 1.0, %v3328
      %v3330 = vrcp.pop %v3266
      %v3331 = vmul.f32 1.0, %v3330
      %v3332 = vrcp.pop %v3267
      %v3333 = vmul.f32 1.0, %v3332
      %v3334 = vrcp.pop %v3268
      %v3335 = vmul.f32 1.0, %v3334
      %v3336 = vrcp.pop %v3269
      %v3337 = vmul.f32 1.0, %v3336
      %v3338 = vrcp.pop %v3270
      %v3339 = vmul.f32 1.0, %v3338
      %v3340 = vrcp.pop %v3271
      %v3341 = vmul.f32 1.0, %v3340
      %v3342 = vrcp.pop %v3272
      %v3343 = vmul.f32 1.0, %v3342
      %v3344 = vrcp.pop %v3273
      %v3345 = vmul.f32 1.0, %v3344
      %3346 = vst [vmem:[%s170] sm:$0xff] %v3275
      %3347 = vst [vmem:[%s170 + $0x8] sm:$0xff] %v3277
      %3348 = vst [vmem:[%s170 + $0x10] sm:$0xff] %v3279
      %3349 = vst [vmem:[%s170 + $0x18] sm:$0xff] %v3281
      %3350 = vst [vmem:[%s170 + $0x20] sm:$0xff] %v3283
      %3351 = vst [vmem:[%s170 + $0x28] sm:$0xff] %v3285
      %3352 = vst [vmem:[%s170 + $0x30] sm:$0xff] %v3287
      %3353 = vst [vmem:[%s170 + $0x38] sm:$0xff] %v3289
      %3354 = vst [vmem:[%s170 + $0x40] sm:$0xff] %v3291
      %3355 = vst [vmem:[%s170 + $0x48] sm:$0xff] %v3293
      %3356 = vst [vmem:[%s170 + $0x50] sm:$0xff] %v3295
      %3357 = vst [vmem:[%s170 + $0x58] sm:$0xff] %v3297
      %3358 = vst [vmem:[%s170 + $0x60] sm:$0xff] %v3299
      %3359 = vst [vmem:[%s170 + $0x68] sm:$0xff] %v3301
      %3360 = vst [vmem:[%s170 + $0x70] sm:$0xff] %v3303
      %3361 = vst [vmem:[%s170 + $0x78] sm:$0xff] %v3305
      %3362 = vst [vmem:[%s170 + $0x80] sm:$0xff] %v3307
      %3363 = vst [vmem:[%s170 + $0x88] sm:$0xff] %v3309
      %3364 = vst [vmem:[%s170 + $0x90] sm:$0xff] %v3311
      %3365 = vst [vmem:[%s170 + $0x98] sm:$0xff] %v3313
      %3366 = vst [vmem:[%s170 + $0xa0] sm:$0xff] %v3315
      %3367 = vst [vmem:[%s170 + $0xa8] sm:$0xff] %v3317
      %3368 = vst [vmem:[%s170 + $0xb0] sm:$0xff] %v3319
      %3369 = vst [vmem:[%s170 + $0xb8] sm:$0xff] %v3321
      %3370 = vst [vmem:[%s170 + $0xc0] sm:$0xff] %v3323
      %3371 = vst [vmem:[%s170 + $0xc8] sm:$0xff] %v3325
      %3372 = vst [vmem:[%s170 + $0xd0] sm:$0xff] %v3327
      %3373 = vst [vmem:[%s170 + $0xd8] sm:$0xff] %v3329
      %3374 = vst [vmem:[%s170 + $0xe0] sm:$0xff] %v3331
      %3375 = vst [vmem:[%s170 + $0xe8] sm:$0xff] %v3333
      %3376 = vst [vmem:[%s170 + $0xf0] sm:$0xff] %v3335
      %3377 = vst [vmem:[%s170 + $0xf8] sm:$0xff] %v3337
      %3378 = vst [vmem:[%s170 + $0x100] sm:$0xff] %v3339
      %3379 = vst [vmem:[%s170 + $0x108] sm:$0xff] %v3341
      %3380 = vst [vmem:[%s170 + $0x110] sm:$0xff] %v3343
      %3381 = vst [vmem:[%s170 + $0x118] sm:$0xff] %v3345
      %p3382 = scmp.lt.s32.totalorder %s14, 1
      %s3383 = scalar_select %p3382, %s14, 1
      %s3384 = smul.addr %s3383, 36
      %s3385 = smul.addr %s3384, 8
      %s3386 = scalar_lea.vmem %s3, %s3385
      // Predicated region
      $region33: #{generator_forward.7} parent=31 // pred_check
        %p3387 = pneg %p100
      $region34: #{generator_forward.7} parent=31 // pred_check_branch
        %3389 = sbr.rel (%p3387) target = $region36
      $region35: #{generator_forward.7} parent=31 // pred_region
        _
      $region36: #{generator_forward.7} parent=31 // pred_fallthru
        _
    $region32: #{generator_forward.7} parent=5 // pred_fallthru
      _
    %p3390 = scmp.le.s32.totalorder 2, %s9
    // Predicated region
    $region37: #{generator_forward.7} parent=5 // pred_check
      %p3391 = pneg %p3390
    $region38: #{generator_forward.7} parent=5 // pred_check_branch
      %3393 = sbr.rel (%p3391) target = $region40
    $region39: #{generator_forward.7} parent=5 // pred_region
      %s3394 = ssub.s32 %s9, 2
      // Predicated region
      $region41: #{generator_forward.7} parent=39 // pred_check
        %p3395 = pneg %p106
      $region42: #{generator_forward.7} parent=39 // pred_check_branch
        %3397 = sbr.rel (%p3395) target = $region44
      $region43: #{generator_forward.7} parent=39 // pred_region
        %p3398 = scmp.lt.s32.totalorder %s15, 1
        %s3399 = scalar_select %p3398, %s15, 1
        %s3400 = smul.addr %s3399, 36
        %s3401 = smul.addr %s3400, 8
        %s3402 = scalar_lea.vmem %s3, %s3401
      $region44: #{generator_forward.7} parent=39 // pred_fallthru
        _
    $region40: #{generator_forward.7} parent=5 // pred_fallthru
      _
  $region6: #{generator_forward.7} parent=0 // loop_footer
    %s13 = sadd.s32 1, %s9
  $region7: #{generator_forward.7} parent=0 // loop_footer_branch
    %8 = sbr.rel target = $region3
  $region8: #{generator_forward.7} parent=0 // loop_exit
    _

</llo_original>
